<compile_context>
chip_gen: v5e
topology: v5e:2x2
jax: 0.10.0
libtpu: 0.0.40
codegen_flags: <defaults>
</compile_context>

<pallas_src>
import functools
import numpy as np
import jax
import jax.numpy as jnp
from jax.experimental import pallas as pl
from jax.experimental.pallas import tpu as pltpu

LANE = 128      # vreg lane width
SUBLANE = 8     # vreg sublane count


def _round_up(x, m):
    return (x + m - 1) // m * m


# ----------------------------- Pallas kernel --------------------------------
def _encoder_kernel(x_ref,        # (TT*BB, F)        input chunk, rows grouped [t, batch-row]
                    wih1_ref,     # (F,    4*H1p)     layer-1 input weights (gate cols padded)
                    whh1_ref,     # (H1p,  4*H1p)     layer-1 recurrent weights
                    b1_ref,       # (1,    4*H1p)     b_ih1 + b_hh1 (f32)
                    w2_ref,       # (H1p+H2p, 4*H2p)  layer-2 stacked [W_ih2; W_hh2]
                    b2_ref,       # (1,    4*H2p)     b_ih2 + b_hh2 (f32)
                    out_ref,      # (BB, H2p)         final hidden of layer 2 (padded)
                    gx_sc,        # (TT*BB, 4*H1p) f32  hoisted layer-1 input gates
                    z_sc,         # (BB, H1p+H2p)  f32  [h1 | h2] recurrent state
                    c1_sc,        # (BB, H1p)      f32
                    c2_sc,        # (BB, H2p)      f32
                    *, TT, BB, H1p, H2p):
    chunk = pl.program_id(1)

    @pl.when(chunk == 0)
    def _():
        z_sc[...] = jnp.zeros_like(z_sc)
        c1_sc[...] = jnp.zeros_like(c1_sc)
        c2_sc[...] = jnp.zeros_like(c2_sc)

    # Hoisted layer-1 input projection: one MXU push for the whole time chunk.
    gx_sc[...] = (jnp.dot(x_ref[...], wih1_ref[...],
                          preferred_element_type=jnp.float32)
                  + b1_ref[...])

    wdt = whh1_ref.dtype   # matmul-input dtype (f32, or bf16 on v6e/v7x)

    def step(t, carry):
        row0 = pl.multiple_of(t * BB, BB)
        gx_t = gx_sc[pl.ds(row0, BB), :]                       # (BB, 4*H1p)

        # ---- layer 1 LSTM cell (input projection already done) ----
        h1_prev = z_sc[:, 0:H1p]
        gates1 = gx_t + jnp.dot(h1_prev.astype(wdt), whh1_ref[...],
                                preferred_element_type=jnp.float32)
        i1 = jax.nn.sigmoid(gates1[:, 0 * H1p:1 * H1p])
        f1 = jax.nn.sigmoid(gates1[:, 1 * H1p:2 * H1p])
        g1 = jnp.tanh(gates1[:, 2 * H1p:3 * H1p])
        o1 = jax.nn.sigmoid(gates1[:, 3 * H1p:4 * H1p])
        c1_new = f1 * c1_sc[...] + i1 * g1
        h1_new = o1 * jnp.tanh(c1_new)
        c1_sc[...] = c1_new
        z_sc[:, 0:H1p] = h1_new            # z is now [h1_new | h2_prev]

        # ---- layer 2 LSTM cell: single fused matmul over [h1_new, h2_prev] ----
        gates2 = (jnp.dot(z_sc[...].astype(wdt), w2_ref[...],
                          preferred_element_type=jnp.float32)
                  + b2_ref[...])
        i2 = jax.nn.sigmoid(gates2[:, 0 * H2p:1 * H2p])
        f2 = jax.nn.sigmoid(gates2[:, 1 * H2p:2 * H2p])
        g2 = jnp.tanh(gates2[:, 2 * H2p:3 * H2p])
        o2 = jax.nn.sigmoid(gates2[:, 3 * H2p:4 * H2p])
        c2_new = f2 * c2_sc[...] + i2 * g2
        h2_new = o2 * jnp.tanh(c2_new)
        c2_sc[...] = c2_new
        z_sc[:, H1p:H1p + H2p] = h2_new
        return carry

    jax.lax.fori_loop(0, TT, step, 0, unroll=True)

    @pl.when(chunk == pl.num_programs(1) - 1)
    def _():
        out_ref[...] = z_sc[:, H1p:H1p + H2p].astype(out_ref.dtype)


# --------------------------- weight / layout prep -----------------------------
def _pad_gate_cols(w_t, H, Hp):
    """(K, 4*H) -> (K, 4*Hp): zero-pad each of the 4 gate blocks to Hp columns."""
    if H == Hp:
        return w_t
    K = w_t.shape[0]
    return jnp.pad(w_t.reshape(K, 4, H), ((0, 0), (0, 0), (0, Hp - H))).reshape(K, 4 * Hp)


def _pad_bias(b, H, Hp):
    if H == Hp:
        return b[None, :]
    return jnp.pad(b.reshape(4, H), ((0, 0), (0, Hp - H))).reshape(1, 4 * Hp)


def _pad_rows(w, Kp):
    K = w.shape[0]
    if K == Kp:
        return w
    return jnp.pad(w, ((0, Kp - K), (0, 0)))


def _vmem_limit_bytes(TT, BB, F, H1p, H2p, compute_dtype):
    cb = jnp.dtype(compute_dtype).itemsize
    fb = 4
    x_blk = TT * BB * F * cb
    w_all = ((F * 4 * H1p + H1p * 4 * H1p + (H1p + H2p) * 4 * H2p) * cb
             + (4 * H1p + 4 * H2p) * fb)
    out_blk = BB * H2p * fb
    scratch = (TT * BB * 4 * H1p + BB * (H1p + H2p) + BB * H1p + BB * H2p) * fb
    est = 2 * (x_blk + w_all + out_blk) + scratch          # double-buffered in/out
    return int(min(48 << 20, max(16 << 20, 2 * est)))      # safe for v7x's 64 MiB


# ------------------------------- wrapper -------------------------------------
def encoder_forward(x, params, *, compute_dtype=jnp.float32, time_chunk=None):
    """x: (B, T, F) float32, batch_first like PyTorch. Returns (B, embedding_dim)."""
    (w_ih1, w_hh1, b_ih1, b_hh1), (w_ih2, w_hh2, b_ih2, b_hh2) = params
    B, T, F = x.shape
    H1 = w_hh1.shape[1]          # hidden_dim = 2 * embedding_dim
    H2 = w_hh2.shape[1]          # embedding_dim
    H1p = _round_up(H1, LANE)
    H2p = _round_up(H2, LANE)

    BB = SUBLANE                              # batch rows per batch block
    B_pad = _round_up(B, BB)
    num_bb = B_pad // BB

    if time_chunk is None:
        time_chunk = min(T, 64)
        while T % time_chunk:
            time_chunk -= 1
    TT = time_chunk
    assert T % TT == 0
    num_chunks = T // TT

    f32 = jnp.float32

    # Input: (B, T, F) -> (num_bb, T*BB, F), rows grouped [time, batch-row].
    x_p = jnp.pad(x.astype(f32), ((0, B_pad - B), (0, 0), (0, 0)))
    x_g = (jnp.transpose(x_p, (1, 0, 2))                    # (T, B_pad, F)
           .reshape(T, num_bb, BB, F)
           .transpose(1, 0, 2, 3)
           .reshape(num_bb, T * BB, F)
           .astype(compute_dtype))

    # Weights: transpose to (in, 4H); pad gate columns / input rows to lane multiples.
    wih1 = _pad_gate_cols(jnp.transpose(w_ih1).astype(f32), H1, H1p).astype(compute_dtype)
    whh1 = _pad_rows(_pad_gate_cols(jnp.transpose(w_hh1).astype(f32), H1, H1p),
                     H1p).astype(compute_dtype)
    b1 = _pad_bias((b_ih1 + b_hh1).astype(f32), H1, H1p)

    wih2 = _pad_rows(_pad_gate_cols(jnp.transpose(w_ih2).astype(f32), H2, H2p), H1p)
    whh2 = _pad_rows(_pad_gate_cols(jnp.transpose(w_hh2).astype(f32), H2, H2p), H2p)
    w2 = jnp.concatenate([wih2, whh2], axis=0).astype(compute_dtype)  # (H1p+H2p, 4*H2p)
    b2 = _pad_bias((b_ih2 + b_hh2).astype(f32), H2, H2p)

    kernel = functools.partial(_encoder_kernel, TT=TT, BB=BB, H1p=H1p, H2p=H2p)

    grid_spec = pltpu.PrefetchScalarGridSpec(
        num_scalar_prefetch=0,
        grid=(num_bb, num_chunks),            # (batch blocks, time chunks)
        in_specs=[
            pl.BlockSpec((pl.Squeezed(), TT * BB, F), lambda b, c: (b, c, 0)),
            pl.BlockSpec((F, 4 * H1p), lambda b, c: (0, 0)),
            pl.BlockSpec((H1p, 4 * H1p), lambda b, c: (0, 0)),
            pl.BlockSpec((1, 4 * H1p), lambda b, c: (0, 0)),
            pl.BlockSpec((H1p + H2p, 4 * H2p), lambda b, c: (0, 0)),
            pl.BlockSpec((1, 4 * H2p), lambda b, c: (0, 0)),
        ],
        out_specs=pl.BlockSpec((BB, H2p), lambda b, c: (b, 0)),
        scratch_shapes=[
            pltpu.VMEM((TT * BB, 4 * H1p), jnp.float32),   # hoisted input gates
            pltpu.VMEM((BB, H1p + H2p), jnp.float32),      # [h1 | h2] state
            pltpu.VMEM((BB, H1p), jnp.float32),            # c1
            pltpu.VMEM((BB, H2p), jnp.float32),            # c2
        ],
    )

    out_pad = pl.pallas_call(
        kernel,
        out_shape=jax.ShapeDtypeStruct((B_pad, H2p), jnp.float32),
        grid_spec=grid_spec,
        compiler_params=pltpu.CompilerParams(
            # batch blocks are independent (v7x: shard across the 2 TCs);
            # time is the sequential recurrence.
            dimension_semantics=("parallel", "arbitrary"),
            vmem_limit_bytes=_vmem_limit_bytes(TT, BB, F, H1p, H2p, compute_dtype),
        ),
    )(x_g, wih1, whh1, b1, w2, b2)

    return out_pad[:B, :H2]


# --------------------------- parameter init ----------------------------------
def init_lstm_params(key, input_size, hidden_size):
    """PyTorch nn.LSTM-style uniform(-1/sqrt(H), 1/sqrt(H)) init, deterministic."""
    bound = 1.0 / float(np.sqrt(hidden_size))
    k0, k1, k2, k3 = jax.random.split(key, 4)
    w_ih = jax.random.uniform(k0, (4 * hidden_size, input_size),
                              minval=-bound, maxval=bound, dtype=jnp.float32)
    w_hh = jax.random.uniform(k1, (4 * hidden_size, hidden_size),
                              minval=-bound, maxval=bound, dtype=jnp.float32)
    b_ih = jax.random.uniform(k2, (4 * hidden_size,),
                              minval=-bound, maxval=bound, dtype=jnp.float32)
    b_hh = jax.random.uniform(k3, (4 * hidden_size,),
                              minval=-bound, maxval=bound, dtype=jnp.float32)
    return w_ih, w_hh, b_ih, b_hh


# --------------------- exact (float64, numpy) reference -----------------------
def encoder_ref_np(x, params):
    def lstm(xs, w_ih, w_hh, b_ih, b_hh):
        B, T, _ = xs.shape
        H = w_hh.shape[1]
        h = np.zeros((B, H)); c = np.zeros((B, H))
        ys = np.zeros((B, T, H))
        for t in range(T):
            g = xs[:, t, :] @ w_ih.T + b_ih + h @ w_hh.T + b_hh
            i, f, gg, o = np.split(g, 4, axis=-1)
            i = 1.0 / (1.0 + np.exp(-i))
            f = 1.0 / (1.0 + np.exp(-f))
            o = 1.0 / (1.0 + np.exp(-o))
            gg = np.tanh(gg)
            c = f * c + i * gg
            h = o * np.tanh(c)
            ys[:, t, :] = h
        return ys, h

    p1, p2 = params
    xs = np.asarray(x, np.float64)
    p1 = [np.asarray(a, np.float64) for a in p1]
    p2 = [np.asarray(a, np.float64) for a in p2]
    y1, _ = lstm(xs, *p1)
    _, h2 = lstm(y1, *p2)
    return h2   # == hidden_n.reshape((B, embedding_dim))


# --------------------------------- main ---------------------------------------
if __name__ == "__main__":
    # Small shapes consistent with the module defaults: batch=2, seq=8,
    # n_features=4, embedding_dim=64 -> hidden_dim=128.
    B, T, F = 2, 8, 4
    embedding_dim = 64
    hidden_dim = 2 * embedding_dim

    key = jax.random.PRNGKey(0)
    kx, k1, k2 = jax.random.split(key, 3)

    x = jax.random.normal(kx, (B, T, F), dtype=jnp.float32)
    params = (init_lstm_params(k1, F, hidden_dim),
              init_lstm_params(k2, hidden_dim, embedding_dim))

    ref = encoder_ref_np(x, params)

    # f32 matmul-input path (all generations). Tolerance leaves headroom for the
    # MXU's multi-pass f32 handling vs. the exact float64 reference.
    out = jax.block_until_ready(encoder_forward(x, params))
    assert out.shape == (B, embedding_dim), out.shape
    np.testing.assert_allclose(np.asarray(out, np.float64), ref, rtol=5e-3, atol=5e-3)

    # bf16 matmul-input path (v6e/v7x): f32 accumulation + f32 h/c state.
    out_bf16 = jax.block_until_ready(
        encoder_forward(x, params, compute_dtype=jnp.bfloat16))
    np.testing.assert_allclose(np.asarray(out_bf16, np.float64), ref,
                               rtol=5e-2, atol=5e-2)

    print("KERNEL_OK")
</pallas_src>

<mosaic_0001>
module attributes {stable_mosaic.version = 11 : i64} {
  func.func @_encoder_kernel(%arg0: i32, %arg1: i32, %arg2: memref<1x64x4xf32, #tpu.memory_space<vmem>>, %arg3: memref<4x512xf32, #tpu.memory_space<vmem>>, %arg4: memref<128x512xf32, #tpu.memory_space<vmem>>, %arg5: memref<1x512xf32, #tpu.memory_space<vmem>>, %arg6: memref<256x512xf32, #tpu.memory_space<vmem>>, %arg7: memref<1x512xf32, #tpu.memory_space<vmem>>, %arg8: memref<8x128xf32, #tpu.memory_space<vmem>>, %arg9: memref<64x512xf32, #tpu.memory_space<vmem>>, %arg10: memref<8x256xf32, #tpu.memory_space<vmem>>, %arg11: memref<8x128xf32, #tpu.memory_space<vmem>>, %arg12: memref<8x128xf32, #tpu.memory_space<vmem>>) attributes {dimension_semantics = [#tpu.dimension_semantics<parallel>, #tpu.dimension_semantics<arbitrary>], iteration_bounds = array<i64: 1, 1>, scalar_prefetch = 0 : i64, scratch_operands = 4 : i64, tpu.core_type = #tpu.core_type<tc>, window_params = [{transform_indices = @transform_0, window_bounds = array<i64: 1, 64, 4>}, {pipeline_mode = #tpu.pipeline_mode<synchronous>, transform_indices = @transform_1, window_bounds = array<i64: 4, 512>}, {pipeline_mode = #tpu.pipeline_mode<synchronous>, transform_indices = @transform_2, window_bounds = array<i64: 128, 512>}, {pipeline_mode = #tpu.pipeline_mode<synchronous>, transform_indices = @transform_3, window_bounds = array<i64: 1, 512>}, {pipeline_mode = #tpu.pipeline_mode<synchronous>, transform_indices = @transform_4, window_bounds = array<i64: 256, 512>}, {pipeline_mode = #tpu.pipeline_mode<synchronous>, transform_indices = @transform_5, window_bounds = array<i64: 1, 512>}, {transform_indices = @transform_6, window_bounds = array<i64: 8, 128>}]} {
    %c0_i32 = arith.constant 0 : i32
    %0 = arith.cmpi eq, %arg1, %c0_i32 : i32
    %1 = arith.extui %0 : i1 to i32
    %c0_i32_0 = arith.constant 0 : i32
    %2 = arith.cmpi ne, %1, %c0_i32_0 : i32
    scf.if %2 {
      %cst_267 = arith.constant 0.000000e+00 : f32
      %574 = vector.broadcast %cst_267 : f32 to vector<8x256xf32>
      %c0_268 = arith.constant 0 : index
      %c0_269 = arith.constant 0 : index
      %575 = vector.load %arg10[%c0_268, %c0_269] : memref<8x256xf32, #tpu.memory_space<vmem>>, vector<8x256xf32>
      tpu.vector_store %arg10[%c0_268, %c0_269], %574 {strides = array<i32>} : memref<8x256xf32, #tpu.memory_space<vmem>>, vector<8x256xf32>,
      %cst_270 = arith.constant 0.000000e+00 : f32
      %576 = vector.broadcast %cst_270 : f32 to vector<8x128xf32>
      %c0_271 = arith.constant 0 : index
      %c0_272 = arith.constant 0 : index
      %577 = vector.load %arg11[%c0_271, %c0_272] : memref<8x128xf32, #tpu.memory_space<vmem>>, vector<8x128xf32>
      tpu.vector_store %arg11[%c0_271, %c0_272], %576 {strides = array<i32>} : memref<8x128xf32, #tpu.memory_space<vmem>>, vector<8x128xf32>,
      %cst_273 = arith.constant 0.000000e+00 : f32
      %578 = vector.broadcast %cst_273 : f32 to vector<8x128xf32>
      %c0_274 = arith.constant 0 : index
      %c0_275 = arith.constant 0 : index
      %579 = vector.load %arg12[%c0_274, %c0_275] : memref<8x128xf32, #tpu.memory_space<vmem>>, vector<8x128xf32>
      tpu.vector_store %arg12[%c0_274, %c0_275], %578 {strides = array<i32>} : memref<8x128xf32, #tpu.memory_space<vmem>>, vector<8x128xf32>,
    } else {
    }
    %c0 = arith.constant 0 : index
    %c0_1 = arith.constant 0 : index
    %c0_2 = arith.constant 0 : index
    %3 = vector.load %arg2[%c0, %c0_1, %c0_2] : memref<1x64x4xf32, #tpu.memory_space<vmem>>, vector<1x64x4xf32>
    %4 = vector.shape_cast %3 : vector<1x64x4xf32> to vector<64x4xf32>
    %c0_3 = arith.constant 0 : index
    %c0_4 = arith.constant 0 : index
    %5 = vector.load %arg3[%c0_3, %c0_4] : memref<4x512xf32, #tpu.memory_space<vmem>>, vector<4x512xf32>
    %cst = arith.constant dense<0.000000e+00> : vector<64x512xf32>
    %6 = tpu.matmul %4, %5, %cst {dimension_numbers = #tpu.dot_dimension_numbers<[1], [0], [0], [1], [0, 0, 1, 1], [], []>} : vector<64x4xf32>, vector<4x512xf32>, vector<64x512xf32> -> vector<64x512xf32>
    %c0_5 = arith.constant 0 : index
    %c0_6 = arith.constant 0 : index
    %7 = vector.load %arg5[%c0_5, %c0_6] : memref<1x512xf32, #tpu.memory_space<vmem>>, vector<1x512xf32>
    %8 = vector.broadcast %7 : vector<1x512xf32> to vector<64x512xf32>
    %9 = arith.addf %6, %8 : vector<64x512xf32>
    %c0_7 = arith.constant 0 : index
    %c0_8 = arith.constant 0 : index
    %10 = vector.load %arg9[%c0_7, %c0_8] : memref<64x512xf32, #tpu.memory_space<vmem>>, vector<64x512xf32>
    tpu.vector_store %arg9[%c0_7, %c0_8], %9 {strides = array<i32>} : memref<64x512xf32, #tpu.memory_space<vmem>>, vector<64x512xf32>,
    %c0_i32_9 = arith.constant 0 : i32
    %c8_i32 = arith.constant 8 : i32
    %11 = arith.muli %c0_i32_9, %c8_i32 : i32
    %12 = tpu.assume_multiple %11, 8 : i32
    %13 = arith.index_cast %12 : i32 to index
    %c0_10 = arith.constant 0 : index
    %14 = vector.load %arg9[%13, %c0_10] : memref<64x512xf32, #tpu.memory_space<vmem>>, vector<8x512xf32>
    %c0_11 = arith.constant 0 : index
    %c0_12 = arith.constant 0 : index
    %15 = vector.load %arg10[%c0_11, %c0_12] : memref<8x256xf32, #tpu.memory_space<vmem>>, vector<8x128xf32>
    %c0_13 = arith.constant 0 : index
    %c0_14 = arith.constant 0 : index
    %16 = vector.load %arg4[%c0_13, %c0_14] : memref<128x512xf32, #tpu.memory_space<vmem>>, vector<128x512xf32>
    %cst_15 = arith.constant dense<0.000000e+00> : vector<8x512xf32>
    %17 = tpu.matmul %15, %16, %cst_15 {dimension_numbers = #tpu.dot_dimension_numbers<[1], [0], [0], [1], [0, 0, 1, 1], [], []>} : vector<8x128xf32>, vector<128x512xf32>, vector<8x512xf32> -> vector<8x512xf32>
    %18 = arith.addf %14, %17 : vector<8x512xf32>
    %19 = vector.extract_strided_slice %18 {offsets = [0, 0], sizes = [8, 128], strides = [1, 1]} : vector<8x512xf32> to vector<8x128xf32>
    %20 = arith.negf %19 : vector<8x128xf32>
    %21 = math.exp %20 : vector<8x128xf32>
    %cst_16 = arith.constant 1.000000e+00 : f32
    %22 = vector.broadcast %cst_16 : f32 to vector<8x128xf32>
    %23 = arith.addf %22, %21 : vector<8x128xf32>
    %24 = arith.divf %22, %23 : vector<8x128xf32>
    %25 = vector.extract_strided_slice %18 {offsets = [0, 128], sizes = [8, 128], strides = [1, 1]} : vector<8x512xf32> to vector<8x128xf32>
    %26 = arith.negf %25 : vector<8x128xf32>
    %27 = math.exp %26 : vector<8x128xf32>
    %cst_17 = arith.constant 1.000000e+00 : f32
    %28 = vector.broadcast %cst_17 : f32 to vector<8x128xf32>
    %29 = arith.addf %28, %27 : vector<8x128xf32>
    %30 = arith.divf %28, %29 : vector<8x128xf32>
    %31 = vector.extract_strided_slice %18 {offsets = [0, 256], sizes = [8, 128], strides = [1, 1]} : vector<8x512xf32> to vector<8x128xf32>
    %32 = math.tanh %31 : vector<8x128xf32>
    %33 = vector.extract_strided_slice %18 {offsets = [0, 384], sizes = [8, 128], strides = [1, 1]} : vector<8x512xf32> to vector<8x128xf32>
    %34 = arith.negf %33 : vector<8x128xf32>
    %35 = math.exp %34 : vector<8x128xf32>
    %cst_18 = arith.constant 1.000000e+00 : f32
    %36 = vector.broadcast %cst_18 : f32 to vector<8x128xf32>
    %37 = arith.addf %36, %35 : vector<8x128xf32>
    %38 = arith.divf %36, %37 : vector<8x128xf32>
    %c0_19 = arith.constant 0 : index
    %c0_20 = arith.constant 0 : index
    %39 = vector.load %arg11[%c0_19, %c0_20] : memref<8x128xf32, #tpu.memory_space<vmem>>, vector<8x128xf32>
    %40 = arith.mulf %30, %39 : vector<8x128xf32>
    %41 = arith.mulf %24, %32 : vector<8x128xf32>
    %42 = arith.addf %40, %41 : vector<8x128xf32>
    %43 = math.tanh %42 : vector<8x128xf32>
    %44 = arith.mulf %38, %43 : vector<8x128xf32>
    %c0_21 = arith.constant 0 : index
    %c0_22 = arith.constant 0 : index
    %45 = vector.load %arg11[%c0_21, %c0_22] : memref<8x128xf32, #tpu.memory_space<vmem>>, vector<8x128xf32>
    tpu.vector_store %arg11[%c0_21, %c0_22], %42 {strides = array<i32>} : memref<8x128xf32, #tpu.memory_space<vmem>>, vector<8x128xf32>,
    %c0_23 = arith.constant 0 : index
    %c0_24 = arith.constant 0 : index
    %46 = vector.load %arg10[%c0_23, %c0_24] : memref<8x256xf32, #tpu.memory_space<vmem>>, vector<8x128xf32>
    tpu.vector_store %arg10[%c0_23, %c0_24], %44 {strides = array<i32>} : memref<8x256xf32, #tpu.memory_space<vmem>>, vector<8x128xf32>,
    %c0_25 = arith.constant 0 : index
    %c0_26 = arith.constant 0 : index
    %47 = vector.load %arg10[%c0_25, %c0_26] : memref<8x256xf32, #tpu.memory_space<vmem>>, vector<8x256xf32>
    %c0_27 = arith.constant 0 : index
    %c0_28 = arith.constant 0 : index
    %48 = vector.load %arg6[%c0_27, %c0_28] : memref<256x512xf32, #tpu.memory_space<vmem>>, vector<256x512xf32>
    %cst_29 = arith.constant dense<0.000000e+00> : vector<8x512xf32>
    %49 = tpu.matmul %47, %48, %cst_29 {dimension_numbers = #tpu.dot_dimension_numbers<[1], [0], [0], [1], [0, 0, 1, 1], [], []>} : vector<8x256xf32>, vector<256x512xf32>, vector<8x512xf32> -> vector<8x512xf32>
    %c0_30 = arith.constant 0 : index
    %c0_31 = arith.constant 0 : index
    %50 = vector.load %arg7[%c0_30, %c0_31] : memref<1x512xf32, #tpu.memory_space<vmem>>, vector<1x512xf32>
    %51 = vector.broadcast %50 : vector<1x512xf32> to vector<8x512xf32>
    %52 = arith.addf %49, %51 : vector<8x512xf32>
    %53 = vector.extract_strided_slice %52 {offsets = [0, 0], sizes = [8, 128], strides = [1, 1]} : vector<8x512xf32> to vector<8x128xf32>
    %54 = arith.negf %53 : vector<8x128xf32>
    %55 = math.exp %54 : vector<8x128xf32>
    %cst_32 = arith.constant 1.000000e+00 : f32
    %56 = vector.broadcast %cst_32 : f32 to vector<8x128xf32>
    %57 = arith.addf %56, %55 : vector<8x128xf32>
    %58 = arith.divf %56, %57 : vector<8x128xf32>
    %59 = vector.extract_strided_slice %52 {offsets = [0, 128], sizes = [8, 128], strides = [1, 1]} : vector<8x512xf32> to vector<8x128xf32>
    %60 = arith.negf %59 : vector<8x128xf32>
    %61 = math.exp %60 : vector<8x128xf32>
    %cst_33 = arith.constant 1.000000e+00 : f32
    %62 = vector.broadcast %cst_33 : f32 to vector<8x128xf32>
    %63 = arith.addf %62, %61 : vector<8x128xf32>
    %64 = arith.divf %62, %63 : vector<8x128xf32>
    %65 = vector.extract_strided_slice %52 {offsets = [0, 256], sizes = [8, 128], strides = [1, 1]} : vector<8x512xf32> to vector<8x128xf32>
    %66 = math.tanh %65 : vector<8x128xf32>
    %67 = vector.extract_strided_slice %52 {offsets = [0, 384], sizes = [8, 128], strides = [1, 1]} : vector<8x512xf32> to vector<8x128xf32>
    %68 = arith.negf %67 : vector<8x128xf32>
    %69 = math.exp %68 : vector<8x128xf32>
    %cst_34 = arith.constant 1.000000e+00 : f32
    %70 = vector.broadcast %cst_34 : f32 to vector<8x128xf32>
    %71 = arith.addf %70, %69 : vector<8x128xf32>
    %72 = arith.divf %70, %71 : vector<8x128xf32>
    %c0_35 = arith.constant 0 : index
    %c0_36 = arith.constant 0 : index
    %73 = vector.load %arg12[%c0_35, %c0_36] : memref<8x128xf32, #tpu.memory_space<vmem>>, vector<8x128xf32>
    %74 = arith.mulf %64, %73 : vector<8x128xf32>
    %75 = arith.mulf %58, %66 : vector<8x128xf32>
    %76 = arith.addf %74, %75 : vector<8x128xf32>
    %77 = math.tanh %76 : vector<8x128xf32>
    %78 = arith.mulf %72, %77 : vector<8x128xf32>
    %c0_37 = arith.constant 0 : index
    %c0_38 = arith.constant 0 : index
    %79 = vector.load %arg12[%c0_37, %c0_38] : memref<8x128xf32, #tpu.memory_space<vmem>>, vector<8x128xf32>
    tpu.vector_store %arg12[%c0_37, %c0_38], %76 {strides = array<i32>} : memref<8x128xf32, #tpu.memory_space<vmem>>, vector<8x128xf32>,
    %c0_39 = arith.constant 0 : index
    %c128 = arith.constant 128 : index
    %80 = vector.load %arg10[%c0_39, %c128] : memref<8x256xf32, #tpu.memory_space<vmem>>, vector<8x128xf32>
    tpu.vector_store %arg10[%c0_39, %c128], %78 {strides = array<i32>} : memref<8x256xf32, #tpu.memory_space<vmem>>, vector<8x128xf32>,
    %c1_i32 = arith.constant 1 : i32
    %c8_i32_40 = arith.constant 8 : i32
    %81 = arith.muli %c1_i32, %c8_i32_40 : i32
    %82 = tpu.assume_multiple %81, 8 : i32
    %83 = arith.index_cast %82 : i32 to index
    %c0_41 = arith.constant 0 : index
    %84 = vector.load %arg9[%83, %c0_41] : memref<64x512xf32, #tpu.memory_space<vmem>>, vector<8x512xf32>
    %c0_42 = arith.constant 0 : index
    %c0_43 = arith.constant 0 : index
    %85 = vector.load %arg10[%c0_42, %c0_43] : memref<8x256xf32, #tpu.memory_space<vmem>>, vector<8x128xf32>
    %c0_44 = arith.constant 0 : index
    %c0_45 = arith.constant 0 : index
    %86 = vector.load %arg4[%c0_44, %c0_45] : memref<128x512xf32, #tpu.memory_space<vmem>>, vector<128x512xf32>
    %cst_46 = arith.constant dense<0.000000e+00> : vector<8x512xf32>
    %87 = tpu.matmul %85, %86, %cst_46 {dimension_numbers = #tpu.dot_dimension_numbers<[1], [0], [0], [1], [0, 0, 1, 1], [], []>} : vector<8x128xf32>, vector<128x512xf32>, vector<8x512xf32> -> vector<8x512xf32>
    %88 = arith.addf %84, %87 : vector<8x512xf32>
    %89 = vector.extract_strided_slice %88 {offsets = [0, 0], sizes = [8, 128], strides = [1, 1]} : vector<8x512xf32> to vector<8x128xf32>
    %90 = arith.negf %89 : vector<8x128xf32>
    %91 = math.exp %90 : vector<8x128xf32>
    %cst_47 = arith.constant 1.000000e+00 : f32
    %92 = vector.broadcast %cst_47 : f32 to vector<8x128xf32>
    %93 = arith.addf %92, %91 : vector<8x128xf32>
    %94 = arith.divf %92, %93 : vector<8x128xf32>
    %95 = vector.extract_strided_slice %88 {offsets = [0, 128], sizes = [8, 128], strides = [1, 1]} : vector<8x512xf32> to vector<8x128xf32>
    %96 = arith.negf %95 : vector<8x128xf32>
    %97 = math.exp %96 : vector<8x128xf32>
    %cst_48 = arith.constant 1.000000e+00 : f32
    %98 = vector.broadcast %cst_48 : f32 to vector<8x128xf32>
    %99 = arith.addf %98, %97 : vector<8x128xf32>
    %100 = arith.divf %98, %99 : vector<8x128xf32>
    %101 = vector.extract_strided_slice %88 {offsets = [0, 256], sizes = [8, 128], strides = [1, 1]} : vector<8x512xf32> to vector<8x128xf32>
    %102 = math.tanh %101 : vector<8x128xf32>
    %103 = vector.extract_strided_slice %88 {offsets = [0, 384], sizes = [8, 128], strides = [1, 1]} : vector<8x512xf32> to vector<8x128xf32>
    %104 = arith.negf %103 : vector<8x128xf32>
    %105 = math.exp %104 : vector<8x128xf32>
    %cst_49 = arith.constant 1.000000e+00 : f32
    %106 = vector.broadcast %cst_49 : f32 to vector<8x128xf32>
    %107 = arith.addf %106, %105 : vector<8x128xf32>
    %108 = arith.divf %106, %107 : vector<8x128xf32>
    %c0_50 = arith.constant 0 : index
    %c0_51 = arith.constant 0 : index
    %109 = vector.load %arg11[%c0_50, %c0_51] : memref<8x128xf32, #tpu.memory_space<vmem>>, vector<8x128xf32>
    %110 = arith.mulf %100, %109 : vector<8x128xf32>
    %111 = arith.mulf %94, %102 : vector<8x128xf32>
    %112 = arith.addf %110, %111 : vector<8x128xf32>
    %113 = math.tanh %112 : vector<8x128xf32>
    %114 = arith.mulf %108, %113 : vector<8x128xf32>
    %c0_52 = arith.constant 0 : index
    %c0_53 = arith.constant 0 : index
    %115 = vector.load %arg11[%c0_52, %c0_53] : memref<8x128xf32, #tpu.memory_space<vmem>>, vector<8x128xf32>
    tpu.vector_store %arg11[%c0_52, %c0_53], %112 {strides = array<i32>} : memref<8x128xf32, #tpu.memory_space<vmem>>, vector<8x128xf32>,
    %c0_54 = arith.constant 0 : index
    %c0_55 = arith.constant 0 : index
    %116 = vector.load %arg10[%c0_54, %c0_55] : memref<8x256xf32, #tpu.memory_space<vmem>>, vector<8x128xf32>
    tpu.vector_store %arg10[%c0_54, %c0_55], %114 {strides = array<i32>} : memref<8x256xf32, #tpu.memory_space<vmem>>, vector<8x128xf32>,
    %c0_56 = arith.constant 0 : index
    %c0_57 = arith.constant 0 : index
    %117 = vector.load %arg10[%c0_56, %c0_57] : memref<8x256xf32, #tpu.memory_space<vmem>>, vector<8x256xf32>
    %c0_58 = arith.constant 0 : index
    %c0_59 = arith.constant 0 : index
    %118 = vector.load %arg6[%c0_58, %c0_59] : memref<256x512xf32, #tpu.memory_space<vmem>>, vector<256x512xf32>
    %cst_60 = arith.constant dense<0.000000e+00> : vector<8x512xf32>
    %119 = tpu.matmul %117, %118, %cst_60 {dimension_numbers = #tpu.dot_dimension_numbers<[1], [0], [0], [1], [0, 0, 1, 1], [], []>} : vector<8x256xf32>, vector<256x512xf32>, vector<8x512xf32> -> vector<8x512xf32>
    %c0_61 = arith.constant 0 : index
    %c0_62 = arith.constant 0 : index
    %120 = vector.load %arg7[%c0_61, %c0_62] : memref<1x512xf32, #tpu.memory_space<vmem>>, vector<1x512xf32>
    %121 = vector.broadcast %120 : vector<1x512xf32> to vector<8x512xf32>
    %122 = arith.addf %119, %121 : vector<8x512xf32>
    %123 = vector.extract_strided_slice %122 {offsets = [0, 0], sizes = [8, 128], strides = [1, 1]} : vector<8x512xf32> to vector<8x128xf32>
    %124 = arith.negf %123 : vector<8x128xf32>
    %125 = math.exp %124 : vector<8x128xf32>
    %cst_63 = arith.constant 1.000000e+00 : f32
    %126 = vector.broadcast %cst_63 : f32 to vector<8x128xf32>
    %127 = arith.addf %126, %125 : vector<8x128xf32>
    %128 = arith.divf %126, %127 : vector<8x128xf32>
    %129 = vector.extract_strided_slice %122 {offsets = [0, 128], sizes = [8, 128], strides = [1, 1]} : vector<8x512xf32> to vector<8x128xf32>
    %130 = arith.negf %129 : vector<8x128xf32>
    %131 = math.exp %130 : vector<8x128xf32>
    %cst_64 = arith.constant 1.000000e+00 : f32
    %132 = vector.broadcast %cst_64 : f32 to vector<8x128xf32>
    %133 = arith.addf %132, %131 : vector<8x128xf32>
    %134 = arith.divf %132, %133 : vector<8x128xf32>
    %135 = vector.extract_strided_slice %122 {offsets = [0, 256], sizes = [8, 128], strides = [1, 1]} : vector<8x512xf32> to vector<8x128xf32>
    %136 = math.tanh %135 : vector<8x128xf32>
    %137 = vector.extract_strided_slice %122 {offsets = [0, 384], sizes = [8, 128], strides = [1, 1]} : vector<8x512xf32> to vector<8x128xf32>
    %138 = arith.negf %137 : vector<8x128xf32>
    %139 = math.exp %138 : vector<8x128xf32>
    %cst_65 = arith.constant 1.000000e+00 : f32
    %140 = vector.broadcast %cst_65 : f32 to vector<8x128xf32>
    %141 = arith.addf %140, %139 : vector<8x128xf32>
    %142 = arith.divf %140, %141 : vector<8x128xf32>
    %c0_66 = arith.constant 0 : index
    %c0_67 = arith.constant 0 : index
    %143 = vector.load %arg12[%c0_66, %c0_67] : memref<8x128xf32, #tpu.memory_space<vmem>>, vector<8x128xf32>
    %144 = arith.mulf %134, %143 : vector<8x128xf32>
    %145 = arith.mulf %128, %136 : vector<8x128xf32>
    %146 = arith.addf %144, %145 : vector<8x128xf32>
    %147 = math.tanh %146 : vector<8x128xf32>
    %148 = arith.mulf %142, %147 : vector<8x128xf32>
    %c0_68 = arith.constant 0 : index
    %c0_69 = arith.constant 0 : index
    %149 = vector.load %arg12[%c0_68, %c0_69] : memref<8x128xf32, #tpu.memory_space<vmem>>, vector<8x128xf32>
    tpu.vector_store %arg12[%c0_68, %c0_69], %146 {strides = array<i32>} : memref<8x128xf32, #tpu.memory_space<vmem>>, vector<8x128xf32>,
    %c0_70 = arith.constant 0 : index
    %c128_71 = arith.constant 128 : index
    %150 = vector.load %arg10[%c0_70, %c128_71] : memref<8x256xf32, #tpu.memory_space<vmem>>, vector<8x128xf32>
    tpu.vector_store %arg10[%c0_70, %c128_71], %148 {strides = array<i32>} : memref<8x256xf32, #tpu.memory_space<vmem>>, vector<8x128xf32>,
    %c2_i32 = arith.constant 2 : i32
    %c8_i32_72 = arith.constant 8 : i32
    %151 = arith.muli %c2_i32, %c8_i32_72 : i32
    %152 = tpu.assume_multiple %151, 8 : i32
    %153 = arith.index_cast %152 : i32 to index
    %c0_73 = arith.constant 0 : index
    %154 = vector.load %arg9[%153, %c0_73] : memref<64x512xf32, #tpu.memory_space<vmem>>, vector<8x512xf32>
    %c0_74 = arith.constant 0 : index
    %c0_75 = arith.constant 0 : index
    %155 = vector.load %arg10[%c0_74, %c0_75] : memref<8x256xf32, #tpu.memory_space<vmem>>, vector<8x128xf32>
    %c0_76 = arith.constant 0 : index
    %c0_77 = arith.constant 0 : index
    %156 = vector.load %arg4[%c0_76, %c0_77] : memref<128x512xf32, #tpu.memory_space<vmem>>, vector<128x512xf32>
    %cst_78 = arith.constant dense<0.000000e+00> : vector<8x512xf32>
    %157 = tpu.matmul %155, %156, %cst_78 {dimension_numbers = #tpu.dot_dimension_numbers<[1], [0], [0], [1], [0, 0, 1, 1], [], []>} : vector<8x128xf32>, vector<128x512xf32>, vector<8x512xf32> -> vector<8x512xf32>
    %158 = arith.addf %154, %157 : vector<8x512xf32>
    %159 = vector.extract_strided_slice %158 {offsets = [0, 0], sizes = [8, 128], strides = [1, 1]} : vector<8x512xf32> to vector<8x128xf32>
    %160 = arith.negf %159 : vector<8x128xf32>
    %161 = math.exp %160 : vector<8x128xf32>
    %cst_79 = arith.constant 1.000000e+00 : f32
    %162 = vector.broadcast %cst_79 : f32 to vector<8x128xf32>
    %163 = arith.addf %162, %161 : vector<8x128xf32>
    %164 = arith.divf %162, %163 : vector<8x128xf32>
    %165 = vector.extract_strided_slice %158 {offsets = [0, 128], sizes = [8, 128], strides = [1, 1]} : vector<8x512xf32> to vector<8x128xf32>
    %166 = arith.negf %165 : vector<8x128xf32>
    %167 = math.exp %166 : vector<8x128xf32>
    %cst_80 = arith.constant 1.000000e+00 : f32
    %168 = vector.broadcast %cst_80 : f32 to vector<8x128xf32>
    %169 = arith.addf %168, %167 : vector<8x128xf32>
    %170 = arith.divf %168, %169 : vector<8x128xf32>
    %171 = vector.extract_strided_slice %158 {offsets = [0, 256], sizes = [8, 128], strides = [1, 1]} : vector<8x512xf32> to vector<8x128xf32>
    %172 = math.tanh %171 : vector<8x128xf32>
    %173 = vector.extract_strided_slice %158 {offsets = [0, 384], sizes = [8, 128], strides = [1, 1]} : vector<8x512xf32> to vector<8x128xf32>
    %174 = arith.negf %173 : vector<8x128xf32>
    %175 = math.exp %174 : vector<8x128xf32>
    %cst_81 = arith.constant 1.000000e+00 : f32
    %176 = vector.broadcast %cst_81 : f32 to vector<8x128xf32>
    %177 = arith.addf %176, %175 : vector<8x128xf32>
    %178 = arith.divf %176, %177 : vector<8x128xf32>
    %c0_82 = arith.constant 0 : index
    %c0_83 = arith.constant 0 : index
    %179 = vector.load %arg11[%c0_82, %c0_83] : memref<8x128xf32, #tpu.memory_space<vmem>>, vector<8x128xf32>
    %180 = arith.mulf %170, %179 : vector<8x128xf32>
    %181 = arith.mulf %164, %172 : vector<8x128xf32>
    %182 = arith.addf %180, %181 : vector<8x128xf32>
    %183 = math.tanh %182 : vector<8x128xf32>
    %184 = arith.mulf %178, %183 : vector<8x128xf32>
    %c0_84 = arith.constant 0 : index
    %c0_85 = arith.constant 0 : index
    %185 = vector.load %arg11[%c0_84, %c0_85] : memref<8x128xf32, #tpu.memory_space<vmem>>, vector<8x128xf32>
    tpu.vector_store %arg11[%c0_84, %c0_85], %182 {strides = array<i32>} : memref<8x128xf32, #tpu.memory_space<vmem>>, vector<8x128xf32>,
    %c0_86 = arith.constant 0 : index
    %c0_87 = arith.constant 0 : index
    %186 = vector.load %arg10[%c0_86, %c0_87] : memref<8x256xf32, #tpu.memory_space<vmem>>, vector<8x128xf32>
    tpu.vector_store %arg10[%c0_86, %c0_87], %184 {strides = array<i32>} : memref<8x256xf32, #tpu.memory_space<vmem>>, vector<8x128xf32>,
    %c0_88 = arith.constant 0 : index
    %c0_89 = arith.constant 0 : index
    %187 = vector.load %arg10[%c0_88, %c0_89] : memref<8x256xf32, #tpu.memory_space<vmem>>, vector<8x256xf32>
    %c0_90 = arith.constant 0 : index
    %c0_91 = arith.constant 0 : index
    %188 = vector.load %arg6[%c0_90, %c0_91] : memref<256x512xf32, #tpu.memory_space<vmem>>, vector<256x512xf32>
    %cst_92 = arith.constant dense<0.000000e+00> : vector<8x512xf32>
    %189 = tpu.matmul %187, %188, %cst_92 {dimension_numbers = #tpu.dot_dimension_numbers<[1], [0], [0], [1], [0, 0, 1, 1], [], []>} : vector<8x256xf32>, vector<256x512xf32>, vector<8x512xf32> -> vector<8x512xf32>
    %c0_93 = arith.constant 0 : index
    %c0_94 = arith.constant 0 : index
    %190 = vector.load %arg7[%c0_93, %c0_94] : memref<1x512xf32, #tpu.memory_space<vmem>>, vector<1x512xf32>
    %191 = vector.broadcast %190 : vector<1x512xf32> to vector<8x512xf32>
    %192 = arith.addf %189, %191 : vector<8x512xf32>
    %193 = vector.extract_strided_slice %192 {offsets = [0, 0], sizes = [8, 128], strides = [1, 1]} : vector<8x512xf32> to vector<8x128xf32>
    %194 = arith.negf %193 : vector<8x128xf32>
    %195 = math.exp %194 : vector<8x128xf32>
    %cst_95 = arith.constant 1.000000e+00 : f32
    %196 = vector.broadcast %cst_95 : f32 to vector<8x128xf32>
    %197 = arith.addf %196, %195 : vector<8x128xf32>
    %198 = arith.divf %196, %197 : vector<8x128xf32>
    %199 = vector.extract_strided_slice %192 {offsets = [0, 128], sizes = [8, 128], strides = [1, 1]} : vector<8x512xf32> to vector<8x128xf32>
    %200 = arith.negf %199 : vector<8x128xf32>
    %201 = math.exp %200 : vector<8x128xf32>
    %cst_96 = arith.constant 1.000000e+00 : f32
    %202 = vector.broadcast %cst_96 : f32 to vector<8x128xf32>
    %203 = arith.addf %202, %201 : vector<8x128xf32>
    %204 = arith.divf %202, %203 : vector<8x128xf32>
    %205 = vector.extract_strided_slice %192 {offsets = [0, 256], sizes = [8, 128], strides = [1, 1]} : vector<8x512xf32> to vector<8x128xf32>
    %206 = math.tanh %205 : vector<8x128xf32>
    %207 = vector.extract_strided_slice %192 {offsets = [0, 384], sizes = [8, 128], strides = [1, 1]} : vector<8x512xf32> to vector<8x128xf32>
    %208 = arith.negf %207 : vector<8x128xf32>
    %209 = math.exp %208 : vector<8x128xf32>
    %cst_97 = arith.constant 1.000000e+00 : f32
    %210 = vector.broadcast %cst_97 : f32 to vector<8x128xf32>
    %211 = arith.addf %210, %209 : vector<8x128xf32>
    %212 = arith.divf %210, %211 : vector<8x128xf32>
    %c0_98 = arith.constant 0 : index
    %c0_99 = arith.constant 0 : index
    %213 = vector.load %arg12[%c0_98, %c0_99] : memref<8x128xf32, #tpu.memory_space<vmem>>, vector<8x128xf32>
    %214 = arith.mulf %204, %213 : vector<8x128xf32>
    %215 = arith.mulf %198, %206 : vector<8x128xf32>
    %216 = arith.addf %214, %215 : vector<8x128xf32>
    %217 = math.tanh %216 : vector<8x128xf32>
    %218 = arith.mulf %212, %217 : vector<8x128xf32>
    %c0_100 = arith.constant 0 : index
    %c0_101 = arith.constant 0 : index
    %219 = vector.load %arg12[%c0_100, %c0_101] : memref<8x128xf32, #tpu.memory_space<vmem>>, vector<8x128xf32>
    tpu.vector_store %arg12[%c0_100, %c0_101], %216 {strides = array<i32>} : memref<8x128xf32, #tpu.memory_space<vmem>>, vector<8x128xf32>,
    %c0_102 = arith.constant 0 : index
    %c128_103 = arith.constant 128 : index
    %220 = vector.load %arg10[%c0_102, %c128_103] : memref<8x256xf32, #tpu.memory_space<vmem>>, vector<8x128xf32>
    tpu.vector_store %arg10[%c0_102, %c128_103], %218 {strides = array<i32>} : memref<8x256xf32, #tpu.memory_space<vmem>>, vector<8x128xf32>,
    %c3_i32 = arith.constant 3 : i32
    %c8_i32_104 = arith.constant 8 : i32
    %221 = arith.muli %c3_i32, %c8_i32_104 : i32
    %222 = tpu.assume_multiple %221, 8 : i32
    %223 = arith.index_cast %222 : i32 to index
    %c0_105 = arith.constant 0 : index
    %224 = vector.load %arg9[%223, %c0_105] : memref<64x512xf32, #tpu.memory_space<vmem>>, vector<8x512xf32>
    %c0_106 = arith.constant 0 : index
    %c0_107 = arith.constant 0 : index
    %225 = vector.load %arg10[%c0_106, %c0_107] : memref<8x256xf32, #tpu.memory_space<vmem>>, vector<8x128xf32>
    %c0_108 = arith.constant 0 : index
    %c0_109 = arith.constant 0 : index
    %226 = vector.load %arg4[%c0_108, %c0_109] : memref<128x512xf32, #tpu.memory_space<vmem>>, vector<128x512xf32>
    %cst_110 = arith.constant dense<0.000000e+00> : vector<8x512xf32>
    %227 = tpu.matmul %225, %226, %cst_110 {dimension_numbers = #tpu.dot_dimension_numbers<[1], [0], [0], [1], [0, 0, 1, 1], [], []>} : vector<8x128xf32>, vector<128x512xf32>, vector<8x512xf32> -> vector<8x512xf32>
    %228 = arith.addf %224, %227 : vector<8x512xf32>
    %229 = vector.extract_strided_slice %228 {offsets = [0, 0], sizes = [8, 128], strides = [1, 1]} : vector<8x512xf32> to vector<8x128xf32>
    %230 = arith.negf %229 : vector<8x128xf32>
    %231 = math.exp %230 : vector<8x128xf32>
    %cst_111 = arith.constant 1.000000e+00 : f32
    %232 = vector.broadcast %cst_111 : f32 to vector<8x128xf32>
    %233 = arith.addf %232, %231 : vector<8x128xf32>
    %234 = arith.divf %232, %233 : vector<8x128xf32>
    %235 = vector.extract_strided_slice %228 {offsets = [0, 128], sizes = [8, 128], strides = [1, 1]} : vector<8x512xf32> to vector<8x128xf32>
    %236 = arith.negf %235 : vector<8x128xf32>
    %237 = math.exp %236 : vector<8x128xf32>
    %cst_112 = arith.constant 1.000000e+00 : f32
    %238 = vector.broadcast %cst_112 : f32 to vector<8x128xf32>
    %239 = arith.addf %238, %237 : vector<8x128xf32>
    %240 = arith.divf %238, %239 : vector<8x128xf32>
    %241 = vector.extract_strided_slice %228 {offsets = [0, 256], sizes = [8, 128], strides = [1, 1]} : vector<8x512xf32> to vector<8x128xf32>
    %242 = math.tanh %241 : vector<8x128xf32>
    %243 = vector.extract_strided_slice %228 {offsets = [0, 384], sizes = [8, 128], strides = [1, 1]} : vector<8x512xf32> to vector<8x128xf32>
    %244 = arith.negf %243 : vector<8x128xf32>
    %245 = math.exp %244 : vector<8x128xf32>
    %cst_113 = arith.constant 1.000000e+00 : f32
    %246 = vector.broadcast %cst_113 : f32 to vector<8x128xf32>
    %247 = arith.addf %246, %245 : vector<8x128xf32>
    %248 = arith.divf %246, %247 : vector<8x128xf32>
    %c0_114 = arith.constant 0 : index
    %c0_115 = arith.constant 0 : index
    %249 = vector.load %arg11[%c0_114, %c0_115] : memref<8x128xf32, #tpu.memory_space<vmem>>, vector<8x128xf32>
    %250 = arith.mulf %240, %249 : vector<8x128xf32>
    %251 = arith.mulf %234, %242 : vector<8x128xf32>
    %252 = arith.addf %250, %251 : vector<8x128xf32>
    %253 = math.tanh %252 : vector<8x128xf32>
    %254 = arith.mulf %248, %253 : vector<8x128xf32>
    %c0_116 = arith.constant 0 : index
    %c0_117 = arith.constant 0 : index
    %255 = vector.load %arg11[%c0_116, %c0_117] : memref<8x128xf32, #tpu.memory_space<vmem>>, vector<8x128xf32>
    tpu.vector_store %arg11[%c0_116, %c0_117], %252 {strides = array<i32>} : memref<8x128xf32, #tpu.memory_space<vmem>>, vector<8x128xf32>,
    %c0_118 = arith.constant 0 : index
    %c0_119 = arith.constant 0 : index
    %256 = vector.load %arg10[%c0_118, %c0_119] : memref<8x256xf32, #tpu.memory_space<vmem>>, vector<8x128xf32>
    tpu.vector_store %arg10[%c0_118, %c0_119], %254 {strides = array<i32>} : memref<8x256xf32, #tpu.memory_space<vmem>>, vector<8x128xf32>,
    %c0_120 = arith.constant 0 : index
    %c0_121 = arith.constant 0 : index
    %257 = vector.load %arg10[%c0_120, %c0_121] : memref<8x256xf32, #tpu.memory_space<vmem>>, vector<8x256xf32>
    %c0_122 = arith.constant 0 : index
    %c0_123 = arith.constant 0 : index
    %258 = vector.load %arg6[%c0_122, %c0_123] : memref<256x512xf32, #tpu.memory_space<vmem>>, vector<256x512xf32>
    %cst_124 = arith.constant dense<0.000000e+00> : vector<8x512xf32>
    %259 = tpu.matmul %257, %258, %cst_124 {dimension_numbers = #tpu.dot_dimension_numbers<[1], [0], [0], [1], [0, 0, 1, 1], [], []>} : vector<8x256xf32>, vector<256x512xf32>, vector<8x512xf32> -> vector<8x512xf32>
    %c0_125 = arith.constant 0 : index
    %c0_126 = arith.constant 0 : index
    %260 = vector.load %arg7[%c0_125, %c0_126] : memref<1x512xf32, #tpu.memory_space<vmem>>, vector<1x512xf32>
    %261 = vector.broadcast %260 : vector<1x512xf32> to vector<8x512xf32>
    %262 = arith.addf %259, %261 : vector<8x512xf32>
    %263 = vector.extract_strided_slice %262 {offsets = [0, 0], sizes = [8, 128], strides = [1, 1]} : vector<8x512xf32> to vector<8x128xf32>
    %264 = arith.negf %263 : vector<8x128xf32>
    %265 = math.exp %264 : vector<8x128xf32>
    %cst_127 = arith.constant 1.000000e+00 : f32
    %266 = vector.broadcast %cst_127 : f32 to vector<8x128xf32>
    %267 = arith.addf %266, %265 : vector<8x128xf32>
    %268 = arith.divf %266, %267 : vector<8x128xf32>
    %269 = vector.extract_strided_slice %262 {offsets = [0, 128], sizes = [8, 128], strides = [1, 1]} : vector<8x512xf32> to vector<8x128xf32>
    %270 = arith.negf %269 : vector<8x128xf32>
    %271 = math.exp %270 : vector<8x128xf32>
    %cst_128 = arith.constant 1.000000e+00 : f32
    %272 = vector.broadcast %cst_128 : f32 to vector<8x128xf32>
    %273 = arith.addf %272, %271 : vector<8x128xf32>
    %274 = arith.divf %272, %273 : vector<8x128xf32>
    %275 = vector.extract_strided_slice %262 {offsets = [0, 256], sizes = [8, 128], strides = [1, 1]} : vector<8x512xf32> to vector<8x128xf32>
    %276 = math.tanh %275 : vector<8x128xf32>
    %277 = vector.extract_strided_slice %262 {offsets = [0, 384], sizes = [8, 128], strides = [1, 1]} : vector<8x512xf32> to vector<8x128xf32>
    %278 = arith.negf %277 : vector<8x128xf32>
    %279 = math.exp %278 : vector<8x128xf32>
    %cst_129 = arith.constant 1.000000e+00 : f32
    %280 = vector.broadcast %cst_129 : f32 to vector<8x128xf32>
    %281 = arith.addf %280, %279 : vector<8x128xf32>
    %282 = arith.divf %280, %281 : vector<8x128xf32>
    %c0_130 = arith.constant 0 : index
    %c0_131 = arith.constant 0 : index
    %283 = vector.load %arg12[%c0_130, %c0_131] : memref<8x128xf32, #tpu.memory_space<vmem>>, vector<8x128xf32>
    %284 = arith.mulf %274, %283 : vector<8x128xf32>
    %285 = arith.mulf %268, %276 : vector<8x128xf32>
    %286 = arith.addf %284, %285 : vector<8x128xf32>
    %287 = math.tanh %286 : vector<8x128xf32>
    %288 = arith.mulf %282, %287 : vector<8x128xf32>
    %c0_132 = arith.constant 0 : index
    %c0_133 = arith.constant 0 : index
    %289 = vector.load %arg12[%c0_132, %c0_133] : memref<8x128xf32, #tpu.memory_space<vmem>>, vector<8x128xf32>
    tpu.vector_store %arg12[%c0_132, %c0_133], %286 {strides = array<i32>} : memref<8x128xf32, #tpu.memory_space<vmem>>, vector<8x128xf32>,
    %c0_134 = arith.constant 0 : index
    %c128_135 = arith.constant 128 : index
    %290 = vector.load %arg10[%c0_134, %c128_135] : memref<8x256xf32, #tpu.memory_space<vmem>>, vector<8x128xf32>
    tpu.vector_store %arg10[%c0_134, %c128_135], %288 {strides = array<i32>} : memref<8x256xf32, #tpu.memory_space<vmem>>, vector<8x128xf32>,
    %c4_i32 = arith.constant 4 : i32
    %c8_i32_136 = arith.constant 8 : i32
    %291 = arith.muli %c4_i32, %c8_i32_136 : i32
    %292 = tpu.assume_multiple %291, 8 : i32
    %293 = arith.index_cast %292 : i32 to index
    %c0_137 = arith.constant 0 : index
    %294 = vector.load %arg9[%293, %c0_137] : memref<64x512xf32, #tpu.memory_space<vmem>>, vector<8x512xf32>
    %c0_138 = arith.constant 0 : index
    %c0_139 = arith.constant 0 : index
    %295 = vector.load %arg10[%c0_138, %c0_139] : memref<8x256xf32, #tpu.memory_space<vmem>>, vector<8x128xf32>
    %c0_140 = arith.constant 0 : index
    %c0_141 = arith.constant 0 : index
    %296 = vector.load %arg4[%c0_140, %c0_141] : memref<128x512xf32, #tpu.memory_space<vmem>>, vector<128x512xf32>
    %cst_142 = arith.constant dense<0.000000e+00> : vector<8x512xf32>
    %297 = tpu.matmul %295, %296, %cst_142 {dimension_numbers = #tpu.dot_dimension_numbers<[1], [0], [0], [1], [0, 0, 1, 1], [], []>} : vector<8x128xf32>, vector<128x512xf32>, vector<8x512xf32> -> vector<8x512xf32>
    %298 = arith.addf %294, %297 : vector<8x512xf32>
    %299 = vector.extract_strided_slice %298 {offsets = [0, 0], sizes = [8, 128], strides = [1, 1]} : vector<8x512xf32> to vector<8x128xf32>
    %300 = arith.negf %299 : vector<8x128xf32>
    %301 = math.exp %300 : vector<8x128xf32>
    %cst_143 = arith.constant 1.000000e+00 : f32
    %302 = vector.broadcast %cst_143 : f32 to vector<8x128xf32>
    %303 = arith.addf %302, %301 : vector<8x128xf32>
    %304 = arith.divf %302, %303 : vector<8x128xf32>
    %305 = vector.extract_strided_slice %298 {offsets = [0, 128], sizes = [8, 128], strides = [1, 1]} : vector<8x512xf32> to vector<8x128xf32>
    %306 = arith.negf %305 : vector<8x128xf32>
    %307 = math.exp %306 : vector<8x128xf32>
    %cst_144 = arith.constant 1.000000e+00 : f32
    %308 = vector.broadcast %cst_144 : f32 to vector<8x128xf32>
    %309 = arith.addf %308, %307 : vector<8x128xf32>
    %310 = arith.divf %308, %309 : vector<8x128xf32>
    %311 = vector.extract_strided_slice %298 {offsets = [0, 256], sizes = [8, 128], strides = [1, 1]} : vector<8x512xf32> to vector<8x128xf32>
    %312 = math.tanh %311 : vector<8x128xf32>
    %313 = vector.extract_strided_slice %298 {offsets = [0, 384], sizes = [8, 128], strides = [1, 1]} : vector<8x512xf32> to vector<8x128xf32>
    %314 = arith.negf %313 : vector<8x128xf32>
    %315 = math.exp %314 : vector<8x128xf32>
    %cst_145 = arith.constant 1.000000e+00 : f32
    %316 = vector.broadcast %cst_145 : f32 to vector<8x128xf32>
    %317 = arith.addf %316, %315 : vector<8x128xf32>
    %318 = arith.divf %316, %317 : vector<8x128xf32>
    %c0_146 = arith.constant 0 : index
    %c0_147 = arith.constant 0 : index
    %319 = vector.load %arg11[%c0_146, %c0_147] : memref<8x128xf32, #tpu.memory_space<vmem>>, vector<8x128xf32>
    %320 = arith.mulf %310, %319 : vector<8x128xf32>
    %321 = arith.mulf %304, %312 : vector<8x128xf32>
    %322 = arith.addf %320, %321 : vector<8x128xf32>
    %323 = math.tanh %322 : vector<8x128xf32>
    %324 = arith.mulf %318, %323 : vector<8x128xf32>
    %c0_148 = arith.constant 0 : index
    %c0_149 = arith.constant 0 : index
    %325 = vector.load %arg11[%c0_148, %c0_149] : memref<8x128xf32, #tpu.memory_space<vmem>>, vector<8x128xf32>
    tpu.vector_store %arg11[%c0_148, %c0_149], %322 {strides = array<i32>} : memref<8x128xf32, #tpu.memory_space<vmem>>, vector<8x128xf32>,
    %c0_150 = arith.constant 0 : index
    %c0_151 = arith.constant 0 : index
    %326 = vector.load %arg10[%c0_150, %c0_151] : memref<8x256xf32, #tpu.memory_space<vmem>>, vector<8x128xf32>
    tpu.vector_store %arg10[%c0_150, %c0_151], %324 {strides = array<i32>} : memref<8x256xf32, #tpu.memory_space<vmem>>, vector<8x128xf32>,
    %c0_152 = arith.constant 0 : index
    %c0_153 = arith.constant 0 : index
    %327 = vector.load %arg10[%c0_152, %c0_153] : memref<8x256xf32, #tpu.memory_space<vmem>>, vector<8x256xf32>
    %c0_154 = arith.constant 0 : index
    %c0_155 = arith.constant 0 : index
    %328 = vector.load %arg6[%c0_154, %c0_155] : memref<256x512xf32, #tpu.memory_space<vmem>>, vector<256x512xf32>
    %cst_156 = arith.constant dense<0.000000e+00> : vector<8x512xf32>
    %329 = tpu.matmul %327, %328, %cst_156 {dimension_numbers = #tpu.dot_dimension_numbers<[1], [0], [0], [1], [0, 0, 1, 1], [], []>} : vector<8x256xf32>, vector<256x512xf32>, vector<8x512xf32> -> vector<8x512xf32>
    %c0_157 = arith.constant 0 : index
    %c0_158 = arith.constant 0 : index
    %330 = vector.load %arg7[%c0_157, %c0_158] : memref<1x512xf32, #tpu.memory_space<vmem>>, vector<1x512xf32>
    %331 = vector.broadcast %330 : vector<1x512xf32> to vector<8x512xf32>
    %332 = arith.addf %329, %331 : vector<8x512xf32>
    %333 = vector.extract_strided_slice %332 {offsets = [0, 0], sizes = [8, 128], strides = [1, 1]} : vector<8x512xf32> to vector<8x128xf32>
    %334 = arith.negf %333 : vector<8x128xf32>
    %335 = math.exp %334 : vector<8x128xf32>
    %cst_159 = arith.constant 1.000000e+00 : f32
    %336 = vector.broadcast %cst_159 : f32 to vector<8x128xf32>
    %337 = arith.addf %336, %335 : vector<8x128xf32>
    %338 = arith.divf %336, %337 : vector<8x128xf32>
    %339 = vector.extract_strided_slice %332 {offsets = [0, 128], sizes = [8, 128], strides = [1, 1]} : vector<8x512xf32> to vector<8x128xf32>
    %340 = arith.negf %339 : vector<8x128xf32>
    %341 = math.exp %340 : vector<8x128xf32>
    %cst_160 = arith.constant 1.000000e+00 : f32
    %342 = vector.broadcast %cst_160 : f32 to vector<8x128xf32>
    %343 = arith.addf %342, %341 : vector<8x128xf32>
    %344 = arith.divf %342, %343 : vector<8x128xf32>
    %345 = vector.extract_strided_slice %332 {offsets = [0, 256], sizes = [8, 128], strides = [1, 1]} : vector<8x512xf32> to vector<8x128xf32>
    %346 = math.tanh %345 : vector<8x128xf32>
    %347 = vector.extract_strided_slice %332 {offsets = [0, 384], sizes = [8, 128], strides = [1, 1]} : vector<8x512xf32> to vector<8x128xf32>
    %348 = arith.negf %347 : vector<8x128xf32>
    %349 = math.exp %348 : vector<8x128xf32>
    %cst_161 = arith.constant 1.000000e+00 : f32
    %350 = vector.broadcast %cst_161 : f32 to vector<8x128xf32>
    %351 = arith.addf %350, %349 : vector<8x128xf32>
    %352 = arith.divf %350, %351 : vector<8x128xf32>
    %c0_162 = arith.constant 0 : index
    %c0_163 = arith.constant 0 : index
    %353 = vector.load %arg12[%c0_162, %c0_163] : memref<8x128xf32, #tpu.memory_space<vmem>>, vector<8x128xf32>
    %354 = arith.mulf %344, %353 : vector<8x128xf32>
    %355 = arith.mulf %338, %346 : vector<8x128xf32>
    %356 = arith.addf %354, %355 : vector<8x128xf32>
    %357 = math.tanh %356 : vector<8x128xf32>
    %358 = arith.mulf %352, %357 : vector<8x128xf32>
    %c0_164 = arith.constant 0 : index
    %c0_165 = arith.constant 0 : index
    %359 = vector.load %arg12[%c0_164, %c0_165] : memref<8x128xf32, #tpu.memory_space<vmem>>, vector<8x128xf32>
    tpu.vector_store %arg12[%c0_164, %c0_165], %356 {strides = array<i32>} : memref<8x128xf32, #tpu.memory_space<vmem>>, vector<8x128xf32>,
    %c0_166 = arith.constant 0 : index
    %c128_167 = arith.constant 128 : index
    %360 = vector.load %arg10[%c0_166, %c128_167] : memref<8x256xf32, #tpu.memory_space<vmem>>, vector<8x128xf32>
    tpu.vector_store %arg10[%c0_166, %c128_167], %358 {strides = array<i32>} : memref<8x256xf32, #tpu.memory_space<vmem>>, vector<8x128xf32>,
    %c5_i32 = arith.constant 5 : i32
    %c8_i32_168 = arith.constant 8 : i32
    %361 = arith.muli %c5_i32, %c8_i32_168 : i32
    %362 = tpu.assume_multiple %361, 8 : i32
    %363 = arith.index_cast %362 : i32 to index
    %c0_169 = arith.constant 0 : index
    %364 = vector.load %arg9[%363, %c0_169] : memref<64x512xf32, #tpu.memory_space<vmem>>, vector<8x512xf32>
    %c0_170 = arith.constant 0 : index
    %c0_171 = arith.constant 0 : index
    %365 = vector.load %arg10[%c0_170, %c0_171] : memref<8x256xf32, #tpu.memory_space<vmem>>, vector<8x128xf32>
    %c0_172 = arith.constant 0 : index
    %c0_173 = arith.constant 0 : index
    %366 = vector.load %arg4[%c0_172, %c0_173] : memref<128x512xf32, #tpu.memory_space<vmem>>, vector<128x512xf32>
    %cst_174 = arith.constant dense<0.000000e+00> : vector<8x512xf32>
    %367 = tpu.matmul %365, %366, %cst_174 {dimension_numbers = #tpu.dot_dimension_numbers<[1], [0], [0], [1], [0, 0, 1, 1], [], []>} : vector<8x128xf32>, vector<128x512xf32>, vector<8x512xf32> -> vector<8x512xf32>
    %368 = arith.addf %364, %367 : vector<8x512xf32>
    %369 = vector.extract_strided_slice %368 {offsets = [0, 0], sizes = [8, 128], strides = [1, 1]} : vector<8x512xf32> to vector<8x128xf32>
    %370 = arith.negf %369 : vector<8x128xf32>
    %371 = math.exp %370 : vector<8x128xf32>
    %cst_175 = arith.constant 1.000000e+00 : f32
    %372 = vector.broadcast %cst_175 : f32 to vector<8x128xf32>
    %373 = arith.addf %372, %371 : vector<8x128xf32>
    %374 = arith.divf %372, %373 : vector<8x128xf32>
    %375 = vector.extract_strided_slice %368 {offsets = [0, 128], sizes = [8, 128], strides = [1, 1]} : vector<8x512xf32> to vector<8x128xf32>
    %376 = arith.negf %375 : vector<8x128xf32>
    %377 = math.exp %376 : vector<8x128xf32>
    %cst_176 = arith.constant 1.000000e+00 : f32
    %378 = vector.broadcast %cst_176 : f32 to vector<8x128xf32>
    %379 = arith.addf %378, %377 : vector<8x128xf32>
    %380 = arith.divf %378, %379 : vector<8x128xf32>
    %381 = vector.extract_strided_slice %368 {offsets = [0, 256], sizes = [8, 128], strides = [1, 1]} : vector<8x512xf32> to vector<8x128xf32>
    %382 = math.tanh %381 : vector<8x128xf32>
    %383 = vector.extract_strided_slice %368 {offsets = [0, 384], sizes = [8, 128], strides = [1, 1]} : vector<8x512xf32> to vector<8x128xf32>
    %384 = arith.negf %383 : vector<8x128xf32>
    %385 = math.exp %384 : vector<8x128xf32>
    %cst_177 = arith.constant 1.000000e+00 : f32
    %386 = vector.broadcast %cst_177 : f32 to vector<8x128xf32>
    %387 = arith.addf %386, %385 : vector<8x128xf32>
    %388 = arith.divf %386, %387 : vector<8x128xf32>
    %c0_178 = arith.constant 0 : index
    %c0_179 = arith.constant 0 : index
    %389 = vector.load %arg11[%c0_178, %c0_179] : memref<8x128xf32, #tpu.memory_space<vmem>>, vector<8x128xf32>
    %390 = arith.mulf %380, %389 : vector<8x128xf32>
    %391 = arith.mulf %374, %382 : vector<8x128xf32>
    %392 = arith.addf %390, %391 : vector<8x128xf32>
    %393 = math.tanh %392 : vector<8x128xf32>
    %394 = arith.mulf %388, %393 : vector<8x128xf32>
    %c0_180 = arith.constant 0 : index
    %c0_181 = arith.constant 0 : index
    %395 = vector.load %arg11[%c0_180, %c0_181] : memref<8x128xf32, #tpu.memory_space<vmem>>, vector<8x128xf32>
    tpu.vector_store %arg11[%c0_180, %c0_181], %392 {strides = array<i32>} : memref<8x128xf32, #tpu.memory_space<vmem>>, vector<8x128xf32>,
    %c0_182 = arith.constant 0 : index
    %c0_183 = arith.constant 0 : index
    %396 = vector.load %arg10[%c0_182, %c0_183] : memref<8x256xf32, #tpu.memory_space<vmem>>, vector<8x128xf32>
    tpu.vector_store %arg10[%c0_182, %c0_183], %394 {strides = array<i32>} : memref<8x256xf32, #tpu.memory_space<vmem>>, vector<8x128xf32>,
    %c0_184 = arith.constant 0 : index
    %c0_185 = arith.constant 0 : index
    %397 = vector.load %arg10[%c0_184, %c0_185] : memref<8x256xf32, #tpu.memory_space<vmem>>, vector<8x256xf32>
    %c0_186 = arith.constant 0 : index
    %c0_187 = arith.constant 0 : index
    %398 = vector.load %arg6[%c0_186, %c0_187] : memref<256x512xf32, #tpu.memory_space<vmem>>, vector<256x512xf32>
    %cst_188 = arith.constant dense<0.000000e+00> : vector<8x512xf32>
    %399 = tpu.matmul %397, %398, %cst_188 {dimension_numbers = #tpu.dot_dimension_numbers<[1], [0], [0], [1], [0, 0, 1, 1], [], []>} : vector<8x256xf32>, vector<256x512xf32>, vector<8x512xf32> -> vector<8x512xf32>
    %c0_189 = arith.constant 0 : index
    %c0_190 = arith.constant 0 : index
    %400 = vector.load %arg7[%c0_189, %c0_190] : memref<1x512xf32, #tpu.memory_space<vmem>>, vector<1x512xf32>
    %401 = vector.broadcast %400 : vector<1x512xf32> to vector<8x512xf32>
    %402 = arith.addf %399, %401 : vector<8x512xf32>
    %403 = vector.extract_strided_slice %402 {offsets = [0, 0], sizes = [8, 128], strides = [1, 1]} : vector<8x512xf32> to vector<8x128xf32>
    %404 = arith.negf %403 : vector<8x128xf32>
    %405 = math.exp %404 : vector<8x128xf32>
    %cst_191 = arith.constant 1.000000e+00 : f32
    %406 = vector.broadcast %cst_191 : f32 to vector<8x128xf32>
    %407 = arith.addf %406, %405 : vector<8x128xf32>
    %408 = arith.divf %406, %407 : vector<8x128xf32>
    %409 = vector.extract_strided_slice %402 {offsets = [0, 128], sizes = [8, 128], strides = [1, 1]} : vector<8x512xf32> to vector<8x128xf32>
    %410 = arith.negf %409 : vector<8x128xf32>
    %411 = math.exp %410 : vector<8x128xf32>
    %cst_192 = arith.constant 1.000000e+00 : f32
    %412 = vector.broadcast %cst_192 : f32 to vector<8x128xf32>
    %413 = arith.addf %412, %411 : vector<8x128xf32>
    %414 = arith.divf %412, %413 : vector<8x128xf32>
    %415 = vector.extract_strided_slice %402 {offsets = [0, 256], sizes = [8, 128], strides = [1, 1]} : vector<8x512xf32> to vector<8x128xf32>
    %416 = math.tanh %415 : vector<8x128xf32>
    %417 = vector.extract_strided_slice %402 {offsets = [0, 384], sizes = [8, 128], strides = [1, 1]} : vector<8x512xf32> to vector<8x128xf32>
    %418 = arith.negf %417 : vector<8x128xf32>
    %419 = math.exp %418 : vector<8x128xf32>
    %cst_193 = arith.constant 1.000000e+00 : f32
    %420 = vector.broadcast %cst_193 : f32 to vector<8x128xf32>
    %421 = arith.addf %420, %419 : vector<8x128xf32>
    %422 = arith.divf %420, %421 : vector<8x128xf32>
    %c0_194 = arith.constant 0 : index
    %c0_195 = arith.constant 0 : index
    %423 = vector.load %arg12[%c0_194, %c0_195] : memref<8x128xf32, #tpu.memory_space<vmem>>, vector<8x128xf32>
    %424 = arith.mulf %414, %423 : vector<8x128xf32>
    %425 = arith.mulf %408, %416 : vector<8x128xf32>
    %426 = arith.addf %424, %425 : vector<8x128xf32>
    %427 = math.tanh %426 : vector<8x128xf32>
    %428 = arith.mulf %422, %427 : vector<8x128xf32>
    %c0_196 = arith.constant 0 : index
    %c0_197 = arith.constant 0 : index
    %429 = vector.load %arg12[%c0_196, %c0_197] : memref<8x128xf32, #tpu.memory_space<vmem>>, vector<8x128xf32>
    tpu.vector_store %arg12[%c0_196, %c0_197], %426 {strides = array<i32>} : memref<8x128xf32, #tpu.memory_space<vmem>>, vector<8x128xf32>,
    %c0_198 = arith.constant 0 : index
    %c128_199 = arith.constant 128 : index
    %430 = vector.load %arg10[%c0_198, %c128_199] : memref<8x256xf32, #tpu.memory_space<vmem>>, vector<8x128xf32>
    tpu.vector_store %arg10[%c0_198, %c128_199], %428 {strides = array<i32>} : memref<8x256xf32, #tpu.memory_space<vmem>>, vector<8x128xf32>,
    %c6_i32 = arith.constant 6 : i32
    %c8_i32_200 = arith.constant 8 : i32
    %431 = arith.muli %c6_i32, %c8_i32_200 : i32
    %432 = tpu.assume_multiple %431, 8 : i32
    %433 = arith.index_cast %432 : i32 to index
    %c0_201 = arith.constant 0 : index
    %434 = vector.load %arg9[%433, %c0_201] : memref<64x512xf32, #tpu.memory_space<vmem>>, vector<8x512xf32>
    %c0_202 = arith.constant 0 : index
    %c0_203 = arith.constant 0 : index
    %435 = vector.load %arg10[%c0_202, %c0_203] : memref<8x256xf32, #tpu.memory_space<vmem>>, vector<8x128xf32>
    %c0_204 = arith.constant 0 : index
    %c0_205 = arith.constant 0 : index
    %436 = vector.load %arg4[%c0_204, %c0_205] : memref<128x512xf32, #tpu.memory_space<vmem>>, vector<128x512xf32>
    %cst_206 = arith.constant dense<0.000000e+00> : vector<8x512xf32>
    %437 = tpu.matmul %435, %436, %cst_206 {dimension_numbers = #tpu.dot_dimension_numbers<[1], [0], [0], [1], [0, 0, 1, 1], [], []>} : vector<8x128xf32>, vector<128x512xf32>, vector<8x512xf32> -> vector<8x512xf32>
    %438 = arith.addf %434, %437 : vector<8x512xf32>
    %439 = vector.extract_strided_slice %438 {offsets = [0, 0], sizes = [8, 128], strides = [1, 1]} : vector<8x512xf32> to vector<8x128xf32>
    %440 = arith.negf %439 : vector<8x128xf32>
    %441 = math.exp %440 : vector<8x128xf32>
    %cst_207 = arith.constant 1.000000e+00 : f32
    %442 = vector.broadcast %cst_207 : f32 to vector<8x128xf32>
    %443 = arith.addf %442, %441 : vector<8x128xf32>
    %444 = arith.divf %442, %443 : vector<8x128xf32>
    %445 = vector.extract_strided_slice %438 {offsets = [0, 128], sizes = [8, 128], strides = [1, 1]} : vector<8x512xf32> to vector<8x128xf32>
    %446 = arith.negf %445 : vector<8x128xf32>
    %447 = math.exp %446 : vector<8x128xf32>
    %cst_208 = arith.constant 1.000000e+00 : f32
    %448 = vector.broadcast %cst_208 : f32 to vector<8x128xf32>
    %449 = arith.addf %448, %447 : vector<8x128xf32>
    %450 = arith.divf %448, %449 : vector<8x128xf32>
    %451 = vector.extract_strided_slice %438 {offsets = [0, 256], sizes = [8, 128], strides = [1, 1]} : vector<8x512xf32> to vector<8x128xf32>
    %452 = math.tanh %451 : vector<8x128xf32>
    %453 = vector.extract_strided_slice %438 {offsets = [0, 384], sizes = [8, 128], strides = [1, 1]} : vector<8x512xf32> to vector<8x128xf32>
    %454 = arith.negf %453 : vector<8x128xf32>
    %455 = math.exp %454 : vector<8x128xf32>
    %cst_209 = arith.constant 1.000000e+00 : f32
    %456 = vector.broadcast %cst_209 : f32 to vector<8x128xf32>
    %457 = arith.addf %456, %455 : vector<8x128xf32>
    %458 = arith.divf %456, %457 : vector<8x128xf32>
    %c0_210 = arith.constant 0 : index
    %c0_211 = arith.constant 0 : index
    %459 = vector.load %arg11[%c0_210, %c0_211] : memref<8x128xf32, #tpu.memory_space<vmem>>, vector<8x128xf32>
    %460 = arith.mulf %450, %459 : vector<8x128xf32>
    %461 = arith.mulf %444, %452 : vector<8x128xf32>
    %462 = arith.addf %460, %461 : vector<8x128xf32>
    %463 = math.tanh %462 : vector<8x128xf32>
    %464 = arith.mulf %458, %463 : vector<8x128xf32>
    %c0_212 = arith.constant 0 : index
    %c0_213 = arith.constant 0 : index
    %465 = vector.load %arg11[%c0_212, %c0_213] : memref<8x128xf32, #tpu.memory_space<vmem>>, vector<8x128xf32>
    tpu.vector_store %arg11[%c0_212, %c0_213], %462 {strides = array<i32>} : memref<8x128xf32, #tpu.memory_space<vmem>>, vector<8x128xf32>,
    %c0_214 = arith.constant 0 : index
    %c0_215 = arith.constant 0 : index
    %466 = vector.load %arg10[%c0_214, %c0_215] : memref<8x256xf32, #tpu.memory_space<vmem>>, vector<8x128xf32>
    tpu.vector_store %arg10[%c0_214, %c0_215], %464 {strides = array<i32>} : memref<8x256xf32, #tpu.memory_space<vmem>>, vector<8x128xf32>,
    %c0_216 = arith.constant 0 : index
    %c0_217 = arith.constant 0 : index
    %467 = vector.load %arg10[%c0_216, %c0_217] : memref<8x256xf32, #tpu.memory_space<vmem>>, vector<8x256xf32>
    %c0_218 = arith.constant 0 : index
    %c0_219 = arith.constant 0 : index
    %468 = vector.load %arg6[%c0_218, %c0_219] : memref<256x512xf32, #tpu.memory_space<vmem>>, vector<256x512xf32>
    %cst_220 = arith.constant dense<0.000000e+00> : vector<8x512xf32>
    %469 = tpu.matmul %467, %468, %cst_220 {dimension_numbers = #tpu.dot_dimension_numbers<[1], [0], [0], [1], [0, 0, 1, 1], [], []>} : vector<8x256xf32>, vector<256x512xf32>, vector<8x512xf32> -> vector<8x512xf32>
    %c0_221 = arith.constant 0 : index
    %c0_222 = arith.constant 0 : index
    %470 = vector.load %arg7[%c0_221, %c0_222] : memref<1x512xf32, #tpu.memory_space<vmem>>, vector<1x512xf32>
    %471 = vector.broadcast %470 : vector<1x512xf32> to vector<8x512xf32>
    %472 = arith.addf %469, %471 : vector<8x512xf32>
    %473 = vector.extract_strided_slice %472 {offsets = [0, 0], sizes = [8, 128], strides = [1, 1]} : vector<8x512xf32> to vector<8x128xf32>
    %474 = arith.negf %473 : vector<8x128xf32>
    %475 = math.exp %474 : vector<8x128xf32>
    %cst_223 = arith.constant 1.000000e+00 : f32
    %476 = vector.broadcast %cst_223 : f32 to vector<8x128xf32>
    %477 = arith.addf %476, %475 : vector<8x128xf32>
    %478 = arith.divf %476, %477 : vector<8x128xf32>
    %479 = vector.extract_strided_slice %472 {offsets = [0, 128], sizes = [8, 128], strides = [1, 1]} : vector<8x512xf32> to vector<8x128xf32>
    %480 = arith.negf %479 : vector<8x128xf32>
    %481 = math.exp %480 : vector<8x128xf32>
    %cst_224 = arith.constant 1.000000e+00 : f32
    %482 = vector.broadcast %cst_224 : f32 to vector<8x128xf32>
    %483 = arith.addf %482, %481 : vector<8x128xf32>
    %484 = arith.divf %482, %483 : vector<8x128xf32>
    %485 = vector.extract_strided_slice %472 {offsets = [0, 256], sizes = [8, 128], strides = [1, 1]} : vector<8x512xf32> to vector<8x128xf32>
    %486 = math.tanh %485 : vector<8x128xf32>
    %487 = vector.extract_strided_slice %472 {offsets = [0, 384], sizes = [8, 128], strides = [1, 1]} : vector<8x512xf32> to vector<8x128xf32>
    %488 = arith.negf %487 : vector<8x128xf32>
    %489 = math.exp %488 : vector<8x128xf32>
    %cst_225 = arith.constant 1.000000e+00 : f32
    %490 = vector.broadcast %cst_225 : f32 to vector<8x128xf32>
    %491 = arith.addf %490, %489 : vector<8x128xf32>
    %492 = arith.divf %490, %491 : vector<8x128xf32>
    %c0_226 = arith.constant 0 : index
    %c0_227 = arith.constant 0 : index
    %493 = vector.load %arg12[%c0_226, %c0_227] : memref<8x128xf32, #tpu.memory_space<vmem>>, vector<8x128xf32>
    %494 = arith.mulf %484, %493 : vector<8x128xf32>
    %495 = arith.mulf %478, %486 : vector<8x128xf32>
    %496 = arith.addf %494, %495 : vector<8x128xf32>
    %497 = math.tanh %496 : vector<8x128xf32>
    %498 = arith.mulf %492, %497 : vector<8x128xf32>
    %c0_228 = arith.constant 0 : index
    %c0_229 = arith.constant 0 : index
    %499 = vector.load %arg12[%c0_228, %c0_229] : memref<8x128xf32, #tpu.memory_space<vmem>>, vector<8x128xf32>
    tpu.vector_store %arg12[%c0_228, %c0_229], %496 {strides = array<i32>} : memref<8x128xf32, #tpu.memory_space<vmem>>, vector<8x128xf32>,
    %c0_230 = arith.constant 0 : index
    %c128_231 = arith.constant 128 : index
    %500 = vector.load %arg10[%c0_230, %c128_231] : memref<8x256xf32, #tpu.memory_space<vmem>>, vector<8x128xf32>
    tpu.vector_store %arg10[%c0_230, %c128_231], %498 {strides = array<i32>} : memref<8x256xf32, #tpu.memory_space<vmem>>, vector<8x128xf32>,
    %c7_i32 = arith.constant 7 : i32
    %c8_i32_232 = arith.constant 8 : i32
    %501 = arith.muli %c7_i32, %c8_i32_232 : i32
    %502 = tpu.assume_multiple %501, 8 : i32
    %503 = arith.index_cast %502 : i32 to index
    %c0_233 = arith.constant 0 : index
    %504 = vector.load %arg9[%503, %c0_233] : memref<64x512xf32, #tpu.memory_space<vmem>>, vector<8x512xf32>
    %c0_234 = arith.constant 0 : index
    %c0_235 = arith.constant 0 : index
    %505 = vector.load %arg10[%c0_234, %c0_235] : memref<8x256xf32, #tpu.memory_space<vmem>>, vector<8x128xf32>
    %c0_236 = arith.constant 0 : index
    %c0_237 = arith.constant 0 : index
    %506 = vector.load %arg4[%c0_236, %c0_237] : memref<128x512xf32, #tpu.memory_space<vmem>>, vector<128x512xf32>
    %cst_238 = arith.constant dense<0.000000e+00> : vector<8x512xf32>
    %507 = tpu.matmul %505, %506, %cst_238 {dimension_numbers = #tpu.dot_dimension_numbers<[1], [0], [0], [1], [0, 0, 1, 1], [], []>} : vector<8x128xf32>, vector<128x512xf32>, vector<8x512xf32> -> vector<8x512xf32>
    %508 = arith.addf %504, %507 : vector<8x512xf32>
    %509 = vector.extract_strided_slice %508 {offsets = [0, 0], sizes = [8, 128], strides = [1, 1]} : vector<8x512xf32> to vector<8x128xf32>
    %510 = arith.negf %509 : vector<8x128xf32>
    %511 = math.exp %510 : vector<8x128xf32>
    %cst_239 = arith.constant 1.000000e+00 : f32
    %512 = vector.broadcast %cst_239 : f32 to vector<8x128xf32>
    %513 = arith.addf %512, %511 : vector<8x128xf32>
    %514 = arith.divf %512, %513 : vector<8x128xf32>
    %515 = vector.extract_strided_slice %508 {offsets = [0, 128], sizes = [8, 128], strides = [1, 1]} : vector<8x512xf32> to vector<8x128xf32>
    %516 = arith.negf %515 : vector<8x128xf32>
    %517 = math.exp %516 : vector<8x128xf32>
    %cst_240 = arith.constant 1.000000e+00 : f32
    %518 = vector.broadcast %cst_240 : f32 to vector<8x128xf32>
    %519 = arith.addf %518, %517 : vector<8x128xf32>
    %520 = arith.divf %518, %519 : vector<8x128xf32>
    %521 = vector.extract_strided_slice %508 {offsets = [0, 256], sizes = [8, 128], strides = [1, 1]} : vector<8x512xf32> to vector<8x128xf32>
    %522 = math.tanh %521 : vector<8x128xf32>
    %523 = vector.extract_strided_slice %508 {offsets = [0, 384], sizes = [8, 128], strides = [1, 1]} : vector<8x512xf32> to vector<8x128xf32>
    %524 = arith.negf %523 : vector<8x128xf32>
    %525 = math.exp %524 : vector<8x128xf32>
    %cst_241 = arith.constant 1.000000e+00 : f32
    %526 = vector.broadcast %cst_241 : f32 to vector<8x128xf32>
    %527 = arith.addf %526, %525 : vector<8x128xf32>
    %528 = arith.divf %526, %527 : vector<8x128xf32>
    %c0_242 = arith.constant 0 : index
    %c0_243 = arith.constant 0 : index
    %529 = vector.load %arg11[%c0_242, %c0_243] : memref<8x128xf32, #tpu.memory_space<vmem>>, vector<8x128xf32>
    %530 = arith.mulf %520, %529 : vector<8x128xf32>
    %531 = arith.mulf %514, %522 : vector<8x128xf32>
    %532 = arith.addf %530, %531 : vector<8x128xf32>
    %533 = math.tanh %532 : vector<8x128xf32>
    %534 = arith.mulf %528, %533 : vector<8x128xf32>
    %c0_244 = arith.constant 0 : index
    %c0_245 = arith.constant 0 : index
    %535 = vector.load %arg11[%c0_244, %c0_245] : memref<8x128xf32, #tpu.memory_space<vmem>>, vector<8x128xf32>
    tpu.vector_store %arg11[%c0_244, %c0_245], %532 {strides = array<i32>} : memref<8x128xf32, #tpu.memory_space<vmem>>, vector<8x128xf32>,
    %c0_246 = arith.constant 0 : index
    %c0_247 = arith.constant 0 : index
    %536 = vector.load %arg10[%c0_246, %c0_247] : memref<8x256xf32, #tpu.memory_space<vmem>>, vector<8x128xf32>
    tpu.vector_store %arg10[%c0_246, %c0_247], %534 {strides = array<i32>} : memref<8x256xf32, #tpu.memory_space<vmem>>, vector<8x128xf32>,
    %c0_248 = arith.constant 0 : index
    %c0_249 = arith.constant 0 : index
    %537 = vector.load %arg10[%c0_248, %c0_249] : memref<8x256xf32, #tpu.memory_space<vmem>>, vector<8x256xf32>
    %c0_250 = arith.constant 0 : index
    %c0_251 = arith.constant 0 : index
    %538 = vector.load %arg6[%c0_250, %c0_251] : memref<256x512xf32, #tpu.memory_space<vmem>>, vector<256x512xf32>
    %cst_252 = arith.constant dense<0.000000e+00> : vector<8x512xf32>
    %539 = tpu.matmul %537, %538, %cst_252 {dimension_numbers = #tpu.dot_dimension_numbers<[1], [0], [0], [1], [0, 0, 1, 1], [], []>} : vector<8x256xf32>, vector<256x512xf32>, vector<8x512xf32> -> vector<8x512xf32>
    %c0_253 = arith.constant 0 : index
    %c0_254 = arith.constant 0 : index
    %540 = vector.load %arg7[%c0_253, %c0_254] : memref<1x512xf32, #tpu.memory_space<vmem>>, vector<1x512xf32>
    %541 = vector.broadcast %540 : vector<1x512xf32> to vector<8x512xf32>
    %542 = arith.addf %539, %541 : vector<8x512xf32>
    %543 = vector.extract_strided_slice %542 {offsets = [0, 0], sizes = [8, 128], strides = [1, 1]} : vector<8x512xf32> to vector<8x128xf32>
    %544 = arith.negf %543 : vector<8x128xf32>
    %545 = math.exp %544 : vector<8x128xf32>
    %cst_255 = arith.constant 1.000000e+00 : f32
    %546 = vector.broadcast %cst_255 : f32 to vector<8x128xf32>
    %547 = arith.addf %546, %545 : vector<8x128xf32>
    %548 = arith.divf %546, %547 : vector<8x128xf32>
    %549 = vector.extract_strided_slice %542 {offsets = [0, 128], sizes = [8, 128], strides = [1, 1]} : vector<8x512xf32> to vector<8x128xf32>
    %550 = arith.negf %549 : vector<8x128xf32>
    %551 = math.exp %550 : vector<8x128xf32>
    %cst_256 = arith.constant 1.000000e+00 : f32
    %552 = vector.broadcast %cst_256 : f32 to vector<8x128xf32>
    %553 = arith.addf %552, %551 : vector<8x128xf32>
    %554 = arith.divf %552, %553 : vector<8x128xf32>
    %555 = vector.extract_strided_slice %542 {offsets = [0, 256], sizes = [8, 128], strides = [1, 1]} : vector<8x512xf32> to vector<8x128xf32>
    %556 = math.tanh %555 : vector<8x128xf32>
    %557 = vector.extract_strided_slice %542 {offsets = [0, 384], sizes = [8, 128], strides = [1, 1]} : vector<8x512xf32> to vector<8x128xf32>
    %558 = arith.negf %557 : vector<8x128xf32>
    %559 = math.exp %558 : vector<8x128xf32>
    %cst_257 = arith.constant 1.000000e+00 : f32
    %560 = vector.broadcast %cst_257 : f32 to vector<8x128xf32>
    %561 = arith.addf %560, %559 : vector<8x128xf32>
    %562 = arith.divf %560, %561 : vector<8x128xf32>
    %c0_258 = arith.constant 0 : index
    %c0_259 = arith.constant 0 : index
    %563 = vector.load %arg12[%c0_258, %c0_259] : memref<8x128xf32, #tpu.memory_space<vmem>>, vector<8x128xf32>
    %564 = arith.mulf %554, %563 : vector<8x128xf32>
    %565 = arith.mulf %548, %556 : vector<8x128xf32>
    %566 = arith.addf %564, %565 : vector<8x128xf32>
    %567 = math.tanh %566 : vector<8x128xf32>
    %568 = arith.mulf %562, %567 : vector<8x128xf32>
    %c0_260 = arith.constant 0 : index
    %c0_261 = arith.constant 0 : index
    %569 = vector.load %arg12[%c0_260, %c0_261] : memref<8x128xf32, #tpu.memory_space<vmem>>, vector<8x128xf32>
    tpu.vector_store %arg12[%c0_260, %c0_261], %566 {strides = array<i32>} : memref<8x128xf32, #tpu.memory_space<vmem>>, vector<8x128xf32>,
    %c0_262 = arith.constant 0 : index
    %c128_263 = arith.constant 128 : index
    %570 = vector.load %arg10[%c0_262, %c128_263] : memref<8x256xf32, #tpu.memory_space<vmem>>, vector<8x128xf32>
    tpu.vector_store %arg10[%c0_262, %c128_263], %568 {strides = array<i32>} : memref<8x256xf32, #tpu.memory_space<vmem>>, vector<8x128xf32>,
    %c8_i32_264 = arith.constant 8 : i32
    %c0_i32_265 = arith.constant 0 : i32
    %571 = arith.cmpi eq, %arg1, %c0_i32_265 : i32
    %572 = arith.extui %571 : i1 to i32
    %c0_i32_266 = arith.constant 0 : i32
    %573 = arith.cmpi ne, %572, %c0_i32_266 : i32
    scf.if %573 {
      %c0_267 = arith.constant 0 : index
      %c128_268 = arith.constant 128 : index
      %574 = vector.load %arg10[%c0_267, %c128_268] : memref<8x256xf32, #tpu.memory_space<vmem>>, vector<8x128xf32>
      %c0_269 = arith.constant 0 : index
      %c0_270 = arith.constant 0 : index
      %575 = vector.load %arg8[%c0_269, %c0_270] : memref<8x128xf32, #tpu.memory_space<vmem>>, vector<8x128xf32>
      tpu.vector_store %arg8[%c0_269, %c0_270], %574 {strides = array<i32>} : memref<8x128xf32, #tpu.memory_space<vmem>>, vector<8x128xf32>,
    } else {
    }
    return
  }
  func.func @transform_0(%arg0: i32, %arg1: i32) -> (i32, i32, i32) {
    %c0_i32 = arith.constant 0 : i32
    %c0_i32_0 = arith.constant 0 : i32
    return %arg0, %arg1, %c0_i32 : i32, i32, i32
  }
  func.func @transform_1(%arg0: i32, %arg1: i32) -> (i32, i32) {
    %c0_i32 = arith.constant 0 : i32
    %c0_i32_0 = arith.constant 0 : i32
    %c0_i32_1 = arith.constant 0 : i32
    return %c0_i32, %c0_i32_0 : i32, i32
  }
  func.func @transform_2(%arg0: i32, %arg1: i32) -> (i32, i32) {
    %c0_i32 = arith.constant 0 : i32
    %c0_i32_0 = arith.constant 0 : i32
    %c0_i32_1 = arith.constant 0 : i32
    return %c0_i32, %c0_i32_0 : i32, i32
  }
  func.func @transform_3(%arg0: i32, %arg1: i32) -> (i32, i32) {
    %c0_i32 = arith.constant 0 : i32
    %c0_i32_0 = arith.constant 0 : i32
    %c0_i32_1 = arith.constant 0 : i32
    return %c0_i32, %c0_i32_0 : i32, i32
  }
  func.func @transform_4(%arg0: i32, %arg1: i32) -> (i32, i32) {
    %c0_i32 = arith.constant 0 : i32
    %c0_i32_0 = arith.constant 0 : i32
    %c0_i32_1 = arith.constant 0 : i32
    return %c0_i32, %c0_i32_0 : i32, i32
  }
  func.func @transform_5(%arg0: i32, %arg1: i32) -> (i32, i32) {
    %c0_i32 = arith.constant 0 : i32
    %c0_i32_0 = arith.constant 0 : i32
    %c0_i32_1 = arith.constant 0 : i32
    return %c0_i32, %c0_i32_0 : i32, i32
  }
  func.func @transform_6(%arg0: i32, %arg1: i32) -> (i32, i32) {
    %c0_i32 = arith.constant 0 : i32
    %c0_i32_0 = arith.constant 0 : i32
    return %arg0, %c0_i32 : i32, i32
  }
}

</mosaic_0001>

<llo_original>
// kernel: tpu_custom_call.1
$region0: #{tpu_custom_call.1}
  #allocation0 [shape = 'u32[]', space=smem, size = 0x4, offset = 0x4, fixed_abs, tag = 'smem constant byte address 0x4 - core index']
  #allocation1 [shape = 'u32[72,128]{1,0:T(1,128)}', space=vmem, size = 0x9000, scoped, tag = 'internal scratch']
  #allocation2 [shape = 'f32[64,512]{1,0:T(8,128)}', space=vmem, size = 0x20000, scoped, tag = 'scratch operand']
  #allocation3 [shape = 'f32[8,256]{1,0:T(8,128)}', space=vmem, size = 0x2000, scoped, tag = 'scratch operand']
  #allocation4 [shape = 'f32[8,128]{1,0:T(8,128)}', space=vmem, size = 0x1000, scoped, tag = 'scratch operand']
  #allocation5 [shape = 'f32[8,128]{1,0:T(8,128)}', space=vmem, size = 0x1000, scoped, tag = 'scratch operand']
  %s0 = inlined_call_operand.vmem [shape: f32[1,64,4], index: 0, kind: input, shape index: {}]
  %s1 = inlined_call_operand.vmem [shape: f32[4,512], index: 1, kind: input, shape index: {}]
  %s2 = inlined_call_operand.hbm [shape: f32[128,512], index: 2, kind: input, shape index: {}]
  %s3 = inlined_call_operand.vmem [shape: f32[1,512], index: 3, kind: input, shape index: {}]
  %s4 = inlined_call_operand.hbm [shape: f32[256,512], index: 4, kind: input, shape index: {}]
  %s5 = inlined_call_operand.vmem [shape: f32[1,512], index: 5, kind: input, shape index: {}]
  %s6 = inlined_call_operand.hbm [shape: f32[8,128], index: 6, kind: output, shape index: {}]
  %s7 = sld [smem:[#allocation0]]
  $region50: #{tpu_custom_call.1} parent=0
    _
  %s9 = ssub.s32 1, %s7
  %s10 = scalar_select 0, %s9, %s7
  $region1: #{tpu_custom_call.1} parent=0
    #allocation6 [shape = 'u8[262144]{0}', space=vmem, size = 0x40000, scoped, tag = 'input window, operand 2, single buffered']
    #allocation7 [shape = 's32[1]{0}', space=sflag, size = 0x4, scoped, tag = 'scoped memory for tpu_custom_call.1']
    #allocation8 [shape = 's32[1]{0}', space=sflag, size = 0x4, scoped, tag = 'scoped memory for tpu_custom_call.1']
    #allocation9 [shape = 'u8[524288]{0}', space=vmem, size = 0x80000, scoped, tag = 'input window, operand 4, single buffered']
    #allocation10 [shape = 's32[1]{0}', space=sflag, size = 0x4, scoped, tag = 'scoped memory for tpu_custom_call.1']
    #allocation11 [shape = 'u8[4096]{0}', space=vmem, size = 0x1000, scoped, tag = 'output window, operand 0, single buffered']
    %11 = vsyncpa [#allocation7], 0
    %12 = vsyncpa [#allocation10], 0
    %13 = vsyncpa [#allocation8], 0
    // Predicated region
    $region2: #{tpu_custom_call.1} parent=1 // pred_check
      _
    $region3: #{tpu_custom_call.1} parent=1 // pred_check_branch
      %15 = sbr.rel (0) target = $region5
    $region4: #{tpu_custom_call.1} parent=1 // pred_region
      _
    $region5: #{tpu_custom_call.1} parent=1 // pred_fallthru
      _
    // Predicated region
    $region6: #{tpu_custom_call.1} parent=1 // pred_check
      _
    $region7: #{tpu_custom_call.1} parent=1 // pred_check_branch
      %17 = sbr.rel (0) target = $region9
    $region8: #{tpu_custom_call.1} parent=1 // pred_region
      _
    $region9: #{tpu_custom_call.1} parent=1 // pred_fallthru
      _
    // Predicated region
    $region10: #{tpu_custom_call.1} parent=1 // pred_check
      _
    $region11: #{tpu_custom_call.1} parent=1 // pred_check_branch
      %19 = sbr.rel (0) target = $region13
    $region12: #{tpu_custom_call.1} parent=1 // pred_region
      %21 = vsyncadd [#allocation7], 0
      %s22 = sshll.u32 %s2, 4
      %s23 = int_to_ptr.hbm [resolvable:$true] %s22
      %s24 = sshll.u32 [#allocation6], 4
      %s25 = int_to_ptr.vmem [resolvable:$true] %s24
      %30 = dma.hbm_to_vmem [thread:$0]  %s23, 8192, %s25, [#allocation7], 512, 512, 32
    $region13: #{tpu_custom_call.1} parent=1 // pred_fallthru
      _
    // Predicated region
    $region14: #{tpu_custom_call.1} parent=1 // pred_check
      _
    $region15: #{tpu_custom_call.1} parent=1 // pred_check_branch
      %32 = sbr.rel (0) target = $region17
    $region16: #{tpu_custom_call.1} parent=1 // pred_region
      _
    $region17: #{tpu_custom_call.1} parent=1 // pred_fallthru
      _
    // Predicated region
    $region18: #{tpu_custom_call.1} parent=1 // pred_check
      _
    $region19: #{tpu_custom_call.1} parent=1 // pred_check_branch
      %34 = sbr.rel (0) target = $region21
    $region20: #{tpu_custom_call.1} parent=1 // pred_region
      %36 = vsyncadd [#allocation10], 0
      %s37 = sshll.u32 %s4, 4
      %s38 = int_to_ptr.hbm [resolvable:$true] %s37
      %s39 = sshll.u32 [#allocation9], 4
      %s40 = int_to_ptr.vmem [resolvable:$true] %s39
      %45 = dma.hbm_to_vmem [thread:$0]  %s38, 16384, %s40, [#allocation10], 512, 512, 32
    $region21: #{tpu_custom_call.1} parent=1 // pred_fallthru
      _
    // Predicated region
    $region22: #{tpu_custom_call.1} parent=1 // pred_check
      _
    $region23: #{tpu_custom_call.1} parent=1 // pred_check_branch
      %47 = sbr.rel (0) target = $region25
    $region24: #{tpu_custom_call.1} parent=1 // pred_region
      _
    $region25: #{tpu_custom_call.1} parent=1 // pred_fallthru
      _
    // Predicated region
    $region26: #{tpu_custom_call.1} parent=1 // pred_check
      _
    $region27: #{tpu_custom_call.1} parent=1 // pred_check_branch
      %49 = sbr.rel (0) target = $region29
    $region28: #{tpu_custom_call.1} parent=1 // pred_region
      %51 = dma.done [#allocation7], 8192
    $region29: #{tpu_custom_call.1} parent=1 // pred_fallthru
      _
    // Predicated region
    $region30: #{tpu_custom_call.1} parent=1 // pred_check
      _
    $region31: #{tpu_custom_call.1} parent=1 // pred_check_branch
      %53 = sbr.rel (0) target = $region33
    $region32: #{tpu_custom_call.1} parent=1 // pred_region
      %55 = dma.done [#allocation10], 16384
    $region33: #{tpu_custom_call.1} parent=1 // pred_fallthru
      _
    %p56 = scmp.eq.s32.totalorder 0, 0
    // Predicated region
    $region34: #{tpu_custom_call.1} parent=1 // pred_check
      %p57 = pneg %p56
    $region35: #{tpu_custom_call.1} parent=1 // pred_check_branch
      %59 = sbr.rel (%p57) target = $region37
    $region36: #{tpu_custom_call.1} parent=1 // pred_region
      %60 = vst [vmem:[#allocation3] sm:$0xff] 0.0
      %61 = vst [vmem:[#allocation3 + $0x8] sm:$0xff] 0.0
      %62 = vst [vmem:[#allocation4] sm:$0xff] 0.0
      %63 = vst [vmem:[#allocation5] sm:$0xff] 0.0
    $region37: #{tpu_custom_call.1} parent=1 // pred_fallthru
      _
    %v64 = vld [vmem:[%s0] sm:$0xff]
    %v65 = vld [vmem:[%s0 + $0x8] sm:$0xff]
    %v66 = vld [vmem:[%s0 + $0x10] sm:$0xff]
    %v67 = vld [vmem:[%s0 + $0x18] sm:$0xff]
    %v68 = vld [vmem:[%s0 + $0x20] sm:$0xff]
    %v69 = vld [vmem:[%s0 + $0x28] sm:$0xff]
    %v70 = vld [vmem:[%s0 + $0x30] sm:$0xff]
    %v71 = vld [vmem:[%s0 + $0x38] sm:$0xff]
    %v72 = vld [vmem:[%s1] sm:$0xff]
    %v73 = vld [vmem:[%s1 + $0x8] sm:$0xff]
    %v74 = vld [vmem:[%s3] sm:$0xf]
    %v76 = vperm.slane %v74, 0
    %v77 = vperm.slane %v74, 1
    %v78 = vperm.slane %v74, 2
    %v79 = vperm.slane %v74, 3
    %86 = vst [vmem:[#allocation1] ss:$2 sm:$0xff] %v72
    %s87 = scalar_lea.vmem [#allocation1], 16
    %88 = vst [vmem:[%s87] ss:$2 sm:$0xff] %v73
    %v89 = vld.sshfl [vmem:[#allocation1] sm:$0xff pattern:$0x75316420]
    %v90 = vld.sshfl [vmem:[#allocation1 + $0x8] sm:$0xff pattern:$0x75316420]
    %v91 = vld.sshfl [vmem:[#allocation1 + $0x10] sm:$0xff pattern:$0x75316420]
    %v92 = vld.sshfl [vmem:[#allocation1 + $0x18] sm:$0xff pattern:$0x75316420]
    %vm93 = vcmask 31744
    %v95 = vsel %vm93, %v64, 0
    %v98 = vsel %vm93, %v65, 0
    %v101 = vsel %vm93, %v66, 0
    %v104 = vsel %vm93, %v67, 0
    %v107 = vsel %vm93, %v68, 0
    %v110 = vsel %vm93, %v69, 0
    %v113 = vsel %vm93, %v70, 0
    %v116 = vsel %vm93, %v71, 0
    %vm118 = vcmask 1043456
    %v119 = vsel %vm118, %v89, 0
    %v121 = vsel %vm118, %v90, 0
    %v123 = vsel %vm118, %v91, 0
    %v125 = vsel %vm118, %v92, 0
    %127 = vmatpush.msra.mxu0 0.0
    %128 = vmatpush.msra.mxu0 0.0
    %129 = vmatpush.msra.mxu0 0.0
    %130 = vmatpush.msra.mxu0 0.0
    %131 = vmatpush.msra.mxu0 0.0
    %132 = vmatpush.msra.mxu0 0.0
    %133 = vmatpush.msra.mxu0 0.0
    %134 = vmatpush.msra.mxu0 0.0
    %135 = vmatpush.msra.mxu0 0.0
    %136 = vmatpush.msra.mxu0 0.0
    %137 = vmatpush.msra.mxu0 0.0
    %138 = vmatpush.msra.mxu0 0.0
    %139 = vmatpush.msra.mxu0 0.0
    %140 = vmatpush.msra.mxu0 0.0
    %141 = vmatpush.msra.mxu0 0.0
    %142 = vmatpush.msra.mxu0 %v119
    %143 = vmatmul.f32.gmra.mxu0 %v95
    %v144 = vpop.f32.mrf.mxu0
    %v145 = vadd.f32 %v76, %v144
    %146 = vmatmul.f32.gmra.mxu0 %v98
    %v147 = vpop.f32.mrf.mxu0
    %v148 = vadd.f32 %v76, %v147
    %149 = vmatmul.f32.gmra.mxu0 %v101
    %v150 = vpop.f32.mrf.mxu0
    %v151 = vadd.f32 %v76, %v150
    %152 = vmatmul.f32.gmra.mxu0 %v104
    %v153 = vpop.f32.mrf.mxu0
    %v154 = vadd.f32 %v76, %v153
    %155 = vmatmul.f32.gmra.mxu0 %v107
    %v156 = vpop.f32.mrf.mxu0
    %v157 = vadd.f32 %v76, %v156
    %158 = vmatmul.f32.gmra.mxu0 %v110
    %v159 = vpop.f32.mrf.mxu0
    %v160 = vadd.f32 %v76, %v159
    %161 = vmatmul.f32.gmra.mxu0 %v113
    %v162 = vpop.f32.mrf.mxu0
    %v163 = vadd.f32 %v76, %v162
    %164 = vmatmul.f32.gmra.mxu0 %v116
    %v165 = vpop.f32.mrf.mxu0
    %v166 = vadd.f32 %v76, %v165
    %167 = vdwg.mxu0
    %168 = vmatpush.msra.mxu0 0.0
    %169 = vmatpush.msra.mxu0 0.0
    %170 = vmatpush.msra.mxu0 0.0
    %171 = vmatpush.msra.mxu0 0.0
    %172 = vmatpush.msra.mxu0 0.0
    %173 = vmatpush.msra.mxu0 0.0
    %174 = vmatpush.msra.mxu0 0.0
    %175 = vmatpush.msra.mxu0 0.0
    %176 = vmatpush.msra.mxu0 0.0
    %177 = vmatpush.msra.mxu0 0.0
    %178 = vmatpush.msra.mxu0 0.0
    %179 = vmatpush.msra.mxu0 0.0
    %180 = vmatpush.msra.mxu0 0.0
    %181 = vmatpush.msra.mxu0 0.0
    %182 = vmatpush.msra.mxu0 0.0
    %183 = vmatpush.msra.mxu0 %v121
    %184 = vmatmul.f32.gmra.mxu0 %v95
    %v185 = vpop.f32.mrf.mxu0
    %v186 = vadd.f32 %v77, %v185
    %187 = vmatmul.f32.gmra.mxu0 %v98
    %v188 = vpop.f32.mrf.mxu0
    %v189 = vadd.f32 %v77, %v188
    %190 = vmatmul.f32.gmra.mxu0 %v101
    %v191 = vpop.f32.mrf.mxu0
    %v192 = vadd.f32 %v77, %v191
    %193 = vmatmul.f32.gmra.mxu0 %v104
    %v194 = vpop.f32.mrf.mxu0
    %v195 = vadd.f32 %v77, %v194
    %196 = vmatmul.f32.gmra.mxu0 %v107
    %v197 = vpop.f32.mrf.mxu0
    %v198 = vadd.f32 %v77, %v197
    %199 = vmatmul.f32.gmra.mxu0 %v110
    %v200 = vpop.f32.mrf.mxu0
    %v201 = vadd.f32 %v77, %v200
    %202 = vmatmul.f32.gmra.mxu0 %v113
    %v203 = vpop.f32.mrf.mxu0
    %v204 = vadd.f32 %v77, %v203
    %205 = vmatmul.f32.gmra.mxu0 %v116
    %v206 = vpop.f32.mrf.mxu0
    %v207 = vadd.f32 %v77, %v206
    %208 = vdwg.mxu0
    %209 = vmatpush.msra.mxu0 0.0
    %210 = vmatpush.msra.mxu0 0.0
    %211 = vmatpush.msra.mxu0 0.0
    %212 = vmatpush.msra.mxu0 0.0
    %213 = vmatpush.msra.mxu0 0.0
    %214 = vmatpush.msra.mxu0 0.0
    %215 = vmatpush.msra.mxu0 0.0
    %216 = vmatpush.msra.mxu0 0.0
    %217 = vmatpush.msra.mxu0 0.0
    %218 = vmatpush.msra.mxu0 0.0
    %219 = vmatpush.msra.mxu0 0.0
    %220 = vmatpush.msra.mxu0 0.0
    %221 = vmatpush.msra.mxu0 0.0
    %222 = vmatpush.msra.mxu0 0.0
    %223 = vmatpush.msra.mxu0 0.0
    %224 = vmatpush.msra.mxu0 %v123
    %225 = vmatmul.f32.gmra.mxu0 %v95
    %v226 = vpop.f32.mrf.mxu0
    %v227 = vadd.f32 %v78, %v226
    %228 = vmatmul.f32.gmra.mxu0 %v98
    %v229 = vpop.f32.mrf.mxu0
    %v230 = vadd.f32 %v78, %v229
    %231 = vmatmul.f32.gmra.mxu0 %v101
    %v232 = vpop.f32.mrf.mxu0
    %v233 = vadd.f32 %v78, %v232
    %234 = vmatmul.f32.gmra.mxu0 %v104
    %v235 = vpop.f32.mrf.mxu0
    %v236 = vadd.f32 %v78, %v235
    %237 = vmatmul.f32.gmra.mxu0 %v107
    %v238 = vpop.f32.mrf.mxu0
    %v239 = vadd.f32 %v78, %v238
    %240 = vmatmul.f32.gmra.mxu0 %v110
    %v241 = vpop.f32.mrf.mxu0
    %v242 = vadd.f32 %v78, %v241
    %243 = vmatmul.f32.gmra.mxu0 %v113
    %v244 = vpop.f32.mrf.mxu0
    %v245 = vadd.f32 %v78, %v244
    %246 = vmatmul.f32.gmra.mxu0 %v116
    %v247 = vpop.f32.mrf.mxu0
    %v248 = vadd.f32 %v78, %v247
    %249 = vdwg.mxu0
    %250 = vmatpush.msra.mxu0 0.0
    %251 = vmatpush.msra.mxu0 0.0
    %252 = vmatpush.msra.mxu0 0.0
    %253 = vmatpush.msra.mxu0 0.0
    %254 = vmatpush.msra.mxu0 0.0
    %255 = vmatpush.msra.mxu0 0.0
    %256 = vmatpush.msra.mxu0 0.0
    %257 = vmatpush.msra.mxu0 0.0
    %258 = vmatpush.msra.mxu0 0.0
    %259 = vmatpush.msra.mxu0 0.0
    %260 = vmatpush.msra.mxu0 0.0
    %261 = vmatpush.msra.mxu0 0.0
    %262 = vmatpush.msra.mxu0 0.0
    %263 = vmatpush.msra.mxu0 0.0
    %264 = vmatpush.msra.mxu0 0.0
    %265 = vmatpush.msra.mxu0 %v125
    %266 = vmatmul.f32.gmra.mxu0 %v95
    %v267 = vpop.f32.mrf.mxu0
    %v268 = vadd.f32 %v79, %v267
    %269 = vmatmul.f32.gmra.mxu0 %v98
    %v270 = vpop.f32.mrf.mxu0
    %v271 = vadd.f32 %v79, %v270
    %272 = vmatmul.f32.gmra.mxu0 %v101
    %v273 = vpop.f32.mrf.mxu0
    %v274 = vadd.f32 %v79, %v273
    %275 = vmatmul.f32.gmra.mxu0 %v104
    %v276 = vpop.f32.mrf.mxu0
    %v277 = vadd.f32 %v79, %v276
    %278 = vmatmul.f32.gmra.mxu0 %v107
    %v279 = vpop.f32.mrf.mxu0
    %v280 = vadd.f32 %v79, %v279
    %281 = vmatmul.f32.gmra.mxu0 %v110
    %v282 = vpop.f32.mrf.mxu0
    %v283 = vadd.f32 %v79, %v282
    %284 = vmatmul.f32.gmra.mxu0 %v113
    %v285 = vpop.f32.mrf.mxu0
    %v286 = vadd.f32 %v79, %v285
    %287 = vmatmul.f32.gmra.mxu0 %v116
    %v288 = vpop.f32.mrf.mxu0
    %v289 = vadd.f32 %v79, %v288
    %290 = vdwg.mxu0
    %291 = vst [vmem:[#allocation2] sm:$0xff] %v145
    %292 = vst [vmem:[#allocation2 + $0x8] sm:$0xff] %v186
    %293 = vst [vmem:[#allocation2 + $0x10] sm:$0xff] %v227
    %294 = vst [vmem:[#allocation2 + $0x18] sm:$0xff] %v268
    %295 = vst [vmem:[#allocation2 + $0x20] sm:$0xff] %v148
    %296 = vst [vmem:[#allocation2 + $0x28] sm:$0xff] %v189
    %297 = vst [vmem:[#allocation2 + $0x30] sm:$0xff] %v230
    %298 = vst [vmem:[#allocation2 + $0x38] sm:$0xff] %v271
    %299 = vst [vmem:[#allocation2 + $0x40] sm:$0xff] %v151
    %300 = vst [vmem:[#allocation2 + $0x48] sm:$0xff] %v192
    %301 = vst [vmem:[#allocation2 + $0x50] sm:$0xff] %v233
    %302 = vst [vmem:[#allocation2 + $0x58] sm:$0xff] %v274
    %303 = vst [vmem:[#allocation2 + $0x60] sm:$0xff] %v154
    %304 = vst [vmem:[#allocation2 + $0x68] sm:$0xff] %v195
    %305 = vst [vmem:[#allocation2 + $0x70] sm:$0xff] %v236
    %306 = vst [vmem:[#allocation2 + $0x78] sm:$0xff] %v277
    %307 = vst [vmem:[#allocation2 + $0x80] sm:$0xff] %v157
    %308 = vst [vmem:[#allocation2 + $0x88] sm:$0xff] %v198
    %309 = vst [vmem:[#allocation2 + $0x90] sm:$0xff] %v239
    %310 = vst [vmem:[#allocation2 + $0x98] sm:$0xff] %v280
    %311 = vst [vmem:[#allocation2 + $0xa0] sm:$0xff] %v160
    %312 = vst [vmem:[#allocation2 + $0xa8] sm:$0xff] %v201
    %313 = vst [vmem:[#allocation2 + $0xb0] sm:$0xff] %v242
    %314 = vst [vmem:[#allocation2 + $0xb8] sm:$0xff] %v283
    %315 = vst [vmem:[#allocation2 + $0xc0] sm:$0xff] %v163
    %316 = vst [vmem:[#allocation2 + $0xc8] sm:$0xff] %v204
    %317 = vst [vmem:[#allocation2 + $0xd0] sm:$0xff] %v245
    %318 = vst [vmem:[#allocation2 + $0xd8] sm:$0xff] %v286
    %319 = vst [vmem:[#allocation2 + $0xe0] sm:$0xff] %v166
    %320 = vst [vmem:[#allocation2 + $0xe8] sm:$0xff] %v207
    %321 = vst [vmem:[#allocation2 + $0xf0] sm:$0xff] %v248
    %322 = vst [vmem:[#allocation2 + $0xf8] sm:$0xff] %v289
    %s323 = smul.u32 0, 4
    %s324 = smul.addr %s323, 8
    %s325 = scalar_lea.vmem [#allocation2], %s324
    %v326 = vld [vmem:[%s325] sm:$0xff]
    %v327 = vld [vmem:[%s325 + $0x8] sm:$0xff]
    %v328 = vld [vmem:[%s325 + $0x10] sm:$0xff]
    %v329 = vld [vmem:[%s325 + $0x18] sm:$0xff]
    %v330 = vld [vmem:[#allocation3] sm:$0xff]
    %v331 = vld [vmem:[#allocation6] sm:$0xff]
    %v332 = vld [vmem:[#allocation6 + $0x8] sm:$0xff]
    %v333 = vld [vmem:[#allocation6 + $0x10] sm:$0xff]
    %v334 = vld [vmem:[#allocation6 + $0x18] sm:$0xff]
    %v335 = vld [vmem:[#allocation6 + $0x20] sm:$0xff]
    %v336 = vld [vmem:[#allocation6 + $0x28] sm:$0xff]
    %v337 = vld [vmem:[#allocation6 + $0x30] sm:$0xff]
    %v338 = vld [vmem:[#allocation6 + $0x38] sm:$0xff]
    %v339 = vld [vmem:[#allocation6 + $0x40] sm:$0xff]
    %v340 = vld [vmem:[#allocation6 + $0x48] sm:$0xff]
    %v341 = vld [vmem:[#allocation6 + $0x50] sm:$0xff]
    %v342 = vld [vmem:[#allocation6 + $0x58] sm:$0xff]
    %v343 = vld [vmem:[#allocation6 + $0x60] sm:$0xff]
    %v344 = vld [vmem:[#allocation6 + $0x68] sm:$0xff]
    %v345 = vld [vmem:[#allocation6 + $0x70] sm:$0xff]
    %v346 = vld [vmem:[#allocation6 + $0x78] sm:$0xff]
    %v347 = vld [vmem:[#allocation6 + $0x80] sm:$0xff]
    %v348 = vld [vmem:[#allocation6 + $0x88] sm:$0xff]
    %v349 = vld [vmem:[#allocation6 + $0x90] sm:$0xff]
    %v350 = vld [vmem:[#allocation6 + $0x98] sm:$0xff]
    %v351 = vld [vmem:[#allocation6 + $0xa0] sm:$0xff]
    %v352 = vld [vmem:[#allocation6 + $0xa8] sm:$0xff]
    %v353 = vld [vmem:[#allocation6 + $0xb0] sm:$0xff]
    %v354 = vld [vmem:[#allocation6 + $0xb8] sm:$0xff]
    %v355 = vld [vmem:[#allocation6 + $0xc0] sm:$0xff]
    %v356 = vld [vmem:[#allocation6 + $0xc8] sm:$0xff]
    %v357 = vld [vmem:[#allocation6 + $0xd0] sm:$0xff]
    %v358 = vld [vmem:[#allocation6 + $0xd8] sm:$0xff]
    %v359 = vld [vmem:[#allocation6 + $0xe0] sm:$0xff]
    %v360 = vld [vmem:[#allocation6 + $0xe8] sm:$0xff]
    %v361 = vld [vmem:[#allocation6 + $0xf0] sm:$0xff]
    %v362 = vld [vmem:[#allocation6 + $0xf8] sm:$0xff]
    %v363 = vld [vmem:[#allocation6 + $0x100] sm:$0xff]
    %v364 = vld [vmem:[#allocation6 + $0x108] sm:$0xff]
    %v365 = vld [vmem:[#allocation6 + $0x110] sm:$0xff]
    %v366 = vld [vmem:[#allocation6 + $0x118] sm:$0xff]
    %v367 = vld [vmem:[#allocation6 + $0x120] sm:$0xff]
    %v368 = vld [vmem:[#allocation6 + $0x128] sm:$0xff]
    %v369 = vld [vmem:[#allocation6 + $0x130] sm:$0xff]
    %v370 = vld [vmem:[#allocation6 + $0x138] sm:$0xff]
    %v371 = vld [vmem:[#allocation6 + $0x140] sm:$0xff]
    %v372 = vld [vmem:[#allocation6 + $0x148] sm:$0xff]
    %v373 = vld [vmem:[#allocation6 + $0x150] sm:$0xff]
    %v374 = vld [vmem:[#allocation6 + $0x158] sm:$0xff]
    %v375 = vld [vmem:[#allocation6 + $0x160] sm:$0xff]
    %v376 = vld [vmem:[#allocation6 + $0x168] sm:$0xff]
    %v377 = vld [vmem:[#allocation6 + $0x170] sm:$0xff]
    %v378 = vld [vmem:[#allocation6 + $0x178] sm:$0xff]
    %v379 = vld [vmem:[#allocation6 + $0x180] sm:$0xff]
    %v380 = vld [vmem:[#allocation6 + $0x188] sm:$0xff]
    %v381 = vld [vmem:[#allocation6 + $0x190] sm:$0xff]
    %v382 = vld [vmem:[#allocation6 + $0x198] sm:$0xff]
    %v383 = vld [vmem:[#allocation6 + $0x1a0] sm:$0xff]
    %v384 = vld [vmem:[#allocation6 + $0x1a8] sm:$0xff]
    %v385 = vld [vmem:[#allocation6 + $0x1b0] sm:$0xff]
    %v386 = vld [vmem:[#allocation6 + $0x1b8] sm:$0xff]
    %v387 = vld [vmem:[#allocation6 + $0x1c0] sm:$0xff]
    %v388 = vld [vmem:[#allocation6 + $0x1c8] sm:$0xff]
    %v389 = vld [vmem:[#allocation6 + $0x1d0] sm:$0xff]
    %v390 = vld [vmem:[#allocation6 + $0x1d8] sm:$0xff]
    %v391 = vld [vmem:[#allocation6 + $0x1e0] sm:$0xff]
    %v392 = vld [vmem:[#allocation6 + $0x1e8] sm:$0xff]
    %v393 = vld [vmem:[#allocation6 + $0x1f0] sm:$0xff]
    %v394 = vld [vmem:[#allocation6 + $0x1f8] sm:$0xff]
    %395 = vmatpush.msra.mxu0 %v391
    %396 = vmatpush.msra.mxu0 %v387
    %397 = vmatpush.msra.mxu0 %v383
    %398 = vmatpush.msra.mxu0 %v379
    %399 = vmatpush.msra.mxu0 %v375
    %400 = vmatpush.msra.mxu0 %v371
    %401 = vmatpush.msra.mxu0 %v367
    %402 = vmatpush.msra.mxu0 %v363
    %403 = vmatpush.msra.mxu0 %v359
    %404 = vmatpush.msra.mxu0 %v355
    %405 = vmatpush.msra.mxu0 %v351
    %406 = vmatpush.msra.mxu0 %v347
    %407 = vmatpush.msra.mxu0 %v343
    %408 = vmatpush.msra.mxu0 %v339
    %409 = vmatpush.msra.mxu0 %v335
    %410 = vmatpush.msra.mxu0 %v331
    %411 = vmatmul.f32.gmra.mxu0 %v330
    %v412 = vpop.f32.mrf.mxu0
    %v413 = vadd.f32 0.0, %v412
    %414 = vdwg.mxu0
    %415 = vmatpush.msra.mxu0 %v392
    %416 = vmatpush.msra.mxu0 %v388
    %417 = vmatpush.msra.mxu0 %v384
    %418 = vmatpush.msra.mxu0 %v380
    %419 = vmatpush.msra.mxu0 %v376
    %420 = vmatpush.msra.mxu0 %v372
    %421 = vmatpush.msra.mxu0 %v368
    %422 = vmatpush.msra.mxu0 %v364
    %423 = vmatpush.msra.mxu0 %v360
    %424 = vmatpush.msra.mxu0 %v356
    %425 = vmatpush.msra.mxu0 %v352
    %426 = vmatpush.msra.mxu0 %v348
    %427 = vmatpush.msra.mxu0 %v344
    %428 = vmatpush.msra.mxu0 %v340
    %429 = vmatpush.msra.mxu0 %v336
    %430 = vmatpush.msra.mxu0 %v332
    %431 = vmatmul.f32.gmra.mxu0 %v330
    %v432 = vpop.f32.mrf.mxu0
    %v433 = vadd.f32 0.0, %v432
    %434 = vdwg.mxu0
    %435 = vmatpush.msra.mxu0 %v393
    %436 = vmatpush.msra.mxu0 %v389
    %437 = vmatpush.msra.mxu0 %v385
    %438 = vmatpush.msra.mxu0 %v381
    %439 = vmatpush.msra.mxu0 %v377
    %440 = vmatpush.msra.mxu0 %v373
    %441 = vmatpush.msra.mxu0 %v369
    %442 = vmatpush.msra.mxu0 %v365
    %443 = vmatpush.msra.mxu0 %v361
    %444 = vmatpush.msra.mxu0 %v357
    %445 = vmatpush.msra.mxu0 %v353
    %446 = vmatpush.msra.mxu0 %v349
    %447 = vmatpush.msra.mxu0 %v345
    %448 = vmatpush.msra.mxu0 %v341
    %449 = vmatpush.msra.mxu0 %v337
    %450 = vmatpush.msra.mxu0 %v333
    %451 = vmatmul.f32.gmra.mxu0 %v330
    %v452 = vpop.f32.mrf.mxu0
    %v453 = vadd.f32 0.0, %v452
    %454 = vdwg.mxu0
    %455 = vmatpush.msra.mxu0 %v394
    %456 = vmatpush.msra.mxu0 %v390
    %457 = vmatpush.msra.mxu0 %v386
    %458 = vmatpush.msra.mxu0 %v382
    %459 = vmatpush.msra.mxu0 %v378
    %460 = vmatpush.msra.mxu0 %v374
    %461 = vmatpush.msra.mxu0 %v370
    %462 = vmatpush.msra.mxu0 %v366
    %463 = vmatpush.msra.mxu0 %v362
    %464 = vmatpush.msra.mxu0 %v358
    %465 = vmatpush.msra.mxu0 %v354
    %466 = vmatpush.msra.mxu0 %v350
    %467 = vmatpush.msra.mxu0 %v346
    %468 = vmatpush.msra.mxu0 %v342
    %469 = vmatpush.msra.mxu0 %v338
    %470 = vmatpush.msra.mxu0 %v334
    %471 = vmatmul.f32.gmra.mxu0 %v330
    %v472 = vpop.f32.mrf.mxu0
    %v473 = vadd.f32 0.0, %v472
    %474 = vdwg.mxu0
    %v475 = vadd.f32 %v326, %v413
    %v476 = vadd.f32 %v327, %v433
    %v477 = vadd.f32 %v328, %v453
    %v478 = vadd.f32 %v329, %v473
    %v479 = vxor.u32 %v475, 2147483648
    %v480 = vmul.f32 %v479, 1.442695
    %v481 = vpow.pop %v480
    %v482 = vadd.f32 %v481, 1.0
    %v483 = vrcp.pop %v482
    %v484 = vmul.f32 %v482, %v483
    %v485 = vsub.f32 1.0, %v484
    %v486 = vmul.f32 %v483, %v485
    %v487 = vadd.f32 %v483, %v486
    %vm488 = vweird.f32 %v482
    %vm489 = vweird.f32 %v483
    %vm490 = vmor %vm488, %vm489
    %v491 = vsel %vm490, %v483, %v487
    %v492 = vand.u32 2147483647, %v482
    %vm493 = vcmp.eq.f32.partialorder %v492, 8.507059e+37
    %v494 = vand.u32 %v482, 2147483648
    %v495 = vor.u32 1.1754944e-38, %v494
    %v496 = vsel %vm493, %v495, %v491
    %v497 = vmul.f32 1.0, %v496
    %v498 = vxor.u32 %v476, 2147483648
    %v499 = vmul.f32 %v498, 1.442695
    %v500 = vpow.pop %v499
    %v501 = vadd.f32 %v500, 1.0
    %v502 = vrcp.pop %v501
    %v503 = vmul.f32 %v501, %v502
    %v504 = vsub.f32 1.0, %v503
    %v505 = vmul.f32 %v502, %v504
    %v506 = vadd.f32 %v502, %v505
    %vm507 = vweird.f32 %v501
    %vm508 = vweird.f32 %v502
    %vm509 = vmor %vm507, %vm508
    %v510 = vsel %vm509, %v502, %v506
    %v511 = vand.u32 2147483647, %v501
    %vm512 = vcmp.eq.f32.partialorder %v511, 8.507059e+37
    %v513 = vand.u32 %v501, 2147483648
    %v514 = vor.u32 1.1754944e-38, %v513
    %v515 = vsel %vm512, %v514, %v510
    %v516 = vmul.f32 1.0, %v515
    %v517 = vtanh.pop %v477
    %v518 = vxor.u32 %v478, 2147483648
    %v519 = vmul.f32 %v518, 1.442695
    %v520 = vpow.pop %v519
    %v521 = vadd.f32 %v520, 1.0
    %v522 = vrcp.pop %v521
    %v523 = vmul.f32 %v521, %v522
    %v524 = vsub.f32 1.0, %v523
    %v525 = vmul.f32 %v522, %v524
    %v526 = vadd.f32 %v522, %v525
    %vm527 = vweird.f32 %v521
    %vm528 = vweird.f32 %v522
    %vm529 = vmor %vm527, %vm528
    %v530 = vsel %vm529, %v522, %v526
    %v531 = vand.u32 2147483647, %v521
    %vm532 = vcmp.eq.f32.partialorder %v531, 8.507059e+37
    %v533 = vand.u32 %v521, 2147483648
    %v534 = vor.u32 1.1754944e-38, %v533
    %v535 = vsel %vm532, %v534, %v530
    %v536 = vmul.f32 1.0, %v535
    %v537 = vld [vmem:[#allocation4] sm:$0xff]
    %v538 = vmul.f32 %v516, %v537
    %v539 = vmul.f32 %v497, %v517
    %v540 = vadd.f32 %v538, %v539
    %v541 = vtanh.pop %v540
    %v542 = vmul.f32 %v536, %v541
    %543 = vst [vmem:[#allocation4] sm:$0xff] %v540
    %544 = vst [vmem:[#allocation3] sm:$0xff] %v542
    %v545 = vld [vmem:[#allocation3] sm:$0xff]
    %v546 = vld [vmem:[#allocation3 + $0x8] sm:$0xff]
    %v547 = vld [vmem:[#allocation9] sm:$0xff]
    %v548 = vld [vmem:[#allocation9 + $0x8] sm:$0xff]
    %v549 = vld [vmem:[#allocation9 + $0x10] sm:$0xff]
    %v550 = vld [vmem:[#allocation9 + $0x18] sm:$0xff]
    %v551 = vld [vmem:[#allocation9 + $0x20] sm:$0xff]
    %v552 = vld [vmem:[#allocation9 + $0x28] sm:$0xff]
    %v553 = vld [vmem:[#allocation9 + $0x30] sm:$0xff]
    %v554 = vld [vmem:[#allocation9 + $0x38] sm:$0xff]
    %v555 = vld [vmem:[#allocation9 + $0x40] sm:$0xff]
    %v556 = vld [vmem:[#allocation9 + $0x48] sm:$0xff]
    %v557 = vld [vmem:[#allocation9 + $0x50] sm:$0xff]
    %v558 = vld [vmem:[#allocation9 + $0x58] sm:$0xff]
    %v559 = vld [vmem:[#allocation9 + $0x60] sm:$0xff]
    %v560 = vld [vmem:[#allocation9 + $0x68] sm:$0xff]
    %v561 = vld [vmem:[#allocation9 + $0x70] sm:$0xff]
    %v562 = vld [vmem:[#allocation9 + $0x78] sm:$0xff]
    %v563 = vld [vmem:[#allocation9 + $0x80] sm:$0xff]
    %v564 = vld [vmem:[#allocation9 + $0x88] sm:$0xff]
    %v565 = vld [vmem:[#allocation9 + $0x90] sm:$0xff]
    %v566 = vld [vmem:[#allocation9 + $0x98] sm:$0xff]
    %v567 = vld [vmem:[#allocation9 + $0xa0] sm:$0xff]
    %v568 = vld [vmem:[#allocation9 + $0xa8] sm:$0xff]
    %v569 = vld [vmem:[#allocation9 + $0xb0] sm:$0xff]
    %v570 = vld [vmem:[#allocation9 + $0xb8] sm:$0xff]
    %v571 = vld [vmem:[#allocation9 + $0xc0] sm:$0xff]
    %v572 = vld [vmem:[#allocation9 + $0xc8] sm:$0xff]
    %v573 = vld [vmem:[#allocation9 + $0xd0] sm:$0xff]
    %v574 = vld [vmem:[#allocation9 + $0xd8] sm:$0xff]
    %v575 = vld [vmem:[#allocation9 + $0xe0] sm:$0xff]
    %v576 = vld [vmem:[#allocation9 + $0xe8] sm:$0xff]
    %v577 = vld [vmem:[#allocation9 + $0xf0] sm:$0xff]
    %v578 = vld [vmem:[#allocation9 + $0xf8] sm:$0xff]
    %v579 = vld [vmem:[#allocation9 + $0x100] sm:$0xff]
    %v580 = vld [vmem:[#allocation9 + $0x108] sm:$0xff]
    %v581 = vld [vmem:[#allocation9 + $0x110] sm:$0xff]
    %v582 = vld [vmem:[#allocation9 + $0x118] sm:$0xff]
    %v583 = vld [vmem:[#allocation9 + $0x120] sm:$0xff]
    %v584 = vld [vmem:[#allocation9 + $0x128] sm:$0xff]
    %v585 = vld [vmem:[#allocation9 + $0x130] sm:$0xff]
    %v586 = vld [vmem:[#allocation9 + $0x138] sm:$0xff]
    %v587 = vld [vmem:[#allocation9 + $0x140] sm:$0xff]
    %v588 = vld [vmem:[#allocation9 + $0x148] sm:$0xff]
    %v589 = vld [vmem:[#allocation9 + $0x150] sm:$0xff]
    %v590 = vld [vmem:[#allocation9 + $0x158] sm:$0xff]
    %v591 = vld [vmem:[#allocation9 + $0x160] sm:$0xff]
    %v592 = vld [vmem:[#allocation9 + $0x168] sm:$0xff]
    %v593 = vld [vmem:[#allocation9 + $0x170] sm:$0xff]
    %v594 = vld [vmem:[#allocation9 + $0x178] sm:$0xff]
    %v595 = vld [vmem:[#allocation9 + $0x180] sm:$0xff]
    %v596 = vld [vmem:[#allocation9 + $0x188] sm:$0xff]
    %v597 = vld [vmem:[#allocation9 + $0x190] sm:$0xff]
    %v598 = vld [vmem:[#allocation9 + $0x198] sm:$0xff]
    %v599 = vld [vmem:[#allocation9 + $0x1a0] sm:$0xff]
    %v600 = vld [vmem:[#allocation9 + $0x1a8] sm:$0xff]
    %v601 = vld [vmem:[#allocation9 + $0x1b0] sm:$0xff]
    %v602 = vld [vmem:[#allocation9 + $0x1b8] sm:$0xff]
    %v603 = vld [vmem:[#allocation9 + $0x1c0] sm:$0xff]
    %v604 = vld [vmem:[#allocation9 + $0x1c8] sm:$0xff]
    %v605 = vld [vmem:[#allocation9 + $0x1d0] sm:$0xff]
    %v606 = vld [vmem:[#allocation9 + $0x1d8] sm:$0xff]
    %v607 = vld [vmem:[#allocation9 + $0x1e0] sm:$0xff]
    %v608 = vld [vmem:[#allocation9 + $0x1e8] sm:$0xff]
    %v609 = vld [vmem:[#allocation9 + $0x1f0] sm:$0xff]
    %v610 = vld [vmem:[#allocation9 + $0x1f8] sm:$0xff]
    %v611 = vld [vmem:[#allocation9 + $0x200] sm:$0xff]
    %v612 = vld [vmem:[#allocation9 + $0x208] sm:$0xff]
    %v613 = vld [vmem:[#allocation9 + $0x210] sm:$0xff]
    %v614 = vld [vmem:[#allocation9 + $0x218] sm:$0xff]
    %v615 = vld [vmem:[#allocation9 + $0x220] sm:$0xff]
    %v616 = vld [vmem:[#allocation9 + $0x228] sm:$0xff]
    %v617 = vld [vmem:[#allocation9 + $0x230] sm:$0xff]
    %v618 = vld [vmem:[#allocation9 + $0x238] sm:$0xff]
    %v619 = vld [vmem:[#allocation9 + $0x240] sm:$0xff]
    %v620 = vld [vmem:[#allocation9 + $0x248] sm:$0xff]
    %v621 = vld [vmem:[#allocation9 + $0x250] sm:$0xff]
    %v622 = vld [vmem:[#allocation9 + $0x258] sm:$0xff]
    %v623 = vld [vmem:[#allocation9 + $0x260] sm:$0xff]
    %v624 = vld [vmem:[#allocation9 + $0x268] sm:$0xff]
    %v625 = vld [vmem:[#allocation9 + $0x270] sm:$0xff]
    %v626 = vld [vmem:[#allocation9 + $0x278] sm:$0xff]
    %v627 = vld [vmem:[#allocation9 + $0x280] sm:$0xff]
    %v628 = vld [vmem:[#allocation9 + $0x288] sm:$0xff]
    %v629 = vld [vmem:[#allocation9 + $0x290] sm:$0xff]
    %v630 = vld [vmem:[#allocation9 + $0x298] sm:$0xff]
    %v631 = vld [vmem:[#allocation9 + $0x2a0] sm:$0xff]
    %v632 = vld [vmem:[#allocation9 + $0x2a8] sm:$0xff]
    %v633 = vld [vmem:[#allocation9 + $0x2b0] sm:$0xff]
    %v634 = vld [vmem:[#allocation9 + $0x2b8] sm:$0xff]
    %v635 = vld [vmem:[#allocation9 + $0x2c0] sm:$0xff]
    %v636 = vld [vmem:[#allocation9 + $0x2c8] sm:$0xff]
    %v637 = vld [vmem:[#allocation9 + $0x2d0] sm:$0xff]
    %v638 = vld [vmem:[#allocation9 + $0x2d8] sm:$0xff]
    %v639 = vld [vmem:[#allocation9 + $0x2e0] sm:$0xff]
    %v640 = vld [vmem:[#allocation9 + $0x2e8] sm:$0xff]
    %v641 = vld [vmem:[#allocation9 + $0x2f0] sm:$0xff]
    %v642 = vld [vmem:[#allocation9 + $0x2f8] sm:$0xff]
    %v643 = vld [vmem:[#allocation9 + $0x300] sm:$0xff]
    %v644 = vld [vmem:[#allocation9 + $0x308] sm:$0xff]
    %v645 = vld [vmem:[#allocation9 + $0x310] sm:$0xff]
    %v646 = vld [vmem:[#allocation9 + $0x318] sm:$0xff]
    %v647 = vld [vmem:[#allocation9 + $0x320] sm:$0xff]
    %v648 = vld [vmem:[#allocation9 + $0x328] sm:$0xff]
    %v649 = vld [vmem:[#allocation9 + $0x330] sm:$0xff]
    %v650 = vld [vmem:[#allocation9 + $0x338] sm:$0xff]
    %v651 = vld [vmem:[#allocation9 + $0x340] sm:$0xff]
    %v652 = vld [vmem:[#allocation9 + $0x348] sm:$0xff]
    %v653 = vld [vmem:[#allocation9 + $0x350] sm:$0xff]
    %v654 = vld [vmem:[#allocation9 + $0x358] sm:$0xff]
    %v655 = vld [vmem:[#allocation9 + $0x360] sm:$0xff]
    %v656 = vld [vmem:[#allocation9 + $0x368] sm:$0xff]
    %v657 = vld [vmem:[#allocation9 + $0x370] sm:$0xff]
    %v658 = vld [vmem:[#allocation9 + $0x378] sm:$0xff]
    %v659 = vld [vmem:[#allocation9 + $0x380] sm:$0xff]
    %v660 = vld [vmem:[#allocation9 + $0x388] sm:$0xff]
    %v661 = vld [vmem:[#allocation9 + $0x390] sm:$0xff]
    %v662 = vld [vmem:[#allocation9 + $0x398] sm:$0xff]
    %v663 = vld [vmem:[#allocation9 + $0x3a0] sm:$0xff]
    %v664 = vld [vmem:[#allocation9 + $0x3a8] sm:$0xff]
    %v665 = vld [vmem:[#allocation9 + $0x3b0] sm:$0xff]
    %v666 = vld [vmem:[#allocation9 + $0x3b8] sm:$0xff]
    %v667 = vld [vmem:[#allocation9 + $0x3c0] sm:$0xff]
    %v668 = vld [vmem:[#allocation9 + $0x3c8] sm:$0xff]
    %v669 = vld [vmem:[#allocation9 + $0x3d0] sm:$0xff]
    %v670 = vld [vmem:[#allocation9 + $0x3d8] sm:$0xff]
    %v671 = vld [vmem:[#allocation9 + $0x3e0] sm:$0xff]
    %v672 = vld [vmem:[#allocation9 + $0x3e8] sm:$0xff]
    %v673 = vld [vmem:[#allocation9 + $0x3f0] sm:$0xff]
    %v674 = vld [vmem:[#allocation9 + $0x3f8] sm:$0xff]
    %v675 = vld [vmem:[%s5] sm:$0xf]
    %v677 = vperm.slane %v675, 0
    %v678 = vperm.slane %v675, 1
    %v679 = vperm.slane %v675, 2
    %v680 = vperm.slane %v675, 3
    %685 = vmatpush.msra.mxu0 %v607
    %686 = vmatpush.msra.mxu0 %v603
    %687 = vmatpush.msra.mxu0 %v599
    %688 = vmatpush.msra.mxu0 %v595
    %689 = vmatpush.msra.mxu0 %v591
    %690 = vmatpush.msra.mxu0 %v587
    %691 = vmatpush.msra.mxu0 %v583
    %692 = vmatpush.msra.mxu0 %v579
    %693 = vmatpush.msra.mxu0 %v575
    %694 = vmatpush.msra.mxu0 %v571
    %695 = vmatpush.msra.mxu0 %v567
    %696 = vmatpush.msra.mxu0 %v563
    %697 = vmatpush.msra.mxu0 %v559
    %698 = vmatpush.msra.mxu0 %v555
    %699 = vmatpush.msra.mxu0 %v551
    %700 = vmatpush.msra.mxu0 %v547
    %701 = vmatmul.f32.gmra.mxu0 %v545
    %v702 = vpop.f32.mrf.mxu0
    %v703 = vadd.f32 %v677, %v702
    %704 = vdwg.mxu0
    %705 = vmatpush.msra.mxu0 %v671
    %706 = vmatpush.msra.mxu0 %v667
    %707 = vmatpush.msra.mxu0 %v663
    %708 = vmatpush.msra.mxu0 %v659
    %709 = vmatpush.msra.mxu0 %v655
    %710 = vmatpush.msra.mxu0 %v651
    %711 = vmatpush.msra.mxu0 %v647
    %712 = vmatpush.msra.mxu0 %v643
    %713 = vmatpush.msra.mxu0 %v639
    %714 = vmatpush.msra.mxu0 %v635
    %715 = vmatpush.msra.mxu0 %v631
    %716 = vmatpush.msra.mxu0 %v627
    %717 = vmatpush.msra.mxu0 %v623
    %718 = vmatpush.msra.mxu0 %v619
    %719 = vmatpush.msra.mxu0 %v615
    %720 = vmatpush.msra.mxu0 %v611
    %721 = vmatmul.f32.gmra.mxu0 %v546
    %v722 = vpop.f32.mrf.mxu0
    %v723 = vadd.f32 %v703, %v722
    %724 = vdwg.mxu0
    %725 = vmatpush.msra.mxu0 %v608
    %726 = vmatpush.msra.mxu0 %v604
    %727 = vmatpush.msra.mxu0 %v600
    %728 = vmatpush.msra.mxu0 %v596
    %729 = vmatpush.msra.mxu0 %v592
    %730 = vmatpush.msra.mxu0 %v588
    %731 = vmatpush.msra.mxu0 %v584
    %732 = vmatpush.msra.mxu0 %v580
    %733 = vmatpush.msra.mxu0 %v576
    %734 = vmatpush.msra.mxu0 %v572
    %735 = vmatpush.msra.mxu0 %v568
    %736 = vmatpush.msra.mxu0 %v564
    %737 = vmatpush.msra.mxu0 %v560
    %738 = vmatpush.msra.mxu0 %v556
    %739 = vmatpush.msra.mxu0 %v552
    %740 = vmatpush.msra.mxu0 %v548
    %741 = vmatmul.f32.gmra.mxu0 %v545
    %v742 = vpop.f32.mrf.mxu0
    %v743 = vadd.f32 %v678, %v742
    %744 = vdwg.mxu0
    %745 = vmatpush.msra.mxu0 %v672
    %746 = vmatpush.msra.mxu0 %v668
    %747 = vmatpush.msra.mxu0 %v664
    %748 = vmatpush.msra.mxu0 %v660
    %749 = vmatpush.msra.mxu0 %v656
    %750 = vmatpush.msra.mxu0 %v652
    %751 = vmatpush.msra.mxu0 %v648
    %752 = vmatpush.msra.mxu0 %v644
    %753 = vmatpush.msra.mxu0 %v640
    %754 = vmatpush.msra.mxu0 %v636
    %755 = vmatpush.msra.mxu0 %v632
    %756 = vmatpush.msra.mxu0 %v628
    %757 = vmatpush.msra.mxu0 %v624
    %758 = vmatpush.msra.mxu0 %v620
    %759 = vmatpush.msra.mxu0 %v616
    %760 = vmatpush.msra.mxu0 %v612
    %761 = vmatmul.f32.gmra.mxu0 %v546
    %v762 = vpop.f32.mrf.mxu0
    %v763 = vadd.f32 %v743, %v762
    %764 = vdwg.mxu0
    %765 = vmatpush.msra.mxu0 %v609
    %766 = vmatpush.msra.mxu0 %v605
    %767 = vmatpush.msra.mxu0 %v601
    %768 = vmatpush.msra.mxu0 %v597
    %769 = vmatpush.msra.mxu0 %v593
    %770 = vmatpush.msra.mxu0 %v589
    %771 = vmatpush.msra.mxu0 %v585
    %772 = vmatpush.msra.mxu0 %v581
    %773 = vmatpush.msra.mxu0 %v577
    %774 = vmatpush.msra.mxu0 %v573
    %775 = vmatpush.msra.mxu0 %v569
    %776 = vmatpush.msra.mxu0 %v565
    %777 = vmatpush.msra.mxu0 %v561
    %778 = vmatpush.msra.mxu0 %v557
    %779 = vmatpush.msra.mxu0 %v553
    %780 = vmatpush.msra.mxu0 %v549
    %781 = vmatmul.f32.gmra.mxu0 %v545
    %v782 = vpop.f32.mrf.mxu0
    %v783 = vadd.f32 %v679, %v782
    %784 = vdwg.mxu0
    %785 = vmatpush.msra.mxu0 %v673
    %786 = vmatpush.msra.mxu0 %v669
    %787 = vmatpush.msra.mxu0 %v665
    %788 = vmatpush.msra.mxu0 %v661
    %789 = vmatpush.msra.mxu0 %v657
    %790 = vmatpush.msra.mxu0 %v653
    %791 = vmatpush.msra.mxu0 %v649
    %792 = vmatpush.msra.mxu0 %v645
    %793 = vmatpush.msra.mxu0 %v641
    %794 = vmatpush.msra.mxu0 %v637
    %795 = vmatpush.msra.mxu0 %v633
    %796 = vmatpush.msra.mxu0 %v629
    %797 = vmatpush.msra.mxu0 %v625
    %798 = vmatpush.msra.mxu0 %v621
    %799 = vmatpush.msra.mxu0 %v617
    %800 = vmatpush.msra.mxu0 %v613
    %801 = vmatmul.f32.gmra.mxu0 %v546
    %v802 = vpop.f32.mrf.mxu0
    %v803 = vadd.f32 %v783, %v802
    %804 = vdwg.mxu0
    %805 = vmatpush.msra.mxu0 %v610
    %806 = vmatpush.msra.mxu0 %v606
    %807 = vmatpush.msra.mxu0 %v602
    %808 = vmatpush.msra.mxu0 %v598
    %809 = vmatpush.msra.mxu0 %v594
    %810 = vmatpush.msra.mxu0 %v590
    %811 = vmatpush.msra.mxu0 %v586
    %812 = vmatpush.msra.mxu0 %v582
    %813 = vmatpush.msra.mxu0 %v578
    %814 = vmatpush.msra.mxu0 %v574
    %815 = vmatpush.msra.mxu0 %v570
    %816 = vmatpush.msra.mxu0 %v566
    %817 = vmatpush.msra.mxu0 %v562
    %818 = vmatpush.msra.mxu0 %v558
    %819 = vmatpush.msra.mxu0 %v554
    %820 = vmatpush.msra.mxu0 %v550
    %821 = vmatmul.f32.gmra.mxu0 %v545
    %v822 = vpop.f32.mrf.mxu0
    %v823 = vadd.f32 %v680, %v822
    %824 = vdwg.mxu0
    %825 = vmatpush.msra.mxu0 %v674
    %826 = vmatpush.msra.mxu0 %v670
    %827 = vmatpush.msra.mxu0 %v666
    %828 = vmatpush.msra.mxu0 %v662
    %829 = vmatpush.msra.mxu0 %v658
    %830 = vmatpush.msra.mxu0 %v654
    %831 = vmatpush.msra.mxu0 %v650
    %832 = vmatpush.msra.mxu0 %v646
    %833 = vmatpush.msra.mxu0 %v642
    %834 = vmatpush.msra.mxu0 %v638
    %835 = vmatpush.msra.mxu0 %v634
    %836 = vmatpush.msra.mxu0 %v630
    %837 = vmatpush.msra.mxu0 %v626
    %838 = vmatpush.msra.mxu0 %v622
    %839 = vmatpush.msra.mxu0 %v618
    %840 = vmatpush.msra.mxu0 %v614
    %841 = vmatmul.f32.gmra.mxu0 %v546
    %v842 = vpop.f32.mrf.mxu0
    %v843 = vadd.f32 %v823, %v842
    %844 = vdwg.mxu0
    %v845 = vxor.u32 %v723, 2147483648
    %v846 = vmul.f32 %v845, 1.442695
    %v847 = vpow.pop %v846
    %v848 = vadd.f32 %v847, 1.0
    %v849 = vrcp.pop %v848
    %v850 = vmul.f32 %v848, %v849
    %v851 = vsub.f32 1.0, %v850
    %v852 = vmul.f32 %v849, %v851
    %v853 = vadd.f32 %v849, %v852
    %vm854 = vweird.f32 %v848
    %vm855 = vweird.f32 %v849
    %vm856 = vmor %vm854, %vm855
    %v857 = vsel %vm856, %v849, %v853
    %v858 = vand.u32 2147483647, %v848
    %vm859 = vcmp.eq.f32.partialorder %v858, 8.507059e+37
    %v860 = vand.u32 %v848, 2147483648
    %v861 = vor.u32 1.1754944e-38, %v860
    %v862 = vsel %vm859, %v861, %v857
    %v863 = vmul.f32 1.0, %v862
    %v864 = vxor.u32 %v763, 2147483648
    %v865 = vmul.f32 %v864, 1.442695
    %v866 = vpow.pop %v865
    %v867 = vadd.f32 %v866, 1.0
    %v868 = vrcp.pop %v867
    %v869 = vmul.f32 %v867, %v868
    %v870 = vsub.f32 1.0, %v869
    %v871 = vmul.f32 %v868, %v870
    %v872 = vadd.f32 %v868, %v871
    %vm873 = vweird.f32 %v867
    %vm874 = vweird.f32 %v868
    %vm875 = vmor %vm873, %vm874
    %v876 = vsel %vm875, %v868, %v872
    %v877 = vand.u32 2147483647, %v867
    %vm878 = vcmp.eq.f32.partialorder %v877, 8.507059e+37
    %v879 = vand.u32 %v867, 2147483648
    %v880 = vor.u32 1.1754944e-38, %v879
    %v881 = vsel %vm878, %v880, %v876
    %v882 = vmul.f32 1.0, %v881
    %v883 = vtanh.pop %v803
    %v884 = vxor.u32 %v843, 2147483648
    %v885 = vmul.f32 %v884, 1.442695
    %v886 = vpow.pop %v885
    %v887 = vadd.f32 %v886, 1.0
    %v888 = vrcp.pop %v887
    %v889 = vmul.f32 %v887, %v888
    %v890 = vsub.f32 1.0, %v889
    %v891 = vmul.f32 %v888, %v890
    %v892 = vadd.f32 %v888, %v891
    %vm893 = vweird.f32 %v887
    %vm894 = vweird.f32 %v888
    %vm895 = vmor %vm893, %vm894
    %v896 = vsel %vm895, %v888, %v892
    %v897 = vand.u32 2147483647, %v887
    %vm898 = vcmp.eq.f32.partialorder %v897, 8.507059e+37
    %v899 = vand.u32 %v887, 2147483648
    %v900 = vor.u32 1.1754944e-38, %v899
    %v901 = vsel %vm898, %v900, %v896
    %v902 = vmul.f32 1.0, %v901
    %v903 = vld [vmem:[#allocation5] sm:$0xff]
    %v904 = vmul.f32 %v882, %v903
    %v905 = vmul.f32 %v863, %v883
    %v906 = vadd.f32 %v904, %v905
    %v907 = vtanh.pop %v906
    %v908 = vmul.f32 %v902, %v907
    %909 = vst [vmem:[#allocation5] sm:$0xff] %v906
    %910 = vst [vmem:[#allocation3 + $0x8] sm:$0xff] %v908
    %s911 = smul.u32 1, 4
    %s912 = smul.addr %s911, 8
    %s913 = scalar_lea.vmem [#allocation2], %s912
    %v914 = vld [vmem:[%s913] sm:$0xff]
    %v915 = vld [vmem:[%s913 + $0x8] sm:$0xff]
    %v916 = vld [vmem:[%s913 + $0x10] sm:$0xff]
    %v917 = vld [vmem:[%s913 + $0x18] sm:$0xff]
    %v918 = vld [vmem:[#allocation3] sm:$0xff]
    %v919 = vld [vmem:[#allocation6] sm:$0xff]
    %v920 = vld [vmem:[#allocation6 + $0x8] sm:$0xff]
    %v921 = vld [vmem:[#allocation6 + $0x10] sm:$0xff]
    %v922 = vld [vmem:[#allocation6 + $0x18] sm:$0xff]
    %v923 = vld [vmem:[#allocation6 + $0x20] sm:$0xff]
    %v924 = vld [vmem:[#allocation6 + $0x28] sm:$0xff]
    %v925 = vld [vmem:[#allocation6 + $0x30] sm:$0xff]
    %v926 = vld [vmem:[#allocation6 + $0x38] sm:$0xff]
    %v927 = vld [vmem:[#allocation6 + $0x40] sm:$0xff]
    %v928 = vld [vmem:[#allocation6 + $0x48] sm:$0xff]
    %v929 = vld [vmem:[#allocation6 + $0x50] sm:$0xff]
    %v930 = vld [vmem:[#allocation6 + $0x58] sm:$0xff]
    %v931 = vld [vmem:[#allocation6 + $0x60] sm:$0xff]
    %v932 = vld [vmem:[#allocation6 + $0x68] sm:$0xff]
    %v933 = vld [vmem:[#allocation6 + $0x70] sm:$0xff]
    %v934 = vld [vmem:[#allocation6 + $0x78] sm:$0xff]
    %v935 = vld [vmem:[#allocation6 + $0x80] sm:$0xff]
    %v936 = vld [vmem:[#allocation6 + $0x88] sm:$0xff]
    %v937 = vld [vmem:[#allocation6 + $0x90] sm:$0xff]
    %v938 = vld [vmem:[#allocation6 + $0x98] sm:$0xff]
    %v939 = vld [vmem:[#allocation6 + $0xa0] sm:$0xff]
    %v940 = vld [vmem:[#allocation6 + $0xa8] sm:$0xff]
    %v941 = vld [vmem:[#allocation6 + $0xb0] sm:$0xff]
    %v942 = vld [vmem:[#allocation6 + $0xb8] sm:$0xff]
    %v943 = vld [vmem:[#allocation6 + $0xc0] sm:$0xff]
    %v944 = vld [vmem:[#allocation6 + $0xc8] sm:$0xff]
    %v945 = vld [vmem:[#allocation6 + $0xd0] sm:$0xff]
    %v946 = vld [vmem:[#allocation6 + $0xd8] sm:$0xff]
    %v947 = vld [vmem:[#allocation6 + $0xe0] sm:$0xff]
    %v948 = vld [vmem:[#allocation6 + $0xe8] sm:$0xff]
    %v949 = vld [vmem:[#allocation6 + $0xf0] sm:$0xff]
    %v950 = vld [vmem:[#allocation6 + $0xf8] sm:$0xff]
    %v951 = vld [vmem:[#allocation6 + $0x100] sm:$0xff]
    %v952 = vld [vmem:[#allocation6 + $0x108] sm:$0xff]
    %v953 = vld [vmem:[#allocation6 + $0x110] sm:$0xff]
    %v954 = vld [vmem:[#allocation6 + $0x118] sm:$0xff]
    %v955 = vld [vmem:[#allocation6 + $0x120] sm:$0xff]
    %v956 = vld [vmem:[#allocation6 + $0x128] sm:$0xff]
    %v957 = vld [vmem:[#allocation6 + $0x130] sm:$0xff]
    %v958 = vld [vmem:[#allocation6 + $0x138] sm:$0xff]
    %v959 = vld [vmem:[#allocation6 + $0x140] sm:$0xff]
    %v960 = vld [vmem:[#allocation6 + $0x148] sm:$0xff]
    %v961 = vld [vmem:[#allocation6 + $0x150] sm:$0xff]
    %v962 = vld [vmem:[#allocation6 + $0x158] sm:$0xff]
    %v963 = vld [vmem:[#allocation6 + $0x160] sm:$0xff]
    %v964 = vld [vmem:[#allocation6 + $0x168] sm:$0xff]
    %v965 = vld [vmem:[#allocation6 + $0x170] sm:$0xff]
    %v966 = vld [vmem:[#allocation6 + $0x178] sm:$0xff]
    %v967 = vld [vmem:[#allocation6 + $0x180] sm:$0xff]
    %v968 = vld [vmem:[#allocation6 + $0x188] sm:$0xff]
    %v969 = vld [vmem:[#allocation6 + $0x190] sm:$0xff]
    %v970 = vld [vmem:[#allocation6 + $0x198] sm:$0xff]
    %v971 = vld [vmem:[#allocation6 + $0x1a0] sm:$0xff]
    %v972 = vld [vmem:[#allocation6 + $0x1a8] sm:$0xff]
    %v973 = vld [vmem:[#allocation6 + $0x1b0] sm:$0xff]
    %v974 = vld [vmem:[#allocation6 + $0x1b8] sm:$0xff]
    %v975 = vld [vmem:[#allocation6 + $0x1c0] sm:$0xff]
    %v976 = vld [vmem:[#allocation6 + $0x1c8] sm:$0xff]
    %v977 = vld [vmem:[#allocation6 + $0x1d0] sm:$0xff]
    %v978 = vld [vmem:[#allocation6 + $0x1d8] sm:$0xff]
    %v979 = vld [vmem:[#allocation6 + $0x1e0] sm:$0xff]
    %v980 = vld [vmem:[#allocation6 + $0x1e8] sm:$0xff]
    %v981 = vld [vmem:[#allocation6 + $0x1f0] sm:$0xff]
    %v982 = vld [vmem:[#allocation6 + $0x1f8] sm:$0xff]
    %983 = vmatpush.msra.mxu0 %v979
    %984 = vmatpush.msra.mxu0 %v975
    %985 = vmatpush.msra.mxu0 %v971
    %986 = vmatpush.msra.mxu0 %v967
    %987 = vmatpush.msra.mxu0 %v963
    %988 = vmatpush.msra.mxu0 %v959
    %989 = vmatpush.msra.mxu0 %v955
    %990 = vmatpush.msra.mxu0 %v951
    %991 = vmatpush.msra.mxu0 %v947
    %992 = vmatpush.msra.mxu0 %v943
    %993 = vmatpush.msra.mxu0 %v939
    %994 = vmatpush.msra.mxu0 %v935
    %995 = vmatpush.msra.mxu0 %v931
    %996 = vmatpush.msra.mxu0 %v927
    %997 = vmatpush.msra.mxu0 %v923
    %998 = vmatpush.msra.mxu0 %v919
    %999 = vmatmul.f32.gmra.mxu0 %v918
    %v1000 = vpop.f32.mrf.mxu0
    %v1001 = vadd.f32 0.0, %v1000
    %1002 = vdwg.mxu0
    %1003 = vmatpush.msra.mxu0 %v980
    %1004 = vmatpush.msra.mxu0 %v976
    %1005 = vmatpush.msra.mxu0 %v972
    %1006 = vmatpush.msra.mxu0 %v968
    %1007 = vmatpush.msra.mxu0 %v964
    %1008 = vmatpush.msra.mxu0 %v960
    %1009 = vmatpush.msra.mxu0 %v956
    %1010 = vmatpush.msra.mxu0 %v952
    %1011 = vmatpush.msra.mxu0 %v948
    %1012 = vmatpush.msra.mxu0 %v944
    %1013 = vmatpush.msra.mxu0 %v940
    %1014 = vmatpush.msra.mxu0 %v936
    %1015 = vmatpush.msra.mxu0 %v932
    %1016 = vmatpush.msra.mxu0 %v928
    %1017 = vmatpush.msra.mxu0 %v924
    %1018 = vmatpush.msra.mxu0 %v920
    %1019 = vmatmul.f32.gmra.mxu0 %v918
    %v1020 = vpop.f32.mrf.mxu0
    %v1021 = vadd.f32 0.0, %v1020
    %1022 = vdwg.mxu0
    %1023 = vmatpush.msra.mxu0 %v981
    %1024 = vmatpush.msra.mxu0 %v977
    %1025 = vmatpush.msra.mxu0 %v973
    %1026 = vmatpush.msra.mxu0 %v969
    %1027 = vmatpush.msra.mxu0 %v965
    %1028 = vmatpush.msra.mxu0 %v961
    %1029 = vmatpush.msra.mxu0 %v957
    %1030 = vmatpush.msra.mxu0 %v953
    %1031 = vmatpush.msra.mxu0 %v949
    %1032 = vmatpush.msra.mxu0 %v945
    %1033 = vmatpush.msra.mxu0 %v941
    %1034 = vmatpush.msra.mxu0 %v937
    %1035 = vmatpush.msra.mxu0 %v933
    %1036 = vmatpush.msra.mxu0 %v929
    %1037 = vmatpush.msra.mxu0 %v925
    %1038 = vmatpush.msra.mxu0 %v921
    %1039 = vmatmul.f32.gmra.mxu0 %v918
    %v1040 = vpop.f32.mrf.mxu0
    %v1041 = vadd.f32 0.0, %v1040
    %1042 = vdwg.mxu0
    %1043 = vmatpush.msra.mxu0 %v982
    %1044 = vmatpush.msra.mxu0 %v978
    %1045 = vmatpush.msra.mxu0 %v974
    %1046 = vmatpush.msra.mxu0 %v970
    %1047 = vmatpush.msra.mxu0 %v966
    %1048 = vmatpush.msra.mxu0 %v962
    %1049 = vmatpush.msra.mxu0 %v958
    %1050 = vmatpush.msra.mxu0 %v954
    %1051 = vmatpush.msra.mxu0 %v950
    %1052 = vmatpush.msra.mxu0 %v946
    %1053 = vmatpush.msra.mxu0 %v942
    %1054 = vmatpush.msra.mxu0 %v938
    %1055 = vmatpush.msra.mxu0 %v934
    %1056 = vmatpush.msra.mxu0 %v930
    %1057 = vmatpush.msra.mxu0 %v926
    %1058 = vmatpush.msra.mxu0 %v922
    %1059 = vmatmul.f32.gmra.mxu0 %v918
    %v1060 = vpop.f32.mrf.mxu0
    %v1061 = vadd.f32 0.0, %v1060
    %1062 = vdwg.mxu0
    %v1063 = vadd.f32 %v914, %v1001
    %v1064 = vadd.f32 %v915, %v1021
    %v1065 = vadd.f32 %v916, %v1041
    %v1066 = vadd.f32 %v917, %v1061
    %v1067 = vxor.u32 %v1063, 2147483648
    %v1068 = vmul.f32 %v1067, 1.442695
    %v1069 = vpow.pop %v1068
    %v1070 = vadd.f32 %v1069, 1.0
    %v1071 = vrcp.pop %v1070
    %v1072 = vmul.f32 %v1070, %v1071
    %v1073 = vsub.f32 1.0, %v1072
    %v1074 = vmul.f32 %v1071, %v1073
    %v1075 = vadd.f32 %v1071, %v1074
    %vm1076 = vweird.f32 %v1070
    %vm1077 = vweird.f32 %v1071
    %vm1078 = vmor %vm1076, %vm1077
    %v1079 = vsel %vm1078, %v1071, %v1075
    %v1080 = vand.u32 2147483647, %v1070
    %vm1081 = vcmp.eq.f32.partialorder %v1080, 8.507059e+37
    %v1082 = vand.u32 %v1070, 2147483648
    %v1083 = vor.u32 1.1754944e-38, %v1082
    %v1084 = vsel %vm1081, %v1083, %v1079
    %v1085 = vmul.f32 1.0, %v1084
    %v1086 = vxor.u32 %v1064, 2147483648
    %v1087 = vmul.f32 %v1086, 1.442695
    %v1088 = vpow.pop %v1087
    %v1089 = vadd.f32 %v1088, 1.0
    %v1090 = vrcp.pop %v1089
    %v1091 = vmul.f32 %v1089, %v1090
    %v1092 = vsub.f32 1.0, %v1091
    %v1093 = vmul.f32 %v1090, %v1092
    %v1094 = vadd.f32 %v1090, %v1093
    %vm1095 = vweird.f32 %v1089
    %vm1096 = vweird.f32 %v1090
    %vm1097 = vmor %vm1095, %vm1096
    %v1098 = vsel %vm1097, %v1090, %v1094
    %v1099 = vand.u32 2147483647, %v1089
    %vm1100 = vcmp.eq.f32.partialorder %v1099, 8.507059e+37
    %v1101 = vand.u32 %v1089, 2147483648
    %v1102 = vor.u32 1.1754944e-38, %v1101
    %v1103 = vsel %vm1100, %v1102, %v1098
    %v1104 = vmul.f32 1.0, %v1103
    %v1105 = vtanh.pop %v1065
    %v1106 = vxor.u32 %v1066, 2147483648
    %v1107 = vmul.f32 %v1106, 1.442695
    %v1108 = vpow.pop %v1107
    %v1109 = vadd.f32 %v1108, 1.0
    %v1110 = vrcp.pop %v1109
    %v1111 = vmul.f32 %v1109, %v1110
    %v1112 = vsub.f32 1.0, %v1111
    %v1113 = vmul.f32 %v1110, %v1112
    %v1114 = vadd.f32 %v1110, %v1113
    %vm1115 = vweird.f32 %v1109
    %vm1116 = vweird.f32 %v1110
    %vm1117 = vmor %vm1115, %vm1116
    %v1118 = vsel %vm1117, %v1110, %v1114
    %v1119 = vand.u32 2147483647, %v1109
    %vm1120 = vcmp.eq.f32.partialorder %v1119, 8.507059e+37
    %v1121 = vand.u32 %v1109, 2147483648
    %v1122 = vor.u32 1.1754944e-38, %v1121
    %v1123 = vsel %vm1120, %v1122, %v1118
    %v1124 = vmul.f32 1.0, %v1123
    %v1125 = vld [vmem:[#allocation4] sm:$0xff]
    %v1126 = vmul.f32 %v1104, %v1125
    %v1127 = vmul.f32 %v1085, %v1105
    %v1128 = vadd.f32 %v1126, %v1127
    %v1129 = vtanh.pop %v1128
    %v1130 = vmul.f32 %v1124, %v1129
    %1131 = vst [vmem:[#allocation4] sm:$0xff] %v1128
    %1132 = vst [vmem:[#allocation3] sm:$0xff] %v1130
    %v1133 = vld [vmem:[#allocation3] sm:$0xff]
    %v1134 = vld [vmem:[#allocation3 + $0x8] sm:$0xff]
    %v1135 = vld [vmem:[#allocation9] sm:$0xff]
    %v1136 = vld [vmem:[#allocation9 + $0x8] sm:$0xff]
    %v1137 = vld [vmem:[#allocation9 + $0x10] sm:$0xff]
    %v1138 = vld [vmem:[#allocation9 + $0x18] sm:$0xff]
    %v1139 = vld [vmem:[#allocation9 + $0x20] sm:$0xff]
    %v1140 = vld [vmem:[#allocation9 + $0x28] sm:$0xff]
    %v1141 = vld [vmem:[#allocation9 + $0x30] sm:$0xff]
    %v1142 = vld [vmem:[#allocation9 + $0x38] sm:$0xff]
    %v1143 = vld [vmem:[#allocation9 + $0x40] sm:$0xff]
    %v1144 = vld [vmem:[#allocation9 + $0x48] sm:$0xff]
    %v1145 = vld [vmem:[#allocation9 + $0x50] sm:$0xff]
    %v1146 = vld [vmem:[#allocation9 + $0x58] sm:$0xff]
    %v1147 = vld [vmem:[#allocation9 + $0x60] sm:$0xff]
    %v1148 = vld [vmem:[#allocation9 + $0x68] sm:$0xff]
    %v1149 = vld [vmem:[#allocation9 + $0x70] sm:$0xff]
    %v1150 = vld [vmem:[#allocation9 + $0x78] sm:$0xff]
    %v1151 = vld [vmem:[#allocation9 + $0x80] sm:$0xff]
    %v1152 = vld [vmem:[#allocation9 + $0x88] sm:$0xff]
    %v1153 = vld [vmem:[#allocation9 + $0x90] sm:$0xff]
    %v1154 = vld [vmem:[#allocation9 + $0x98] sm:$0xff]
    %v1155 = vld [vmem:[#allocation9 + $0xa0] sm:$0xff]
    %v1156 = vld [vmem:[#allocation9 + $0xa8] sm:$0xff]
    %v1157 = vld [vmem:[#allocation9 + $0xb0] sm:$0xff]
    %v1158 = vld [vmem:[#allocation9 + $0xb8] sm:$0xff]
    %v1159 = vld [vmem:[#allocation9 + $0xc0] sm:$0xff]
    %v1160 = vld [vmem:[#allocation9 + $0xc8] sm:$0xff]
    %v1161 = vld [vmem:[#allocation9 + $0xd0] sm:$0xff]
    %v1162 = vld [vmem:[#allocation9 + $0xd8] sm:$0xff]
    %v1163 = vld [vmem:[#allocation9 + $0xe0] sm:$0xff]
    %v1164 = vld [vmem:[#allocation9 + $0xe8] sm:$0xff]
    %v1165 = vld [vmem:[#allocation9 + $0xf0] sm:$0xff]
    %v1166 = vld [vmem:[#allocation9 + $0xf8] sm:$0xff]
    %v1167 = vld [vmem:[#allocation9 + $0x100] sm:$0xff]
    %v1168 = vld [vmem:[#allocation9 + $0x108] sm:$0xff]
    %v1169 = vld [vmem:[#allocation9 + $0x110] sm:$0xff]
    %v1170 = vld [vmem:[#allocation9 + $0x118] sm:$0xff]
    %v1171 = vld [vmem:[#allocation9 + $0x120] sm:$0xff]
    %v1172 = vld [vmem:[#allocation9 + $0x128] sm:$0xff]
    %v1173 = vld [vmem:[#allocation9 + $0x130] sm:$0xff]
    %v1174 = vld [vmem:[#allocation9 + $0x138] sm:$0xff]
    %v1175 = vld [vmem:[#allocation9 + $0x140] sm:$0xff]
    %v1176 = vld [vmem:[#allocation9 + $0x148] sm:$0xff]
    %v1177 = vld [vmem:[#allocation9 + $0x150] sm:$0xff]
    %v1178 = vld [vmem:[#allocation9 + $0x158] sm:$0xff]
    %v1179 = vld [vmem:[#allocation9 + $0x160] sm:$0xff]
    %v1180 = vld [vmem:[#allocation9 + $0x168] sm:$0xff]
    %v1181 = vld [vmem:[#allocation9 + $0x170] sm:$0xff]
    %v1182 = vld [vmem:[#allocation9 + $0x178] sm:$0xff]
    %v1183 = vld [vmem:[#allocation9 + $0x180] sm:$0xff]
    %v1184 = vld [vmem:[#allocation9 + $0x188] sm:$0xff]
    %v1185 = vld [vmem:[#allocation9 + $0x190] sm:$0xff]
    %v1186 = vld [vmem:[#allocation9 + $0x198] sm:$0xff]
    %v1187 = vld [vmem:[#allocation9 + $0x1a0] sm:$0xff]
    %v1188 = vld [vmem:[#allocation9 + $0x1a8] sm:$0xff]
    %v1189 = vld [vmem:[#allocation9 + $0x1b0] sm:$0xff]
    %v1190 = vld [vmem:[#allocation9 + $0x1b8] sm:$0xff]
    %v1191 = vld [vmem:[#allocation9 + $0x1c0] sm:$0xff]
    %v1192 = vld [vmem:[#allocation9 + $0x1c8] sm:$0xff]
    %v1193 = vld [vmem:[#allocation9 + $0x1d0] sm:$0xff]
    %v1194 = vld [vmem:[#allocation9 + $0x1d8] sm:$0xff]
    %v1195 = vld [vmem:[#allocation9 + $0x1e0] sm:$0xff]
    %v1196 = vld [vmem:[#allocation9 + $0x1e8] sm:$0xff]
    %v1197 = vld [vmem:[#allocation9 + $0x1f0] sm:$0xff]
    %v1198 = vld [vmem:[#allocation9 + $0x1f8] sm:$0xff]
    %v1199 = vld [vmem:[#allocation9 + $0x200] sm:$0xff]
    %v1200 = vld [vmem:[#allocation9 + $0x208] sm:$0xff]
    %v1201 = vld [vmem:[#allocation9 + $0x210] sm:$0xff]
    %v1202 = vld [vmem:[#allocation9 + $0x218] sm:$0xff]
    %v1203 = vld [vmem:[#allocation9 + $0x220] sm:$0xff]
    %v1204 = vld [vmem:[#allocation9 + $0x228] sm:$0xff]
    %v1205 = vld [vmem:[#allocation9 + $0x230] sm:$0xff]
    %v1206 = vld [vmem:[#allocation9 + $0x238] sm:$0xff]
    %v1207 = vld [vmem:[#allocation9 + $0x240] sm:$0xff]
    %v1208 = vld [vmem:[#allocation9 + $0x248] sm:$0xff]
    %v1209 = vld [vmem:[#allocation9 + $0x250] sm:$0xff]
    %v1210 = vld [vmem:[#allocation9 + $0x258] sm:$0xff]
    %v1211 = vld [vmem:[#allocation9 + $0x260] sm:$0xff]
    %v1212 = vld [vmem:[#allocation9 + $0x268] sm:$0xff]
    %v1213 = vld [vmem:[#allocation9 + $0x270] sm:$0xff]
    %v1214 = vld [vmem:[#allocation9 + $0x278] sm:$0xff]
    %v1215 = vld [vmem:[#allocation9 + $0x280] sm:$0xff]
    %v1216 = vld [vmem:[#allocation9 + $0x288] sm:$0xff]
    %v1217 = vld [vmem:[#allocation9 + $0x290] sm:$0xff]
    %v1218 = vld [vmem:[#allocation9 + $0x298] sm:$0xff]
    %v1219 = vld [vmem:[#allocation9 + $0x2a0] sm:$0xff]
    %v1220 = vld [vmem:[#allocation9 + $0x2a8] sm:$0xff]
    %v1221 = vld [vmem:[#allocation9 + $0x2b0] sm:$0xff]
    %v1222 = vld [vmem:[#allocation9 + $0x2b8] sm:$0xff]
    %v1223 = vld [vmem:[#allocation9 + $0x2c0] sm:$0xff]
    %v1224 = vld [vmem:[#allocation9 + $0x2c8] sm:$0xff]
    %v1225 = vld [vmem:[#allocation9 + $0x2d0] sm:$0xff]
    %v1226 = vld [vmem:[#allocation9 + $0x2d8] sm:$0xff]
    %v1227 = vld [vmem:[#allocation9 + $0x2e0] sm:$0xff]
    %v1228 = vld [vmem:[#allocation9 + $0x2e8] sm:$0xff]
    %v1229 = vld [vmem:[#allocation9 + $0x2f0] sm:$0xff]
    %v1230 = vld [vmem:[#allocation9 + $0x2f8] sm:$0xff]
    %v1231 = vld [vmem:[#allocation9 + $0x300] sm:$0xff]
    %v1232 = vld [vmem:[#allocation9 + $0x308] sm:$0xff]
    %v1233 = vld [vmem:[#allocation9 + $0x310] sm:$0xff]
    %v1234 = vld [vmem:[#allocation9 + $0x318] sm:$0xff]
    %v1235 = vld [vmem:[#allocation9 + $0x320] sm:$0xff]
    %v1236 = vld [vmem:[#allocation9 + $0x328] sm:$0xff]
    %v1237 = vld [vmem:[#allocation9 + $0x330] sm:$0xff]
    %v1238 = vld [vmem:[#allocation9 + $0x338] sm:$0xff]
    %v1239 = vld [vmem:[#allocation9 + $0x340] sm:$0xff]
    %v1240 = vld [vmem:[#allocation9 + $0x348] sm:$0xff]
    %v1241 = vld [vmem:[#allocation9 + $0x350] sm:$0xff]
    %v1242 = vld [vmem:[#allocation9 + $0x358] sm:$0xff]
    %v1243 = vld [vmem:[#allocation9 + $0x360] sm:$0xff]
    %v1244 = vld [vmem:[#allocation9 + $0x368] sm:$0xff]
    %v1245 = vld [vmem:[#allocation9 + $0x370] sm:$0xff]
    %v1246 = vld [vmem:[#allocation9 + $0x378] sm:$0xff]
    %v1247 = vld [vmem:[#allocation9 + $0x380] sm:$0xff]
    %v1248 = vld [vmem:[#allocation9 + $0x388] sm:$0xff]
    %v1249 = vld [vmem:[#allocation9 + $0x390] sm:$0xff]
    %v1250 = vld [vmem:[#allocation9 + $0x398] sm:$0xff]
    %v1251 = vld [vmem:[#allocation9 + $0x3a0] sm:$0xff]
    %v1252 = vld [vmem:[#allocation9 + $0x3a8] sm:$0xff]
    %v1253 = vld [vmem:[#allocation9 + $0x3b0] sm:$0xff]
    %v1254 = vld [vmem:[#allocation9 + $0x3b8] sm:$0xff]
    %v1255 = vld [vmem:[#allocation9 + $0x3c0] sm:$0xff]
    %v1256 = vld [vmem:[#allocation9 + $0x3c8] sm:$0xff]
    %v1257 = vld [vmem:[#allocation9 + $0x3d0] sm:$0xff]
    %v1258 = vld [vmem:[#allocation9 + $0x3d8] sm:$0xff]
    %v1259 = vld [vmem:[#allocation9 + $0x3e0] sm:$0xff]
    %v1260 = vld [vmem:[#allocation9 + $0x3e8] sm:$0xff]
    %v1261 = vld [vmem:[#allocation9 + $0x3f0] sm:$0xff]
    %v1262 = vld [vmem:[#allocation9 + $0x3f8] sm:$0xff]
    %v1263 = vld [vmem:[%s5] sm:$0xf]
    %v1265 = vperm.slane %v1263, 0
    %v1266 = vperm.slane %v1263, 1
    %v1267 = vperm.slane %v1263, 2
    %v1268 = vperm.slane %v1263, 3
    %1273 = vmatpush.msra.mxu0 %v1195
    %1274 = vmatpush.msra.mxu0 %v1191
    %1275 = vmatpush.msra.mxu0 %v1187
    %1276 = vmatpush.msra.mxu0 %v1183
    %1277 = vmatpush.msra.mxu0 %v1179
    %1278 = vmatpush.msra.mxu0 %v1175
    %1279 = vmatpush.msra.mxu0 %v1171
    %1280 = vmatpush.msra.mxu0 %v1167
    %1281 = vmatpush.msra.mxu0 %v1163
    %1282 = vmatpush.msra.mxu0 %v1159
    %1283 = vmatpush.msra.mxu0 %v1155
    %1284 = vmatpush.msra.mxu0 %v1151
    %1285 = vmatpush.msra.mxu0 %v1147
    %1286 = vmatpush.msra.mxu0 %v1143
    %1287 = vmatpush.msra.mxu0 %v1139
    %1288 = vmatpush.msra.mxu0 %v1135
    %1289 = vmatmul.f32.gmra.mxu0 %v1133
    %v1290 = vpop.f32.mrf.mxu0
    %v1291 = vadd.f32 %v1265, %v1290
    %1292 = vdwg.mxu0
    %1293 = vmatpush.msra.mxu0 %v1259
    %1294 = vmatpush.msra.mxu0 %v1255
    %1295 = vmatpush.msra.mxu0 %v1251
    %1296 = vmatpush.msra.mxu0 %v1247
    %1297 = vmatpush.msra.mxu0 %v1243
    %1298 = vmatpush.msra.mxu0 %v1239
    %1299 = vmatpush.msra.mxu0 %v1235
    %1300 = vmatpush.msra.mxu0 %v1231
    %1301 = vmatpush.msra.mxu0 %v1227
    %1302 = vmatpush.msra.mxu0 %v1223
    %1303 = vmatpush.msra.mxu0 %v1219
    %1304 = vmatpush.msra.mxu0 %v1215
    %1305 = vmatpush.msra.mxu0 %v1211
    %1306 = vmatpush.msra.mxu0 %v1207
    %1307 = vmatpush.msra.mxu0 %v1203
    %1308 = vmatpush.msra.mxu0 %v1199
    %1309 = vmatmul.f32.gmra.mxu0 %v1134
    %v1310 = vpop.f32.mrf.mxu0
    %v1311 = vadd.f32 %v1291, %v1310
    %1312 = vdwg.mxu0
    %1313 = vmatpush.msra.mxu0 %v1196
    %1314 = vmatpush.msra.mxu0 %v1192
    %1315 = vmatpush.msra.mxu0 %v1188
    %1316 = vmatpush.msra.mxu0 %v1184
    %1317 = vmatpush.msra.mxu0 %v1180
    %1318 = vmatpush.msra.mxu0 %v1176
    %1319 = vmatpush.msra.mxu0 %v1172
    %1320 = vmatpush.msra.mxu0 %v1168
    %1321 = vmatpush.msra.mxu0 %v1164
    %1322 = vmatpush.msra.mxu0 %v1160
    %1323 = vmatpush.msra.mxu0 %v1156
    %1324 = vmatpush.msra.mxu0 %v1152
    %1325 = vmatpush.msra.mxu0 %v1148
    %1326 = vmatpush.msra.mxu0 %v1144
    %1327 = vmatpush.msra.mxu0 %v1140
    %1328 = vmatpush.msra.mxu0 %v1136
    %1329 = vmatmul.f32.gmra.mxu0 %v1133
    %v1330 = vpop.f32.mrf.mxu0
    %v1331 = vadd.f32 %v1266, %v1330
    %1332 = vdwg.mxu0
    %1333 = vmatpush.msra.mxu0 %v1260
    %1334 = vmatpush.msra.mxu0 %v1256
    %1335 = vmatpush.msra.mxu0 %v1252
    %1336 = vmatpush.msra.mxu0 %v1248
    %1337 = vmatpush.msra.mxu0 %v1244
    %1338 = vmatpush.msra.mxu0 %v1240
    %1339 = vmatpush.msra.mxu0 %v1236
    %1340 = vmatpush.msra.mxu0 %v1232
    %1341 = vmatpush.msra.mxu0 %v1228
    %1342 = vmatpush.msra.mxu0 %v1224
    %1343 = vmatpush.msra.mxu0 %v1220
    %1344 = vmatpush.msra.mxu0 %v1216
    %1345 = vmatpush.msra.mxu0 %v1212
    %1346 = vmatpush.msra.mxu0 %v1208
    %1347 = vmatpush.msra.mxu0 %v1204
    %1348 = vmatpush.msra.mxu0 %v1200
    %1349 = vmatmul.f32.gmra.mxu0 %v1134
    %v1350 = vpop.f32.mrf.mxu0
    %v1351 = vadd.f32 %v1331, %v1350
    %1352 = vdwg.mxu0
    %1353 = vmatpush.msra.mxu0 %v1197
    %1354 = vmatpush.msra.mxu0 %v1193
    %1355 = vmatpush.msra.mxu0 %v1189
    %1356 = vmatpush.msra.mxu0 %v1185
    %1357 = vmatpush.msra.mxu0 %v1181
    %1358 = vmatpush.msra.mxu0 %v1177
    %1359 = vmatpush.msra.mxu0 %v1173
    %1360 = vmatpush.msra.mxu0 %v1169
    %1361 = vmatpush.msra.mxu0 %v1165
    %1362 = vmatpush.msra.mxu0 %v1161
    %1363 = vmatpush.msra.mxu0 %v1157
    %1364 = vmatpush.msra.mxu0 %v1153
    %1365 = vmatpush.msra.mxu0 %v1149
    %1366 = vmatpush.msra.mxu0 %v1145
    %1367 = vmatpush.msra.mxu0 %v1141
    %1368 = vmatpush.msra.mxu0 %v1137
    %1369 = vmatmul.f32.gmra.mxu0 %v1133
    %v1370 = vpop.f32.mrf.mxu0
    %v1371 = vadd.f32 %v1267, %v1370
    %1372 = vdwg.mxu0
    %1373 = vmatpush.msra.mxu0 %v1261
    %1374 = vmatpush.msra.mxu0 %v1257
    %1375 = vmatpush.msra.mxu0 %v1253
    %1376 = vmatpush.msra.mxu0 %v1249
    %1377 = vmatpush.msra.mxu0 %v1245
    %1378 = vmatpush.msra.mxu0 %v1241
    %1379 = vmatpush.msra.mxu0 %v1237
    %1380 = vmatpush.msra.mxu0 %v1233
    %1381 = vmatpush.msra.mxu0 %v1229
    %1382 = vmatpush.msra.mxu0 %v1225
    %1383 = vmatpush.msra.mxu0 %v1221
    %1384 = vmatpush.msra.mxu0 %v1217
    %1385 = vmatpush.msra.mxu0 %v1213
    %1386 = vmatpush.msra.mxu0 %v1209
    %1387 = vmatpush.msra.mxu0 %v1205
    %1388 = vmatpush.msra.mxu0 %v1201
    %1389 = vmatmul.f32.gmra.mxu0 %v1134
    %v1390 = vpop.f32.mrf.mxu0
    %v1391 = vadd.f32 %v1371, %v1390
    %1392 = vdwg.mxu0
    %1393 = vmatpush.msra.mxu0 %v1198
    %1394 = vmatpush.msra.mxu0 %v1194
    %1395 = vmatpush.msra.mxu0 %v1190
    %1396 = vmatpush.msra.mxu0 %v1186
    %1397 = vmatpush.msra.mxu0 %v1182
    %1398 = vmatpush.msra.mxu0 %v1178
    %1399 = vmatpush.msra.mxu0 %v1174
    %1400 = vmatpush.msra.mxu0 %v1170
    %1401 = vmatpush.msra.mxu0 %v1166
    %1402 = vmatpush.msra.mxu0 %v1162
    %1403 = vmatpush.msra.mxu0 %v1158
    %1404 = vmatpush.msra.mxu0 %v1154
    %1405 = vmatpush.msra.mxu0 %v1150
    %1406 = vmatpush.msra.mxu0 %v1146
    %1407 = vmatpush.msra.mxu0 %v1142
    %1408 = vmatpush.msra.mxu0 %v1138
    %1409 = vmatmul.f32.gmra.mxu0 %v1133
    %v1410 = vpop.f32.mrf.mxu0
    %v1411 = vadd.f32 %v1268, %v1410
    %1412 = vdwg.mxu0
    %1413 = vmatpush.msra.mxu0 %v1262
    %1414 = vmatpush.msra.mxu0 %v1258
    %1415 = vmatpush.msra.mxu0 %v1254
    %1416 = vmatpush.msra.mxu0 %v1250
    %1417 = vmatpush.msra.mxu0 %v1246
    %1418 = vmatpush.msra.mxu0 %v1242
    %1419 = vmatpush.msra.mxu0 %v1238
    %1420 = vmatpush.msra.mxu0 %v1234
    %1421 = vmatpush.msra.mxu0 %v1230
    %1422 = vmatpush.msra.mxu0 %v1226
    %1423 = vmatpush.msra.mxu0 %v1222
    %1424 = vmatpush.msra.mxu0 %v1218
    %1425 = vmatpush.msra.mxu0 %v1214
    %1426 = vmatpush.msra.mxu0 %v1210
    %1427 = vmatpush.msra.mxu0 %v1206
    %1428 = vmatpush.msra.mxu0 %v1202
    %1429 = vmatmul.f32.gmra.mxu0 %v1134
    %v1430 = vpop.f32.mrf.mxu0
    %v1431 = vadd.f32 %v1411, %v1430
    %1432 = vdwg.mxu0
    %v1433 = vxor.u32 %v1311, 2147483648
    %v1434 = vmul.f32 %v1433, 1.442695
    %v1435 = vpow.pop %v1434
    %v1436 = vadd.f32 %v1435, 1.0
    %v1437 = vrcp.pop %v1436
    %v1438 = vmul.f32 %v1436, %v1437
    %v1439 = vsub.f32 1.0, %v1438
    %v1440 = vmul.f32 %v1437, %v1439
    %v1441 = vadd.f32 %v1437, %v1440
    %vm1442 = vweird.f32 %v1436
    %vm1443 = vweird.f32 %v1437
    %vm1444 = vmor %vm1442, %vm1443
    %v1445 = vsel %vm1444, %v1437, %v1441
    %v1446 = vand.u32 2147483647, %v1436
    %vm1447 = vcmp.eq.f32.partialorder %v1446, 8.507059e+37
    %v1448 = vand.u32 %v1436, 2147483648
    %v1449 = vor.u32 1.1754944e-38, %v1448
    %v1450 = vsel %vm1447, %v1449, %v1445
    %v1451 = vmul.f32 1.0, %v1450
    %v1452 = vxor.u32 %v1351, 2147483648
    %v1453 = vmul.f32 %v1452, 1.442695
    %v1454 = vpow.pop %v1453
    %v1455 = vadd.f32 %v1454, 1.0
    %v1456 = vrcp.pop %v1455
    %v1457 = vmul.f32 %v1455, %v1456
    %v1458 = vsub.f32 1.0, %v1457
    %v1459 = vmul.f32 %v1456, %v1458
    %v1460 = vadd.f32 %v1456, %v1459
    %vm1461 = vweird.f32 %v1455
    %vm1462 = vweird.f32 %v1456
    %vm1463 = vmor %vm1461, %vm1462
    %v1464 = vsel %vm1463, %v1456, %v1460
    %v1465 = vand.u32 2147483647, %v1455
    %vm1466 = vcmp.eq.f32.partialorder %v1465, 8.507059e+37
    %v1467 = vand.u32 %v1455, 2147483648
    %v1468 = vor.u32 1.1754944e-38, %v1467
    %v1469 = vsel %vm1466, %v1468, %v1464
    %v1470 = vmul.f32 1.0, %v1469
    %v1471 = vtanh.pop %v1391
    %v1472 = vxor.u32 %v1431, 2147483648
    %v1473 = vmul.f32 %v1472, 1.442695
    %v1474 = vpow.pop %v1473
    %v1475 = vadd.f32 %v1474, 1.0
    %v1476 = vrcp.pop %v1475
    %v1477 = vmul.f32 %v1475, %v1476
    %v1478 = vsub.f32 1.0, %v1477
    %v1479 = vmul.f32 %v1476, %v1478
    %v1480 = vadd.f32 %v1476, %v1479
    %vm1481 = vweird.f32 %v1475
    %vm1482 = vweird.f32 %v1476
    %vm1483 = vmor %vm1481, %vm1482
    %v1484 = vsel %vm1483, %v1476, %v1480
    %v1485 = vand.u32 2147483647, %v1475
    %vm1486 = vcmp.eq.f32.partialorder %v1485, 8.507059e+37
    %v1487 = vand.u32 %v1475, 2147483648
    %v1488 = vor.u32 1.1754944e-38, %v1487
    %v1489 = vsel %vm1486, %v1488, %v1484
    %v1490 = vmul.f32 1.0, %v1489
    %v1491 = vld [vmem:[#allocation5] sm:$0xff]
    %v1492 = vmul.f32 %v1470, %v1491
    %v1493 = vmul.f32 %v1451, %v1471
    %v1494 = vadd.f32 %v1492, %v1493
    %v1495 = vtanh.pop %v1494
    %v1496 = vmul.f32 %v1490, %v1495
    %1497 = vst [vmem:[#allocation5] sm:$0xff] %v1494
    %1498 = vst [vmem:[#allocation3 + $0x8] sm:$0xff] %v1496
    %s1499 = smul.u32 2, 4
    %s1500 = smul.addr %s1499, 8
    %s1501 = scalar_lea.vmem [#allocation2], %s1500
    %v1502 = vld [vmem:[%s1501] sm:$0xff]
    %v1503 = vld [vmem:[%s1501 + $0x8] sm:$0xff]
    %v1504 = vld [vmem:[%s1501 + $0x10] sm:$0xff]
    %v1505 = vld [vmem:[%s1501 + $0x18] sm:$0xff]
    %v1506 = vld [vmem:[#allocation3] sm:$0xff]
    %v1507 = vld [vmem:[#allocation6] sm:$0xff]
    %v1508 = vld [vmem:[#allocation6 + $0x8] sm:$0xff]
    %v1509 = vld [vmem:[#allocation6 + $0x10] sm:$0xff]
    %v1510 = vld [vmem:[#allocation6 + $0x18] sm:$0xff]
    %v1511 = vld [vmem:[#allocation6 + $0x20] sm:$0xff]
    %v1512 = vld [vmem:[#allocation6 + $0x28] sm:$0xff]
    %v1513 = vld [vmem:[#allocation6 + $0x30] sm:$0xff]
    %v1514 = vld [vmem:[#allocation6 + $0x38] sm:$0xff]
    %v1515 = vld [vmem:[#allocation6 + $0x40] sm:$0xff]
    %v1516 = vld [vmem:[#allocation6 + $0x48] sm:$0xff]
    %v1517 = vld [vmem:[#allocation6 + $0x50] sm:$0xff]
    %v1518 = vld [vmem:[#allocation6 + $0x58] sm:$0xff]
    %v1519 = vld [vmem:[#allocation6 + $0x60] sm:$0xff]
    %v1520 = vld [vmem:[#allocation6 + $0x68] sm:$0xff]
    %v1521 = vld [vmem:[#allocation6 + $0x70] sm:$0xff]
    %v1522 = vld [vmem:[#allocation6 + $0x78] sm:$0xff]
    %v1523 = vld [vmem:[#allocation6 + $0x80] sm:$0xff]
    %v1524 = vld [vmem:[#allocation6 + $0x88] sm:$0xff]
    %v1525 = vld [vmem:[#allocation6 + $0x90] sm:$0xff]
    %v1526 = vld [vmem:[#allocation6 + $0x98] sm:$0xff]
    %v1527 = vld [vmem:[#allocation6 + $0xa0] sm:$0xff]
    %v1528 = vld [vmem:[#allocation6 + $0xa8] sm:$0xff]
    %v1529 = vld [vmem:[#allocation6 + $0xb0] sm:$0xff]
    %v1530 = vld [vmem:[#allocation6 + $0xb8] sm:$0xff]
    %v1531 = vld [vmem:[#allocation6 + $0xc0] sm:$0xff]
    %v1532 = vld [vmem:[#allocation6 + $0xc8] sm:$0xff]
    %v1533 = vld [vmem:[#allocation6 + $0xd0] sm:$0xff]
    %v1534 = vld [vmem:[#allocation6 + $0xd8] sm:$0xff]
    %v1535 = vld [vmem:[#allocation6 + $0xe0] sm:$0xff]
    %v1536 = vld [vmem:[#allocation6 + $0xe8] sm:$0xff]
    %v1537 = vld [vmem:[#allocation6 + $0xf0] sm:$0xff]
    %v1538 = vld [vmem:[#allocation6 + $0xf8] sm:$0xff]
    %v1539 = vld [vmem:[#allocation6 + $0x100] sm:$0xff]
    %v1540 = vld [vmem:[#allocation6 + $0x108] sm:$0xff]
    %v1541 = vld [vmem:[#allocation6 + $0x110] sm:$0xff]
    %v1542 = vld [vmem:[#allocation6 + $0x118] sm:$0xff]
    %v1543 = vld [vmem:[#allocation6 + $0x120] sm:$0xff]
    %v1544 = vld [vmem:[#allocation6 + $0x128] sm:$0xff]
    %v1545 = vld [vmem:[#allocation6 + $0x130] sm:$0xff]
    %v1546 = vld [vmem:[#allocation6 + $0x138] sm:$0xff]
    %v1547 = vld [vmem:[#allocation6 + $0x140] sm:$0xff]
    %v1548 = vld [vmem:[#allocation6 + $0x148] sm:$0xff]
    %v1549 = vld [vmem:[#allocation6 + $0x150] sm:$0xff]
    %v1550 = vld [vmem:[#allocation6 + $0x158] sm:$0xff]
    %v1551 = vld [vmem:[#allocation6 + $0x160] sm:$0xff]
    %v1552 = vld [vmem:[#allocation6 + $0x168] sm:$0xff]
    %v1553 = vld [vmem:[#allocation6 + $0x170] sm:$0xff]
    %v1554 = vld [vmem:[#allocation6 + $0x178] sm:$0xff]
    %v1555 = vld [vmem:[#allocation6 + $0x180] sm:$0xff]
    %v1556 = vld [vmem:[#allocation6 + $0x188] sm:$0xff]
    %v1557 = vld [vmem:[#allocation6 + $0x190] sm:$0xff]
    %v1558 = vld [vmem:[#allocation6 + $0x198] sm:$0xff]
    %v1559 = vld [vmem:[#allocation6 + $0x1a0] sm:$0xff]
    %v1560 = vld [vmem:[#allocation6 + $0x1a8] sm:$0xff]
    %v1561 = vld [vmem:[#allocation6 + $0x1b0] sm:$0xff]
    %v1562 = vld [vmem:[#allocation6 + $0x1b8] sm:$0xff]
    %v1563 = vld [vmem:[#allocation6 + $0x1c0] sm:$0xff]
    %v1564 = vld [vmem:[#allocation6 + $0x1c8] sm:$0xff]
    %v1565 = vld [vmem:[#allocation6 + $0x1d0] sm:$0xff]
    %v1566 = vld [vmem:[#allocation6 + $0x1d8] sm:$0xff]
    %v1567 = vld [vmem:[#allocation6 + $0x1e0] sm:$0xff]
    %v1568 = vld [vmem:[#allocation6 + $0x1e8] sm:$0xff]
    %v1569 = vld [vmem:[#allocation6 + $0x1f0] sm:$0xff]
    %v1570 = vld [vmem:[#allocation6 + $0x1f8] sm:$0xff]
    %1571 = vmatpush.msra.mxu0 %v1567
    %1572 = vmatpush.msra.mxu0 %v1563
    %1573 = vmatpush.msra.mxu0 %v1559
    %1574 = vmatpush.msra.mxu0 %v1555
    %1575 = vmatpush.msra.mxu0 %v1551
    %1576 = vmatpush.msra.mxu0 %v1547
    %1577 = vmatpush.msra.mxu0 %v1543
    %1578 = vmatpush.msra.mxu0 %v1539
    %1579 = vmatpush.msra.mxu0 %v1535
    %1580 = vmatpush.msra.mxu0 %v1531
    %1581 = vmatpush.msra.mxu0 %v1527
    %1582 = vmatpush.msra.mxu0 %v1523
    %1583 = vmatpush.msra.mxu0 %v1519
    %1584 = vmatpush.msra.mxu0 %v1515
    %1585 = vmatpush.msra.mxu0 %v1511
    %1586 = vmatpush.msra.mxu0 %v1507
    %1587 = vmatmul.f32.gmra.mxu0 %v1506
    %v1588 = vpop.f32.mrf.mxu0
    %v1589 = vadd.f32 0.0, %v1588
    %1590 = vdwg.mxu0
    %1591 = vmatpush.msra.mxu0 %v1568
    %1592 = vmatpush.msra.mxu0 %v1564
    %1593 = vmatpush.msra.mxu0 %v1560
    %1594 = vmatpush.msra.mxu0 %v1556
    %1595 = vmatpush.msra.mxu0 %v1552
    %1596 = vmatpush.msra.mxu0 %v1548
    %1597 = vmatpush.msra.mxu0 %v1544
    %1598 = vmatpush.msra.mxu0 %v1540
    %1599 = vmatpush.msra.mxu0 %v1536
    %1600 = vmatpush.msra.mxu0 %v1532
    %1601 = vmatpush.msra.mxu0 %v1528
    %1602 = vmatpush.msra.mxu0 %v1524
    %1603 = vmatpush.msra.mxu0 %v1520
    %1604 = vmatpush.msra.mxu0 %v1516
    %1605 = vmatpush.msra.mxu0 %v1512
    %1606 = vmatpush.msra.mxu0 %v1508
    %1607 = vmatmul.f32.gmra.mxu0 %v1506
    %v1608 = vpop.f32.mrf.mxu0
    %v1609 = vadd.f32 0.0, %v1608
    %1610 = vdwg.mxu0
    %1611 = vmatpush.msra.mxu0 %v1569
    %1612 = vmatpush.msra.mxu0 %v1565
    %1613 = vmatpush.msra.mxu0 %v1561
    %1614 = vmatpush.msra.mxu0 %v1557
    %1615 = vmatpush.msra.mxu0 %v1553
    %1616 = vmatpush.msra.mxu0 %v1549
    %1617 = vmatpush.msra.mxu0 %v1545
    %1618 = vmatpush.msra.mxu0 %v1541
    %1619 = vmatpush.msra.mxu0 %v1537
    %1620 = vmatpush.msra.mxu0 %v1533
    %1621 = vmatpush.msra.mxu0 %v1529
    %1622 = vmatpush.msra.mxu0 %v1525
    %1623 = vmatpush.msra.mxu0 %v1521
    %1624 = vmatpush.msra.mxu0 %v1517
    %1625 = vmatpush.msra.mxu0 %v1513
    %1626 = vmatpush.msra.mxu0 %v1509
    %1627 = vmatmul.f32.gmra.mxu0 %v1506
    %v1628 = vpop.f32.mrf.mxu0
    %v1629 = vadd.f32 0.0, %v1628
    %1630 = vdwg.mxu0
    %1631 = vmatpush.msra.mxu0 %v1570
    %1632 = vmatpush.msra.mxu0 %v1566
    %1633 = vmatpush.msra.mxu0 %v1562
    %1634 = vmatpush.msra.mxu0 %v1558
    %1635 = vmatpush.msra.mxu0 %v1554
    %1636 = vmatpush.msra.mxu0 %v1550
    %1637 = vmatpush.msra.mxu0 %v1546
    %1638 = vmatpush.msra.mxu0 %v1542
    %1639 = vmatpush.msra.mxu0 %v1538
    %1640 = vmatpush.msra.mxu0 %v1534
    %1641 = vmatpush.msra.mxu0 %v1530
    %1642 = vmatpush.msra.mxu0 %v1526
    %1643 = vmatpush.msra.mxu0 %v1522
    %1644 = vmatpush.msra.mxu0 %v1518
    %1645 = vmatpush.msra.mxu0 %v1514
    %1646 = vmatpush.msra.mxu0 %v1510
    %1647 = vmatmul.f32.gmra.mxu0 %v1506
    %v1648 = vpop.f32.mrf.mxu0
    %v1649 = vadd.f32 0.0, %v1648
    %1650 = vdwg.mxu0
    %v1651 = vadd.f32 %v1502, %v1589
    %v1652 = vadd.f32 %v1503, %v1609
    %v1653 = vadd.f32 %v1504, %v1629
    %v1654 = vadd.f32 %v1505, %v1649
    %v1655 = vxor.u32 %v1651, 2147483648
    %v1656 = vmul.f32 %v1655, 1.442695
    %v1657 = vpow.pop %v1656
    %v1658 = vadd.f32 %v1657, 1.0
    %v1659 = vrcp.pop %v1658
    %v1660 = vmul.f32 %v1658, %v1659
    %v1661 = vsub.f32 1.0, %v1660
    %v1662 = vmul.f32 %v1659, %v1661
    %v1663 = vadd.f32 %v1659, %v1662
    %vm1664 = vweird.f32 %v1658
    %vm1665 = vweird.f32 %v1659
    %vm1666 = vmor %vm1664, %vm1665
    %v1667 = vsel %vm1666, %v1659, %v1663
    %v1668 = vand.u32 2147483647, %v1658
    %vm1669 = vcmp.eq.f32.partialorder %v1668, 8.507059e+37
    %v1670 = vand.u32 %v1658, 2147483648
    %v1671 = vor.u32 1.1754944e-38, %v1670
    %v1672 = vsel %vm1669, %v1671, %v1667
    %v1673 = vmul.f32 1.0, %v1672
    %v1674 = vxor.u32 %v1652, 2147483648
    %v1675 = vmul.f32 %v1674, 1.442695
    %v1676 = vpow.pop %v1675
    %v1677 = vadd.f32 %v1676, 1.0
    %v1678 = vrcp.pop %v1677
    %v1679 = vmul.f32 %v1677, %v1678
    %v1680 = vsub.f32 1.0, %v1679
    %v1681 = vmul.f32 %v1678, %v1680
    %v1682 = vadd.f32 %v1678, %v1681
    %vm1683 = vweird.f32 %v1677
    %vm1684 = vweird.f32 %v1678
    %vm1685 = vmor %vm1683, %vm1684
    %v1686 = vsel %vm1685, %v1678, %v1682
    %v1687 = vand.u32 2147483647, %v1677
    %vm1688 = vcmp.eq.f32.partialorder %v1687, 8.507059e+37
    %v1689 = vand.u32 %v1677, 2147483648
    %v1690 = vor.u32 1.1754944e-38, %v1689
    %v1691 = vsel %vm1688, %v1690, %v1686
    %v1692 = vmul.f32 1.0, %v1691
    %v1693 = vtanh.pop %v1653
    %v1694 = vxor.u32 %v1654, 2147483648
    %v1695 = vmul.f32 %v1694, 1.442695
    %v1696 = vpow.pop %v1695
    %v1697 = vadd.f32 %v1696, 1.0
    %v1698 = vrcp.pop %v1697
    %v1699 = vmul.f32 %v1697, %v1698
    %v1700 = vsub.f32 1.0, %v1699
    %v1701 = vmul.f32 %v1698, %v1700
    %v1702 = vadd.f32 %v1698, %v1701
    %vm1703 = vweird.f32 %v1697
    %vm1704 = vweird.f32 %v1698
    %vm1705 = vmor %vm1703, %vm1704
    %v1706 = vsel %vm1705, %v1698, %v1702
    %v1707 = vand.u32 2147483647, %v1697
    %vm1708 = vcmp.eq.f32.partialorder %v1707, 8.507059e+37
    %v1709 = vand.u32 %v1697, 2147483648
    %v1710 = vor.u32 1.1754944e-38, %v1709
    %v1711 = vsel %vm1708, %v1710, %v1706
    %v1712 = vmul.f32 1.0, %v1711
    %v1713 = vld [vmem:[#allocation4] sm:$0xff]
    %v1714 = vmul.f32 %v1692, %v1713
    %v1715 = vmul.f32 %v1673, %v1693
    %v1716 = vadd.f32 %v1714, %v1715
    %v1717 = vtanh.pop %v1716
    %v1718 = vmul.f32 %v1712, %v1717
    %1719 = vst [vmem:[#allocation4] sm:$0xff] %v1716
    %1720 = vst [vmem:[#allocation3] sm:$0xff] %v1718
    %v1721 = vld [vmem:[#allocation3] sm:$0xff]
    %v1722 = vld [vmem:[#allocation3 + $0x8] sm:$0xff]
    %v1723 = vld [vmem:[#allocation9] sm:$0xff]
    %v1724 = vld [vmem:[#allocation9 + $0x8] sm:$0xff]
    %v1725 = vld [vmem:[#allocation9 + $0x10] sm:$0xff]
    %v1726 = vld [vmem:[#allocation9 + $0x18] sm:$0xff]
    %v1727 = vld [vmem:[#allocation9 + $0x20] sm:$0xff]
    %v1728 = vld [vmem:[#allocation9 + $0x28] sm:$0xff]
    %v1729 = vld [vmem:[#allocation9 + $0x30] sm:$0xff]
    %v1730 = vld [vmem:[#allocation9 + $0x38] sm:$0xff]
    %v1731 = vld [vmem:[#allocation9 + $0x40] sm:$0xff]
    %v1732 = vld [vmem:[#allocation9 + $0x48] sm:$0xff]
    %v1733 = vld [vmem:[#allocation9 + $0x50] sm:$0xff]
    %v1734 = vld [vmem:[#allocation9 + $0x58] sm:$0xff]
    %v1735 = vld [vmem:[#allocation9 + $0x60] sm:$0xff]
    %v1736 = vld [vmem:[#allocation9 + $0x68] sm:$0xff]
    %v1737 = vld [vmem:[#allocation9 + $0x70] sm:$0xff]
    %v1738 = vld [vmem:[#allocation9 + $0x78] sm:$0xff]
    %v1739 = vld [vmem:[#allocation9 + $0x80] sm:$0xff]
    %v1740 = vld [vmem:[#allocation9 + $0x88] sm:$0xff]
    %v1741 = vld [vmem:[#allocation9 + $0x90] sm:$0xff]
    %v1742 = vld [vmem:[#allocation9 + $0x98] sm:$0xff]
    %v1743 = vld [vmem:[#allocation9 + $0xa0] sm:$0xff]
    %v1744 = vld [vmem:[#allocation9 + $0xa8] sm:$0xff]
    %v1745 = vld [vmem:[#allocation9 + $0xb0] sm:$0xff]
    %v1746 = vld [vmem:[#allocation9 + $0xb8] sm:$0xff]
    %v1747 = vld [vmem:[#allocation9 + $0xc0] sm:$0xff]
    %v1748 = vld [vmem:[#allocation9 + $0xc8] sm:$0xff]
    %v1749 = vld [vmem:[#allocation9 + $0xd0] sm:$0xff]
    %v1750 = vld [vmem:[#allocation9 + $0xd8] sm:$0xff]
    %v1751 = vld [vmem:[#allocation9 + $0xe0] sm:$0xff]
    %v1752 = vld [vmem:[#allocation9 + $0xe8] sm:$0xff]
    %v1753 = vld [vmem:[#allocation9 + $0xf0] sm:$0xff]
    %v1754 = vld [vmem:[#allocation9 + $0xf8] sm:$0xff]
    %v1755 = vld [vmem:[#allocation9 + $0x100] sm:$0xff]
    %v1756 = vld [vmem:[#allocation9 + $0x108] sm:$0xff]
    %v1757 = vld [vmem:[#allocation9 + $0x110] sm:$0xff]
    %v1758 = vld [vmem:[#allocation9 + $0x118] sm:$0xff]
    %v1759 = vld [vmem:[#allocation9 + $0x120] sm:$0xff]
    %v1760 = vld [vmem:[#allocation9 + $0x128] sm:$0xff]
    %v1761 = vld [vmem:[#allocation9 + $0x130] sm:$0xff]
    %v1762 = vld [vmem:[#allocation9 + $0x138] sm:$0xff]
    %v1763 = vld [vmem:[#allocation9 + $0x140] sm:$0xff]
    %v1764 = vld [vmem:[#allocation9 + $0x148] sm:$0xff]
    %v1765 = vld [vmem:[#allocation9 + $0x150] sm:$0xff]
    %v1766 = vld [vmem:[#allocation9 + $0x158] sm:$0xff]
    %v1767 = vld [vmem:[#allocation9 + $0x160] sm:$0xff]
    %v1768 = vld [vmem:[#allocation9 + $0x168] sm:$0xff]
    %v1769 = vld [vmem:[#allocation9 + $0x170] sm:$0xff]
    %v1770 = vld [vmem:[#allocation9 + $0x178] sm:$0xff]
    %v1771 = vld [vmem:[#allocation9 + $0x180] sm:$0xff]
    %v1772 = vld [vmem:[#allocation9 + $0x188] sm:$0xff]
    %v1773 = vld [vmem:[#allocation9 + $0x190] sm:$0xff]
    %v1774 = vld [vmem:[#allocation9 + $0x198] sm:$0xff]
    %v1775 = vld [vmem:[#allocation9 + $0x1a0] sm:$0xff]
    %v1776 = vld [vmem:[#allocation9 + $0x1a8] sm:$0xff]
    %v1777 = vld [vmem:[#allocation9 + $0x1b0] sm:$0xff]
    %v1778 = vld [vmem:[#allocation9 + $0x1b8] sm:$0xff]
    %v1779 = vld [vmem:[#allocation9 + $0x1c0] sm:$0xff]
    %v1780 = vld [vmem:[#allocation9 + $0x1c8] sm:$0xff]
    %v1781 = vld [vmem:[#allocation9 + $0x1d0] sm:$0xff]
    %v1782 = vld [vmem:[#allocation9 + $0x1d8] sm:$0xff]
    %v1783 = vld [vmem:[#allocation9 + $0x1e0] sm:$0xff]
    %v1784 = vld [vmem:[#allocation9 + $0x1e8] sm:$0xff]
    %v1785 = vld [vmem:[#allocation9 + $0x1f0] sm:$0xff]
    %v1786 = vld [vmem:[#allocation9 + $0x1f8] sm:$0xff]
    %v1787 = vld [vmem:[#allocation9 + $0x200] sm:$0xff]
    %v1788 = vld [vmem:[#allocation9 + $0x208] sm:$0xff]
    %v1789 = vld [vmem:[#allocation9 + $0x210] sm:$0xff]
    %v1790 = vld [vmem:[#allocation9 + $0x218] sm:$0xff]
    %v1791 = vld [vmem:[#allocation9 + $0x220] sm:$0xff]
    %v1792 = vld [vmem:[#allocation9 + $0x228] sm:$0xff]
    %v1793 = vld [vmem:[#allocation9 + $0x230] sm:$0xff]
    %v1794 = vld [vmem:[#allocation9 + $0x238] sm:$0xff]
    %v1795 = vld [vmem:[#allocation9 + $0x240] sm:$0xff]
    %v1796 = vld [vmem:[#allocation9 + $0x248] sm:$0xff]
    %v1797 = vld [vmem:[#allocation9 + $0x250] sm:$0xff]
    %v1798 = vld [vmem:[#allocation9 + $0x258] sm:$0xff]
    %v1799 = vld [vmem:[#allocation9 + $0x260] sm:$0xff]
    %v1800 = vld [vmem:[#allocation9 + $0x268] sm:$0xff]
    %v1801 = vld [vmem:[#allocation9 + $0x270] sm:$0xff]
    %v1802 = vld [vmem:[#allocation9 + $0x278] sm:$0xff]
    %v1803 = vld [vmem:[#allocation9 + $0x280] sm:$0xff]
    %v1804 = vld [vmem:[#allocation9 + $0x288] sm:$0xff]
    %v1805 = vld [vmem:[#allocation9 + $0x290] sm:$0xff]
    %v1806 = vld [vmem:[#allocation9 + $0x298] sm:$0xff]
    %v1807 = vld [vmem:[#allocation9 + $0x2a0] sm:$0xff]
    %v1808 = vld [vmem:[#allocation9 + $0x2a8] sm:$0xff]
    %v1809 = vld [vmem:[#allocation9 + $0x2b0] sm:$0xff]
    %v1810 = vld [vmem:[#allocation9 + $0x2b8] sm:$0xff]
    %v1811 = vld [vmem:[#allocation9 + $0x2c0] sm:$0xff]
    %v1812 = vld [vmem:[#allocation9 + $0x2c8] sm:$0xff]
    %v1813 = vld [vmem:[#allocation9 + $0x2d0] sm:$0xff]
    %v1814 = vld [vmem:[#allocation9 + $0x2d8] sm:$0xff]
    %v1815 = vld [vmem:[#allocation9 + $0x2e0] sm:$0xff]
    %v1816 = vld [vmem:[#allocation9 + $0x2e8] sm:$0xff]
    %v1817 = vld [vmem:[#allocation9 + $0x2f0] sm:$0xff]
    %v1818 = vld [vmem:[#allocation9 + $0x2f8] sm:$0xff]
    %v1819 = vld [vmem:[#allocation9 + $0x300] sm:$0xff]
    %v1820 = vld [vmem:[#allocation9 + $0x308] sm:$0xff]
    %v1821 = vld [vmem:[#allocation9 + $0x310] sm:$0xff]
    %v1822 = vld [vmem:[#allocation9 + $0x318] sm:$0xff]
    %v1823 = vld [vmem:[#allocation9 + $0x320] sm:$0xff]
    %v1824 = vld [vmem:[#allocation9 + $0x328] sm:$0xff]
    %v1825 = vld [vmem:[#allocation9 + $0x330] sm:$0xff]
    %v1826 = vld [vmem:[#allocation9 + $0x338] sm:$0xff]
    %v1827 = vld [vmem:[#allocation9 + $0x340] sm:$0xff]
    %v1828 = vld [vmem:[#allocation9 + $0x348] sm:$0xff]
    %v1829 = vld [vmem:[#allocation9 + $0x350] sm:$0xff]
    %v1830 = vld [vmem:[#allocation9 + $0x358] sm:$0xff]
    %v1831 = vld [vmem:[#allocation9 + $0x360] sm:$0xff]
    %v1832 = vld [vmem:[#allocation9 + $0x368] sm:$0xff]
    %v1833 = vld [vmem:[#allocation9 + $0x370] sm:$0xff]
    %v1834 = vld [vmem:[#allocation9 + $0x378] sm:$0xff]
    %v1835 = vld [vmem:[#allocation9 + $0x380] sm:$0xff]
    %v1836 = vld [vmem:[#allocation9 + $0x388] sm:$0xff]
    %v1837 = vld [vmem:[#allocation9 + $0x390] sm:$0xff]
    %v1838 = vld [vmem:[#allocation9 + $0x398] sm:$0xff]
    %v1839 = vld [vmem:[#allocation9 + $0x3a0] sm:$0xff]
    %v1840 = vld [vmem:[#allocation9 + $0x3a8] sm:$0xff]
    %v1841 = vld [vmem:[#allocation9 + $0x3b0] sm:$0xff]
    %v1842 = vld [vmem:[#allocation9 + $0x3b8] sm:$0xff]
    %v1843 = vld [vmem:[#allocation9 + $0x3c0] sm:$0xff]
    %v1844 = vld [vmem:[#allocation9 + $0x3c8] sm:$0xff]
    %v1845 = vld [vmem:[#allocation9 + $0x3d0] sm:$0xff]
    %v1846 = vld [vmem:[#allocation9 + $0x3d8] sm:$0xff]
    %v1847 = vld [vmem:[#allocation9 + $0x3e0] sm:$0xff]
    %v1848 = vld [vmem:[#allocation9 + $0x3e8] sm:$0xff]
    %v1849 = vld [vmem:[#allocation9 + $0x3f0] sm:$0xff]
    %v1850 = vld [vmem:[#allocation9 + $0x3f8] sm:$0xff]
    %v1851 = vld [vmem:[%s5] sm:$0xf]
    %v1853 = vperm.slane %v1851, 0
    %v1854 = vperm.slane %v1851, 1
    %v1855 = vperm.slane %v1851, 2
    %v1856 = vperm.slane %v1851, 3
    %1861 = vmatpush.msra.mxu0 %v1783
    %1862 = vmatpush.msra.mxu0 %v1779
    %1863 = vmatpush.msra.mxu0 %v1775
    %1864 = vmatpush.msra.mxu0 %v1771
    %1865 = vmatpush.msra.mxu0 %v1767
    %1866 = vmatpush.msra.mxu0 %v1763
    %1867 = vmatpush.msra.mxu0 %v1759
    %1868 = vmatpush.msra.mxu0 %v1755
    %1869 = vmatpush.msra.mxu0 %v1751
    %1870 = vmatpush.msra.mxu0 %v1747
    %1871 = vmatpush.msra.mxu0 %v1743
    %1872 = vmatpush.msra.mxu0 %v1739
    %1873 = vmatpush.msra.mxu0 %v1735
    %1874 = vmatpush.msra.mxu0 %v1731
    %1875 = vmatpush.msra.mxu0 %v1727
    %1876 = vmatpush.msra.mxu0 %v1723
    %1877 = vmatmul.f32.gmra.mxu0 %v1721
    %v1878 = vpop.f32.mrf.mxu0
    %v1879 = vadd.f32 %v1853, %v1878
    %1880 = vdwg.mxu0
    %1881 = vmatpush.msra.mxu0 %v1847
    %1882 = vmatpush.msra.mxu0 %v1843
    %1883 = vmatpush.msra.mxu0 %v1839
    %1884 = vmatpush.msra.mxu0 %v1835
    %1885 = vmatpush.msra.mxu0 %v1831
    %1886 = vmatpush.msra.mxu0 %v1827
    %1887 = vmatpush.msra.mxu0 %v1823
    %1888 = vmatpush.msra.mxu0 %v1819
    %1889 = vmatpush.msra.mxu0 %v1815
    %1890 = vmatpush.msra.mxu0 %v1811
    %1891 = vmatpush.msra.mxu0 %v1807
    %1892 = vmatpush.msra.mxu0 %v1803
    %1893 = vmatpush.msra.mxu0 %v1799
    %1894 = vmatpush.msra.mxu0 %v1795
    %1895 = vmatpush.msra.mxu0 %v1791
    %1896 = vmatpush.msra.mxu0 %v1787
    %1897 = vmatmul.f32.gmra.mxu0 %v1722
    %v1898 = vpop.f32.mrf.mxu0
    %v1899 = vadd.f32 %v1879, %v1898
    %1900 = vdwg.mxu0
    %1901 = vmatpush.msra.mxu0 %v1784
    %1902 = vmatpush.msra.mxu0 %v1780
    %1903 = vmatpush.msra.mxu0 %v1776
    %1904 = vmatpush.msra.mxu0 %v1772
    %1905 = vmatpush.msra.mxu0 %v1768
    %1906 = vmatpush.msra.mxu0 %v1764
    %1907 = vmatpush.msra.mxu0 %v1760
    %1908 = vmatpush.msra.mxu0 %v1756
    %1909 = vmatpush.msra.mxu0 %v1752
    %1910 = vmatpush.msra.mxu0 %v1748
    %1911 = vmatpush.msra.mxu0 %v1744
    %1912 = vmatpush.msra.mxu0 %v1740
    %1913 = vmatpush.msra.mxu0 %v1736
    %1914 = vmatpush.msra.mxu0 %v1732
    %1915 = vmatpush.msra.mxu0 %v1728
    %1916 = vmatpush.msra.mxu0 %v1724
    %1917 = vmatmul.f32.gmra.mxu0 %v1721
    %v1918 = vpop.f32.mrf.mxu0
    %v1919 = vadd.f32 %v1854, %v1918
    %1920 = vdwg.mxu0
    %1921 = vmatpush.msra.mxu0 %v1848
    %1922 = vmatpush.msra.mxu0 %v1844
    %1923 = vmatpush.msra.mxu0 %v1840
    %1924 = vmatpush.msra.mxu0 %v1836
    %1925 = vmatpush.msra.mxu0 %v1832
    %1926 = vmatpush.msra.mxu0 %v1828
    %1927 = vmatpush.msra.mxu0 %v1824
    %1928 = vmatpush.msra.mxu0 %v1820
    %1929 = vmatpush.msra.mxu0 %v1816
    %1930 = vmatpush.msra.mxu0 %v1812
    %1931 = vmatpush.msra.mxu0 %v1808
    %1932 = vmatpush.msra.mxu0 %v1804
    %1933 = vmatpush.msra.mxu0 %v1800
    %1934 = vmatpush.msra.mxu0 %v1796
    %1935 = vmatpush.msra.mxu0 %v1792
    %1936 = vmatpush.msra.mxu0 %v1788
    %1937 = vmatmul.f32.gmra.mxu0 %v1722
    %v1938 = vpop.f32.mrf.mxu0
    %v1939 = vadd.f32 %v1919, %v1938
    %1940 = vdwg.mxu0
    %1941 = vmatpush.msra.mxu0 %v1785
    %1942 = vmatpush.msra.mxu0 %v1781
    %1943 = vmatpush.msra.mxu0 %v1777
    %1944 = vmatpush.msra.mxu0 %v1773
    %1945 = vmatpush.msra.mxu0 %v1769
    %1946 = vmatpush.msra.mxu0 %v1765
    %1947 = vmatpush.msra.mxu0 %v1761
    %1948 = vmatpush.msra.mxu0 %v1757
    %1949 = vmatpush.msra.mxu0 %v1753
    %1950 = vmatpush.msra.mxu0 %v1749
    %1951 = vmatpush.msra.mxu0 %v1745
    %1952 = vmatpush.msra.mxu0 %v1741
    %1953 = vmatpush.msra.mxu0 %v1737
    %1954 = vmatpush.msra.mxu0 %v1733
    %1955 = vmatpush.msra.mxu0 %v1729
    %1956 = vmatpush.msra.mxu0 %v1725
    %1957 = vmatmul.f32.gmra.mxu0 %v1721
    %v1958 = vpop.f32.mrf.mxu0
    %v1959 = vadd.f32 %v1855, %v1958
    %1960 = vdwg.mxu0
    %1961 = vmatpush.msra.mxu0 %v1849
    %1962 = vmatpush.msra.mxu0 %v1845
    %1963 = vmatpush.msra.mxu0 %v1841
    %1964 = vmatpush.msra.mxu0 %v1837
    %1965 = vmatpush.msra.mxu0 %v1833
    %1966 = vmatpush.msra.mxu0 %v1829
    %1967 = vmatpush.msra.mxu0 %v1825
    %1968 = vmatpush.msra.mxu0 %v1821
    %1969 = vmatpush.msra.mxu0 %v1817
    %1970 = vmatpush.msra.mxu0 %v1813
    %1971 = vmatpush.msra.mxu0 %v1809
    %1972 = vmatpush.msra.mxu0 %v1805
    %1973 = vmatpush.msra.mxu0 %v1801
    %1974 = vmatpush.msra.mxu0 %v1797
    %1975 = vmatpush.msra.mxu0 %v1793
    %1976 = vmatpush.msra.mxu0 %v1789
    %1977 = vmatmul.f32.gmra.mxu0 %v1722
    %v1978 = vpop.f32.mrf.mxu0
    %v1979 = vadd.f32 %v1959, %v1978
    %1980 = vdwg.mxu0
    %1981 = vmatpush.msra.mxu0 %v1786
    %1982 = vmatpush.msra.mxu0 %v1782
    %1983 = vmatpush.msra.mxu0 %v1778
    %1984 = vmatpush.msra.mxu0 %v1774
    %1985 = vmatpush.msra.mxu0 %v1770
    %1986 = vmatpush.msra.mxu0 %v1766
    %1987 = vmatpush.msra.mxu0 %v1762
    %1988 = vmatpush.msra.mxu0 %v1758
    %1989 = vmatpush.msra.mxu0 %v1754
    %1990 = vmatpush.msra.mxu0 %v1750
    %1991 = vmatpush.msra.mxu0 %v1746
    %1992 = vmatpush.msra.mxu0 %v1742
    %1993 = vmatpush.msra.mxu0 %v1738
    %1994 = vmatpush.msra.mxu0 %v1734
    %1995 = vmatpush.msra.mxu0 %v1730
    %1996 = vmatpush.msra.mxu0 %v1726
    %1997 = vmatmul.f32.gmra.mxu0 %v1721
    %v1998 = vpop.f32.mrf.mxu0
    %v1999 = vadd.f32 %v1856, %v1998
    %2000 = vdwg.mxu0
    %2001 = vmatpush.msra.mxu0 %v1850
    %2002 = vmatpush.msra.mxu0 %v1846
    %2003 = vmatpush.msra.mxu0 %v1842
    %2004 = vmatpush.msra.mxu0 %v1838
    %2005 = vmatpush.msra.mxu0 %v1834
    %2006 = vmatpush.msra.mxu0 %v1830
    %2007 = vmatpush.msra.mxu0 %v1826
    %2008 = vmatpush.msra.mxu0 %v1822
    %2009 = vmatpush.msra.mxu0 %v1818
    %2010 = vmatpush.msra.mxu0 %v1814
    %2011 = vmatpush.msra.mxu0 %v1810
    %2012 = vmatpush.msra.mxu0 %v1806
    %2013 = vmatpush.msra.mxu0 %v1802
    %2014 = vmatpush.msra.mxu0 %v1798
    %2015 = vmatpush.msra.mxu0 %v1794
    %2016 = vmatpush.msra.mxu0 %v1790
    %2017 = vmatmul.f32.gmra.mxu0 %v1722
    %v2018 = vpop.f32.mrf.mxu0
    %v2019 = vadd.f32 %v1999, %v2018
    %2020 = vdwg.mxu0
    %v2021 = vxor.u32 %v1899, 2147483648
    %v2022 = vmul.f32 %v2021, 1.442695
    %v2023 = vpow.pop %v2022
    %v2024 = vadd.f32 %v2023, 1.0
    %v2025 = vrcp.pop %v2024
    %v2026 = vmul.f32 %v2024, %v2025
    %v2027 = vsub.f32 1.0, %v2026
    %v2028 = vmul.f32 %v2025, %v2027
    %v2029 = vadd.f32 %v2025, %v2028
    %vm2030 = vweird.f32 %v2024
    %vm2031 = vweird.f32 %v2025
    %vm2032 = vmor %vm2030, %vm2031
    %v2033 = vsel %vm2032, %v2025, %v2029
    %v2034 = vand.u32 2147483647, %v2024
    %vm2035 = vcmp.eq.f32.partialorder %v2034, 8.507059e+37
    %v2036 = vand.u32 %v2024, 2147483648
    %v2037 = vor.u32 1.1754944e-38, %v2036
    %v2038 = vsel %vm2035, %v2037, %v2033
    %v2039 = vmul.f32 1.0, %v2038
    %v2040 = vxor.u32 %v1939, 2147483648
    %v2041 = vmul.f32 %v2040, 1.442695
    %v2042 = vpow.pop %v2041
    %v2043 = vadd.f32 %v2042, 1.0
    %v2044 = vrcp.pop %v2043
    %v2045 = vmul.f32 %v2043, %v2044
    %v2046 = vsub.f32 1.0, %v2045
    %v2047 = vmul.f32 %v2044, %v2046
    %v2048 = vadd.f32 %v2044, %v2047
    %vm2049 = vweird.f32 %v2043
    %vm2050 = vweird.f32 %v2044
    %vm2051 = vmor %vm2049, %vm2050
    %v2052 = vsel %vm2051, %v2044, %v2048
    %v2053 = vand.u32 2147483647, %v2043
    %vm2054 = vcmp.eq.f32.partialorder %v2053, 8.507059e+37
    %v2055 = vand.u32 %v2043, 2147483648
    %v2056 = vor.u32 1.1754944e-38, %v2055
    %v2057 = vsel %vm2054, %v2056, %v2052
    %v2058 = vmul.f32 1.0, %v2057
    %v2059 = vtanh.pop %v1979
    %v2060 = vxor.u32 %v2019, 2147483648
    %v2061 = vmul.f32 %v2060, 1.442695
    %v2062 = vpow.pop %v2061
    %v2063 = vadd.f32 %v2062, 1.0
    %v2064 = vrcp.pop %v2063
    %v2065 = vmul.f32 %v2063, %v2064
    %v2066 = vsub.f32 1.0, %v2065
    %v2067 = vmul.f32 %v2064, %v2066
    %v2068 = vadd.f32 %v2064, %v2067
    %vm2069 = vweird.f32 %v2063
    %vm2070 = vweird.f32 %v2064
    %vm2071 = vmor %vm2069, %vm2070
    %v2072 = vsel %vm2071, %v2064, %v2068
    %v2073 = vand.u32 2147483647, %v2063
    %vm2074 = vcmp.eq.f32.partialorder %v2073, 8.507059e+37
    %v2075 = vand.u32 %v2063, 2147483648
    %v2076 = vor.u32 1.1754944e-38, %v2075
    %v2077 = vsel %vm2074, %v2076, %v2072
    %v2078 = vmul.f32 1.0, %v2077
    %v2079 = vld [vmem:[#allocation5] sm:$0xff]
    %v2080 = vmul.f32 %v2058, %v2079
    %v2081 = vmul.f32 %v2039, %v2059
    %v2082 = vadd.f32 %v2080, %v2081
    %v2083 = vtanh.pop %v2082
    %v2084 = vmul.f32 %v2078, %v2083
    %2085 = vst [vmem:[#allocation5] sm:$0xff] %v2082
    %2086 = vst [vmem:[#allocation3 + $0x8] sm:$0xff] %v2084
    %s2087 = smul.u32 3, 4
    %s2088 = smul.addr %s2087, 8
    %s2089 = scalar_lea.vmem [#allocation2], %s2088
    %v2090 = vld [vmem:[%s2089] sm:$0xff]
    %v2091 = vld [vmem:[%s2089 + $0x8] sm:$0xff]
    %v2092 = vld [vmem:[%s2089 + $0x10] sm:$0xff]
    %v2093 = vld [vmem:[%s2089 + $0x18] sm:$0xff]
    %v2094 = vld [vmem:[#allocation3] sm:$0xff]
    %v2095 = vld [vmem:[#allocation6] sm:$0xff]
    %v2096 = vld [vmem:[#allocation6 + $0x8] sm:$0xff]
    %v2097 = vld [vmem:[#allocation6 + $0x10] sm:$0xff]
    %v2098 = vld [vmem:[#allocation6 + $0x18] sm:$0xff]
    %v2099 = vld [vmem:[#allocation6 + $0x20] sm:$0xff]
    %v2100 = vld [vmem:[#allocation6 + $0x28] sm:$0xff]
    %v2101 = vld [vmem:[#allocation6 + $0x30] sm:$0xff]
    %v2102 = vld [vmem:[#allocation6 + $0x38] sm:$0xff]
    %v2103 = vld [vmem:[#allocation6 + $0x40] sm:$0xff]
    %v2104 = vld [vmem:[#allocation6 + $0x48] sm:$0xff]
    %v2105 = vld [vmem:[#allocation6 + $0x50] sm:$0xff]
    %v2106 = vld [vmem:[#allocation6 + $0x58] sm:$0xff]
    %v2107 = vld [vmem:[#allocation6 + $0x60] sm:$0xff]
    %v2108 = vld [vmem:[#allocation6 + $0x68] sm:$0xff]
    %v2109 = vld [vmem:[#allocation6 + $0x70] sm:$0xff]
    %v2110 = vld [vmem:[#allocation6 + $0x78] sm:$0xff]
    %v2111 = vld [vmem:[#allocation6 + $0x80] sm:$0xff]
    %v2112 = vld [vmem:[#allocation6 + $0x88] sm:$0xff]
    %v2113 = vld [vmem:[#allocation6 + $0x90] sm:$0xff]
    %v2114 = vld [vmem:[#allocation6 + $0x98] sm:$0xff]
    %v2115 = vld [vmem:[#allocation6 + $0xa0] sm:$0xff]
    %v2116 = vld [vmem:[#allocation6 + $0xa8] sm:$0xff]
    %v2117 = vld [vmem:[#allocation6 + $0xb0] sm:$0xff]
    %v2118 = vld [vmem:[#allocation6 + $0xb8] sm:$0xff]
    %v2119 = vld [vmem:[#allocation6 + $0xc0] sm:$0xff]
    %v2120 = vld [vmem:[#allocation6 + $0xc8] sm:$0xff]
    %v2121 = vld [vmem:[#allocation6 + $0xd0] sm:$0xff]
    %v2122 = vld [vmem:[#allocation6 + $0xd8] sm:$0xff]
    %v2123 = vld [vmem:[#allocation6 + $0xe0] sm:$0xff]
    %v2124 = vld [vmem:[#allocation6 + $0xe8] sm:$0xff]
    %v2125 = vld [vmem:[#allocation6 + $0xf0] sm:$0xff]
    %v2126 = vld [vmem:[#allocation6 + $0xf8] sm:$0xff]
    %v2127 = vld [vmem:[#allocation6 + $0x100] sm:$0xff]
    %v2128 = vld [vmem:[#allocation6 + $0x108] sm:$0xff]
    %v2129 = vld [vmem:[#allocation6 + $0x110] sm:$0xff]
    %v2130 = vld [vmem:[#allocation6 + $0x118] sm:$0xff]
    %v2131 = vld [vmem:[#allocation6 + $0x120] sm:$0xff]
    %v2132 = vld [vmem:[#allocation6 + $0x128] sm:$0xff]
    %v2133 = vld [vmem:[#allocation6 + $0x130] sm:$0xff]
    %v2134 = vld [vmem:[#allocation6 + $0x138] sm:$0xff]
    %v2135 = vld [vmem:[#allocation6 + $0x140] sm:$0xff]
    %v2136 = vld [vmem:[#allocation6 + $0x148] sm:$0xff]
    %v2137 = vld [vmem:[#allocation6 + $0x150] sm:$0xff]
    %v2138 = vld [vmem:[#allocation6 + $0x158] sm:$0xff]
    %v2139 = vld [vmem:[#allocation6 + $0x160] sm:$0xff]
    %v2140 = vld [vmem:[#allocation6 + $0x168] sm:$0xff]
    %v2141 = vld [vmem:[#allocation6 + $0x170] sm:$0xff]
    %v2142 = vld [vmem:[#allocation6 + $0x178] sm:$0xff]
    %v2143 = vld [vmem:[#allocation6 + $0x180] sm:$0xff]
    %v2144 = vld [vmem:[#allocation6 + $0x188] sm:$0xff]
    %v2145 = vld [vmem:[#allocation6 + $0x190] sm:$0xff]
    %v2146 = vld [vmem:[#allocation6 + $0x198] sm:$0xff]
    %v2147 = vld [vmem:[#allocation6 + $0x1a0] sm:$0xff]
    %v2148 = vld [vmem:[#allocation6 + $0x1a8] sm:$0xff]
    %v2149 = vld [vmem:[#allocation6 + $0x1b0] sm:$0xff]
    %v2150 = vld [vmem:[#allocation6 + $0x1b8] sm:$0xff]
    %v2151 = vld [vmem:[#allocation6 + $0x1c0] sm:$0xff]
    %v2152 = vld [vmem:[#allocation6 + $0x1c8] sm:$0xff]
    %v2153 = vld [vmem:[#allocation6 + $0x1d0] sm:$0xff]
    %v2154 = vld [vmem:[#allocation6 + $0x1d8] sm:$0xff]
    %v2155 = vld [vmem:[#allocation6 + $0x1e0] sm:$0xff]
    %v2156 = vld [vmem:[#allocation6 + $0x1e8] sm:$0xff]
    %v2157 = vld [vmem:[#allocation6 + $0x1f0] sm:$0xff]
    %v2158 = vld [vmem:[#allocation6 + $0x1f8] sm:$0xff]
    %2159 = vmatpush.msra.mxu0 %v2155
    %2160 = vmatpush.msra.mxu0 %v2151
    %2161 = vmatpush.msra.mxu0 %v2147
    %2162 = vmatpush.msra.mxu0 %v2143
    %2163 = vmatpush.msra.mxu0 %v2139
    %2164 = vmatpush.msra.mxu0 %v2135
    %2165 = vmatpush.msra.mxu0 %v2131
    %2166 = vmatpush.msra.mxu0 %v2127
    %2167 = vmatpush.msra.mxu0 %v2123
    %2168 = vmatpush.msra.mxu0 %v2119
    %2169 = vmatpush.msra.mxu0 %v2115
    %2170 = vmatpush.msra.mxu0 %v2111
    %2171 = vmatpush.msra.mxu0 %v2107
    %2172 = vmatpush.msra.mxu0 %v2103
    %2173 = vmatpush.msra.mxu0 %v2099
    %2174 = vmatpush.msra.mxu0 %v2095
    %2175 = vmatmul.f32.gmra.mxu0 %v2094
    %v2176 = vpop.f32.mrf.mxu0
    %v2177 = vadd.f32 0.0, %v2176
    %2178 = vdwg.mxu0
    %2179 = vmatpush.msra.mxu0 %v2156
    %2180 = vmatpush.msra.mxu0 %v2152
    %2181 = vmatpush.msra.mxu0 %v2148
    %2182 = vmatpush.msra.mxu0 %v2144
    %2183 = vmatpush.msra.mxu0 %v2140
    %2184 = vmatpush.msra.mxu0 %v2136
    %2185 = vmatpush.msra.mxu0 %v2132
    %2186 = vmatpush.msra.mxu0 %v2128
    %2187 = vmatpush.msra.mxu0 %v2124
    %2188 = vmatpush.msra.mxu0 %v2120
    %2189 = vmatpush.msra.mxu0 %v2116
    %2190 = vmatpush.msra.mxu0 %v2112
    %2191 = vmatpush.msra.mxu0 %v2108
    %2192 = vmatpush.msra.mxu0 %v2104
    %2193 = vmatpush.msra.mxu0 %v2100
    %2194 = vmatpush.msra.mxu0 %v2096
    %2195 = vmatmul.f32.gmra.mxu0 %v2094
    %v2196 = vpop.f32.mrf.mxu0
    %v2197 = vadd.f32 0.0, %v2196
    %2198 = vdwg.mxu0
    %2199 = vmatpush.msra.mxu0 %v2157
    %2200 = vmatpush.msra.mxu0 %v2153
    %2201 = vmatpush.msra.mxu0 %v2149
    %2202 = vmatpush.msra.mxu0 %v2145
    %2203 = vmatpush.msra.mxu0 %v2141
    %2204 = vmatpush.msra.mxu0 %v2137
    %2205 = vmatpush.msra.mxu0 %v2133
    %2206 = vmatpush.msra.mxu0 %v2129
    %2207 = vmatpush.msra.mxu0 %v2125
    %2208 = vmatpush.msra.mxu0 %v2121
    %2209 = vmatpush.msra.mxu0 %v2117
    %2210 = vmatpush.msra.mxu0 %v2113
    %2211 = vmatpush.msra.mxu0 %v2109
    %2212 = vmatpush.msra.mxu0 %v2105
    %2213 = vmatpush.msra.mxu0 %v2101
    %2214 = vmatpush.msra.mxu0 %v2097
    %2215 = vmatmul.f32.gmra.mxu0 %v2094
    %v2216 = vpop.f32.mrf.mxu0
    %v2217 = vadd.f32 0.0, %v2216
    %2218 = vdwg.mxu0
    %2219 = vmatpush.msra.mxu0 %v2158
    %2220 = vmatpush.msra.mxu0 %v2154
    %2221 = vmatpush.msra.mxu0 %v2150
    %2222 = vmatpush.msra.mxu0 %v2146
    %2223 = vmatpush.msra.mxu0 %v2142
    %2224 = vmatpush.msra.mxu0 %v2138
    %2225 = vmatpush.msra.mxu0 %v2134
    %2226 = vmatpush.msra.mxu0 %v2130
    %2227 = vmatpush.msra.mxu0 %v2126
    %2228 = vmatpush.msra.mxu0 %v2122
    %2229 = vmatpush.msra.mxu0 %v2118
    %2230 = vmatpush.msra.mxu0 %v2114
    %2231 = vmatpush.msra.mxu0 %v2110
    %2232 = vmatpush.msra.mxu0 %v2106
    %2233 = vmatpush.msra.mxu0 %v2102
    %2234 = vmatpush.msra.mxu0 %v2098
    %2235 = vmatmul.f32.gmra.mxu0 %v2094
    %v2236 = vpop.f32.mrf.mxu0
    %v2237 = vadd.f32 0.0, %v2236
    %2238 = vdwg.mxu0
    %v2239 = vadd.f32 %v2090, %v2177
    %v2240 = vadd.f32 %v2091, %v2197
    %v2241 = vadd.f32 %v2092, %v2217
    %v2242 = vadd.f32 %v2093, %v2237
    %v2243 = vxor.u32 %v2239, 2147483648
    %v2244 = vmul.f32 %v2243, 1.442695
    %v2245 = vpow.pop %v2244
    %v2246 = vadd.f32 %v2245, 1.0
    %v2247 = vrcp.pop %v2246
    %v2248 = vmul.f32 %v2246, %v2247
    %v2249 = vsub.f32 1.0, %v2248
    %v2250 = vmul.f32 %v2247, %v2249
    %v2251 = vadd.f32 %v2247, %v2250
    %vm2252 = vweird.f32 %v2246
    %vm2253 = vweird.f32 %v2247
    %vm2254 = vmor %vm2252, %vm2253
    %v2255 = vsel %vm2254, %v2247, %v2251
    %v2256 = vand.u32 2147483647, %v2246
    %vm2257 = vcmp.eq.f32.partialorder %v2256, 8.507059e+37
    %v2258 = vand.u32 %v2246, 2147483648
    %v2259 = vor.u32 1.1754944e-38, %v2258
    %v2260 = vsel %vm2257, %v2259, %v2255
    %v2261 = vmul.f32 1.0, %v2260
    %v2262 = vxor.u32 %v2240, 2147483648
    %v2263 = vmul.f32 %v2262, 1.442695
    %v2264 = vpow.pop %v2263
    %v2265 = vadd.f32 %v2264, 1.0
    %v2266 = vrcp.pop %v2265
    %v2267 = vmul.f32 %v2265, %v2266
    %v2268 = vsub.f32 1.0, %v2267
    %v2269 = vmul.f32 %v2266, %v2268
    %v2270 = vadd.f32 %v2266, %v2269
    %vm2271 = vweird.f32 %v2265
    %vm2272 = vweird.f32 %v2266
    %vm2273 = vmor %vm2271, %vm2272
    %v2274 = vsel %vm2273, %v2266, %v2270
    %v2275 = vand.u32 2147483647, %v2265
    %vm2276 = vcmp.eq.f32.partialorder %v2275, 8.507059e+37
    %v2277 = vand.u32 %v2265, 2147483648
    %v2278 = vor.u32 1.1754944e-38, %v2277
    %v2279 = vsel %vm2276, %v2278, %v2274
    %v2280 = vmul.f32 1.0, %v2279
    %v2281 = vtanh.pop %v2241
    %v2282 = vxor.u32 %v2242, 2147483648
    %v2283 = vmul.f32 %v2282, 1.442695
    %v2284 = vpow.pop %v2283
    %v2285 = vadd.f32 %v2284, 1.0
    %v2286 = vrcp.pop %v2285
    %v2287 = vmul.f32 %v2285, %v2286
    %v2288 = vsub.f32 1.0, %v2287
    %v2289 = vmul.f32 %v2286, %v2288
    %v2290 = vadd.f32 %v2286, %v2289
    %vm2291 = vweird.f32 %v2285
    %vm2292 = vweird.f32 %v2286
    %vm2293 = vmor %vm2291, %vm2292
    %v2294 = vsel %vm2293, %v2286, %v2290
    %v2295 = vand.u32 2147483647, %v2285
    %vm2296 = vcmp.eq.f32.partialorder %v2295, 8.507059e+37
    %v2297 = vand.u32 %v2285, 2147483648
    %v2298 = vor.u32 1.1754944e-38, %v2297
    %v2299 = vsel %vm2296, %v2298, %v2294
    %v2300 = vmul.f32 1.0, %v2299
    %v2301 = vld [vmem:[#allocation4] sm:$0xff]
    %v2302 = vmul.f32 %v2280, %v2301
    %v2303 = vmul.f32 %v2261, %v2281
    %v2304 = vadd.f32 %v2302, %v2303
    %v2305 = vtanh.pop %v2304
    %v2306 = vmul.f32 %v2300, %v2305
    %2307 = vst [vmem:[#allocation4] sm:$0xff] %v2304
    %2308 = vst [vmem:[#allocation3] sm:$0xff] %v2306
    %v2309 = vld [vmem:[#allocation3] sm:$0xff]
    %v2310 = vld [vmem:[#allocation3 + $0x8] sm:$0xff]
    %v2311 = vld [vmem:[#allocation9] sm:$0xff]
    %v2312 = vld [vmem:[#allocation9 + $0x8] sm:$0xff]
    %v2313 = vld [vmem:[#allocation9 + $0x10] sm:$0xff]
    %v2314 = vld [vmem:[#allocation9 + $0x18] sm:$0xff]
    %v2315 = vld [vmem:[#allocation9 + $0x20] sm:$0xff]
    %v2316 = vld [vmem:[#allocation9 + $0x28] sm:$0xff]
    %v2317 = vld [vmem:[#allocation9 + $0x30] sm:$0xff]
    %v2318 = vld [vmem:[#allocation9 + $0x38] sm:$0xff]
    %v2319 = vld [vmem:[#allocation9 + $0x40] sm:$0xff]
    %v2320 = vld [vmem:[#allocation9 + $0x48] sm:$0xff]
    %v2321 = vld [vmem:[#allocation9 + $0x50] sm:$0xff]
    %v2322 = vld [vmem:[#allocation9 + $0x58] sm:$0xff]
    %v2323 = vld [vmem:[#allocation9 + $0x60] sm:$0xff]
    %v2324 = vld [vmem:[#allocation9 + $0x68] sm:$0xff]
    %v2325 = vld [vmem:[#allocation9 + $0x70] sm:$0xff]
    %v2326 = vld [vmem:[#allocation9 + $0x78] sm:$0xff]
    %v2327 = vld [vmem:[#allocation9 + $0x80] sm:$0xff]
    %v2328 = vld [vmem:[#allocation9 + $0x88] sm:$0xff]
    %v2329 = vld [vmem:[#allocation9 + $0x90] sm:$0xff]
    %v2330 = vld [vmem:[#allocation9 + $0x98] sm:$0xff]
    %v2331 = vld [vmem:[#allocation9 + $0xa0] sm:$0xff]
    %v2332 = vld [vmem:[#allocation9 + $0xa8] sm:$0xff]
    %v2333 = vld [vmem:[#allocation9 + $0xb0] sm:$0xff]
    %v2334 = vld [vmem:[#allocation9 + $0xb8] sm:$0xff]
    %v2335 = vld [vmem:[#allocation9 + $0xc0] sm:$0xff]
    %v2336 = vld [vmem:[#allocation9 + $0xc8] sm:$0xff]
    %v2337 = vld [vmem:[#allocation9 + $0xd0] sm:$0xff]
    %v2338 = vld [vmem:[#allocation9 + $0xd8] sm:$0xff]
    %v2339 = vld [vmem:[#allocation9 + $0xe0] sm:$0xff]
    %v2340 = vld [vmem:[#allocation9 + $0xe8] sm:$0xff]
    %v2341 = vld [vmem:[#allocation9 + $0xf0] sm:$0xff]
    %v2342 = vld [vmem:[#allocation9 + $0xf8] sm:$0xff]
    %v2343 = vld [vmem:[#allocation9 + $0x100] sm:$0xff]
    %v2344 = vld [vmem:[#allocation9 + $0x108] sm:$0xff]
    %v2345 = vld [vmem:[#allocation9 + $0x110] sm:$0xff]
    %v2346 = vld [vmem:[#allocation9 + $0x118] sm:$0xff]
    %v2347 = vld [vmem:[#allocation9 + $0x120] sm:$0xff]
    %v2348 = vld [vmem:[#allocation9 + $0x128] sm:$0xff]
    %v2349 = vld [vmem:[#allocation9 + $0x130] sm:$0xff]
    %v2350 = vld [vmem:[#allocation9 + $0x138] sm:$0xff]
    %v2351 = vld [vmem:[#allocation9 + $0x140] sm:$0xff]
    %v2352 = vld [vmem:[#allocation9 + $0x148] sm:$0xff]
    %v2353 = vld [vmem:[#allocation9 + $0x150] sm:$0xff]
    %v2354 = vld [vmem:[#allocation9 + $0x158] sm:$0xff]
    %v2355 = vld [vmem:[#allocation9 + $0x160] sm:$0xff]
    %v2356 = vld [vmem:[#allocation9 + $0x168] sm:$0xff]
    %v2357 = vld [vmem:[#allocation9 + $0x170] sm:$0xff]
    %v2358 = vld [vmem:[#allocation9 + $0x178] sm:$0xff]
    %v2359 = vld [vmem:[#allocation9 + $0x180] sm:$0xff]
    %v2360 = vld [vmem:[#allocation9 + $0x188] sm:$0xff]
    %v2361 = vld [vmem:[#allocation9 + $0x190] sm:$0xff]
    %v2362 = vld [vmem:[#allocation9 + $0x198] sm:$0xff]
    %v2363 = vld [vmem:[#allocation9 + $0x1a0] sm:$0xff]
    %v2364 = vld [vmem:[#allocation9 + $0x1a8] sm:$0xff]
    %v2365 = vld [vmem:[#allocation9 + $0x1b0] sm:$0xff]
    %v2366 = vld [vmem:[#allocation9 + $0x1b8] sm:$0xff]
    %v2367 = vld [vmem:[#allocation9 + $0x1c0] sm:$0xff]
    %v2368 = vld [vmem:[#allocation9 + $0x1c8] sm:$0xff]
    %v2369 = vld [vmem:[#allocation9 + $0x1d0] sm:$0xff]
    %v2370 = vld [vmem:[#allocation9 + $0x1d8] sm:$0xff]
    %v2371 = vld [vmem:[#allocation9 + $0x1e0] sm:$0xff]
    %v2372 = vld [vmem:[#allocation9 + $0x1e8] sm:$0xff]
    %v2373 = vld [vmem:[#allocation9 + $0x1f0] sm:$0xff]
    %v2374 = vld [vmem:[#allocation9 + $0x1f8] sm:$0xff]
    %v2375 = vld [vmem:[#allocation9 + $0x200] sm:$0xff]
    %v2376 = vld [vmem:[#allocation9 + $0x208] sm:$0xff]
    %v2377 = vld [vmem:[#allocation9 + $0x210] sm:$0xff]
    %v2378 = vld [vmem:[#allocation9 + $0x218] sm:$0xff]
    %v2379 = vld [vmem:[#allocation9 + $0x220] sm:$0xff]
    %v2380 = vld [vmem:[#allocation9 + $0x228] sm:$0xff]
    %v2381 = vld [vmem:[#allocation9 + $0x230] sm:$0xff]
    %v2382 = vld [vmem:[#allocation9 + $0x238] sm:$0xff]
    %v2383 = vld [vmem:[#allocation9 + $0x240] sm:$0xff]
    %v2384 = vld [vmem:[#allocation9 + $0x248] sm:$0xff]
    %v2385 = vld [vmem:[#allocation9 + $0x250] sm:$0xff]
    %v2386 = vld [vmem:[#allocation9 + $0x258] sm:$0xff]
    %v2387 = vld [vmem:[#allocation9 + $0x260] sm:$0xff]
    %v2388 = vld [vmem:[#allocation9 + $0x268] sm:$0xff]
    %v2389 = vld [vmem:[#allocation9 + $0x270] sm:$0xff]
    %v2390 = vld [vmem:[#allocation9 + $0x278] sm:$0xff]
    %v2391 = vld [vmem:[#allocation9 + $0x280] sm:$0xff]
    %v2392 = vld [vmem:[#allocation9 + $0x288] sm:$0xff]
    %v2393 = vld [vmem:[#allocation9 + $0x290] sm:$0xff]
    %v2394 = vld [vmem:[#allocation9 + $0x298] sm:$0xff]
    %v2395 = vld [vmem:[#allocation9 + $0x2a0] sm:$0xff]
    %v2396 = vld [vmem:[#allocation9 + $0x2a8] sm:$0xff]
    %v2397 = vld [vmem:[#allocation9 + $0x2b0] sm:$0xff]
    %v2398 = vld [vmem:[#allocation9 + $0x2b8] sm:$0xff]
    %v2399 = vld [vmem:[#allocation9 + $0x2c0] sm:$0xff]
    %v2400 = vld [vmem:[#allocation9 + $0x2c8] sm:$0xff]
    %v2401 = vld [vmem:[#allocation9 + $0x2d0] sm:$0xff]
    %v2402 = vld [vmem:[#allocation9 + $0x2d8] sm:$0xff]
    %v2403 = vld [vmem:[#allocation9 + $0x2e0] sm:$0xff]
    %v2404 = vld [vmem:[#allocation9 + $0x2e8] sm:$0xff]
    %v2405 = vld [vmem:[#allocation9 + $0x2f0] sm:$0xff]
    %v2406 = vld [vmem:[#allocation9 + $0x2f8] sm:$0xff]
    %v2407 = vld [vmem:[#allocation9 + $0x300] sm:$0xff]
    %v2408 = vld [vmem:[#allocation9 + $0x308] sm:$0xff]
    %v2409 = vld [vmem:[#allocation9 + $0x310] sm:$0xff]
    %v2410 = vld [vmem:[#allocation9 + $0x318] sm:$0xff]
    %v2411 = vld [vmem:[#allocation9 + $0x320] sm:$0xff]
    %v2412 = vld [vmem:[#allocation9 + $0x328] sm:$0xff]
    %v2413 = vld [vmem:[#allocation9 + $0x330] sm:$0xff]
    %v2414 = vld [vmem:[#allocation9 + $0x338] sm:$0xff]
    %v2415 = vld [vmem:[#allocation9 + $0x340] sm:$0xff]
    %v2416 = vld [vmem:[#allocation9 + $0x348] sm:$0xff]
    %v2417 = vld [vmem:[#allocation9 + $0x350] sm:$0xff]
    %v2418 = vld [vmem:[#allocation9 + $0x358] sm:$0xff]
    %v2419 = vld [vmem:[#allocation9 + $0x360] sm:$0xff]
    %v2420 = vld [vmem:[#allocation9 + $0x368] sm:$0xff]
    %v2421 = vld [vmem:[#allocation9 + $0x370] sm:$0xff]
    %v2422 = vld [vmem:[#allocation9 + $0x378] sm:$0xff]
    %v2423 = vld [vmem:[#allocation9 + $0x380] sm:$0xff]
    %v2424 = vld [vmem:[#allocation9 + $0x388] sm:$0xff]
    %v2425 = vld [vmem:[#allocation9 + $0x390] sm:$0xff]
    %v2426 = vld [vmem:[#allocation9 + $0x398] sm:$0xff]
    %v2427 = vld [vmem:[#allocation9 + $0x3a0] sm:$0xff]
    %v2428 = vld [vmem:[#allocation9 + $0x3a8] sm:$0xff]
    %v2429 = vld [vmem:[#allocation9 + $0x3b0] sm:$0xff]
    %v2430 = vld [vmem:[#allocation9 + $0x3b8] sm:$0xff]
    %v2431 = vld [vmem:[#allocation9 + $0x3c0] sm:$0xff]
    %v2432 = vld [vmem:[#allocation9 + $0x3c8] sm:$0xff]
    %v2433 = vld [vmem:[#allocation9 + $0x3d0] sm:$0xff]
    %v2434 = vld [vmem:[#allocation9 + $0x3d8] sm:$0xff]
    %v2435 = vld [vmem:[#allocation9 + $0x3e0] sm:$0xff]
    %v2436 = vld [vmem:[#allocation9 + $0x3e8] sm:$0xff]
    %v2437 = vld [vmem:[#allocation9 + $0x3f0] sm:$0xff]
    %v2438 = vld [vmem:[#allocation9 + $0x3f8] sm:$0xff]
    %v2439 = vld [vmem:[%s5] sm:$0xf]
    %v2441 = vperm.slane %v2439, 0
    %v2442 = vperm.slane %v2439, 1
    %v2443 = vperm.slane %v2439, 2
    %v2444 = vperm.slane %v2439, 3
    %2449 = vmatpush.msra.mxu0 %v2371
    %2450 = vmatpush.msra.mxu0 %v2367
    %2451 = vmatpush.msra.mxu0 %v2363
    %2452 = vmatpush.msra.mxu0 %v2359
    %2453 = vmatpush.msra.mxu0 %v2355
    %2454 = vmatpush.msra.mxu0 %v2351
    %2455 = vmatpush.msra.mxu0 %v2347
    %2456 = vmatpush.msra.mxu0 %v2343
    %2457 = vmatpush.msra.mxu0 %v2339
    %2458 = vmatpush.msra.mxu0 %v2335
    %2459 = vmatpush.msra.mxu0 %v2331
    %2460 = vmatpush.msra.mxu0 %v2327
    %2461 = vmatpush.msra.mxu0 %v2323
    %2462 = vmatpush.msra.mxu0 %v2319
    %2463 = vmatpush.msra.mxu0 %v2315
    %2464 = vmatpush.msra.mxu0 %v2311
    %2465 = vmatmul.f32.gmra.mxu0 %v2309
    %v2466 = vpop.f32.mrf.mxu0
    %v2467 = vadd.f32 %v2441, %v2466
    %2468 = vdwg.mxu0
    %2469 = vmatpush.msra.mxu0 %v2435
    %2470 = vmatpush.msra.mxu0 %v2431
    %2471 = vmatpush.msra.mxu0 %v2427
    %2472 = vmatpush.msra.mxu0 %v2423
    %2473 = vmatpush.msra.mxu0 %v2419
    %2474 = vmatpush.msra.mxu0 %v2415
    %2475 = vmatpush.msra.mxu0 %v2411
    %2476 = vmatpush.msra.mxu0 %v2407
    %2477 = vmatpush.msra.mxu0 %v2403
    %2478 = vmatpush.msra.mxu0 %v2399
    %2479 = vmatpush.msra.mxu0 %v2395
    %2480 = vmatpush.msra.mxu0 %v2391
    %2481 = vmatpush.msra.mxu0 %v2387
    %2482 = vmatpush.msra.mxu0 %v2383
    %2483 = vmatpush.msra.mxu0 %v2379
    %2484 = vmatpush.msra.mxu0 %v2375
    %2485 = vmatmul.f32.gmra.mxu0 %v2310
    %v2486 = vpop.f32.mrf.mxu0
    %v2487 = vadd.f32 %v2467, %v2486
    %2488 = vdwg.mxu0
    %2489 = vmatpush.msra.mxu0 %v2372
    %2490 = vmatpush.msra.mxu0 %v2368
    %2491 = vmatpush.msra.mxu0 %v2364
    %2492 = vmatpush.msra.mxu0 %v2360
    %2493 = vmatpush.msra.mxu0 %v2356
    %2494 = vmatpush.msra.mxu0 %v2352
    %2495 = vmatpush.msra.mxu0 %v2348
    %2496 = vmatpush.msra.mxu0 %v2344
    %2497 = vmatpush.msra.mxu0 %v2340
    %2498 = vmatpush.msra.mxu0 %v2336
    %2499 = vmatpush.msra.mxu0 %v2332
    %2500 = vmatpush.msra.mxu0 %v2328
    %2501 = vmatpush.msra.mxu0 %v2324
    %2502 = vmatpush.msra.mxu0 %v2320
    %2503 = vmatpush.msra.mxu0 %v2316
    %2504 = vmatpush.msra.mxu0 %v2312
    %2505 = vmatmul.f32.gmra.mxu0 %v2309
    %v2506 = vpop.f32.mrf.mxu0
    %v2507 = vadd.f32 %v2442, %v2506
    %2508 = vdwg.mxu0
    %2509 = vmatpush.msra.mxu0 %v2436
    %2510 = vmatpush.msra.mxu0 %v2432
    %2511 = vmatpush.msra.mxu0 %v2428
    %2512 = vmatpush.msra.mxu0 %v2424
    %2513 = vmatpush.msra.mxu0 %v2420
    %2514 = vmatpush.msra.mxu0 %v2416
    %2515 = vmatpush.msra.mxu0 %v2412
    %2516 = vmatpush.msra.mxu0 %v2408
    %2517 = vmatpush.msra.mxu0 %v2404
    %2518 = vmatpush.msra.mxu0 %v2400
    %2519 = vmatpush.msra.mxu0 %v2396
    %2520 = vmatpush.msra.mxu0 %v2392
    %2521 = vmatpush.msra.mxu0 %v2388
    %2522 = vmatpush.msra.mxu0 %v2384
    %2523 = vmatpush.msra.mxu0 %v2380
    %2524 = vmatpush.msra.mxu0 %v2376
    %2525 = vmatmul.f32.gmra.mxu0 %v2310
    %v2526 = vpop.f32.mrf.mxu0
    %v2527 = vadd.f32 %v2507, %v2526
    %2528 = vdwg.mxu0
    %2529 = vmatpush.msra.mxu0 %v2373
    %2530 = vmatpush.msra.mxu0 %v2369
    %2531 = vmatpush.msra.mxu0 %v2365
    %2532 = vmatpush.msra.mxu0 %v2361
    %2533 = vmatpush.msra.mxu0 %v2357
    %2534 = vmatpush.msra.mxu0 %v2353
    %2535 = vmatpush.msra.mxu0 %v2349
    %2536 = vmatpush.msra.mxu0 %v2345
    %2537 = vmatpush.msra.mxu0 %v2341
    %2538 = vmatpush.msra.mxu0 %v2337
    %2539 = vmatpush.msra.mxu0 %v2333
    %2540 = vmatpush.msra.mxu0 %v2329
    %2541 = vmatpush.msra.mxu0 %v2325
    %2542 = vmatpush.msra.mxu0 %v2321
    %2543 = vmatpush.msra.mxu0 %v2317
    %2544 = vmatpush.msra.mxu0 %v2313
    %2545 = vmatmul.f32.gmra.mxu0 %v2309
    %v2546 = vpop.f32.mrf.mxu0
    %v2547 = vadd.f32 %v2443, %v2546
    %2548 = vdwg.mxu0
    %2549 = vmatpush.msra.mxu0 %v2437
    %2550 = vmatpush.msra.mxu0 %v2433
    %2551 = vmatpush.msra.mxu0 %v2429
    %2552 = vmatpush.msra.mxu0 %v2425
    %2553 = vmatpush.msra.mxu0 %v2421
    %2554 = vmatpush.msra.mxu0 %v2417
    %2555 = vmatpush.msra.mxu0 %v2413
    %2556 = vmatpush.msra.mxu0 %v2409
    %2557 = vmatpush.msra.mxu0 %v2405
    %2558 = vmatpush.msra.mxu0 %v2401
    %2559 = vmatpush.msra.mxu0 %v2397
    %2560 = vmatpush.msra.mxu0 %v2393
    %2561 = vmatpush.msra.mxu0 %v2389
    %2562 = vmatpush.msra.mxu0 %v2385
    %2563 = vmatpush.msra.mxu0 %v2381
    %2564 = vmatpush.msra.mxu0 %v2377
    %2565 = vmatmul.f32.gmra.mxu0 %v2310
    %v2566 = vpop.f32.mrf.mxu0
    %v2567 = vadd.f32 %v2547, %v2566
    %2568 = vdwg.mxu0
    %2569 = vmatpush.msra.mxu0 %v2374
    %2570 = vmatpush.msra.mxu0 %v2370
    %2571 = vmatpush.msra.mxu0 %v2366
    %2572 = vmatpush.msra.mxu0 %v2362
    %2573 = vmatpush.msra.mxu0 %v2358
    %2574 = vmatpush.msra.mxu0 %v2354
    %2575 = vmatpush.msra.mxu0 %v2350
    %2576 = vmatpush.msra.mxu0 %v2346
    %2577 = vmatpush.msra.mxu0 %v2342
    %2578 = vmatpush.msra.mxu0 %v2338
    %2579 = vmatpush.msra.mxu0 %v2334
    %2580 = vmatpush.msra.mxu0 %v2330
    %2581 = vmatpush.msra.mxu0 %v2326
    %2582 = vmatpush.msra.mxu0 %v2322
    %2583 = vmatpush.msra.mxu0 %v2318
    %2584 = vmatpush.msra.mxu0 %v2314
    %2585 = vmatmul.f32.gmra.mxu0 %v2309
    %v2586 = vpop.f32.mrf.mxu0
    %v2587 = vadd.f32 %v2444, %v2586
    %2588 = vdwg.mxu0
    %2589 = vmatpush.msra.mxu0 %v2438
    %2590 = vmatpush.msra.mxu0 %v2434
    %2591 = vmatpush.msra.mxu0 %v2430
    %2592 = vmatpush.msra.mxu0 %v2426
    %2593 = vmatpush.msra.mxu0 %v2422
    %2594 = vmatpush.msra.mxu0 %v2418
    %2595 = vmatpush.msra.mxu0 %v2414
    %2596 = vmatpush.msra.mxu0 %v2410
    %2597 = vmatpush.msra.mxu0 %v2406
    %2598 = vmatpush.msra.mxu0 %v2402
    %2599 = vmatpush.msra.mxu0 %v2398
    %2600 = vmatpush.msra.mxu0 %v2394
    %2601 = vmatpush.msra.mxu0 %v2390
    %2602 = vmatpush.msra.mxu0 %v2386
    %2603 = vmatpush.msra.mxu0 %v2382
    %2604 = vmatpush.msra.mxu0 %v2378
    %2605 = vmatmul.f32.gmra.mxu0 %v2310
    %v2606 = vpop.f32.mrf.mxu0
    %v2607 = vadd.f32 %v2587, %v2606
    %2608 = vdwg.mxu0
    %v2609 = vxor.u32 %v2487, 2147483648
    %v2610 = vmul.f32 %v2609, 1.442695
    %v2611 = vpow.pop %v2610
    %v2612 = vadd.f32 %v2611, 1.0
    %v2613 = vrcp.pop %v2612
    %v2614 = vmul.f32 %v2612, %v2613
    %v2615 = vsub.f32 1.0, %v2614
    %v2616 = vmul.f32 %v2613, %v2615
    %v2617 = vadd.f32 %v2613, %v2616
    %vm2618 = vweird.f32 %v2612
    %vm2619 = vweird.f32 %v2613
    %vm2620 = vmor %vm2618, %vm2619
    %v2621 = vsel %vm2620, %v2613, %v2617
    %v2622 = vand.u32 2147483647, %v2612
    %vm2623 = vcmp.eq.f32.partialorder %v2622, 8.507059e+37
    %v2624 = vand.u32 %v2612, 2147483648
    %v2625 = vor.u32 1.1754944e-38, %v2624
    %v2626 = vsel %vm2623, %v2625, %v2621
    %v2627 = vmul.f32 1.0, %v2626
    %v2628 = vxor.u32 %v2527, 2147483648
    %v2629 = vmul.f32 %v2628, 1.442695
    %v2630 = vpow.pop %v2629
    %v2631 = vadd.f32 %v2630, 1.0
    %v2632 = vrcp.pop %v2631
    %v2633 = vmul.f32 %v2631, %v2632
    %v2634 = vsub.f32 1.0, %v2633
    %v2635 = vmul.f32 %v2632, %v2634
    %v2636 = vadd.f32 %v2632, %v2635
    %vm2637 = vweird.f32 %v2631
    %vm2638 = vweird.f32 %v2632
    %vm2639 = vmor %vm2637, %vm2638
    %v2640 = vsel %vm2639, %v2632, %v2636
    %v2641 = vand.u32 2147483647, %v2631
    %vm2642 = vcmp.eq.f32.partialorder %v2641, 8.507059e+37
    %v2643 = vand.u32 %v2631, 2147483648
    %v2644 = vor.u32 1.1754944e-38, %v2643
    %v2645 = vsel %vm2642, %v2644, %v2640
    %v2646 = vmul.f32 1.0, %v2645
    %v2647 = vtanh.pop %v2567
    %v2648 = vxor.u32 %v2607, 2147483648
    %v2649 = vmul.f32 %v2648, 1.442695
    %v2650 = vpow.pop %v2649
    %v2651 = vadd.f32 %v2650, 1.0
    %v2652 = vrcp.pop %v2651
    %v2653 = vmul.f32 %v2651, %v2652
    %v2654 = vsub.f32 1.0, %v2653
    %v2655 = vmul.f32 %v2652, %v2654
    %v2656 = vadd.f32 %v2652, %v2655
    %vm2657 = vweird.f32 %v2651
    %vm2658 = vweird.f32 %v2652
    %vm2659 = vmor %vm2657, %vm2658
    %v2660 = vsel %vm2659, %v2652, %v2656
    %v2661 = vand.u32 2147483647, %v2651
    %vm2662 = vcmp.eq.f32.partialorder %v2661, 8.507059e+37
    %v2663 = vand.u32 %v2651, 2147483648
    %v2664 = vor.u32 1.1754944e-38, %v2663
    %v2665 = vsel %vm2662, %v2664, %v2660
    %v2666 = vmul.f32 1.0, %v2665
    %v2667 = vld [vmem:[#allocation5] sm:$0xff]
    %v2668 = vmul.f32 %v2646, %v2667
    %v2669 = vmul.f32 %v2627, %v2647
    %v2670 = vadd.f32 %v2668, %v2669
    %v2671 = vtanh.pop %v2670
    %v2672 = vmul.f32 %v2666, %v2671
    %2673 = vst [vmem:[#allocation5] sm:$0xff] %v2670
    %2674 = vst [vmem:[#allocation3 + $0x8] sm:$0xff] %v2672
    %s2675 = smul.u32 4, 4
    %s2676 = smul.addr %s2675, 8
    %s2677 = scalar_lea.vmem [#allocation2], %s2676
    %v2678 = vld [vmem:[%s2677] sm:$0xff]
    %v2679 = vld [vmem:[%s2677 + $0x8] sm:$0xff]
    %v2680 = vld [vmem:[%s2677 + $0x10] sm:$0xff]
    %v2681 = vld [vmem:[%s2677 + $0x18] sm:$0xff]
    %v2682 = vld [vmem:[#allocation3] sm:$0xff]
    %v2683 = vld [vmem:[#allocation6] sm:$0xff]
    %v2684 = vld [vmem:[#allocation6 + $0x8] sm:$0xff]
    %v2685 = vld [vmem:[#allocation6 + $0x10] sm:$0xff]
    %v2686 = vld [vmem:[#allocation6 + $0x18] sm:$0xff]
    %v2687 = vld [vmem:[#allocation6 + $0x20] sm:$0xff]
    %v2688 = vld [vmem:[#allocation6 + $0x28] sm:$0xff]
    %v2689 = vld [vmem:[#allocation6 + $0x30] sm:$0xff]
    %v2690 = vld [vmem:[#allocation6 + $0x38] sm:$0xff]
    %v2691 = vld [vmem:[#allocation6 + $0x40] sm:$0xff]
    %v2692 = vld [vmem:[#allocation6 + $0x48] sm:$0xff]
    %v2693 = vld [vmem:[#allocation6 + $0x50] sm:$0xff]
    %v2694 = vld [vmem:[#allocation6 + $0x58] sm:$0xff]
    %v2695 = vld [vmem:[#allocation6 + $0x60] sm:$0xff]
    %v2696 = vld [vmem:[#allocation6 + $0x68] sm:$0xff]
    %v2697 = vld [vmem:[#allocation6 + $0x70] sm:$0xff]
    %v2698 = vld [vmem:[#allocation6 + $0x78] sm:$0xff]
    %v2699 = vld [vmem:[#allocation6 + $0x80] sm:$0xff]
    %v2700 = vld [vmem:[#allocation6 + $0x88] sm:$0xff]
    %v2701 = vld [vmem:[#allocation6 + $0x90] sm:$0xff]
    %v2702 = vld [vmem:[#allocation6 + $0x98] sm:$0xff]
    %v2703 = vld [vmem:[#allocation6 + $0xa0] sm:$0xff]
    %v2704 = vld [vmem:[#allocation6 + $0xa8] sm:$0xff]
    %v2705 = vld [vmem:[#allocation6 + $0xb0] sm:$0xff]
    %v2706 = vld [vmem:[#allocation6 + $0xb8] sm:$0xff]
    %v2707 = vld [vmem:[#allocation6 + $0xc0] sm:$0xff]
    %v2708 = vld [vmem:[#allocation6 + $0xc8] sm:$0xff]
    %v2709 = vld [vmem:[#allocation6 + $0xd0] sm:$0xff]
    %v2710 = vld [vmem:[#allocation6 + $0xd8] sm:$0xff]
    %v2711 = vld [vmem:[#allocation6 + $0xe0] sm:$0xff]
    %v2712 = vld [vmem:[#allocation6 + $0xe8] sm:$0xff]
    %v2713 = vld [vmem:[#allocation6 + $0xf0] sm:$0xff]
    %v2714 = vld [vmem:[#allocation6 + $0xf8] sm:$0xff]
    %v2715 = vld [vmem:[#allocation6 + $0x100] sm:$0xff]
    %v2716 = vld [vmem:[#allocation6 + $0x108] sm:$0xff]
    %v2717 = vld [vmem:[#allocation6 + $0x110] sm:$0xff]
    %v2718 = vld [vmem:[#allocation6 + $0x118] sm:$0xff]
    %v2719 = vld [vmem:[#allocation6 + $0x120] sm:$0xff]
    %v2720 = vld [vmem:[#allocation6 + $0x128] sm:$0xff]
    %v2721 = vld [vmem:[#allocation6 + $0x130] sm:$0xff]
    %v2722 = vld [vmem:[#allocation6 + $0x138] sm:$0xff]
    %v2723 = vld [vmem:[#allocation6 + $0x140] sm:$0xff]
    %v2724 = vld [vmem:[#allocation6 + $0x148] sm:$0xff]
    %v2725 = vld [vmem:[#allocation6 + $0x150] sm:$0xff]
    %v2726 = vld [vmem:[#allocation6 + $0x158] sm:$0xff]
    %v2727 = vld [vmem:[#allocation6 + $0x160] sm:$0xff]
    %v2728 = vld [vmem:[#allocation6 + $0x168] sm:$0xff]
    %v2729 = vld [vmem:[#allocation6 + $0x170] sm:$0xff]
    %v2730 = vld [vmem:[#allocation6 + $0x178] sm:$0xff]
    %v2731 = vld [vmem:[#allocation6 + $0x180] sm:$0xff]
    %v2732 = vld [vmem:[#allocation6 + $0x188] sm:$0xff]
    %v2733 = vld [vmem:[#allocation6 + $0x190] sm:$0xff]
    %v2734 = vld [vmem:[#allocation6 + $0x198] sm:$0xff]
    %v2735 = vld [vmem:[#allocation6 + $0x1a0] sm:$0xff]
    %v2736 = vld [vmem:[#allocation6 + $0x1a8] sm:$0xff]
    %v2737 = vld [vmem:[#allocation6 + $0x1b0] sm:$0xff]
    %v2738 = vld [vmem:[#allocation6 + $0x1b8] sm:$0xff]
    %v2739 = vld [vmem:[#allocation6 + $0x1c0] sm:$0xff]
    %v2740 = vld [vmem:[#allocation6 + $0x1c8] sm:$0xff]
    %v2741 = vld [vmem:[#allocation6 + $0x1d0] sm:$0xff]
    %v2742 = vld [vmem:[#allocation6 + $0x1d8] sm:$0xff]
    %v2743 = vld [vmem:[#allocation6 + $0x1e0] sm:$0xff]
    %v2744 = vld [vmem:[#allocation6 + $0x1e8] sm:$0xff]
    %v2745 = vld [vmem:[#allocation6 + $0x1f0] sm:$0xff]
    %v2746 = vld [vmem:[#allocation6 + $0x1f8] sm:$0xff]
    %2747 = vmatpush.msra.mxu0 %v2743
    %2748 = vmatpush.msra.mxu0 %v2739
    %2749 = vmatpush.msra.mxu0 %v2735
    %2750 = vmatpush.msra.mxu0 %v2731
    %2751 = vmatpush.msra.mxu0 %v2727
    %2752 = vmatpush.msra.mxu0 %v2723
    %2753 = vmatpush.msra.mxu0 %v2719
    %2754 = vmatpush.msra.mxu0 %v2715
    %2755 = vmatpush.msra.mxu0 %v2711
    %2756 = vmatpush.msra.mxu0 %v2707
    %2757 = vmatpush.msra.mxu0 %v2703
    %2758 = vmatpush.msra.mxu0 %v2699
    %2759 = vmatpush.msra.mxu0 %v2695
    %2760 = vmatpush.msra.mxu0 %v2691
    %2761 = vmatpush.msra.mxu0 %v2687
    %2762 = vmatpush.msra.mxu0 %v2683
    %2763 = vmatmul.f32.gmra.mxu0 %v2682
    %v2764 = vpop.f32.mrf.mxu0
    %v2765 = vadd.f32 0.0, %v2764
    %2766 = vdwg.mxu0
    %2767 = vmatpush.msra.mxu0 %v2744
    %2768 = vmatpush.msra.mxu0 %v2740
    %2769 = vmatpush.msra.mxu0 %v2736
    %2770 = vmatpush.msra.mxu0 %v2732
    %2771 = vmatpush.msra.mxu0 %v2728
    %2772 = vmatpush.msra.mxu0 %v2724
    %2773 = vmatpush.msra.mxu0 %v2720
    %2774 = vmatpush.msra.mxu0 %v2716
    %2775 = vmatpush.msra.mxu0 %v2712
    %2776 = vmatpush.msra.mxu0 %v2708
    %2777 = vmatpush.msra.mxu0 %v2704
    %2778 = vmatpush.msra.mxu0 %v2700
    %2779 = vmatpush.msra.mxu0 %v2696
    %2780 = vmatpush.msra.mxu0 %v2692
    %2781 = vmatpush.msra.mxu0 %v2688
    %2782 = vmatpush.msra.mxu0 %v2684
    %2783 = vmatmul.f32.gmra.mxu0 %v2682
    %v2784 = vpop.f32.mrf.mxu0
    %v2785 = vadd.f32 0.0, %v2784
    %2786 = vdwg.mxu0
    %2787 = vmatpush.msra.mxu0 %v2745
    %2788 = vmatpush.msra.mxu0 %v2741
    %2789 = vmatpush.msra.mxu0 %v2737
    %2790 = vmatpush.msra.mxu0 %v2733
    %2791 = vmatpush.msra.mxu0 %v2729
    %2792 = vmatpush.msra.mxu0 %v2725
    %2793 = vmatpush.msra.mxu0 %v2721
    %2794 = vmatpush.msra.mxu0 %v2717
    %2795 = vmatpush.msra.mxu0 %v2713
    %2796 = vmatpush.msra.mxu0 %v2709
    %2797 = vmatpush.msra.mxu0 %v2705
    %2798 = vmatpush.msra.mxu0 %v2701
    %2799 = vmatpush.msra.mxu0 %v2697
    %2800 = vmatpush.msra.mxu0 %v2693
    %2801 = vmatpush.msra.mxu0 %v2689
    %2802 = vmatpush.msra.mxu0 %v2685
    %2803 = vmatmul.f32.gmra.mxu0 %v2682
    %v2804 = vpop.f32.mrf.mxu0
    %v2805 = vadd.f32 0.0, %v2804
    %2806 = vdwg.mxu0
    %2807 = vmatpush.msra.mxu0 %v2746
    %2808 = vmatpush.msra.mxu0 %v2742
    %2809 = vmatpush.msra.mxu0 %v2738
    %2810 = vmatpush.msra.mxu0 %v2734
    %2811 = vmatpush.msra.mxu0 %v2730
    %2812 = vmatpush.msra.mxu0 %v2726
    %2813 = vmatpush.msra.mxu0 %v2722
    %2814 = vmatpush.msra.mxu0 %v2718
    %2815 = vmatpush.msra.mxu0 %v2714
    %2816 = vmatpush.msra.mxu0 %v2710
    %2817 = vmatpush.msra.mxu0 %v2706
    %2818 = vmatpush.msra.mxu0 %v2702
    %2819 = vmatpush.msra.mxu0 %v2698
    %2820 = vmatpush.msra.mxu0 %v2694
    %2821 = vmatpush.msra.mxu0 %v2690
    %2822 = vmatpush.msra.mxu0 %v2686
    %2823 = vmatmul.f32.gmra.mxu0 %v2682
    %v2824 = vpop.f32.mrf.mxu0
    %v2825 = vadd.f32 0.0, %v2824
    %2826 = vdwg.mxu0
    %v2827 = vadd.f32 %v2678, %v2765
    %v2828 = vadd.f32 %v2679, %v2785
    %v2829 = vadd.f32 %v2680, %v2805
    %v2830 = vadd.f32 %v2681, %v2825
    %v2831 = vxor.u32 %v2827, 2147483648
    %v2832 = vmul.f32 %v2831, 1.442695
    %v2833 = vpow.pop %v2832
    %v2834 = vadd.f32 %v2833, 1.0
    %v2835 = vrcp.pop %v2834
    %v2836 = vmul.f32 %v2834, %v2835
    %v2837 = vsub.f32 1.0, %v2836
    %v2838 = vmul.f32 %v2835, %v2837
    %v2839 = vadd.f32 %v2835, %v2838
    %vm2840 = vweird.f32 %v2834
    %vm2841 = vweird.f32 %v2835
    %vm2842 = vmor %vm2840, %vm2841
    %v2843 = vsel %vm2842, %v2835, %v2839
    %v2844 = vand.u32 2147483647, %v2834
    %vm2845 = vcmp.eq.f32.partialorder %v2844, 8.507059e+37
    %v2846 = vand.u32 %v2834, 2147483648
    %v2847 = vor.u32 1.1754944e-38, %v2846
    %v2848 = vsel %vm2845, %v2847, %v2843
    %v2849 = vmul.f32 1.0, %v2848
    %v2850 = vxor.u32 %v2828, 2147483648
    %v2851 = vmul.f32 %v2850, 1.442695
    %v2852 = vpow.pop %v2851
    %v2853 = vadd.f32 %v2852, 1.0
    %v2854 = vrcp.pop %v2853
    %v2855 = vmul.f32 %v2853, %v2854
    %v2856 = vsub.f32 1.0, %v2855
    %v2857 = vmul.f32 %v2854, %v2856
    %v2858 = vadd.f32 %v2854, %v2857
    %vm2859 = vweird.f32 %v2853
    %vm2860 = vweird.f32 %v2854
    %vm2861 = vmor %vm2859, %vm2860
    %v2862 = vsel %vm2861, %v2854, %v2858
    %v2863 = vand.u32 2147483647, %v2853
    %vm2864 = vcmp.eq.f32.partialorder %v2863, 8.507059e+37
    %v2865 = vand.u32 %v2853, 2147483648
    %v2866 = vor.u32 1.1754944e-38, %v2865
    %v2867 = vsel %vm2864, %v2866, %v2862
    %v2868 = vmul.f32 1.0, %v2867
    %v2869 = vtanh.pop %v2829
    %v2870 = vxor.u32 %v2830, 2147483648
    %v2871 = vmul.f32 %v2870, 1.442695
    %v2872 = vpow.pop %v2871
    %v2873 = vadd.f32 %v2872, 1.0
    %v2874 = vrcp.pop %v2873
    %v2875 = vmul.f32 %v2873, %v2874
    %v2876 = vsub.f32 1.0, %v2875
    %v2877 = vmul.f32 %v2874, %v2876
    %v2878 = vadd.f32 %v2874, %v2877
    %vm2879 = vweird.f32 %v2873
    %vm2880 = vweird.f32 %v2874
    %vm2881 = vmor %vm2879, %vm2880
    %v2882 = vsel %vm2881, %v2874, %v2878
    %v2883 = vand.u32 2147483647, %v2873
    %vm2884 = vcmp.eq.f32.partialorder %v2883, 8.507059e+37
    %v2885 = vand.u32 %v2873, 2147483648
    %v2886 = vor.u32 1.1754944e-38, %v2885
    %v2887 = vsel %vm2884, %v2886, %v2882
    %v2888 = vmul.f32 1.0, %v2887
    %v2889 = vld [vmem:[#allocation4] sm:$0xff]
    %v2890 = vmul.f32 %v2868, %v2889
    %v2891 = vmul.f32 %v2849, %v2869
    %v2892 = vadd.f32 %v2890, %v2891
    %v2893 = vtanh.pop %v2892
    %v2894 = vmul.f32 %v2888, %v2893
    %2895 = vst [vmem:[#allocation4] sm:$0xff] %v2892
    %2896 = vst [vmem:[#allocation3] sm:$0xff] %v2894
    %v2897 = vld [vmem:[#allocation3] sm:$0xff]
    %v2898 = vld [vmem:[#allocation3 + $0x8] sm:$0xff]
    %v2899 = vld [vmem:[#allocation9] sm:$0xff]
    %v2900 = vld [vmem:[#allocation9 + $0x8] sm:$0xff]
    %v2901 = vld [vmem:[#allocation9 + $0x10] sm:$0xff]
    %v2902 = vld [vmem:[#allocation9 + $0x18] sm:$0xff]
    %v2903 = vld [vmem:[#allocation9 + $0x20] sm:$0xff]
    %v2904 = vld [vmem:[#allocation9 + $0x28] sm:$0xff]
    %v2905 = vld [vmem:[#allocation9 + $0x30] sm:$0xff]
    %v2906 = vld [vmem:[#allocation9 + $0x38] sm:$0xff]
    %v2907 = vld [vmem:[#allocation9 + $0x40] sm:$0xff]
    %v2908 = vld [vmem:[#allocation9 + $0x48] sm:$0xff]
    %v2909 = vld [vmem:[#allocation9 + $0x50] sm:$0xff]
    %v2910 = vld [vmem:[#allocation9 + $0x58] sm:$0xff]
    %v2911 = vld [vmem:[#allocation9 + $0x60] sm:$0xff]
    %v2912 = vld [vmem:[#allocation9 + $0x68] sm:$0xff]
    %v2913 = vld [vmem:[#allocation9 + $0x70] sm:$0xff]
    %v2914 = vld [vmem:[#allocation9 + $0x78] sm:$0xff]
    %v2915 = vld [vmem:[#allocation9 + $0x80] sm:$0xff]
    %v2916 = vld [vmem:[#allocation9 + $0x88] sm:$0xff]
    %v2917 = vld [vmem:[#allocation9 + $0x90] sm:$0xff]
    %v2918 = vld [vmem:[#allocation9 + $0x98] sm:$0xff]
    %v2919 = vld [vmem:[#allocation9 + $0xa0] sm:$0xff]
    %v2920 = vld [vmem:[#allocation9 + $0xa8] sm:$0xff]
    %v2921 = vld [vmem:[#allocation9 + $0xb0] sm:$0xff]
    %v2922 = vld [vmem:[#allocation9 + $0xb8] sm:$0xff]
    %v2923 = vld [vmem:[#allocation9 + $0xc0] sm:$0xff]
    %v2924 = vld [vmem:[#allocation9 + $0xc8] sm:$0xff]
    %v2925 = vld [vmem:[#allocation9 + $0xd0] sm:$0xff]
    %v2926 = vld [vmem:[#allocation9 + $0xd8] sm:$0xff]
    %v2927 = vld [vmem:[#allocation9 + $0xe0] sm:$0xff]
    %v2928 = vld [vmem:[#allocation9 + $0xe8] sm:$0xff]
    %v2929 = vld [vmem:[#allocation9 + $0xf0] sm:$0xff]
    %v2930 = vld [vmem:[#allocation9 + $0xf8] sm:$0xff]
    %v2931 = vld [vmem:[#allocation9 + $0x100] sm:$0xff]
    %v2932 = vld [vmem:[#allocation9 + $0x108] sm:$0xff]
    %v2933 = vld [vmem:[#allocation9 + $0x110] sm:$0xff]
    %v2934 = vld [vmem:[#allocation9 + $0x118] sm:$0xff]
    %v2935 = vld [vmem:[#allocation9 + $0x120] sm:$0xff]
    %v2936 = vld [vmem:[#allocation9 + $0x128] sm:$0xff]
    %v2937 = vld [vmem:[#allocation9 + $0x130] sm:$0xff]
    %v2938 = vld [vmem:[#allocation9 + $0x138] sm:$0xff]
    %v2939 = vld [vmem:[#allocation9 + $0x140] sm:$0xff]
    %v2940 = vld [vmem:[#allocation9 + $0x148] sm:$0xff]
    %v2941 = vld [vmem:[#allocation9 + $0x150] sm:$0xff]
    %v2942 = vld [vmem:[#allocation9 + $0x158] sm:$0xff]
    %v2943 = vld [vmem:[#allocation9 + $0x160] sm:$0xff]
    %v2944 = vld [vmem:[#allocation9 + $0x168] sm:$0xff]
    %v2945 = vld [vmem:[#allocation9 + $0x170] sm:$0xff]
    %v2946 = vld [vmem:[#allocation9 + $0x178] sm:$0xff]
    %v2947 = vld [vmem:[#allocation9 + $0x180] sm:$0xff]
    %v2948 = vld [vmem:[#allocation9 + $0x188] sm:$0xff]
    %v2949 = vld [vmem:[#allocation9 + $0x190] sm:$0xff]
    %v2950 = vld [vmem:[#allocation9 + $0x198] sm:$0xff]
    %v2951 = vld [vmem:[#allocation9 + $0x1a0] sm:$0xff]
    %v2952 = vld [vmem:[#allocation9 + $0x1a8] sm:$0xff]
    %v2953 = vld [vmem:[#allocation9 + $0x1b0] sm:$0xff]
    %v2954 = vld [vmem:[#allocation9 + $0x1b8] sm:$0xff]
    %v2955 = vld [vmem:[#allocation9 + $0x1c0] sm:$0xff]
    %v2956 = vld [vmem:[#allocation9 + $0x1c8] sm:$0xff]
    %v2957 = vld [vmem:[#allocation9 + $0x1d0] sm:$0xff]
    %v2958 = vld [vmem:[#allocation9 + $0x1d8] sm:$0xff]
    %v2959 = vld [vmem:[#allocation9 + $0x1e0] sm:$0xff]
    %v2960 = vld [vmem:[#allocation9 + $0x1e8] sm:$0xff]
    %v2961 = vld [vmem:[#allocation9 + $0x1f0] sm:$0xff]
    %v2962 = vld [vmem:[#allocation9 + $0x1f8] sm:$0xff]
    %v2963 = vld [vmem:[#allocation9 + $0x200] sm:$0xff]
    %v2964 = vld [vmem:[#allocation9 + $0x208] sm:$0xff]
    %v2965 = vld [vmem:[#allocation9 + $0x210] sm:$0xff]
    %v2966 = vld [vmem:[#allocation9 + $0x218] sm:$0xff]
    %v2967 = vld [vmem:[#allocation9 + $0x220] sm:$0xff]
    %v2968 = vld [vmem:[#allocation9 + $0x228] sm:$0xff]
    %v2969 = vld [vmem:[#allocation9 + $0x230] sm:$0xff]
    %v2970 = vld [vmem:[#allocation9 + $0x238] sm:$0xff]
    %v2971 = vld [vmem:[#allocation9 + $0x240] sm:$0xff]
    %v2972 = vld [vmem:[#allocation9 + $0x248] sm:$0xff]
    %v2973 = vld [vmem:[#allocation9 + $0x250] sm:$0xff]
    %v2974 = vld [vmem:[#allocation9 + $0x258] sm:$0xff]
    %v2975 = vld [vmem:[#allocation9 + $0x260] sm:$0xff]
    %v2976 = vld [vmem:[#allocation9 + $0x268] sm:$0xff]
    %v2977 = vld [vmem:[#allocation9 + $0x270] sm:$0xff]
    %v2978 = vld [vmem:[#allocation9 + $0x278] sm:$0xff]
    %v2979 = vld [vmem:[#allocation9 + $0x280] sm:$0xff]
    %v2980 = vld [vmem:[#allocation9 + $0x288] sm:$0xff]
    %v2981 = vld [vmem:[#allocation9 + $0x290] sm:$0xff]
    %v2982 = vld [vmem:[#allocation9 + $0x298] sm:$0xff]
    %v2983 = vld [vmem:[#allocation9 + $0x2a0] sm:$0xff]
    %v2984 = vld [vmem:[#allocation9 + $0x2a8] sm:$0xff]
    %v2985 = vld [vmem:[#allocation9 + $0x2b0] sm:$0xff]
    %v2986 = vld [vmem:[#allocation9 + $0x2b8] sm:$0xff]
    %v2987 = vld [vmem:[#allocation9 + $0x2c0] sm:$0xff]
    %v2988 = vld [vmem:[#allocation9 + $0x2c8] sm:$0xff]
    %v2989 = vld [vmem:[#allocation9 + $0x2d0] sm:$0xff]
    %v2990 = vld [vmem:[#allocation9 + $0x2d8] sm:$0xff]
    %v2991 = vld [vmem:[#allocation9 + $0x2e0] sm:$0xff]
    %v2992 = vld [vmem:[#allocation9 + $0x2e8] sm:$0xff]
    %v2993 = vld [vmem:[#allocation9 + $0x2f0] sm:$0xff]
    %v2994 = vld [vmem:[#allocation9 + $0x2f8] sm:$0xff]
    %v2995 = vld [vmem:[#allocation9 + $0x300] sm:$0xff]
    %v2996 = vld [vmem:[#allocation9 + $0x308] sm:$0xff]
    %v2997 = vld [vmem:[#allocation9 + $0x310] sm:$0xff]
    %v2998 = vld [vmem:[#allocation9 + $0x318] sm:$0xff]
    %v2999 = vld [vmem:[#allocation9 + $0x320] sm:$0xff]
    %v3000 = vld [vmem:[#allocation9 + $0x328] sm:$0xff]
    %v3001 = vld [vmem:[#allocation9 + $0x330] sm:$0xff]
    %v3002 = vld [vmem:[#allocation9 + $0x338] sm:$0xff]
    %v3003 = vld [vmem:[#allocation9 + $0x340] sm:$0xff]
    %v3004 = vld [vmem:[#allocation9 + $0x348] sm:$0xff]
    %v3005 = vld [vmem:[#allocation9 + $0x350] sm:$0xff]
    %v3006 = vld [vmem:[#allocation9 + $0x358] sm:$0xff]
    %v3007 = vld [vmem:[#allocation9 + $0x360] sm:$0xff]
    %v3008 = vld [vmem:[#allocation9 + $0x368] sm:$0xff]
    %v3009 = vld [vmem:[#allocation9 + $0x370] sm:$0xff]
    %v3010 = vld [vmem:[#allocation9 + $0x378] sm:$0xff]
    %v3011 = vld [vmem:[#allocation9 + $0x380] sm:$0xff]
    %v3012 = vld [vmem:[#allocation9 + $0x388] sm:$0xff]
    %v3013 = vld [vmem:[#allocation9 + $0x390] sm:$0xff]
    %v3014 = vld [vmem:[#allocation9 + $0x398] sm:$0xff]
    %v3015 = vld [vmem:[#allocation9 + $0x3a0] sm:$0xff]
    %v3016 = vld [vmem:[#allocation9 + $0x3a8] sm:$0xff]
    %v3017 = vld [vmem:[#allocation9 + $0x3b0] sm:$0xff]
    %v3018 = vld [vmem:[#allocation9 + $0x3b8] sm:$0xff]
    %v3019 = vld [vmem:[#allocation9 + $0x3c0] sm:$0xff]
    %v3020 = vld [vmem:[#allocation9 + $0x3c8] sm:$0xff]
    %v3021 = vld [vmem:[#allocation9 + $0x3d0] sm:$0xff]
    %v3022 = vld [vmem:[#allocation9 + $0x3d8] sm:$0xff]
    %v3023 = vld [vmem:[#allocation9 + $0x3e0] sm:$0xff]
    %v3024 = vld [vmem:[#allocation9 + $0x3e8] sm:$0xff]
    %v3025 = vld [vmem:[#allocation9 + $0x3f0] sm:$0xff]
    %v3026 = vld [vmem:[#allocation9 + $0x3f8] sm:$0xff]
    %v3027 = vld [vmem:[%s5] sm:$0xf]
    %v3029 = vperm.slane %v3027, 0
    %v3030 = vperm.slane %v3027, 1
    %v3031 = vperm.slane %v3027, 2
    %v3032 = vperm.slane %v3027, 3
    %3037 = vmatpush.msra.mxu0 %v2959
    %3038 = vmatpush.msra.mxu0 %v2955
    %3039 = vmatpush.msra.mxu0 %v2951
    %3040 = vmatpush.msra.mxu0 %v2947
    %3041 = vmatpush.msra.mxu0 %v2943
    %3042 = vmatpush.msra.mxu0 %v2939
    %3043 = vmatpush.msra.mxu0 %v2935
    %3044 = vmatpush.msra.mxu0 %v2931
    %3045 = vmatpush.msra.mxu0 %v2927
    %3046 = vmatpush.msra.mxu0 %v2923
    %3047 = vmatpush.msra.mxu0 %v2919
    %3048 = vmatpush.msra.mxu0 %v2915
    %3049 = vmatpush.msra.mxu0 %v2911
    %3050 = vmatpush.msra.mxu0 %v2907
    %3051 = vmatpush.msra.mxu0 %v2903
    %3052 = vmatpush.msra.mxu0 %v2899
    %3053 = vmatmul.f32.gmra.mxu0 %v2897
    %v3054 = vpop.f32.mrf.mxu0
    %v3055 = vadd.f32 %v3029, %v3054
    %3056 = vdwg.mxu0
    %3057 = vmatpush.msra.mxu0 %v3023
    %3058 = vmatpush.msra.mxu0 %v3019
    %3059 = vmatpush.msra.mxu0 %v3015
    %3060 = vmatpush.msra.mxu0 %v3011
    %3061 = vmatpush.msra.mxu0 %v3007
    %3062 = vmatpush.msra.mxu0 %v3003
    %3063 = vmatpush.msra.mxu0 %v2999
    %3064 = vmatpush.msra.mxu0 %v2995
    %3065 = vmatpush.msra.mxu0 %v2991
    %3066 = vmatpush.msra.mxu0 %v2987
    %3067 = vmatpush.msra.mxu0 %v2983
    %3068 = vmatpush.msra.mxu0 %v2979
    %3069 = vmatpush.msra.mxu0 %v2975
    %3070 = vmatpush.msra.mxu0 %v2971
    %3071 = vmatpush.msra.mxu0 %v2967
    %3072 = vmatpush.msra.mxu0 %v2963
    %3073 = vmatmul.f32.gmra.mxu0 %v2898
    %v3074 = vpop.f32.mrf.mxu0
    %v3075 = vadd.f32 %v3055, %v3074
    %3076 = vdwg.mxu0
    %3077 = vmatpush.msra.mxu0 %v2960
    %3078 = vmatpush.msra.mxu0 %v2956
    %3079 = vmatpush.msra.mxu0 %v2952
    %3080 = vmatpush.msra.mxu0 %v2948
    %3081 = vmatpush.msra.mxu0 %v2944
    %3082 = vmatpush.msra.mxu0 %v2940
    %3083 = vmatpush.msra.mxu0 %v2936
    %3084 = vmatpush.msra.mxu0 %v2932
    %3085 = vmatpush.msra.mxu0 %v2928
    %3086 = vmatpush.msra.mxu0 %v2924
    %3087 = vmatpush.msra.mxu0 %v2920
    %3088 = vmatpush.msra.mxu0 %v2916
    %3089 = vmatpush.msra.mxu0 %v2912
    %3090 = vmatpush.msra.mxu0 %v2908
    %3091 = vmatpush.msra.mxu0 %v2904
    %3092 = vmatpush.msra.mxu0 %v2900
    %3093 = vmatmul.f32.gmra.mxu0 %v2897
    %v3094 = vpop.f32.mrf.mxu0
    %v3095 = vadd.f32 %v3030, %v3094
    %3096 = vdwg.mxu0
    %3097 = vmatpush.msra.mxu0 %v3024
    %3098 = vmatpush.msra.mxu0 %v3020
    %3099 = vmatpush.msra.mxu0 %v3016
    %3100 = vmatpush.msra.mxu0 %v3012
    %3101 = vmatpush.msra.mxu0 %v3008
    %3102 = vmatpush.msra.mxu0 %v3004
    %3103 = vmatpush.msra.mxu0 %v3000
    %3104 = vmatpush.msra.mxu0 %v2996
    %3105 = vmatpush.msra.mxu0 %v2992
    %3106 = vmatpush.msra.mxu0 %v2988
    %3107 = vmatpush.msra.mxu0 %v2984
    %3108 = vmatpush.msra.mxu0 %v2980
    %3109 = vmatpush.msra.mxu0 %v2976
    %3110 = vmatpush.msra.mxu0 %v2972
    %3111 = vmatpush.msra.mxu0 %v2968
    %3112 = vmatpush.msra.mxu0 %v2964
    %3113 = vmatmul.f32.gmra.mxu0 %v2898
    %v3114 = vpop.f32.mrf.mxu0
    %v3115 = vadd.f32 %v3095, %v3114
    %3116 = vdwg.mxu0
    %3117 = vmatpush.msra.mxu0 %v2961
    %3118 = vmatpush.msra.mxu0 %v2957
    %3119 = vmatpush.msra.mxu0 %v2953
    %3120 = vmatpush.msra.mxu0 %v2949
    %3121 = vmatpush.msra.mxu0 %v2945
    %3122 = vmatpush.msra.mxu0 %v2941
    %3123 = vmatpush.msra.mxu0 %v2937
    %3124 = vmatpush.msra.mxu0 %v2933
    %3125 = vmatpush.msra.mxu0 %v2929
    %3126 = vmatpush.msra.mxu0 %v2925
    %3127 = vmatpush.msra.mxu0 %v2921
    %3128 = vmatpush.msra.mxu0 %v2917
    %3129 = vmatpush.msra.mxu0 %v2913
    %3130 = vmatpush.msra.mxu0 %v2909
    %3131 = vmatpush.msra.mxu0 %v2905
    %3132 = vmatpush.msra.mxu0 %v2901
    %3133 = vmatmul.f32.gmra.mxu0 %v2897
    %v3134 = vpop.f32.mrf.mxu0
    %v3135 = vadd.f32 %v3031, %v3134
    %3136 = vdwg.mxu0
    %3137 = vmatpush.msra.mxu0 %v3025
    %3138 = vmatpush.msra.mxu0 %v3021
    %3139 = vmatpush.msra.mxu0 %v3017
    %3140 = vmatpush.msra.mxu0 %v3013
    %3141 = vmatpush.msra.mxu0 %v3009
    %3142 = vmatpush.msra.mxu0 %v3005
    %3143 = vmatpush.msra.mxu0 %v3001
    %3144 = vmatpush.msra.mxu0 %v2997
    %3145 = vmatpush.msra.mxu0 %v2993
    %3146 = vmatpush.msra.mxu0 %v2989
    %3147 = vmatpush.msra.mxu0 %v2985
    %3148 = vmatpush.msra.mxu0 %v2981
    %3149 = vmatpush.msra.mxu0 %v2977
    %3150 = vmatpush.msra.mxu0 %v2973
    %3151 = vmatpush.msra.mxu0 %v2969
    %3152 = vmatpush.msra.mxu0 %v2965
    %3153 = vmatmul.f32.gmra.mxu0 %v2898
    %v3154 = vpop.f32.mrf.mxu0
    %v3155 = vadd.f32 %v3135, %v3154
    %3156 = vdwg.mxu0
    %3157 = vmatpush.msra.mxu0 %v2962
    %3158 = vmatpush.msra.mxu0 %v2958
    %3159 = vmatpush.msra.mxu0 %v2954
    %3160 = vmatpush.msra.mxu0 %v2950
    %3161 = vmatpush.msra.mxu0 %v2946
    %3162 = vmatpush.msra.mxu0 %v2942
    %3163 = vmatpush.msra.mxu0 %v2938
    %3164 = vmatpush.msra.mxu0 %v2934
    %3165 = vmatpush.msra.mxu0 %v2930
    %3166 = vmatpush.msra.mxu0 %v2926
    %3167 = vmatpush.msra.mxu0 %v2922
    %3168 = vmatpush.msra.mxu0 %v2918
    %3169 = vmatpush.msra.mxu0 %v2914
    %3170 = vmatpush.msra.mxu0 %v2910
    %3171 = vmatpush.msra.mxu0 %v2906
    %3172 = vmatpush.msra.mxu0 %v2902
    %3173 = vmatmul.f32.gmra.mxu0 %v2897
    %v3174 = vpop.f32.mrf.mxu0
    %v3175 = vadd.f32 %v3032, %v3174
    %3176 = vdwg.mxu0
    %3177 = vmatpush.msra.mxu0 %v3026
    %3178 = vmatpush.msra.mxu0 %v3022
    %3179 = vmatpush.msra.mxu0 %v3018
    %3180 = vmatpush.msra.mxu0 %v3014
    %3181 = vmatpush.msra.mxu0 %v3010
    %3182 = vmatpush.msra.mxu0 %v3006
    %3183 = vmatpush.msra.mxu0 %v3002
    %3184 = vmatpush.msra.mxu0 %v2998
    %3185 = vmatpush.msra.mxu0 %v2994
    %3186 = vmatpush.msra.mxu0 %v2990
    %3187 = vmatpush.msra.mxu0 %v2986
    %3188 = vmatpush.msra.mxu0 %v2982
    %3189 = vmatpush.msra.mxu0 %v2978
    %3190 = vmatpush.msra.mxu0 %v2974
    %3191 = vmatpush.msra.mxu0 %v2970
    %3192 = vmatpush.msra.mxu0 %v2966
    %3193 = vmatmul.f32.gmra.mxu0 %v2898
    %v3194 = vpop.f32.mrf.mxu0
    %v3195 = vadd.f32 %v3175, %v3194
    %3196 = vdwg.mxu0
    %v3197 = vxor.u32 %v3075, 2147483648
    %v3198 = vmul.f32 %v3197, 1.442695
    %v3199 = vpow.pop %v3198
    %v3200 = vadd.f32 %v3199, 1.0
    %v3201 = vrcp.pop %v3200
    %v3202 = vmul.f32 %v3200, %v3201
    %v3203 = vsub.f32 1.0, %v3202
    %v3204 = vmul.f32 %v3201, %v3203
    %v3205 = vadd.f32 %v3201, %v3204
    %vm3206 = vweird.f32 %v3200
    %vm3207 = vweird.f32 %v3201
    %vm3208 = vmor %vm3206, %vm3207
    %v3209 = vsel %vm3208, %v3201, %v3205
    %v3210 = vand.u32 2147483647, %v3200
    %vm3211 = vcmp.eq.f32.partialorder %v3210, 8.507059e+37
    %v3212 = vand.u32 %v3200, 2147483648
    %v3213 = vor.u32 1.1754944e-38, %v3212
    %v3214 = vsel %vm3211, %v3213, %v3209
    %v3215 = vmul.f32 1.0, %v3214
    %v3216 = vxor.u32 %v3115, 2147483648
    %v3217 = vmul.f32 %v3216, 1.442695
    %v3218 = vpow.pop %v3217
    %v3219 = vadd.f32 %v3218, 1.0
    %v3220 = vrcp.pop %v3219
    %v3221 = vmul.f32 %v3219, %v3220
    %v3222 = vsub.f32 1.0, %v3221
    %v3223 = vmul.f32 %v3220, %v3222
    %v3224 = vadd.f32 %v3220, %v3223
    %vm3225 = vweird.f32 %v3219
    %vm3226 = vweird.f32 %v3220
    %vm3227 = vmor %vm3225, %vm3226
    %v3228 = vsel %vm3227, %v3220, %v3224
    %v3229 = vand.u32 2147483647, %v3219
    %vm3230 = vcmp.eq.f32.partialorder %v3229, 8.507059e+37
    %v3231 = vand.u32 %v3219, 2147483648
    %v3232 = vor.u32 1.1754944e-38, %v3231
    %v3233 = vsel %vm3230, %v3232, %v3228
    %v3234 = vmul.f32 1.0, %v3233
    %v3235 = vtanh.pop %v3155
    %v3236 = vxor.u32 %v3195, 2147483648
    %v3237 = vmul.f32 %v3236, 1.442695
    %v3238 = vpow.pop %v3237
    %v3239 = vadd.f32 %v3238, 1.0
    %v3240 = vrcp.pop %v3239
    %v3241 = vmul.f32 %v3239, %v3240
    %v3242 = vsub.f32 1.0, %v3241
    %v3243 = vmul.f32 %v3240, %v3242
    %v3244 = vadd.f32 %v3240, %v3243
    %vm3245 = vweird.f32 %v3239
    %vm3246 = vweird.f32 %v3240
    %vm3247 = vmor %vm3245, %vm3246
    %v3248 = vsel %vm3247, %v3240, %v3244
    %v3249 = vand.u32 2147483647, %v3239
    %vm3250 = vcmp.eq.f32.partialorder %v3249, 8.507059e+37
    %v3251 = vand.u32 %v3239, 2147483648
    %v3252 = vor.u32 1.1754944e-38, %v3251
    %v3253 = vsel %vm3250, %v3252, %v3248
    %v3254 = vmul.f32 1.0, %v3253
    %v3255 = vld [vmem:[#allocation5] sm:$0xff]
    %v3256 = vmul.f32 %v3234, %v3255
    %v3257 = vmul.f32 %v3215, %v3235
    %v3258 = vadd.f32 %v3256, %v3257
    %v3259 = vtanh.pop %v3258
    %v3260 = vmul.f32 %v3254, %v3259
    %3261 = vst [vmem:[#allocation5] sm:$0xff] %v3258
    %3262 = vst [vmem:[#allocation3 + $0x8] sm:$0xff] %v3260
    %s3263 = smul.u32 5, 4
    %s3264 = smul.addr %s3263, 8
    %s3265 = scalar_lea.vmem [#allocation2], %s3264
    %v3266 = vld [vmem:[%s3265] sm:$0xff]
    %v3267 = vld [vmem:[%s3265 + $0x8] sm:$0xff]
    %v3268 = vld [vmem:[%s3265 + $0x10] sm:$0xff]
    %v3269 = vld [vmem:[%s3265 + $0x18] sm:$0xff]
    %v3270 = vld [vmem:[#allocation3] sm:$0xff]
    %v3271 = vld [vmem:[#allocation6] sm:$0xff]
    %v3272 = vld [vmem:[#allocation6 + $0x8] sm:$0xff]
    %v3273 = vld [vmem:[#allocation6 + $0x10] sm:$0xff]
    %v3274 = vld [vmem:[#allocation6 + $0x18] sm:$0xff]
    %v3275 = vld [vmem:[#allocation6 + $0x20] sm:$0xff]
    %v3276 = vld [vmem:[#allocation6 + $0x28] sm:$0xff]
    %v3277 = vld [vmem:[#allocation6 + $0x30] sm:$0xff]
    %v3278 = vld [vmem:[#allocation6 + $0x38] sm:$0xff]
    %v3279 = vld [vmem:[#allocation6 + $0x40] sm:$0xff]
    %v3280 = vld [vmem:[#allocation6 + $0x48] sm:$0xff]
    %v3281 = vld [vmem:[#allocation6 + $0x50] sm:$0xff]
    %v3282 = vld [vmem:[#allocation6 + $0x58] sm:$0xff]
    %v3283 = vld [vmem:[#allocation6 + $0x60] sm:$0xff]
    %v3284 = vld [vmem:[#allocation6 + $0x68] sm:$0xff]
    %v3285 = vld [vmem:[#allocation6 + $0x70] sm:$0xff]
    %v3286 = vld [vmem:[#allocation6 + $0x78] sm:$0xff]
    %v3287 = vld [vmem:[#allocation6 + $0x80] sm:$0xff]
    %v3288 = vld [vmem:[#allocation6 + $0x88] sm:$0xff]
    %v3289 = vld [vmem:[#allocation6 + $0x90] sm:$0xff]
    %v3290 = vld [vmem:[#allocation6 + $0x98] sm:$0xff]
    %v3291 = vld [vmem:[#allocation6 + $0xa0] sm:$0xff]
    %v3292 = vld [vmem:[#allocation6 + $0xa8] sm:$0xff]
    %v3293 = vld [vmem:[#allocation6 + $0xb0] sm:$0xff]
    %v3294 = vld [vmem:[#allocation6 + $0xb8] sm:$0xff]
    %v3295 = vld [vmem:[#allocation6 + $0xc0] sm:$0xff]
    %v3296 = vld [vmem:[#allocation6 + $0xc8] sm:$0xff]
    %v3297 = vld [vmem:[#allocation6 + $0xd0] sm:$0xff]
    %v3298 = vld [vmem:[#allocation6 + $0xd8] sm:$0xff]
    %v3299 = vld [vmem:[#allocation6 + $0xe0] sm:$0xff]
    %v3300 = vld [vmem:[#allocation6 + $0xe8] sm:$0xff]
    %v3301 = vld [vmem:[#allocation6 + $0xf0] sm:$0xff]
    %v3302 = vld [vmem:[#allocation6 + $0xf8] sm:$0xff]
    %v3303 = vld [vmem:[#allocation6 + $0x100] sm:$0xff]
    %v3304 = vld [vmem:[#allocation6 + $0x108] sm:$0xff]
    %v3305 = vld [vmem:[#allocation6 + $0x110] sm:$0xff]
    %v3306 = vld [vmem:[#allocation6 + $0x118] sm:$0xff]
    %v3307 = vld [vmem:[#allocation6 + $0x120] sm:$0xff]
    %v3308 = vld [vmem:[#allocation6 + $0x128] sm:$0xff]
    %v3309 = vld [vmem:[#allocation6 + $0x130] sm:$0xff]
    %v3310 = vld [vmem:[#allocation6 + $0x138] sm:$0xff]
    %v3311 = vld [vmem:[#allocation6 + $0x140] sm:$0xff]
    %v3312 = vld [vmem:[#allocation6 + $0x148] sm:$0xff]
    %v3313 = vld [vmem:[#allocation6 + $0x150] sm:$0xff]
    %v3314 = vld [vmem:[#allocation6 + $0x158] sm:$0xff]
    %v3315 = vld [vmem:[#allocation6 + $0x160] sm:$0xff]
    %v3316 = vld [vmem:[#allocation6 + $0x168] sm:$0xff]
    %v3317 = vld [vmem:[#allocation6 + $0x170] sm:$0xff]
    %v3318 = vld [vmem:[#allocation6 + $0x178] sm:$0xff]
    %v3319 = vld [vmem:[#allocation6 + $0x180] sm:$0xff]
    %v3320 = vld [vmem:[#allocation6 + $0x188] sm:$0xff]
    %v3321 = vld [vmem:[#allocation6 + $0x190] sm:$0xff]
    %v3322 = vld [vmem:[#allocation6 + $0x198] sm:$0xff]
    %v3323 = vld [vmem:[#allocation6 + $0x1a0] sm:$0xff]
    %v3324 = vld [vmem:[#allocation6 + $0x1a8] sm:$0xff]
    %v3325 = vld [vmem:[#allocation6 + $0x1b0] sm:$0xff]
    %v3326 = vld [vmem:[#allocation6 + $0x1b8] sm:$0xff]
    %v3327 = vld [vmem:[#allocation6 + $0x1c0] sm:$0xff]
    %v3328 = vld [vmem:[#allocation6 + $0x1c8] sm:$0xff]
    %v3329 = vld [vmem:[#allocation6 + $0x1d0] sm:$0xff]
    %v3330 = vld [vmem:[#allocation6 + $0x1d8] sm:$0xff]
    %v3331 = vld [vmem:[#allocation6 + $0x1e0] sm:$0xff]
    %v3332 = vld [vmem:[#allocation6 + $0x1e8] sm:$0xff]
    %v3333 = vld [vmem:[#allocation6 + $0x1f0] sm:$0xff]
    %v3334 = vld [vmem:[#allocation6 + $0x1f8] sm:$0xff]
    %3335 = vmatpush.msra.mxu0 %v3331
    %3336 = vmatpush.msra.mxu0 %v3327
    %3337 = vmatpush.msra.mxu0 %v3323
    %3338 = vmatpush.msra.mxu0 %v3319
    %3339 = vmatpush.msra.mxu0 %v3315
    %3340 = vmatpush.msra.mxu0 %v3311
    %3341 = vmatpush.msra.mxu0 %v3307
    %3342 = vmatpush.msra.mxu0 %v3303
    %3343 = vmatpush.msra.mxu0 %v3299
    %3344 = vmatpush.msra.mxu0 %v3295
    %3345 = vmatpush.msra.mxu0 %v3291
    %3346 = vmatpush.msra.mxu0 %v3287
    %3347 = vmatpush.msra.mxu0 %v3283
    %3348 = vmatpush.msra.mxu0 %v3279
    %3349 = vmatpush.msra.mxu0 %v3275
    %3350 = vmatpush.msra.mxu0 %v3271
    %3351 = vmatmul.f32.gmra.mxu0 %v3270
    %v3352 = vpop.f32.mrf.mxu0
    %v3353 = vadd.f32 0.0, %v3352
    %3354 = vdwg.mxu0
    %3355 = vmatpush.msra.mxu0 %v3332
    %3356 = vmatpush.msra.mxu0 %v3328
    %3357 = vmatpush.msra.mxu0 %v3324
    %3358 = vmatpush.msra.mxu0 %v3320
    %3359 = vmatpush.msra.mxu0 %v3316
    %3360 = vmatpush.msra.mxu0 %v3312
    %3361 = vmatpush.msra.mxu0 %v3308
    %3362 = vmatpush.msra.mxu0 %v3304
    %3363 = vmatpush.msra.mxu0 %v3300
    %3364 = vmatpush.msra.mxu0 %v3296
    %3365 = vmatpush.msra.mxu0 %v3292
    %3366 = vmatpush.msra.mxu0 %v3288
    %3367 = vmatpush.msra.mxu0 %v3284
    %3368 = vmatpush.msra.mxu0 %v3280
    %3369 = vmatpush.msra.mxu0 %v3276
    %3370 = vmatpush.msra.mxu0 %v3272
    %3371 = vmatmul.f32.gmra.mxu0 %v3270
    %v3372 = vpop.f32.mrf.mxu0
    %v3373 = vadd.f32 0.0, %v3372
    %3374 = vdwg.mxu0
    %3375 = vmatpush.msra.mxu0 %v3333
    %3376 = vmatpush.msra.mxu0 %v3329
    %3377 = vmatpush.msra.mxu0 %v3325
    %3378 = vmatpush.msra.mxu0 %v3321
    %3379 = vmatpush.msra.mxu0 %v3317
    %3380 = vmatpush.msra.mxu0 %v3313
    %3381 = vmatpush.msra.mxu0 %v3309
    %3382 = vmatpush.msra.mxu0 %v3305
    %3383 = vmatpush.msra.mxu0 %v3301
    %3384 = vmatpush.msra.mxu0 %v3297
    %3385 = vmatpush.msra.mxu0 %v3293
    %3386 = vmatpush.msra.mxu0 %v3289
    %3387 = vmatpush.msra.mxu0 %v3285
    %3388 = vmatpush.msra.mxu0 %v3281
    %3389 = vmatpush.msra.mxu0 %v3277
    %3390 = vmatpush.msra.mxu0 %v3273
    %3391 = vmatmul.f32.gmra.mxu0 %v3270
    %v3392 = vpop.f32.mrf.mxu0
    %v3393 = vadd.f32 0.0, %v3392
    %3394 = vdwg.mxu0
    %3395 = vmatpush.msra.mxu0 %v3334
    %3396 = vmatpush.msra.mxu0 %v3330
    %3397 = vmatpush.msra.mxu0 %v3326
    %3398 = vmatpush.msra.mxu0 %v3322
    %3399 = vmatpush.msra.mxu0 %v3318
    %3400 = vmatpush.msra.mxu0 %v3314
    %3401 = vmatpush.msra.mxu0 %v3310
    %3402 = vmatpush.msra.mxu0 %v3306
    %3403 = vmatpush.msra.mxu0 %v3302
    %3404 = vmatpush.msra.mxu0 %v3298
    %3405 = vmatpush.msra.mxu0 %v3294
    %3406 = vmatpush.msra.mxu0 %v3290
    %3407 = vmatpush.msra.mxu0 %v3286
    %3408 = vmatpush.msra.mxu0 %v3282
    %3409 = vmatpush.msra.mxu0 %v3278
    %3410 = vmatpush.msra.mxu0 %v3274
    %3411 = vmatmul.f32.gmra.mxu0 %v3270
    %v3412 = vpop.f32.mrf.mxu0
    %v3413 = vadd.f32 0.0, %v3412
    %3414 = vdwg.mxu0
    %v3415 = vadd.f32 %v3266, %v3353
    %v3416 = vadd.f32 %v3267, %v3373
    %v3417 = vadd.f32 %v3268, %v3393
    %v3418 = vadd.f32 %v3269, %v3413
    %v3419 = vxor.u32 %v3415, 2147483648
    %v3420 = vmul.f32 %v3419, 1.442695
    %v3421 = vpow.pop %v3420
    %v3422 = vadd.f32 %v3421, 1.0
    %v3423 = vrcp.pop %v3422
    %v3424 = vmul.f32 %v3422, %v3423
    %v3425 = vsub.f32 1.0, %v3424
    %v3426 = vmul.f32 %v3423, %v3425
    %v3427 = vadd.f32 %v3423, %v3426
    %vm3428 = vweird.f32 %v3422
    %vm3429 = vweird.f32 %v3423
    %vm3430 = vmor %vm3428, %vm3429
    %v3431 = vsel %vm3430, %v3423, %v3427
    %v3432 = vand.u32 2147483647, %v3422
    %vm3433 = vcmp.eq.f32.partialorder %v3432, 8.507059e+37
    %v3434 = vand.u32 %v3422, 2147483648
    %v3435 = vor.u32 1.1754944e-38, %v3434
    %v3436 = vsel %vm3433, %v3435, %v3431
    %v3437 = vmul.f32 1.0, %v3436
    %v3438 = vxor.u32 %v3416, 2147483648
    %v3439 = vmul.f32 %v3438, 1.442695
    %v3440 = vpow.pop %v3439
    %v3441 = vadd.f32 %v3440, 1.0
    %v3442 = vrcp.pop %v3441
    %v3443 = vmul.f32 %v3441, %v3442
    %v3444 = vsub.f32 1.0, %v3443
    %v3445 = vmul.f32 %v3442, %v3444
    %v3446 = vadd.f32 %v3442, %v3445
    %vm3447 = vweird.f32 %v3441
    %vm3448 = vweird.f32 %v3442
    %vm3449 = vmor %vm3447, %vm3448
    %v3450 = vsel %vm3449, %v3442, %v3446
    %v3451 = vand.u32 2147483647, %v3441
    %vm3452 = vcmp.eq.f32.partialorder %v3451, 8.507059e+37
    %v3453 = vand.u32 %v3441, 2147483648
    %v3454 = vor.u32 1.1754944e-38, %v3453
    %v3455 = vsel %vm3452, %v3454, %v3450
    %v3456 = vmul.f32 1.0, %v3455
    %v3457 = vtanh.pop %v3417
    %v3458 = vxor.u32 %v3418, 2147483648
    %v3459 = vmul.f32 %v3458, 1.442695
    %v3460 = vpow.pop %v3459
    %v3461 = vadd.f32 %v3460, 1.0
    %v3462 = vrcp.pop %v3461
    %v3463 = vmul.f32 %v3461, %v3462
    %v3464 = vsub.f32 1.0, %v3463
    %v3465 = vmul.f32 %v3462, %v3464
    %v3466 = vadd.f32 %v3462, %v3465
    %vm3467 = vweird.f32 %v3461
    %vm3468 = vweird.f32 %v3462
    %vm3469 = vmor %vm3467, %vm3468
    %v3470 = vsel %vm3469, %v3462, %v3466
    %v3471 = vand.u32 2147483647, %v3461
    %vm3472 = vcmp.eq.f32.partialorder %v3471, 8.507059e+37
    %v3473 = vand.u32 %v3461, 2147483648
    %v3474 = vor.u32 1.1754944e-38, %v3473
    %v3475 = vsel %vm3472, %v3474, %v3470
    %v3476 = vmul.f32 1.0, %v3475
    %v3477 = vld [vmem:[#allocation4] sm:$0xff]
    %v3478 = vmul.f32 %v3456, %v3477
    %v3479 = vmul.f32 %v3437, %v3457
    %v3480 = vadd.f32 %v3478, %v3479
    %v3481 = vtanh.pop %v3480
    %v3482 = vmul.f32 %v3476, %v3481
    %3483 = vst [vmem:[#allocation4] sm:$0xff] %v3480
    %3484 = vst [vmem:[#allocation3] sm:$0xff] %v3482
    %v3485 = vld [vmem:[#allocation3] sm:$0xff]
    %v3486 = vld [vmem:[#allocation3 + $0x8] sm:$0xff]
    %v3487 = vld [vmem:[#allocation9] sm:$0xff]
    %v3488 = vld [vmem:[#allocation9 + $0x8] sm:$0xff]
    %v3489 = vld [vmem:[#allocation9 + $0x10] sm:$0xff]
    %v3490 = vld [vmem:[#allocation9 + $0x18] sm:$0xff]
    %v3491 = vld [vmem:[#allocation9 + $0x20] sm:$0xff]
    %v3492 = vld [vmem:[#allocation9 + $0x28] sm:$0xff]
    %v3493 = vld [vmem:[#allocation9 + $0x30] sm:$0xff]
    %v3494 = vld [vmem:[#allocation9 + $0x38] sm:$0xff]
    %v3495 = vld [vmem:[#allocation9 + $0x40] sm:$0xff]
    %v3496 = vld [vmem:[#allocation9 + $0x48] sm:$0xff]
    %v3497 = vld [vmem:[#allocation9 + $0x50] sm:$0xff]
    %v3498 = vld [vmem:[#allocation9 + $0x58] sm:$0xff]
    %v3499 = vld [vmem:[#allocation9 + $0x60] sm:$0xff]
    %v3500 = vld [vmem:[#allocation9 + $0x68] sm:$0xff]
    %v3501 = vld [vmem:[#allocation9 + $0x70] sm:$0xff]
    %v3502 = vld [vmem:[#allocation9 + $0x78] sm:$0xff]
    %v3503 = vld [vmem:[#allocation9 + $0x80] sm:$0xff]
    %v3504 = vld [vmem:[#allocation9 + $0x88] sm:$0xff]
    %v3505 = vld [vmem:[#allocation9 + $0x90] sm:$0xff]
    %v3506 = vld [vmem:[#allocation9 + $0x98] sm:$0xff]
    %v3507 = vld [vmem:[#allocation9 + $0xa0] sm:$0xff]
    %v3508 = vld [vmem:[#allocation9 + $0xa8] sm:$0xff]
    %v3509 = vld [vmem:[#allocation9 + $0xb0] sm:$0xff]
    %v3510 = vld [vmem:[#allocation9 + $0xb8] sm:$0xff]
    %v3511 = vld [vmem:[#allocation9 + $0xc0] sm:$0xff]
    %v3512 = vld [vmem:[#allocation9 + $0xc8] sm:$0xff]
    %v3513 = vld [vmem:[#allocation9 + $0xd0] sm:$0xff]
    %v3514 = vld [vmem:[#allocation9 + $0xd8] sm:$0xff]
    %v3515 = vld [vmem:[#allocation9 + $0xe0] sm:$0xff]
    %v3516 = vld [vmem:[#allocation9 + $0xe8] sm:$0xff]
    %v3517 = vld [vmem:[#allocation9 + $0xf0] sm:$0xff]
    %v3518 = vld [vmem:[#allocation9 + $0xf8] sm:$0xff]
    %v3519 = vld [vmem:[#allocation9 + $0x100] sm:$0xff]
    %v3520 = vld [vmem:[#allocation9 + $0x108] sm:$0xff]
    %v3521 = vld [vmem:[#allocation9 + $0x110] sm:$0xff]
    %v3522 = vld [vmem:[#allocation9 + $0x118] sm:$0xff]
    %v3523 = vld [vmem:[#allocation9 + $0x120] sm:$0xff]
    %v3524 = vld [vmem:[#allocation9 + $0x128] sm:$0xff]
    %v3525 = vld [vmem:[#allocation9 + $0x130] sm:$0xff]
    %v3526 = vld [vmem:[#allocation9 + $0x138] sm:$0xff]
    %v3527 = vld [vmem:[#allocation9 + $0x140] sm:$0xff]
    %v3528 = vld [vmem:[#allocation9 + $0x148] sm:$0xff]
    %v3529 = vld [vmem:[#allocation9 + $0x150] sm:$0xff]
    %v3530 = vld [vmem:[#allocation9 + $0x158] sm:$0xff]
    %v3531 = vld [vmem:[#allocation9 + $0x160] sm:$0xff]
    %v3532 = vld [vmem:[#allocation9 + $0x168] sm:$0xff]
    %v3533 = vld [vmem:[#allocation9 + $0x170] sm:$0xff]
    %v3534 = vld [vmem:[#allocation9 + $0x178] sm:$0xff]
    %v3535 = vld [vmem:[#allocation9 + $0x180] sm:$0xff]
    %v3536 = vld [vmem:[#allocation9 + $0x188] sm:$0xff]
    %v3537 = vld [vmem:[#allocation9 + $0x190] sm:$0xff]
    %v3538 = vld [vmem:[#allocation9 + $0x198] sm:$0xff]
    %v3539 = vld [vmem:[#allocation9 + $0x1a0] sm:$0xff]
    %v3540 = vld [vmem:[#allocation9 + $0x1a8] sm:$0xff]
    %v3541 = vld [vmem:[#allocation9 + $0x1b0] sm:$0xff]
    %v3542 = vld [vmem:[#allocation9 + $0x1b8] sm:$0xff]
    %v3543 = vld [vmem:[#allocation9 + $0x1c0] sm:$0xff]
    %v3544 = vld [vmem:[#allocation9 + $0x1c8] sm:$0xff]
    %v3545 = vld [vmem:[#allocation9 + $0x1d0] sm:$0xff]
    %v3546 = vld [vmem:[#allocation9 + $0x1d8] sm:$0xff]
    %v3547 = vld [vmem:[#allocation9 + $0x1e0] sm:$0xff]
    %v3548 = vld [vmem:[#allocation9 + $0x1e8] sm:$0xff]
    %v3549 = vld [vmem:[#allocation9 + $0x1f0] sm:$0xff]
    %v3550 = vld [vmem:[#allocation9 + $0x1f8] sm:$0xff]
    %v3551 = vld [vmem:[#allocation9 + $0x200] sm:$0xff]
    %v3552 = vld [vmem:[#allocation9 + $0x208] sm:$0xff]
    %v3553 = vld [vmem:[#allocation9 + $0x210] sm:$0xff]
    %v3554 = vld [vmem:[#allocation9 + $0x218] sm:$0xff]
    %v3555 = vld [vmem:[#allocation9 + $0x220] sm:$0xff]
    %v3556 = vld [vmem:[#allocation9 + $0x228] sm:$0xff]
    %v3557 = vld [vmem:[#allocation9 + $0x230] sm:$0xff]
    %v3558 = vld [vmem:[#allocation9 + $0x238] sm:$0xff]
    %v3559 = vld [vmem:[#allocation9 + $0x240] sm:$0xff]
    %v3560 = vld [vmem:[#allocation9 + $0x248] sm:$0xff]
    %v3561 = vld [vmem:[#allocation9 + $0x250] sm:$0xff]
    %v3562 = vld [vmem:[#allocation9 + $0x258] sm:$0xff]
    %v3563 = vld [vmem:[#allocation9 + $0x260] sm:$0xff]
    %v3564 = vld [vmem:[#allocation9 + $0x268] sm:$0xff]
    %v3565 = vld [vmem:[#allocation9 + $0x270] sm:$0xff]
    %v3566 = vld [vmem:[#allocation9 + $0x278] sm:$0xff]
    %v3567 = vld [vmem:[#allocation9 + $0x280] sm:$0xff]
    %v3568 = vld [vmem:[#allocation9 + $0x288] sm:$0xff]
    %v3569 = vld [vmem:[#allocation9 + $0x290] sm:$0xff]
    %v3570 = vld [vmem:[#allocation9 + $0x298] sm:$0xff]
    %v3571 = vld [vmem:[#allocation9 + $0x2a0] sm:$0xff]
    %v3572 = vld [vmem:[#allocation9 + $0x2a8] sm:$0xff]
    %v3573 = vld [vmem:[#allocation9 + $0x2b0] sm:$0xff]
    %v3574 = vld [vmem:[#allocation9 + $0x2b8] sm:$0xff]
    %v3575 = vld [vmem:[#allocation9 + $0x2c0] sm:$0xff]
    %v3576 = vld [vmem:[#allocation9 + $0x2c8] sm:$0xff]
    %v3577 = vld [vmem:[#allocation9 + $0x2d0] sm:$0xff]
    %v3578 = vld [vmem:[#allocation9 + $0x2d8] sm:$0xff]
    %v3579 = vld [vmem:[#allocation9 + $0x2e0] sm:$0xff]
    %v3580 = vld [vmem:[#allocation9 + $0x2e8] sm:$0xff]
    %v3581 = vld [vmem:[#allocation9 + $0x2f0] sm:$0xff]
    %v3582 = vld [vmem:[#allocation9 + $0x2f8] sm:$0xff]
    %v3583 = vld [vmem:[#allocation9 + $0x300] sm:$0xff]
    %v3584 = vld [vmem:[#allocation9 + $0x308] sm:$0xff]
    %v3585 = vld [vmem:[#allocation9 + $0x310] sm:$0xff]
    %v3586 = vld [vmem:[#allocation9 + $0x318] sm:$0xff]
    %v3587 = vld [vmem:[#allocation9 + $0x320] sm:$0xff]
    %v3588 = vld [vmem:[#allocation9 + $0x328] sm:$0xff]
    %v3589 = vld [vmem:[#allocation9 + $0x330] sm:$0xff]
    %v3590 = vld [vmem:[#allocation9 + $0x338] sm:$0xff]
    %v3591 = vld [vmem:[#allocation9 + $0x340] sm:$0xff]
    %v3592 = vld [vmem:[#allocation9 + $0x348] sm:$0xff]
    %v3593 = vld [vmem:[#allocation9 + $0x350] sm:$0xff]
    %v3594 = vld [vmem:[#allocation9 + $0x358] sm:$0xff]
    %v3595 = vld [vmem:[#allocation9 + $0x360] sm:$0xff]
    %v3596 = vld [vmem:[#allocation9 + $0x368] sm:$0xff]
    %v3597 = vld [vmem:[#allocation9 + $0x370] sm:$0xff]
    %v3598 = vld [vmem:[#allocation9 + $0x378] sm:$0xff]
    %v3599 = vld [vmem:[#allocation9 + $0x380] sm:$0xff]
    %v3600 = vld [vmem:[#allocation9 + $0x388] sm:$0xff]
    %v3601 = vld [vmem:[#allocation9 + $0x390] sm:$0xff]
    %v3602 = vld [vmem:[#allocation9 + $0x398] sm:$0xff]
    %v3603 = vld [vmem:[#allocation9 + $0x3a0] sm:$0xff]
    %v3604 = vld [vmem:[#allocation9 + $0x3a8] sm:$0xff]
    %v3605 = vld [vmem:[#allocation9 + $0x3b0] sm:$0xff]
    %v3606 = vld [vmem:[#allocation9 + $0x3b8] sm:$0xff]
    %v3607 = vld [vmem:[#allocation9 + $0x3c0] sm:$0xff]
    %v3608 = vld [vmem:[#allocation9 + $0x3c8] sm:$0xff]
    %v3609 = vld [vmem:[#allocation9 + $0x3d0] sm:$0xff]
    %v3610 = vld [vmem:[#allocation9 + $0x3d8] sm:$0xff]
    %v3611 = vld [vmem:[#allocation9 + $0x3e0] sm:$0xff]
    %v3612 = vld [vmem:[#allocation9 + $0x3e8] sm:$0xff]
    %v3613 = vld [vmem:[#allocation9 + $0x3f0] sm:$0xff]
    %v3614 = vld [vmem:[#allocation9 + $0x3f8] sm:$0xff]
    %v3615 = vld [vmem:[%s5] sm:$0xf]
    %v3617 = vperm.slane %v3615, 0
    %v3618 = vperm.slane %v3615, 1
    %v3619 = vperm.slane %v3615, 2
    %v3620 = vperm.slane %v3615, 3
    %3625 = vmatpush.msra.mxu0 %v3547
    %3626 = vmatpush.msra.mxu0 %v3543
    %3627 = vmatpush.msra.mxu0 %v3539
    %3628 = vmatpush.msra.mxu0 %v3535
    %3629 = vmatpush.msra.mxu0 %v3531
    %3630 = vmatpush.msra.mxu0 %v3527
    %3631 = vmatpush.msra.mxu0 %v3523
    %3632 = vmatpush.msra.mxu0 %v3519
    %3633 = vmatpush.msra.mxu0 %v3515
    %3634 = vmatpush.msra.mxu0 %v3511
    %3635 = vmatpush.msra.mxu0 %v3507
    %3636 = vmatpush.msra.mxu0 %v3503
    %3637 = vmatpush.msra.mxu0 %v3499
    %3638 = vmatpush.msra.mxu0 %v3495
    %3639 = vmatpush.msra.mxu0 %v3491
    %3640 = vmatpush.msra.mxu0 %v3487
    %3641 = vmatmul.f32.gmra.mxu0 %v3485
    %v3642 = vpop.f32.mrf.mxu0
    %v3643 = vadd.f32 %v3617, %v3642
    %3644 = vdwg.mxu0
    %3645 = vmatpush.msra.mxu0 %v3611
    %3646 = vmatpush.msra.mxu0 %v3607
    %3647 = vmatpush.msra.mxu0 %v3603
    %3648 = vmatpush.msra.mxu0 %v3599
    %3649 = vmatpush.msra.mxu0 %v3595
    %3650 = vmatpush.msra.mxu0 %v3591
    %3651 = vmatpush.msra.mxu0 %v3587
    %3652 = vmatpush.msra.mxu0 %v3583
    %3653 = vmatpush.msra.mxu0 %v3579
    %3654 = vmatpush.msra.mxu0 %v3575
    %3655 = vmatpush.msra.mxu0 %v3571
    %3656 = vmatpush.msra.mxu0 %v3567
    %3657 = vmatpush.msra.mxu0 %v3563
    %3658 = vmatpush.msra.mxu0 %v3559
    %3659 = vmatpush.msra.mxu0 %v3555
    %3660 = vmatpush.msra.mxu0 %v3551
    %3661 = vmatmul.f32.gmra.mxu0 %v3486
    %v3662 = vpop.f32.mrf.mxu0
    %v3663 = vadd.f32 %v3643, %v3662
    %3664 = vdwg.mxu0
    %3665 = vmatpush.msra.mxu0 %v3548
    %3666 = vmatpush.msra.mxu0 %v3544
    %3667 = vmatpush.msra.mxu0 %v3540
    %3668 = vmatpush.msra.mxu0 %v3536
    %3669 = vmatpush.msra.mxu0 %v3532
    %3670 = vmatpush.msra.mxu0 %v3528
    %3671 = vmatpush.msra.mxu0 %v3524
    %3672 = vmatpush.msra.mxu0 %v3520
    %3673 = vmatpush.msra.mxu0 %v3516
    %3674 = vmatpush.msra.mxu0 %v3512
    %3675 = vmatpush.msra.mxu0 %v3508
    %3676 = vmatpush.msra.mxu0 %v3504
    %3677 = vmatpush.msra.mxu0 %v3500
    %3678 = vmatpush.msra.mxu0 %v3496
    %3679 = vmatpush.msra.mxu0 %v3492
    %3680 = vmatpush.msra.mxu0 %v3488
    %3681 = vmatmul.f32.gmra.mxu0 %v3485
    %v3682 = vpop.f32.mrf.mxu0
    %v3683 = vadd.f32 %v3618, %v3682
    %3684 = vdwg.mxu0
    %3685 = vmatpush.msra.mxu0 %v3612
    %3686 = vmatpush.msra.mxu0 %v3608
    %3687 = vmatpush.msra.mxu0 %v3604
    %3688 = vmatpush.msra.mxu0 %v3600
    %3689 = vmatpush.msra.mxu0 %v3596
    %3690 = vmatpush.msra.mxu0 %v3592
    %3691 = vmatpush.msra.mxu0 %v3588
    %3692 = vmatpush.msra.mxu0 %v3584
    %3693 = vmatpush.msra.mxu0 %v3580
    %3694 = vmatpush.msra.mxu0 %v3576
    %3695 = vmatpush.msra.mxu0 %v3572
    %3696 = vmatpush.msra.mxu0 %v3568
    %3697 = vmatpush.msra.mxu0 %v3564
    %3698 = vmatpush.msra.mxu0 %v3560
    %3699 = vmatpush.msra.mxu0 %v3556
    %3700 = vmatpush.msra.mxu0 %v3552
    %3701 = vmatmul.f32.gmra.mxu0 %v3486
    %v3702 = vpop.f32.mrf.mxu0
    %v3703 = vadd.f32 %v3683, %v3702
    %3704 = vdwg.mxu0
    %3705 = vmatpush.msra.mxu0 %v3549
    %3706 = vmatpush.msra.mxu0 %v3545
    %3707 = vmatpush.msra.mxu0 %v3541
    %3708 = vmatpush.msra.mxu0 %v3537
    %3709 = vmatpush.msra.mxu0 %v3533
    %3710 = vmatpush.msra.mxu0 %v3529
    %3711 = vmatpush.msra.mxu0 %v3525
    %3712 = vmatpush.msra.mxu0 %v3521
    %3713 = vmatpush.msra.mxu0 %v3517
    %3714 = vmatpush.msra.mxu0 %v3513
    %3715 = vmatpush.msra.mxu0 %v3509
    %3716 = vmatpush.msra.mxu0 %v3505
    %3717 = vmatpush.msra.mxu0 %v3501
    %3718 = vmatpush.msra.mxu0 %v3497
    %3719 = vmatpush.msra.mxu0 %v3493
    %3720 = vmatpush.msra.mxu0 %v3489
    %3721 = vmatmul.f32.gmra.mxu0 %v3485
    %v3722 = vpop.f32.mrf.mxu0
    %v3723 = vadd.f32 %v3619, %v3722
    %3724 = vdwg.mxu0
    %3725 = vmatpush.msra.mxu0 %v3613
    %3726 = vmatpush.msra.mxu0 %v3609
    %3727 = vmatpush.msra.mxu0 %v3605
    %3728 = vmatpush.msra.mxu0 %v3601
    %3729 = vmatpush.msra.mxu0 %v3597
    %3730 = vmatpush.msra.mxu0 %v3593
    %3731 = vmatpush.msra.mxu0 %v3589
    %3732 = vmatpush.msra.mxu0 %v3585
    %3733 = vmatpush.msra.mxu0 %v3581
    %3734 = vmatpush.msra.mxu0 %v3577
    %3735 = vmatpush.msra.mxu0 %v3573
    %3736 = vmatpush.msra.mxu0 %v3569
    %3737 = vmatpush.msra.mxu0 %v3565
    %3738 = vmatpush.msra.mxu0 %v3561
    %3739 = vmatpush.msra.mxu0 %v3557
    %3740 = vmatpush.msra.mxu0 %v3553
    %3741 = vmatmul.f32.gmra.mxu0 %v3486
    %v3742 = vpop.f32.mrf.mxu0
    %v3743 = vadd.f32 %v3723, %v3742
    %3744 = vdwg.mxu0
    %3745 = vmatpush.msra.mxu0 %v3550
    %3746 = vmatpush.msra.mxu0 %v3546
    %3747 = vmatpush.msra.mxu0 %v3542
    %3748 = vmatpush.msra.mxu0 %v3538
    %3749 = vmatpush.msra.mxu0 %v3534
    %3750 = vmatpush.msra.mxu0 %v3530
    %3751 = vmatpush.msra.mxu0 %v3526
    %3752 = vmatpush.msra.mxu0 %v3522
    %3753 = vmatpush.msra.mxu0 %v3518
    %3754 = vmatpush.msra.mxu0 %v3514
    %3755 = vmatpush.msra.mxu0 %v3510
    %3756 = vmatpush.msra.mxu0 %v3506
    %3757 = vmatpush.msra.mxu0 %v3502
    %3758 = vmatpush.msra.mxu0 %v3498
    %3759 = vmatpush.msra.mxu0 %v3494
    %3760 = vmatpush.msra.mxu0 %v3490
    %3761 = vmatmul.f32.gmra.mxu0 %v3485
    %v3762 = vpop.f32.mrf.mxu0
    %v3763 = vadd.f32 %v3620, %v3762
    %3764 = vdwg.mxu0
    %3765 = vmatpush.msra.mxu0 %v3614
    %3766 = vmatpush.msra.mxu0 %v3610
    %3767 = vmatpush.msra.mxu0 %v3606
    %3768 = vmatpush.msra.mxu0 %v3602
    %3769 = vmatpush.msra.mxu0 %v3598
    %3770 = vmatpush.msra.mxu0 %v3594
    %3771 = vmatpush.msra.mxu0 %v3590
    %3772 = vmatpush.msra.mxu0 %v3586
    %3773 = vmatpush.msra.mxu0 %v3582
    %3774 = vmatpush.msra.mxu0 %v3578
    %3775 = vmatpush.msra.mxu0 %v3574
    %3776 = vmatpush.msra.mxu0 %v3570
    %3777 = vmatpush.msra.mxu0 %v3566
    %3778 = vmatpush.msra.mxu0 %v3562
    %3779 = vmatpush.msra.mxu0 %v3558
    %3780 = vmatpush.msra.mxu0 %v3554
    %3781 = vmatmul.f32.gmra.mxu0 %v3486
    %v3782 = vpop.f32.mrf.mxu0
    %v3783 = vadd.f32 %v3763, %v3782
    %3784 = vdwg.mxu0
    %v3785 = vxor.u32 %v3663, 2147483648
    %v3786 = vmul.f32 %v3785, 1.442695
    %v3787 = vpow.pop %v3786
    %v3788 = vadd.f32 %v3787, 1.0
    %v3789 = vrcp.pop %v3788
    %v3790 = vmul.f32 %v3788, %v3789
    %v3791 = vsub.f32 1.0, %v3790
    %v3792 = vmul.f32 %v3789, %v3791
    %v3793 = vadd.f32 %v3789, %v3792
    %vm3794 = vweird.f32 %v3788
    %vm3795 = vweird.f32 %v3789
    %vm3796 = vmor %vm3794, %vm3795
    %v3797 = vsel %vm3796, %v3789, %v3793
    %v3798 = vand.u32 2147483647, %v3788
    %vm3799 = vcmp.eq.f32.partialorder %v3798, 8.507059e+37
    %v3800 = vand.u32 %v3788, 2147483648
    %v3801 = vor.u32 1.1754944e-38, %v3800
    %v3802 = vsel %vm3799, %v3801, %v3797
    %v3803 = vmul.f32 1.0, %v3802
    %v3804 = vxor.u32 %v3703, 2147483648
    %v3805 = vmul.f32 %v3804, 1.442695
    %v3806 = vpow.pop %v3805
    %v3807 = vadd.f32 %v3806, 1.0
    %v3808 = vrcp.pop %v3807
    %v3809 = vmul.f32 %v3807, %v3808
    %v3810 = vsub.f32 1.0, %v3809
    %v3811 = vmul.f32 %v3808, %v3810
    %v3812 = vadd.f32 %v3808, %v3811
    %vm3813 = vweird.f32 %v3807
    %vm3814 = vweird.f32 %v3808
    %vm3815 = vmor %vm3813, %vm3814
    %v3816 = vsel %vm3815, %v3808, %v3812
    %v3817 = vand.u32 2147483647, %v3807
    %vm3818 = vcmp.eq.f32.partialorder %v3817, 8.507059e+37
    %v3819 = vand.u32 %v3807, 2147483648
    %v3820 = vor.u32 1.1754944e-38, %v3819
    %v3821 = vsel %vm3818, %v3820, %v3816
    %v3822 = vmul.f32 1.0, %v3821
    %v3823 = vtanh.pop %v3743
    %v3824 = vxor.u32 %v3783, 2147483648
    %v3825 = vmul.f32 %v3824, 1.442695
    %v3826 = vpow.pop %v3825
    %v3827 = vadd.f32 %v3826, 1.0
    %v3828 = vrcp.pop %v3827
    %v3829 = vmul.f32 %v3827, %v3828
    %v3830 = vsub.f32 1.0, %v3829
    %v3831 = vmul.f32 %v3828, %v3830
    %v3832 = vadd.f32 %v3828, %v3831
    %vm3833 = vweird.f32 %v3827
    %vm3834 = vweird.f32 %v3828
    %vm3835 = vmor %vm3833, %vm3834
    %v3836 = vsel %vm3835, %v3828, %v3832
    %v3837 = vand.u32 2147483647, %v3827
    %vm3838 = vcmp.eq.f32.partialorder %v3837, 8.507059e+37
    %v3839 = vand.u32 %v3827, 2147483648
    %v3840 = vor.u32 1.1754944e-38, %v3839
    %v3841 = vsel %vm3838, %v3840, %v3836
    %v3842 = vmul.f32 1.0, %v3841
    %v3843 = vld [vmem:[#allocation5] sm:$0xff]
    %v3844 = vmul.f32 %v3822, %v3843
    %v3845 = vmul.f32 %v3803, %v3823
    %v3846 = vadd.f32 %v3844, %v3845
    %v3847 = vtanh.pop %v3846
    %v3848 = vmul.f32 %v3842, %v3847
    %3849 = vst [vmem:[#allocation5] sm:$0xff] %v3846
    %3850 = vst [vmem:[#allocation3 + $0x8] sm:$0xff] %v3848
    %s3851 = smul.u32 6, 4
    %s3852 = smul.addr %s3851, 8
    %s3853 = scalar_lea.vmem [#allocation2], %s3852
    %v3854 = vld [vmem:[%s3853] sm:$0xff]
    %v3855 = vld [vmem:[%s3853 + $0x8] sm:$0xff]
    %v3856 = vld [vmem:[%s3853 + $0x10] sm:$0xff]
    %v3857 = vld [vmem:[%s3853 + $0x18] sm:$0xff]
    %v3858 = vld [vmem:[#allocation3] sm:$0xff]
    %v3859 = vld [vmem:[#allocation6] sm:$0xff]
    %v3860 = vld [vmem:[#allocation6 + $0x8] sm:$0xff]
    %v3861 = vld [vmem:[#allocation6 + $0x10] sm:$0xff]
    %v3862 = vld [vmem:[#allocation6 + $0x18] sm:$0xff]
    %v3863 = vld [vmem:[#allocation6 + $0x20] sm:$0xff]
    %v3864 = vld [vmem:[#allocation6 + $0x28] sm:$0xff]
    %v3865 = vld [vmem:[#allocation6 + $0x30] sm:$0xff]
    %v3866 = vld [vmem:[#allocation6 + $0x38] sm:$0xff]
    %v3867 = vld [vmem:[#allocation6 + $0x40] sm:$0xff]
    %v3868 = vld [vmem:[#allocation6 + $0x48] sm:$0xff]
    %v3869 = vld [vmem:[#allocation6 + $0x50] sm:$0xff]
    %v3870 = vld [vmem:[#allocation6 + $0x58] sm:$0xff]
    %v3871 = vld [vmem:[#allocation6 + $0x60] sm:$0xff]
    %v3872 = vld [vmem:[#allocation6 + $0x68] sm:$0xff]
    %v3873 = vld [vmem:[#allocation6 + $0x70] sm:$0xff]
    %v3874 = vld [vmem:[#allocation6 + $0x78] sm:$0xff]
    %v3875 = vld [vmem:[#allocation6 + $0x80] sm:$0xff]
    %v3876 = vld [vmem:[#allocation6 + $0x88] sm:$0xff]
    %v3877 = vld [vmem:[#allocation6 + $0x90] sm:$0xff]
    %v3878 = vld [vmem:[#allocation6 + $0x98] sm:$0xff]
    %v3879 = vld [vmem:[#allocation6 + $0xa0] sm:$0xff]
    %v3880 = vld [vmem:[#allocation6 + $0xa8] sm:$0xff]
    %v3881 = vld [vmem:[#allocation6 + $0xb0] sm:$0xff]
    %v3882 = vld [vmem:[#allocation6 + $0xb8] sm:$0xff]
    %v3883 = vld [vmem:[#allocation6 + $0xc0] sm:$0xff]
    %v3884 = vld [vmem:[#allocation6 + $0xc8] sm:$0xff]
    %v3885 = vld [vmem:[#allocation6 + $0xd0] sm:$0xff]
    %v3886 = vld [vmem:[#allocation6 + $0xd8] sm:$0xff]
    %v3887 = vld [vmem:[#allocation6 + $0xe0] sm:$0xff]
    %v3888 = vld [vmem:[#allocation6 + $0xe8] sm:$0xff]
    %v3889 = vld [vmem:[#allocation6 + $0xf0] sm:$0xff]
    %v3890 = vld [vmem:[#allocation6 + $0xf8] sm:$0xff]
    %v3891 = vld [vmem:[#allocation6 + $0x100] sm:$0xff]
    %v3892 = vld [vmem:[#allocation6 + $0x108] sm:$0xff]
    %v3893 = vld [vmem:[#allocation6 + $0x110] sm:$0xff]
    %v3894 = vld [vmem:[#allocation6 + $0x118] sm:$0xff]
    %v3895 = vld [vmem:[#allocation6 + $0x120] sm:$0xff]
    %v3896 = vld [vmem:[#allocation6 + $0x128] sm:$0xff]
    %v3897 = vld [vmem:[#allocation6 + $0x130] sm:$0xff]
    %v3898 = vld [vmem:[#allocation6 + $0x138] sm:$0xff]
    %v3899 = vld [vmem:[#allocation6 + $0x140] sm:$0xff]
    %v3900 = vld [vmem:[#allocation6 + $0x148] sm:$0xff]
    %v3901 = vld [vmem:[#allocation6 + $0x150] sm:$0xff]
    %v3902 = vld [vmem:[#allocation6 + $0x158] sm:$0xff]
    %v3903 = vld [vmem:[#allocation6 + $0x160] sm:$0xff]
    %v3904 = vld [vmem:[#allocation6 + $0x168] sm:$0xff]
    %v3905 = vld [vmem:[#allocation6 + $0x170] sm:$0xff]
    %v3906 = vld [vmem:[#allocation6 + $0x178] sm:$0xff]
    %v3907 = vld [vmem:[#allocation6 + $0x180] sm:$0xff]
    %v3908 = vld [vmem:[#allocation6 + $0x188] sm:$0xff]
    %v3909 = vld [vmem:[#allocation6 + $0x190] sm:$0xff]
    %v3910 = vld [vmem:[#allocation6 + $0x198] sm:$0xff]
    %v3911 = vld [vmem:[#allocation6 + $0x1a0] sm:$0xff]
    %v3912 = vld [vmem:[#allocation6 + $0x1a8] sm:$0xff]
    %v3913 = vld [vmem:[#allocation6 + $0x1b0] sm:$0xff]
    %v3914 = vld [vmem:[#allocation6 + $0x1b8] sm:$0xff]
    %v3915 = vld [vmem:[#allocation6 + $0x1c0] sm:$0xff]
    %v3916 = vld [vmem:[#allocation6 + $0x1c8] sm:$0xff]
    %v3917 = vld [vmem:[#allocation6 + $0x1d0] sm:$0xff]
    %v3918 = vld [vmem:[#allocation6 + $0x1d8] sm:$0xff]
    %v3919 = vld [vmem:[#allocation6 + $0x1e0] sm:$0xff]
    %v3920 = vld [vmem:[#allocation6 + $0x1e8] sm:$0xff]
    %v3921 = vld [vmem:[#allocation6 + $0x1f0] sm:$0xff]
    %v3922 = vld [vmem:[#allocation6 + $0x1f8] sm:$0xff]
    %3923 = vmatpush.msra.mxu0 %v3919
    %3924 = vmatpush.msra.mxu0 %v3915
    %3925 = vmatpush.msra.mxu0 %v3911
    %3926 = vmatpush.msra.mxu0 %v3907
    %3927 = vmatpush.msra.mxu0 %v3903
    %3928 = vmatpush.msra.mxu0 %v3899
    %3929 = vmatpush.msra.mxu0 %v3895
    %3930 = vmatpush.msra.mxu0 %v3891
    %3931 = vmatpush.msra.mxu0 %v3887
    %3932 = vmatpush.msra.mxu0 %v3883
    %3933 = vmatpush.msra.mxu0 %v3879
    %3934 = vmatpush.msra.mxu0 %v3875
    %3935 = vmatpush.msra.mxu0 %v3871
    %3936 = vmatpush.msra.mxu0 %v3867
    %3937 = vmatpush.msra.mxu0 %v3863
    %3938 = vmatpush.msra.mxu0 %v3859
    %3939 = vmatmul.f32.gmra.mxu0 %v3858
    %v3940 = vpop.f32.mrf.mxu0
    %v3941 = vadd.f32 0.0, %v3940
    %3942 = vdwg.mxu0
    %3943 = vmatpush.msra.mxu0 %v3920
    %3944 = vmatpush.msra.mxu0 %v3916
    %3945 = vmatpush.msra.mxu0 %v3912
    %3946 = vmatpush.msra.mxu0 %v3908
    %3947 = vmatpush.msra.mxu0 %v3904
    %3948 = vmatpush.msra.mxu0 %v3900
    %3949 = vmatpush.msra.mxu0 %v3896
    %3950 = vmatpush.msra.mxu0 %v3892
    %3951 = vmatpush.msra.mxu0 %v3888
    %3952 = vmatpush.msra.mxu0 %v3884
    %3953 = vmatpush.msra.mxu0 %v3880
    %3954 = vmatpush.msra.mxu0 %v3876
    %3955 = vmatpush.msra.mxu0 %v3872
    %3956 = vmatpush.msra.mxu0 %v3868
    %3957 = vmatpush.msra.mxu0 %v3864
    %3958 = vmatpush.msra.mxu0 %v3860
    %3959 = vmatmul.f32.gmra.mxu0 %v3858
    %v3960 = vpop.f32.mrf.mxu0
    %v3961 = vadd.f32 0.0, %v3960
    %3962 = vdwg.mxu0
    %3963 = vmatpush.msra.mxu0 %v3921
    %3964 = vmatpush.msra.mxu0 %v3917
    %3965 = vmatpush.msra.mxu0 %v3913
    %3966 = vmatpush.msra.mxu0 %v3909
    %3967 = vmatpush.msra.mxu0 %v3905
    %3968 = vmatpush.msra.mxu0 %v3901
    %3969 = vmatpush.msra.mxu0 %v3897
    %3970 = vmatpush.msra.mxu0 %v3893
    %3971 = vmatpush.msra.mxu0 %v3889
    %3972 = vmatpush.msra.mxu0 %v3885
    %3973 = vmatpush.msra.mxu0 %v3881
    %3974 = vmatpush.msra.mxu0 %v3877
    %3975 = vmatpush.msra.mxu0 %v3873
    %3976 = vmatpush.msra.mxu0 %v3869
    %3977 = vmatpush.msra.mxu0 %v3865
    %3978 = vmatpush.msra.mxu0 %v3861
    %3979 = vmatmul.f32.gmra.mxu0 %v3858
    %v3980 = vpop.f32.mrf.mxu0
    %v3981 = vadd.f32 0.0, %v3980
    %3982 = vdwg.mxu0
    %3983 = vmatpush.msra.mxu0 %v3922
    %3984 = vmatpush.msra.mxu0 %v3918
    %3985 = vmatpush.msra.mxu0 %v3914
    %3986 = vmatpush.msra.mxu0 %v3910
    %3987 = vmatpush.msra.mxu0 %v3906
    %3988 = vmatpush.msra.mxu0 %v3902
    %3989 = vmatpush.msra.mxu0 %v3898
    %3990 = vmatpush.msra.mxu0 %v3894
    %3991 = vmatpush.msra.mxu0 %v3890
    %3992 = vmatpush.msra.mxu0 %v3886
    %3993 = vmatpush.msra.mxu0 %v3882
    %3994 = vmatpush.msra.mxu0 %v3878
    %3995 = vmatpush.msra.mxu0 %v3874
    %3996 = vmatpush.msra.mxu0 %v3870
    %3997 = vmatpush.msra.mxu0 %v3866
    %3998 = vmatpush.msra.mxu0 %v3862
    %3999 = vmatmul.f32.gmra.mxu0 %v3858
    %v4000 = vpop.f32.mrf.mxu0
    %v4001 = vadd.f32 0.0, %v4000
    %4002 = vdwg.mxu0
    %v4003 = vadd.f32 %v3854, %v3941
    %v4004 = vadd.f32 %v3855, %v3961
    %v4005 = vadd.f32 %v3856, %v3981
    %v4006 = vadd.f32 %v3857, %v4001
    %v4007 = vxor.u32 %v4003, 2147483648
    %v4008 = vmul.f32 %v4007, 1.442695
    %v4009 = vpow.pop %v4008
    %v4010 = vadd.f32 %v4009, 1.0
    %v4011 = vrcp.pop %v4010
    %v4012 = vmul.f32 %v4010, %v4011
    %v4013 = vsub.f32 1.0, %v4012
    %v4014 = vmul.f32 %v4011, %v4013
    %v4015 = vadd.f32 %v4011, %v4014
    %vm4016 = vweird.f32 %v4010
    %vm4017 = vweird.f32 %v4011
    %vm4018 = vmor %vm4016, %vm4017
    %v4019 = vsel %vm4018, %v4011, %v4015
    %v4020 = vand.u32 2147483647, %v4010
    %vm4021 = vcmp.eq.f32.partialorder %v4020, 8.507059e+37
    %v4022 = vand.u32 %v4010, 2147483648
    %v4023 = vor.u32 1.1754944e-38, %v4022
    %v4024 = vsel %vm4021, %v4023, %v4019
    %v4025 = vmul.f32 1.0, %v4024
    %v4026 = vxor.u32 %v4004, 2147483648
    %v4027 = vmul.f32 %v4026, 1.442695
    %v4028 = vpow.pop %v4027
    %v4029 = vadd.f32 %v4028, 1.0
    %v4030 = vrcp.pop %v4029
    %v4031 = vmul.f32 %v4029, %v4030
    %v4032 = vsub.f32 1.0, %v4031
    %v4033 = vmul.f32 %v4030, %v4032
    %v4034 = vadd.f32 %v4030, %v4033
    %vm4035 = vweird.f32 %v4029
    %vm4036 = vweird.f32 %v4030
    %vm4037 = vmor %vm4035, %vm4036
    %v4038 = vsel %vm4037, %v4030, %v4034
    %v4039 = vand.u32 2147483647, %v4029
    %vm4040 = vcmp.eq.f32.partialorder %v4039, 8.507059e+37
    %v4041 = vand.u32 %v4029, 2147483648
    %v4042 = vor.u32 1.1754944e-38, %v4041
    %v4043 = vsel %vm4040, %v4042, %v4038
    %v4044 = vmul.f32 1.0, %v4043
    %v4045 = vtanh.pop %v4005
    %v4046 = vxor.u32 %v4006, 2147483648
    %v4047 = vmul.f32 %v4046, 1.442695
    %v4048 = vpow.pop %v4047
    %v4049 = vadd.f32 %v4048, 1.0
    %v4050 = vrcp.pop %v4049
    %v4051 = vmul.f32 %v4049, %v4050
    %v4052 = vsub.f32 1.0, %v4051
    %v4053 = vmul.f32 %v4050, %v4052
    %v4054 = vadd.f32 %v4050, %v4053
    %vm4055 = vweird.f32 %v4049
    %vm4056 = vweird.f32 %v4050
    %vm4057 = vmor %vm4055, %vm4056
    %v4058 = vsel %vm4057, %v4050, %v4054
    %v4059 = vand.u32 2147483647, %v4049
    %vm4060 = vcmp.eq.f32.partialorder %v4059, 8.507059e+37
    %v4061 = vand.u32 %v4049, 2147483648
    %v4062 = vor.u32 1.1754944e-38, %v4061
    %v4063 = vsel %vm4060, %v4062, %v4058
    %v4064 = vmul.f32 1.0, %v4063
    %v4065 = vld [vmem:[#allocation4] sm:$0xff]
    %v4066 = vmul.f32 %v4044, %v4065
    %v4067 = vmul.f32 %v4025, %v4045
    %v4068 = vadd.f32 %v4066, %v4067
    %v4069 = vtanh.pop %v4068
    %v4070 = vmul.f32 %v4064, %v4069
    %4071 = vst [vmem:[#allocation4] sm:$0xff] %v4068
    %4072 = vst [vmem:[#allocation3] sm:$0xff] %v4070
    %v4073 = vld [vmem:[#allocation3] sm:$0xff]
    %v4074 = vld [vmem:[#allocation3 + $0x8] sm:$0xff]
    %v4075 = vld [vmem:[#allocation9] sm:$0xff]
    %v4076 = vld [vmem:[#allocation9 + $0x8] sm:$0xff]
    %v4077 = vld [vmem:[#allocation9 + $0x10] sm:$0xff]
    %v4078 = vld [vmem:[#allocation9 + $0x18] sm:$0xff]
    %v4079 = vld [vmem:[#allocation9 + $0x20] sm:$0xff]
    %v4080 = vld [vmem:[#allocation9 + $0x28] sm:$0xff]
    %v4081 = vld [vmem:[#allocation9 + $0x30] sm:$0xff]
    %v4082 = vld [vmem:[#allocation9 + $0x38] sm:$0xff]
    %v4083 = vld [vmem:[#allocation9 + $0x40] sm:$0xff]
    %v4084 = vld [vmem:[#allocation9 + $0x48] sm:$0xff]
    %v4085 = vld [vmem:[#allocation9 + $0x50] sm:$0xff]
    %v4086 = vld [vmem:[#allocation9 + $0x58] sm:$0xff]
    %v4087 = vld [vmem:[#allocation9 + $0x60] sm:$0xff]
    %v4088 = vld [vmem:[#allocation9 + $0x68] sm:$0xff]
    %v4089 = vld [vmem:[#allocation9 + $0x70] sm:$0xff]
    %v4090 = vld [vmem:[#allocation9 + $0x78] sm:$0xff]
    %v4091 = vld [vmem:[#allocation9 + $0x80] sm:$0xff]
    %v4092 = vld [vmem:[#allocation9 + $0x88] sm:$0xff]
    %v4093 = vld [vmem:[#allocation9 + $0x90] sm:$0xff]
    %v4094 = vld [vmem:[#allocation9 + $0x98] sm:$0xff]
    %v4095 = vld [vmem:[#allocation9 + $0xa0] sm:$0xff]
    %v4096 = vld [vmem:[#allocation9 + $0xa8] sm:$0xff]
    %v4097 = vld [vmem:[#allocation9 + $0xb0] sm:$0xff]
    %v4098 = vld [vmem:[#allocation9 + $0xb8] sm:$0xff]
    %v4099 = vld [vmem:[#allocation9 + $0xc0] sm:$0xff]
    %v4100 = vld [vmem:[#allocation9 + $0xc8] sm:$0xff]
    %v4101 = vld [vmem:[#allocation9 + $0xd0] sm:$0xff]
    %v4102 = vld [vmem:[#allocation9 + $0xd8] sm:$0xff]
    %v4103 = vld [vmem:[#allocation9 + $0xe0] sm:$0xff]
    %v4104 = vld [vmem:[#allocation9 + $0xe8] sm:$0xff]
    %v4105 = vld [vmem:[#allocation9 + $0xf0] sm:$0xff]
    %v4106 = vld [vmem:[#allocation9 + $0xf8] sm:$0xff]
    %v4107 = vld [vmem:[#allocation9 + $0x100] sm:$0xff]
    %v4108 = vld [vmem:[#allocation9 + $0x108] sm:$0xff]
    %v4109 = vld [vmem:[#allocation9 + $0x110] sm:$0xff]
    %v4110 = vld [vmem:[#allocation9 + $0x118] sm:$0xff]
    %v4111 = vld [vmem:[#allocation9 + $0x120] sm:$0xff]
    %v4112 = vld [vmem:[#allocation9 + $0x128] sm:$0xff]
    %v4113 = vld [vmem:[#allocation9 + $0x130] sm:$0xff]
    %v4114 = vld [vmem:[#allocation9 + $0x138] sm:$0xff]
    %v4115 = vld [vmem:[#allocation9 + $0x140] sm:$0xff]
    %v4116 = vld [vmem:[#allocation9 + $0x148] sm:$0xff]
    %v4117 = vld [vmem:[#allocation9 + $0x150] sm:$0xff]
    %v4118 = vld [vmem:[#allocation9 + $0x158] sm:$0xff]
    %v4119 = vld [vmem:[#allocation9 + $0x160] sm:$0xff]
    %v4120 = vld [vmem:[#allocation9 + $0x168] sm:$0xff]
    %v4121 = vld [vmem:[#allocation9 + $0x170] sm:$0xff]
    %v4122 = vld [vmem:[#allocation9 + $0x178] sm:$0xff]
    %v4123 = vld [vmem:[#allocation9 + $0x180] sm:$0xff]
    %v4124 = vld [vmem:[#allocation9 + $0x188] sm:$0xff]
    %v4125 = vld [vmem:[#allocation9 + $0x190] sm:$0xff]
    %v4126 = vld [vmem:[#allocation9 + $0x198] sm:$0xff]
    %v4127 = vld [vmem:[#allocation9 + $0x1a0] sm:$0xff]
    %v4128 = vld [vmem:[#allocation9 + $0x1a8] sm:$0xff]
    %v4129 = vld [vmem:[#allocation9 + $0x1b0] sm:$0xff]
    %v4130 = vld [vmem:[#allocation9 + $0x1b8] sm:$0xff]
    %v4131 = vld [vmem:[#allocation9 + $0x1c0] sm:$0xff]
    %v4132 = vld [vmem:[#allocation9 + $0x1c8] sm:$0xff]
    %v4133 = vld [vmem:[#allocation9 + $0x1d0] sm:$0xff]
    %v4134 = vld [vmem:[#allocation9 + $0x1d8] sm:$0xff]
    %v4135 = vld [vmem:[#allocation9 + $0x1e0] sm:$0xff]
    %v4136 = vld [vmem:[#allocation9 + $0x1e8] sm:$0xff]
    %v4137 = vld [vmem:[#allocation9 + $0x1f0] sm:$0xff]
    %v4138 = vld [vmem:[#allocation9 + $0x1f8] sm:$0xff]
    %v4139 = vld [vmem:[#allocation9 + $0x200] sm:$0xff]
    %v4140 = vld [vmem:[#allocation9 + $0x208] sm:$0xff]
    %v4141 = vld [vmem:[#allocation9 + $0x210] sm:$0xff]
    %v4142 = vld [vmem:[#allocation9 + $0x218] sm:$0xff]
    %v4143 = vld [vmem:[#allocation9 + $0x220] sm:$0xff]
    %v4144 = vld [vmem:[#allocation9 + $0x228] sm:$0xff]
    %v4145 = vld [vmem:[#allocation9 + $0x230] sm:$0xff]
    %v4146 = vld [vmem:[#allocation9 + $0x238] sm:$0xff]
    %v4147 = vld [vmem:[#allocation9 + $0x240] sm:$0xff]
    %v4148 = vld [vmem:[#allocation9 + $0x248] sm:$0xff]
    %v4149 = vld [vmem:[#allocation9 + $0x250] sm:$0xff]
    %v4150 = vld [vmem:[#allocation9 + $0x258] sm:$0xff]
    %v4151 = vld [vmem:[#allocation9 + $0x260] sm:$0xff]
    %v4152 = vld [vmem:[#allocation9 + $0x268] sm:$0xff]
    %v4153 = vld [vmem:[#allocation9 + $0x270] sm:$0xff]
    %v4154 = vld [vmem:[#allocation9 + $0x278] sm:$0xff]
    %v4155 = vld [vmem:[#allocation9 + $0x280] sm:$0xff]
    %v4156 = vld [vmem:[#allocation9 + $0x288] sm:$0xff]
    %v4157 = vld [vmem:[#allocation9 + $0x290] sm:$0xff]
    %v4158 = vld [vmem:[#allocation9 + $0x298] sm:$0xff]
    %v4159 = vld [vmem:[#allocation9 + $0x2a0] sm:$0xff]
    %v4160 = vld [vmem:[#allocation9 + $0x2a8] sm:$0xff]
    %v4161 = vld [vmem:[#allocation9 + $0x2b0] sm:$0xff]
    %v4162 = vld [vmem:[#allocation9 + $0x2b8] sm:$0xff]
    %v4163 = vld [vmem:[#allocation9 + $0x2c0] sm:$0xff]
    %v4164 = vld [vmem:[#allocation9 + $0x2c8] sm:$0xff]
    %v4165 = vld [vmem:[#allocation9 + $0x2d0] sm:$0xff]
    %v4166 = vld [vmem:[#allocation9 + $0x2d8] sm:$0xff]
    %v4167 = vld [vmem:[#allocation9 + $0x2e0] sm:$0xff]
    %v4168 = vld [vmem:[#allocation9 + $0x2e8] sm:$0xff]
    %v4169 = vld [vmem:[#allocation9 + $0x2f0] sm:$0xff]
    %v4170 = vld [vmem:[#allocation9 + $0x2f8] sm:$0xff]
    %v4171 = vld [vmem:[#allocation9 + $0x300] sm:$0xff]
    %v4172 = vld [vmem:[#allocation9 + $0x308] sm:$0xff]
    %v4173 = vld [vmem:[#allocation9 + $0x310] sm:$0xff]
    %v4174 = vld [vmem:[#allocation9 + $0x318] sm:$0xff]
    %v4175 = vld [vmem:[#allocation9 + $0x320] sm:$0xff]
    %v4176 = vld [vmem:[#allocation9 + $0x328] sm:$0xff]
    %v4177 = vld [vmem:[#allocation9 + $0x330] sm:$0xff]
    %v4178 = vld [vmem:[#allocation9 + $0x338] sm:$0xff]
    %v4179 = vld [vmem:[#allocation9 + $0x340] sm:$0xff]
    %v4180 = vld [vmem:[#allocation9 + $0x348] sm:$0xff]
    %v4181 = vld [vmem:[#allocation9 + $0x350] sm:$0xff]
    %v4182 = vld [vmem:[#allocation9 + $0x358] sm:$0xff]
    %v4183 = vld [vmem:[#allocation9 + $0x360] sm:$0xff]
    %v4184 = vld [vmem:[#allocation9 + $0x368] sm:$0xff]
    %v4185 = vld [vmem:[#allocation9 + $0x370] sm:$0xff]
    %v4186 = vld [vmem:[#allocation9 + $0x378] sm:$0xff]
    %v4187 = vld [vmem:[#allocation9 + $0x380] sm:$0xff]
    %v4188 = vld [vmem:[#allocation9 + $0x388] sm:$0xff]
    %v4189 = vld [vmem:[#allocation9 + $0x390] sm:$0xff]
    %v4190 = vld [vmem:[#allocation9 + $0x398] sm:$0xff]
    %v4191 = vld [vmem:[#allocation9 + $0x3a0] sm:$0xff]
    %v4192 = vld [vmem:[#allocation9 + $0x3a8] sm:$0xff]
    %v4193 = vld [vmem:[#allocation9 + $0x3b0] sm:$0xff]
    %v4194 = vld [vmem:[#allocation9 + $0x3b8] sm:$0xff]
    %v4195 = vld [vmem:[#allocation9 + $0x3c0] sm:$0xff]
    %v4196 = vld [vmem:[#allocation9 + $0x3c8] sm:$0xff]
    %v4197 = vld [vmem:[#allocation9 + $0x3d0] sm:$0xff]
    %v4198 = vld [vmem:[#allocation9 + $0x3d8] sm:$0xff]
    %v4199 = vld [vmem:[#allocation9 + $0x3e0] sm:$0xff]
    %v4200 = vld [vmem:[#allocation9 + $0x3e8] sm:$0xff]
    %v4201 = vld [vmem:[#allocation9 + $0x3f0] sm:$0xff]
    %v4202 = vld [vmem:[#allocation9 + $0x3f8] sm:$0xff]
    %v4203 = vld [vmem:[%s5] sm:$0xf]
    %v4205 = vperm.slane %v4203, 0
    %v4206 = vperm.slane %v4203, 1
    %v4207 = vperm.slane %v4203, 2
    %v4208 = vperm.slane %v4203, 3
    %4213 = vmatpush.msra.mxu0 %v4135
    %4214 = vmatpush.msra.mxu0 %v4131
    %4215 = vmatpush.msra.mxu0 %v4127
    %4216 = vmatpush.msra.mxu0 %v4123
    %4217 = vmatpush.msra.mxu0 %v4119
    %4218 = vmatpush.msra.mxu0 %v4115
    %4219 = vmatpush.msra.mxu0 %v4111
    %4220 = vmatpush.msra.mxu0 %v4107
    %4221 = vmatpush.msra.mxu0 %v4103
    %4222 = vmatpush.msra.mxu0 %v4099
    %4223 = vmatpush.msra.mxu0 %v4095
    %4224 = vmatpush.msra.mxu0 %v4091
    %4225 = vmatpush.msra.mxu0 %v4087
    %4226 = vmatpush.msra.mxu0 %v4083
    %4227 = vmatpush.msra.mxu0 %v4079
    %4228 = vmatpush.msra.mxu0 %v4075
    %4229 = vmatmul.f32.gmra.mxu0 %v4073
    %v4230 = vpop.f32.mrf.mxu0
    %v4231 = vadd.f32 %v4205, %v4230
    %4232 = vdwg.mxu0
    %4233 = vmatpush.msra.mxu0 %v4199
    %4234 = vmatpush.msra.mxu0 %v4195
    %4235 = vmatpush.msra.mxu0 %v4191
    %4236 = vmatpush.msra.mxu0 %v4187
    %4237 = vmatpush.msra.mxu0 %v4183
    %4238 = vmatpush.msra.mxu0 %v4179
    %4239 = vmatpush.msra.mxu0 %v4175
    %4240 = vmatpush.msra.mxu0 %v4171
    %4241 = vmatpush.msra.mxu0 %v4167
    %4242 = vmatpush.msra.mxu0 %v4163
    %4243 = vmatpush.msra.mxu0 %v4159
    %4244 = vmatpush.msra.mxu0 %v4155
    %4245 = vmatpush.msra.mxu0 %v4151
    %4246 = vmatpush.msra.mxu0 %v4147
    %4247 = vmatpush.msra.mxu0 %v4143
    %4248 = vmatpush.msra.mxu0 %v4139
    %4249 = vmatmul.f32.gmra.mxu0 %v4074
    %v4250 = vpop.f32.mrf.mxu0
    %v4251 = vadd.f32 %v4231, %v4250
    %4252 = vdwg.mxu0
    %4253 = vmatpush.msra.mxu0 %v4136
    %4254 = vmatpush.msra.mxu0 %v4132
    %4255 = vmatpush.msra.mxu0 %v4128
    %4256 = vmatpush.msra.mxu0 %v4124
    %4257 = vmatpush.msra.mxu0 %v4120
    %4258 = vmatpush.msra.mxu0 %v4116
    %4259 = vmatpush.msra.mxu0 %v4112
    %4260 = vmatpush.msra.mxu0 %v4108
    %4261 = vmatpush.msra.mxu0 %v4104
    %4262 = vmatpush.msra.mxu0 %v4100
    %4263 = vmatpush.msra.mxu0 %v4096
    %4264 = vmatpush.msra.mxu0 %v4092
    %4265 = vmatpush.msra.mxu0 %v4088
    %4266 = vmatpush.msra.mxu0 %v4084
    %4267 = vmatpush.msra.mxu0 %v4080
    %4268 = vmatpush.msra.mxu0 %v4076
    %4269 = vmatmul.f32.gmra.mxu0 %v4073
    %v4270 = vpop.f32.mrf.mxu0
    %v4271 = vadd.f32 %v4206, %v4270
    %4272 = vdwg.mxu0
    %4273 = vmatpush.msra.mxu0 %v4200
    %4274 = vmatpush.msra.mxu0 %v4196
    %4275 = vmatpush.msra.mxu0 %v4192
    %4276 = vmatpush.msra.mxu0 %v4188
    %4277 = vmatpush.msra.mxu0 %v4184
    %4278 = vmatpush.msra.mxu0 %v4180
    %4279 = vmatpush.msra.mxu0 %v4176
    %4280 = vmatpush.msra.mxu0 %v4172
    %4281 = vmatpush.msra.mxu0 %v4168
    %4282 = vmatpush.msra.mxu0 %v4164
    %4283 = vmatpush.msra.mxu0 %v4160
    %4284 = vmatpush.msra.mxu0 %v4156
    %4285 = vmatpush.msra.mxu0 %v4152
    %4286 = vmatpush.msra.mxu0 %v4148
    %4287 = vmatpush.msra.mxu0 %v4144
    %4288 = vmatpush.msra.mxu0 %v4140
    %4289 = vmatmul.f32.gmra.mxu0 %v4074
    %v4290 = vpop.f32.mrf.mxu0
    %v4291 = vadd.f32 %v4271, %v4290
    %4292 = vdwg.mxu0
    %4293 = vmatpush.msra.mxu0 %v4137
    %4294 = vmatpush.msra.mxu0 %v4133
    %4295 = vmatpush.msra.mxu0 %v4129
    %4296 = vmatpush.msra.mxu0 %v4125
    %4297 = vmatpush.msra.mxu0 %v4121
    %4298 = vmatpush.msra.mxu0 %v4117
    %4299 = vmatpush.msra.mxu0 %v4113
    %4300 = vmatpush.msra.mxu0 %v4109
    %4301 = vmatpush.msra.mxu0 %v4105
    %4302 = vmatpush.msra.mxu0 %v4101
    %4303 = vmatpush.msra.mxu0 %v4097
    %4304 = vmatpush.msra.mxu0 %v4093
    %4305 = vmatpush.msra.mxu0 %v4089
    %4306 = vmatpush.msra.mxu0 %v4085
    %4307 = vmatpush.msra.mxu0 %v4081
    %4308 = vmatpush.msra.mxu0 %v4077
    %4309 = vmatmul.f32.gmra.mxu0 %v4073
    %v4310 = vpop.f32.mrf.mxu0
    %v4311 = vadd.f32 %v4207, %v4310
    %4312 = vdwg.mxu0
    %4313 = vmatpush.msra.mxu0 %v4201
    %4314 = vmatpush.msra.mxu0 %v4197
    %4315 = vmatpush.msra.mxu0 %v4193
    %4316 = vmatpush.msra.mxu0 %v4189
    %4317 = vmatpush.msra.mxu0 %v4185
    %4318 = vmatpush.msra.mxu0 %v4181
    %4319 = vmatpush.msra.mxu0 %v4177
    %4320 = vmatpush.msra.mxu0 %v4173
    %4321 = vmatpush.msra.mxu0 %v4169
    %4322 = vmatpush.msra.mxu0 %v4165
    %4323 = vmatpush.msra.mxu0 %v4161
    %4324 = vmatpush.msra.mxu0 %v4157
    %4325 = vmatpush.msra.mxu0 %v4153
    %4326 = vmatpush.msra.mxu0 %v4149
    %4327 = vmatpush.msra.mxu0 %v4145
    %4328 = vmatpush.msra.mxu0 %v4141
    %4329 = vmatmul.f32.gmra.mxu0 %v4074
    %v4330 = vpop.f32.mrf.mxu0
    %v4331 = vadd.f32 %v4311, %v4330
    %4332 = vdwg.mxu0
    %4333 = vmatpush.msra.mxu0 %v4138
    %4334 = vmatpush.msra.mxu0 %v4134
    %4335 = vmatpush.msra.mxu0 %v4130
    %4336 = vmatpush.msra.mxu0 %v4126
    %4337 = vmatpush.msra.mxu0 %v4122
    %4338 = vmatpush.msra.mxu0 %v4118
    %4339 = vmatpush.msra.mxu0 %v4114
    %4340 = vmatpush.msra.mxu0 %v4110
    %4341 = vmatpush.msra.mxu0 %v4106
    %4342 = vmatpush.msra.mxu0 %v4102
    %4343 = vmatpush.msra.mxu0 %v4098
    %4344 = vmatpush.msra.mxu0 %v4094
    %4345 = vmatpush.msra.mxu0 %v4090
    %4346 = vmatpush.msra.mxu0 %v4086
    %4347 = vmatpush.msra.mxu0 %v4082
    %4348 = vmatpush.msra.mxu0 %v4078
    %4349 = vmatmul.f32.gmra.mxu0 %v4073
    %v4350 = vpop.f32.mrf.mxu0
    %v4351 = vadd.f32 %v4208, %v4350
    %4352 = vdwg.mxu0
    %4353 = vmatpush.msra.mxu0 %v4202
    %4354 = vmatpush.msra.mxu0 %v4198
    %4355 = vmatpush.msra.mxu0 %v4194
    %4356 = vmatpush.msra.mxu0 %v4190
    %4357 = vmatpush.msra.mxu0 %v4186
    %4358 = vmatpush.msra.mxu0 %v4182
    %4359 = vmatpush.msra.mxu0 %v4178
    %4360 = vmatpush.msra.mxu0 %v4174
    %4361 = vmatpush.msra.mxu0 %v4170
    %4362 = vmatpush.msra.mxu0 %v4166
    %4363 = vmatpush.msra.mxu0 %v4162
    %4364 = vmatpush.msra.mxu0 %v4158
    %4365 = vmatpush.msra.mxu0 %v4154
    %4366 = vmatpush.msra.mxu0 %v4150
    %4367 = vmatpush.msra.mxu0 %v4146
    %4368 = vmatpush.msra.mxu0 %v4142
    %4369 = vmatmul.f32.gmra.mxu0 %v4074
    %v4370 = vpop.f32.mrf.mxu0
    %v4371 = vadd.f32 %v4351, %v4370
    %4372 = vdwg.mxu0
    %v4373 = vxor.u32 %v4251, 2147483648
    %v4374 = vmul.f32 %v4373, 1.442695
    %v4375 = vpow.pop %v4374
    %v4376 = vadd.f32 %v4375, 1.0
    %v4377 = vrcp.pop %v4376
    %v4378 = vmul.f32 %v4376, %v4377
    %v4379 = vsub.f32 1.0, %v4378
    %v4380 = vmul.f32 %v4377, %v4379
    %v4381 = vadd.f32 %v4377, %v4380
    %vm4382 = vweird.f32 %v4376
    %vm4383 = vweird.f32 %v4377
    %vm4384 = vmor %vm4382, %vm4383
    %v4385 = vsel %vm4384, %v4377, %v4381
    %v4386 = vand.u32 2147483647, %v4376
    %vm4387 = vcmp.eq.f32.partialorder %v4386, 8.507059e+37
    %v4388 = vand.u32 %v4376, 2147483648
    %v4389 = vor.u32 1.1754944e-38, %v4388
    %v4390 = vsel %vm4387, %v4389, %v4385
    %v4391 = vmul.f32 1.0, %v4390
    %v4392 = vxor.u32 %v4291, 2147483648
    %v4393 = vmul.f32 %v4392, 1.442695
    %v4394 = vpow.pop %v4393
    %v4395 = vadd.f32 %v4394, 1.0
    %v4396 = vrcp.pop %v4395
    %v4397 = vmul.f32 %v4395, %v4396
    %v4398 = vsub.f32 1.0, %v4397
    %v4399 = vmul.f32 %v4396, %v4398
    %v4400 = vadd.f32 %v4396, %v4399
    %vm4401 = vweird.f32 %v4395
    %vm4402 = vweird.f32 %v4396
    %vm4403 = vmor %vm4401, %vm4402
    %v4404 = vsel %vm4403, %v4396, %v4400
    %v4405 = vand.u32 2147483647, %v4395
    %vm4406 = vcmp.eq.f32.partialorder %v4405, 8.507059e+37
    %v4407 = vand.u32 %v4395, 2147483648
    %v4408 = vor.u32 1.1754944e-38, %v4407
    %v4409 = vsel %vm4406, %v4408, %v4404
    %v4410 = vmul.f32 1.0, %v4409
    %v4411 = vtanh.pop %v4331
    %v4412 = vxor.u32 %v4371, 2147483648
    %v4413 = vmul.f32 %v4412, 1.442695
    %v4414 = vpow.pop %v4413
    %v4415 = vadd.f32 %v4414, 1.0
    %v4416 = vrcp.pop %v4415
    %v4417 = vmul.f32 %v4415, %v4416
    %v4418 = vsub.f32 1.0, %v4417
    %v4419 = vmul.f32 %v4416, %v4418
    %v4420 = vadd.f32 %v4416, %v4419
    %vm4421 = vweird.f32 %v4415
    %vm4422 = vweird.f32 %v4416
    %vm4423 = vmor %vm4421, %vm4422
    %v4424 = vsel %vm4423, %v4416, %v4420
    %v4425 = vand.u32 2147483647, %v4415
    %vm4426 = vcmp.eq.f32.partialorder %v4425, 8.507059e+37
    %v4427 = vand.u32 %v4415, 2147483648
    %v4428 = vor.u32 1.1754944e-38, %v4427
    %v4429 = vsel %vm4426, %v4428, %v4424
    %v4430 = vmul.f32 1.0, %v4429
    %v4431 = vld [vmem:[#allocation5] sm:$0xff]
    %v4432 = vmul.f32 %v4410, %v4431
    %v4433 = vmul.f32 %v4391, %v4411
    %v4434 = vadd.f32 %v4432, %v4433
    %v4435 = vtanh.pop %v4434
    %v4436 = vmul.f32 %v4430, %v4435
    %4437 = vst [vmem:[#allocation5] sm:$0xff] %v4434
    %4438 = vst [vmem:[#allocation3 + $0x8] sm:$0xff] %v4436
    %s4439 = smul.u32 7, 4
    %s4440 = smul.addr %s4439, 8
    %s4441 = scalar_lea.vmem [#allocation2], %s4440
    %v4442 = vld [vmem:[%s4441] sm:$0xff]
    %v4443 = vld [vmem:[%s4441 + $0x8] sm:$0xff]
    %v4444 = vld [vmem:[%s4441 + $0x10] sm:$0xff]
    %v4445 = vld [vmem:[%s4441 + $0x18] sm:$0xff]
    %v4446 = vld [vmem:[#allocation3] sm:$0xff]
    %v4447 = vld [vmem:[#allocation6] sm:$0xff]
    %v4448 = vld [vmem:[#allocation6 + $0x8] sm:$0xff]
    %v4449 = vld [vmem:[#allocation6 + $0x10] sm:$0xff]
    %v4450 = vld [vmem:[#allocation6 + $0x18] sm:$0xff]
    %v4451 = vld [vmem:[#allocation6 + $0x20] sm:$0xff]
    %v4452 = vld [vmem:[#allocation6 + $0x28] sm:$0xff]
    %v4453 = vld [vmem:[#allocation6 + $0x30] sm:$0xff]
    %v4454 = vld [vmem:[#allocation6 + $0x38] sm:$0xff]
    %v4455 = vld [vmem:[#allocation6 + $0x40] sm:$0xff]
    %v4456 = vld [vmem:[#allocation6 + $0x48] sm:$0xff]
    %v4457 = vld [vmem:[#allocation6 + $0x50] sm:$0xff]
    %v4458 = vld [vmem:[#allocation6 + $0x58] sm:$0xff]
    %v4459 = vld [vmem:[#allocation6 + $0x60] sm:$0xff]
    %v4460 = vld [vmem:[#allocation6 + $0x68] sm:$0xff]
    %v4461 = vld [vmem:[#allocation6 + $0x70] sm:$0xff]
    %v4462 = vld [vmem:[#allocation6 + $0x78] sm:$0xff]
    %v4463 = vld [vmem:[#allocation6 + $0x80] sm:$0xff]
    %v4464 = vld [vmem:[#allocation6 + $0x88] sm:$0xff]
    %v4465 = vld [vmem:[#allocation6 + $0x90] sm:$0xff]
    %v4466 = vld [vmem:[#allocation6 + $0x98] sm:$0xff]
    %v4467 = vld [vmem:[#allocation6 + $0xa0] sm:$0xff]
    %v4468 = vld [vmem:[#allocation6 + $0xa8] sm:$0xff]
    %v4469 = vld [vmem:[#allocation6 + $0xb0] sm:$0xff]
    %v4470 = vld [vmem:[#allocation6 + $0xb8] sm:$0xff]
    %v4471 = vld [vmem:[#allocation6 + $0xc0] sm:$0xff]
    %v4472 = vld [vmem:[#allocation6 + $0xc8] sm:$0xff]
    %v4473 = vld [vmem:[#allocation6 + $0xd0] sm:$0xff]
    %v4474 = vld [vmem:[#allocation6 + $0xd8] sm:$0xff]
    %v4475 = vld [vmem:[#allocation6 + $0xe0] sm:$0xff]
    %v4476 = vld [vmem:[#allocation6 + $0xe8] sm:$0xff]
    %v4477 = vld [vmem:[#allocation6 + $0xf0] sm:$0xff]
    %v4478 = vld [vmem:[#allocation6 + $0xf8] sm:$0xff]
    %v4479 = vld [vmem:[#allocation6 + $0x100] sm:$0xff]
    %v4480 = vld [vmem:[#allocation6 + $0x108] sm:$0xff]
    %v4481 = vld [vmem:[#allocation6 + $0x110] sm:$0xff]
    %v4482 = vld [vmem:[#allocation6 + $0x118] sm:$0xff]
    %v4483 = vld [vmem:[#allocation6 + $0x120] sm:$0xff]
    %v4484 = vld [vmem:[#allocation6 + $0x128] sm:$0xff]
    %v4485 = vld [vmem:[#allocation6 + $0x130] sm:$0xff]
    %v4486 = vld [vmem:[#allocation6 + $0x138] sm:$0xff]
    %v4487 = vld [vmem:[#allocation6 + $0x140] sm:$0xff]
    %v4488 = vld [vmem:[#allocation6 + $0x148] sm:$0xff]
    %v4489 = vld [vmem:[#allocation6 + $0x150] sm:$0xff]
    %v4490 = vld [vmem:[#allocation6 + $0x158] sm:$0xff]
    %v4491 = vld [vmem:[#allocation6 + $0x160] sm:$0xff]
    %v4492 = vld [vmem:[#allocation6 + $0x168] sm:$0xff]
    %v4493 = vld [vmem:[#allocation6 + $0x170] sm:$0xff]
    %v4494 = vld [vmem:[#allocation6 + $0x178] sm:$0xff]
    %v4495 = vld [vmem:[#allocation6 + $0x180] sm:$0xff]
    %v4496 = vld [vmem:[#allocation6 + $0x188] sm:$0xff]
    %v4497 = vld [vmem:[#allocation6 + $0x190] sm:$0xff]
    %v4498 = vld [vmem:[#allocation6 + $0x198] sm:$0xff]
    %v4499 = vld [vmem:[#allocation6 + $0x1a0] sm:$0xff]
    %v4500 = vld [vmem:[#allocation6 + $0x1a8] sm:$0xff]
    %v4501 = vld [vmem:[#allocation6 + $0x1b0] sm:$0xff]
    %v4502 = vld [vmem:[#allocation6 + $0x1b8] sm:$0xff]
    %v4503 = vld [vmem:[#allocation6 + $0x1c0] sm:$0xff]
    %v4504 = vld [vmem:[#allocation6 + $0x1c8] sm:$0xff]
    %v4505 = vld [vmem:[#allocation6 + $0x1d0] sm:$0xff]
    %v4506 = vld [vmem:[#allocation6 + $0x1d8] sm:$0xff]
    %v4507 = vld [vmem:[#allocation6 + $0x1e0] sm:$0xff]
    %v4508 = vld [vmem:[#allocation6 + $0x1e8] sm:$0xff]
    %v4509 = vld [vmem:[#allocation6 + $0x1f0] sm:$0xff]
    %v4510 = vld [vmem:[#allocation6 + $0x1f8] sm:$0xff]
    %4511 = vmatpush.msra.mxu0 %v4507
    %4512 = vmatpush.msra.mxu0 %v4503
    %4513 = vmatpush.msra.mxu0 %v4499
    %4514 = vmatpush.msra.mxu0 %v4495
    %4515 = vmatpush.msra.mxu0 %v4491
    %4516 = vmatpush.msra.mxu0 %v4487
    %4517 = vmatpush.msra.mxu0 %v4483
    %4518 = vmatpush.msra.mxu0 %v4479
    %4519 = vmatpush.msra.mxu0 %v4475
    %4520 = vmatpush.msra.mxu0 %v4471
    %4521 = vmatpush.msra.mxu0 %v4467
    %4522 = vmatpush.msra.mxu0 %v4463
    %4523 = vmatpush.msra.mxu0 %v4459
    %4524 = vmatpush.msra.mxu0 %v4455
    %4525 = vmatpush.msra.mxu0 %v4451
    %4526 = vmatpush.msra.mxu0 %v4447
    %4527 = vmatmul.f32.gmra.mxu0 %v4446
    %v4528 = vpop.f32.mrf.mxu0
    %v4529 = vadd.f32 0.0, %v4528
    %4530 = vdwg.mxu0
    %4531 = vmatpush.msra.mxu0 %v4508
    %4532 = vmatpush.msra.mxu0 %v4504
    %4533 = vmatpush.msra.mxu0 %v4500
    %4534 = vmatpush.msra.mxu0 %v4496
    %4535 = vmatpush.msra.mxu0 %v4492
    %4536 = vmatpush.msra.mxu0 %v4488
    %4537 = vmatpush.msra.mxu0 %v4484
    %4538 = vmatpush.msra.mxu0 %v4480
    %4539 = vmatpush.msra.mxu0 %v4476
    %4540 = vmatpush.msra.mxu0 %v4472
    %4541 = vmatpush.msra.mxu0 %v4468
    %4542 = vmatpush.msra.mxu0 %v4464
    %4543 = vmatpush.msra.mxu0 %v4460
    %4544 = vmatpush.msra.mxu0 %v4456
    %4545 = vmatpush.msra.mxu0 %v4452
    %4546 = vmatpush.msra.mxu0 %v4448
    %4547 = vmatmul.f32.gmra.mxu0 %v4446
    %v4548 = vpop.f32.mrf.mxu0
    %v4549 = vadd.f32 0.0, %v4548
    %4550 = vdwg.mxu0
    %4551 = vmatpush.msra.mxu0 %v4509
    %4552 = vmatpush.msra.mxu0 %v4505
    %4553 = vmatpush.msra.mxu0 %v4501
    %4554 = vmatpush.msra.mxu0 %v4497
    %4555 = vmatpush.msra.mxu0 %v4493
    %4556 = vmatpush.msra.mxu0 %v4489
    %4557 = vmatpush.msra.mxu0 %v4485
    %4558 = vmatpush.msra.mxu0 %v4481
    %4559 = vmatpush.msra.mxu0 %v4477
    %4560 = vmatpush.msra.mxu0 %v4473
    %4561 = vmatpush.msra.mxu0 %v4469
    %4562 = vmatpush.msra.mxu0 %v4465
    %4563 = vmatpush.msra.mxu0 %v4461
    %4564 = vmatpush.msra.mxu0 %v4457
    %4565 = vmatpush.msra.mxu0 %v4453
    %4566 = vmatpush.msra.mxu0 %v4449
    %4567 = vmatmul.f32.gmra.mxu0 %v4446
    %v4568 = vpop.f32.mrf.mxu0
    %v4569 = vadd.f32 0.0, %v4568
    %4570 = vdwg.mxu0
    %4571 = vmatpush.msra.mxu0 %v4510
    %4572 = vmatpush.msra.mxu0 %v4506
    %4573 = vmatpush.msra.mxu0 %v4502
    %4574 = vmatpush.msra.mxu0 %v4498
    %4575 = vmatpush.msra.mxu0 %v4494
    %4576 = vmatpush.msra.mxu0 %v4490
    %4577 = vmatpush.msra.mxu0 %v4486
    %4578 = vmatpush.msra.mxu0 %v4482
    %4579 = vmatpush.msra.mxu0 %v4478
    %4580 = vmatpush.msra.mxu0 %v4474
    %4581 = vmatpush.msra.mxu0 %v4470
    %4582 = vmatpush.msra.mxu0 %v4466
    %4583 = vmatpush.msra.mxu0 %v4462
    %4584 = vmatpush.msra.mxu0 %v4458
    %4585 = vmatpush.msra.mxu0 %v4454
    %4586 = vmatpush.msra.mxu0 %v4450
    %4587 = vmatmul.f32.gmra.mxu0 %v4446
    %v4588 = vpop.f32.mrf.mxu0
    %v4589 = vadd.f32 0.0, %v4588
    %4590 = vdwg.mxu0
    %v4591 = vadd.f32 %v4442, %v4529
    %v4592 = vadd.f32 %v4443, %v4549
    %v4593 = vadd.f32 %v4444, %v4569
    %v4594 = vadd.f32 %v4445, %v4589
    %v4595 = vxor.u32 %v4591, 2147483648
    %v4596 = vmul.f32 %v4595, 1.442695
    %v4597 = vpow.pop %v4596
    %v4598 = vadd.f32 %v4597, 1.0
    %v4599 = vrcp.pop %v4598
    %v4600 = vmul.f32 %v4598, %v4599
    %v4601 = vsub.f32 1.0, %v4600
    %v4602 = vmul.f32 %v4599, %v4601
    %v4603 = vadd.f32 %v4599, %v4602
    %vm4604 = vweird.f32 %v4598
    %vm4605 = vweird.f32 %v4599
    %vm4606 = vmor %vm4604, %vm4605
    %v4607 = vsel %vm4606, %v4599, %v4603
    %v4608 = vand.u32 2147483647, %v4598
    %vm4609 = vcmp.eq.f32.partialorder %v4608, 8.507059e+37
    %v4610 = vand.u32 %v4598, 2147483648
    %v4611 = vor.u32 1.1754944e-38, %v4610
    %v4612 = vsel %vm4609, %v4611, %v4607
    %v4613 = vmul.f32 1.0, %v4612
    %v4614 = vxor.u32 %v4592, 2147483648
    %v4615 = vmul.f32 %v4614, 1.442695
    %v4616 = vpow.pop %v4615
    %v4617 = vadd.f32 %v4616, 1.0
    %v4618 = vrcp.pop %v4617
    %v4619 = vmul.f32 %v4617, %v4618
    %v4620 = vsub.f32 1.0, %v4619
    %v4621 = vmul.f32 %v4618, %v4620
    %v4622 = vadd.f32 %v4618, %v4621
    %vm4623 = vweird.f32 %v4617
    %vm4624 = vweird.f32 %v4618
    %vm4625 = vmor %vm4623, %vm4624
    %v4626 = vsel %vm4625, %v4618, %v4622
    %v4627 = vand.u32 2147483647, %v4617
    %vm4628 = vcmp.eq.f32.partialorder %v4627, 8.507059e+37
    %v4629 = vand.u32 %v4617, 2147483648
    %v4630 = vor.u32 1.1754944e-38, %v4629
    %v4631 = vsel %vm4628, %v4630, %v4626
    %v4632 = vmul.f32 1.0, %v4631
    %v4633 = vtanh.pop %v4593
    %v4634 = vxor.u32 %v4594, 2147483648
    %v4635 = vmul.f32 %v4634, 1.442695
    %v4636 = vpow.pop %v4635
    %v4637 = vadd.f32 %v4636, 1.0
    %v4638 = vrcp.pop %v4637
    %v4639 = vmul.f32 %v4637, %v4638
    %v4640 = vsub.f32 1.0, %v4639
    %v4641 = vmul.f32 %v4638, %v4640
    %v4642 = vadd.f32 %v4638, %v4641
    %vm4643 = vweird.f32 %v4637
    %vm4644 = vweird.f32 %v4638
    %vm4645 = vmor %vm4643, %vm4644
    %v4646 = vsel %vm4645, %v4638, %v4642
    %v4647 = vand.u32 2147483647, %v4637
    %vm4648 = vcmp.eq.f32.partialorder %v4647, 8.507059e+37
    %v4649 = vand.u32 %v4637, 2147483648
    %v4650 = vor.u32 1.1754944e-38, %v4649
    %v4651 = vsel %vm4648, %v4650, %v4646
    %v4652 = vmul.f32 1.0, %v4651
    %v4653 = vld [vmem:[#allocation4] sm:$0xff]
    %v4654 = vmul.f32 %v4632, %v4653
    %v4655 = vmul.f32 %v4613, %v4633
    %v4656 = vadd.f32 %v4654, %v4655
    %v4657 = vtanh.pop %v4656
    %v4658 = vmul.f32 %v4652, %v4657
    %4659 = vst [vmem:[#allocation4] sm:$0xff] %v4656
    %4660 = vst [vmem:[#allocation3] sm:$0xff] %v4658
    %v4661 = vld [vmem:[#allocation3] sm:$0xff]
    %v4662 = vld [vmem:[#allocation3 + $0x8] sm:$0xff]
    %v4663 = vld [vmem:[#allocation9] sm:$0xff]
    %v4664 = vld [vmem:[#allocation9 + $0x8] sm:$0xff]
    %v4665 = vld [vmem:[#allocation9 + $0x10] sm:$0xff]
    %v4666 = vld [vmem:[#allocation9 + $0x18] sm:$0xff]
    %v4667 = vld [vmem:[#allocation9 + $0x20] sm:$0xff]
    %v4668 = vld [vmem:[#allocation9 + $0x28] sm:$0xff]
    %v4669 = vld [vmem:[#allocation9 + $0x30] sm:$0xff]
    %v4670 = vld [vmem:[#allocation9 + $0x38] sm:$0xff]
    %v4671 = vld [vmem:[#allocation9 + $0x40] sm:$0xff]
    %v4672 = vld [vmem:[#allocation9 + $0x48] sm:$0xff]
    %v4673 = vld [vmem:[#allocation9 + $0x50] sm:$0xff]
    %v4674 = vld [vmem:[#allocation9 + $0x58] sm:$0xff]
    %v4675 = vld [vmem:[#allocation9 + $0x60] sm:$0xff]
    %v4676 = vld [vmem:[#allocation9 + $0x68] sm:$0xff]
    %v4677 = vld [vmem:[#allocation9 + $0x70] sm:$0xff]
    %v4678 = vld [vmem:[#allocation9 + $0x78] sm:$0xff]
    %v4679 = vld [vmem:[#allocation9 + $0x80] sm:$0xff]
    %v4680 = vld [vmem:[#allocation9 + $0x88] sm:$0xff]
    %v4681 = vld [vmem:[#allocation9 + $0x90] sm:$0xff]
    %v4682 = vld [vmem:[#allocation9 + $0x98] sm:$0xff]
    %v4683 = vld [vmem:[#allocation9 + $0xa0] sm:$0xff]
    %v4684 = vld [vmem:[#allocation9 + $0xa8] sm:$0xff]
    %v4685 = vld [vmem:[#allocation9 + $0xb0] sm:$0xff]
    %v4686 = vld [vmem:[#allocation9 + $0xb8] sm:$0xff]
    %v4687 = vld [vmem:[#allocation9 + $0xc0] sm:$0xff]
    %v4688 = vld [vmem:[#allocation9 + $0xc8] sm:$0xff]
    %v4689 = vld [vmem:[#allocation9 + $0xd0] sm:$0xff]
    %v4690 = vld [vmem:[#allocation9 + $0xd8] sm:$0xff]
    %v4691 = vld [vmem:[#allocation9 + $0xe0] sm:$0xff]
    %v4692 = vld [vmem:[#allocation9 + $0xe8] sm:$0xff]
    %v4693 = vld [vmem:[#allocation9 + $0xf0] sm:$0xff]
    %v4694 = vld [vmem:[#allocation9 + $0xf8] sm:$0xff]
    %v4695 = vld [vmem:[#allocation9 + $0x100] sm:$0xff]
    %v4696 = vld [vmem:[#allocation9 + $0x108] sm:$0xff]
    %v4697 = vld [vmem:[#allocation9 + $0x110] sm:$0xff]
    %v4698 = vld [vmem:[#allocation9 + $0x118] sm:$0xff]
    %v4699 = vld [vmem:[#allocation9 + $0x120] sm:$0xff]
    %v4700 = vld [vmem:[#allocation9 + $0x128] sm:$0xff]
    %v4701 = vld [vmem:[#allocation9 + $0x130] sm:$0xff]
    %v4702 = vld [vmem:[#allocation9 + $0x138] sm:$0xff]
    %v4703 = vld [vmem:[#allocation9 + $0x140] sm:$0xff]
    %v4704 = vld [vmem:[#allocation9 + $0x148] sm:$0xff]
    %v4705 = vld [vmem:[#allocation9 + $0x150] sm:$0xff]
    %v4706 = vld [vmem:[#allocation9 + $0x158] sm:$0xff]
    %v4707 = vld [vmem:[#allocation9 + $0x160] sm:$0xff]
    %v4708 = vld [vmem:[#allocation9 + $0x168] sm:$0xff]
    %v4709 = vld [vmem:[#allocation9 + $0x170] sm:$0xff]
    %v4710 = vld [vmem:[#allocation9 + $0x178] sm:$0xff]
    %v4711 = vld [vmem:[#allocation9 + $0x180] sm:$0xff]
    %v4712 = vld [vmem:[#allocation9 + $0x188] sm:$0xff]
    %v4713 = vld [vmem:[#allocation9 + $0x190] sm:$0xff]
    %v4714 = vld [vmem:[#allocation9 + $0x198] sm:$0xff]
    %v4715 = vld [vmem:[#allocation9 + $0x1a0] sm:$0xff]
    %v4716 = vld [vmem:[#allocation9 + $0x1a8] sm:$0xff]
    %v4717 = vld [vmem:[#allocation9 + $0x1b0] sm:$0xff]
    %v4718 = vld [vmem:[#allocation9 + $0x1b8] sm:$0xff]
    %v4719 = vld [vmem:[#allocation9 + $0x1c0] sm:$0xff]
    %v4720 = vld [vmem:[#allocation9 + $0x1c8] sm:$0xff]
    %v4721 = vld [vmem:[#allocation9 + $0x1d0] sm:$0xff]
    %v4722 = vld [vmem:[#allocation9 + $0x1d8] sm:$0xff]
    %v4723 = vld [vmem:[#allocation9 + $0x1e0] sm:$0xff]
    %v4724 = vld [vmem:[#allocation9 + $0x1e8] sm:$0xff]
    %v4725 = vld [vmem:[#allocation9 + $0x1f0] sm:$0xff]
    %v4726 = vld [vmem:[#allocation9 + $0x1f8] sm:$0xff]
    %v4727 = vld [vmem:[#allocation9 + $0x200] sm:$0xff]
    %v4728 = vld [vmem:[#allocation9 + $0x208] sm:$0xff]
    %v4729 = vld [vmem:[#allocation9 + $0x210] sm:$0xff]
    %v4730 = vld [vmem:[#allocation9 + $0x218] sm:$0xff]
    %v4731 = vld [vmem:[#allocation9 + $0x220] sm:$0xff]
    %v4732 = vld [vmem:[#allocation9 + $0x228] sm:$0xff]
    %v4733 = vld [vmem:[#allocation9 + $0x230] sm:$0xff]
    %v4734 = vld [vmem:[#allocation9 + $0x238] sm:$0xff]
    %v4735 = vld [vmem:[#allocation9 + $0x240] sm:$0xff]
    %v4736 = vld [vmem:[#allocation9 + $0x248] sm:$0xff]
    %v4737 = vld [vmem:[#allocation9 + $0x250] sm:$0xff]
    %v4738 = vld [vmem:[#allocation9 + $0x258] sm:$0xff]
    %v4739 = vld [vmem:[#allocation9 + $0x260] sm:$0xff]
    %v4740 = vld [vmem:[#allocation9 + $0x268] sm:$0xff]
    %v4741 = vld [vmem:[#allocation9 + $0x270] sm:$0xff]
    %v4742 = vld [vmem:[#allocation9 + $0x278] sm:$0xff]
    %v4743 = vld [vmem:[#allocation9 + $0x280] sm:$0xff]
    %v4744 = vld [vmem:[#allocation9 + $0x288] sm:$0xff]
    %v4745 = vld [vmem:[#allocation9 + $0x290] sm:$0xff]
    %v4746 = vld [vmem:[#allocation9 + $0x298] sm:$0xff]
    %v4747 = vld [vmem:[#allocation9 + $0x2a0] sm:$0xff]
    %v4748 = vld [vmem:[#allocation9 + $0x2a8] sm:$0xff]
    %v4749 = vld [vmem:[#allocation9 + $0x2b0] sm:$0xff]
    %v4750 = vld [vmem:[#allocation9 + $0x2b8] sm:$0xff]
    %v4751 = vld [vmem:[#allocation9 + $0x2c0] sm:$0xff]
    %v4752 = vld [vmem:[#allocation9 + $0x2c8] sm:$0xff]
    %v4753 = vld [vmem:[#allocation9 + $0x2d0] sm:$0xff]
    %v4754 = vld [vmem:[#allocation9 + $0x2d8] sm:$0xff]
    %v4755 = vld [vmem:[#allocation9 + $0x2e0] sm:$0xff]
    %v4756 = vld [vmem:[#allocation9 + $0x2e8] sm:$0xff]
    %v4757 = vld [vmem:[#allocation9 + $0x2f0] sm:$0xff]
    %v4758 = vld [vmem:[#allocation9 + $0x2f8] sm:$0xff]
    %v4759 = vld [vmem:[#allocation9 + $0x300] sm:$0xff]
    %v4760 = vld [vmem:[#allocation9 + $0x308] sm:$0xff]
    %v4761 = vld [vmem:[#allocation9 + $0x310] sm:$0xff]
    %v4762 = vld [vmem:[#allocation9 + $0x318] sm:$0xff]
    %v4763 = vld [vmem:[#allocation9 + $0x320] sm:$0xff]
    %v4764 = vld [vmem:[#allocation9 + $0x328] sm:$0xff]
    %v4765 = vld [vmem:[#allocation9 + $0x330] sm:$0xff]
    %v4766 = vld [vmem:[#allocation9 + $0x338] sm:$0xff]
    %v4767 = vld [vmem:[#allocation9 + $0x340] sm:$0xff]
    %v4768 = vld [vmem:[#allocation9 + $0x348] sm:$0xff]
    %v4769 = vld [vmem:[#allocation9 + $0x350] sm:$0xff]
    %v4770 = vld [vmem:[#allocation9 + $0x358] sm:$0xff]
    %v4771 = vld [vmem:[#allocation9 + $0x360] sm:$0xff]
    %v4772 = vld [vmem:[#allocation9 + $0x368] sm:$0xff]
    %v4773 = vld [vmem:[#allocation9 + $0x370] sm:$0xff]
    %v4774 = vld [vmem:[#allocation9 + $0x378] sm:$0xff]
    %v4775 = vld [vmem:[#allocation9 + $0x380] sm:$0xff]
    %v4776 = vld [vmem:[#allocation9 + $0x388] sm:$0xff]
    %v4777 = vld [vmem:[#allocation9 + $0x390] sm:$0xff]
    %v4778 = vld [vmem:[#allocation9 + $0x398] sm:$0xff]
    %v4779 = vld [vmem:[#allocation9 + $0x3a0] sm:$0xff]
    %v4780 = vld [vmem:[#allocation9 + $0x3a8] sm:$0xff]
    %v4781 = vld [vmem:[#allocation9 + $0x3b0] sm:$0xff]
    %v4782 = vld [vmem:[#allocation9 + $0x3b8] sm:$0xff]
    %v4783 = vld [vmem:[#allocation9 + $0x3c0] sm:$0xff]
    %v4784 = vld [vmem:[#allocation9 + $0x3c8] sm:$0xff]
    %v4785 = vld [vmem:[#allocation9 + $0x3d0] sm:$0xff]
    %v4786 = vld [vmem:[#allocation9 + $0x3d8] sm:$0xff]
    %v4787 = vld [vmem:[#allocation9 + $0x3e0] sm:$0xff]
    %v4788 = vld [vmem:[#allocation9 + $0x3e8] sm:$0xff]
    %v4789 = vld [vmem:[#allocation9 + $0x3f0] sm:$0xff]
    %v4790 = vld [vmem:[#allocation9 + $0x3f8] sm:$0xff]
    %v4791 = vld [vmem:[%s5] sm:$0xf]
    %v4793 = vperm.slane %v4791, 0
    %v4794 = vperm.slane %v4791, 1
    %v4795 = vperm.slane %v4791, 2
    %v4796 = vperm.slane %v4791, 3
    %4801 = vmatpush.msra.mxu0 %v4723
    %4802 = vmatpush.msra.mxu0 %v4719
    %4803 = vmatpush.msra.mxu0 %v4715
    %4804 = vmatpush.msra.mxu0 %v4711
    %4805 = vmatpush.msra.mxu0 %v4707
    %4806 = vmatpush.msra.mxu0 %v4703
    %4807 = vmatpush.msra.mxu0 %v4699
    %4808 = vmatpush.msra.mxu0 %v4695
    %4809 = vmatpush.msra.mxu0 %v4691
    %4810 = vmatpush.msra.mxu0 %v4687
    %4811 = vmatpush.msra.mxu0 %v4683
    %4812 = vmatpush.msra.mxu0 %v4679
    %4813 = vmatpush.msra.mxu0 %v4675
    %4814 = vmatpush.msra.mxu0 %v4671
    %4815 = vmatpush.msra.mxu0 %v4667
    %4816 = vmatpush.msra.mxu0 %v4663
    %4817 = vmatmul.f32.gmra.mxu0 %v4661
    %v4818 = vpop.f32.mrf.mxu0
    %v4819 = vadd.f32 %v4793, %v4818
    %4820 = vdwg.mxu0
    %4821 = vmatpush.msra.mxu0 %v4787
    %4822 = vmatpush.msra.mxu0 %v4783
    %4823 = vmatpush.msra.mxu0 %v4779
    %4824 = vmatpush.msra.mxu0 %v4775
    %4825 = vmatpush.msra.mxu0 %v4771
    %4826 = vmatpush.msra.mxu0 %v4767
    %4827 = vmatpush.msra.mxu0 %v4763
    %4828 = vmatpush.msra.mxu0 %v4759
    %4829 = vmatpush.msra.mxu0 %v4755
    %4830 = vmatpush.msra.mxu0 %v4751
    %4831 = vmatpush.msra.mxu0 %v4747
    %4832 = vmatpush.msra.mxu0 %v4743
    %4833 = vmatpush.msra.mxu0 %v4739
    %4834 = vmatpush.msra.mxu0 %v4735
    %4835 = vmatpush.msra.mxu0 %v4731
    %4836 = vmatpush.msra.mxu0 %v4727
    %4837 = vmatmul.f32.gmra.mxu0 %v4662
    %v4838 = vpop.f32.mrf.mxu0
    %v4839 = vadd.f32 %v4819, %v4838
    %4840 = vdwg.mxu0
    %4841 = vmatpush.msra.mxu0 %v4724
    %4842 = vmatpush.msra.mxu0 %v4720
    %4843 = vmatpush.msra.mxu0 %v4716
    %4844 = vmatpush.msra.mxu0 %v4712
    %4845 = vmatpush.msra.mxu0 %v4708
    %4846 = vmatpush.msra.mxu0 %v4704
    %4847 = vmatpush.msra.mxu0 %v4700
    %4848 = vmatpush.msra.mxu0 %v4696
    %4849 = vmatpush.msra.mxu0 %v4692
    %4850 = vmatpush.msra.mxu0 %v4688
    %4851 = vmatpush.msra.mxu0 %v4684
    %4852 = vmatpush.msra.mxu0 %v4680
    %4853 = vmatpush.msra.mxu0 %v4676
    %4854 = vmatpush.msra.mxu0 %v4672
    %4855 = vmatpush.msra.mxu0 %v4668
    %4856 = vmatpush.msra.mxu0 %v4664
    %4857 = vmatmul.f32.gmra.mxu0 %v4661
    %v4858 = vpop.f32.mrf.mxu0
    %v4859 = vadd.f32 %v4794, %v4858
    %4860 = vdwg.mxu0
    %4861 = vmatpush.msra.mxu0 %v4788
    %4862 = vmatpush.msra.mxu0 %v4784
    %4863 = vmatpush.msra.mxu0 %v4780
    %4864 = vmatpush.msra.mxu0 %v4776
    %4865 = vmatpush.msra.mxu0 %v4772
    %4866 = vmatpush.msra.mxu0 %v4768
    %4867 = vmatpush.msra.mxu0 %v4764
    %4868 = vmatpush.msra.mxu0 %v4760
    %4869 = vmatpush.msra.mxu0 %v4756
    %4870 = vmatpush.msra.mxu0 %v4752
    %4871 = vmatpush.msra.mxu0 %v4748
    %4872 = vmatpush.msra.mxu0 %v4744
    %4873 = vmatpush.msra.mxu0 %v4740
    %4874 = vmatpush.msra.mxu0 %v4736
    %4875 = vmatpush.msra.mxu0 %v4732
    %4876 = vmatpush.msra.mxu0 %v4728
    %4877 = vmatmul.f32.gmra.mxu0 %v4662
    %v4878 = vpop.f32.mrf.mxu0
    %v4879 = vadd.f32 %v4859, %v4878
    %4880 = vdwg.mxu0
    %4881 = vmatpush.msra.mxu0 %v4725
    %4882 = vmatpush.msra.mxu0 %v4721
    %4883 = vmatpush.msra.mxu0 %v4717
    %4884 = vmatpush.msra.mxu0 %v4713
    %4885 = vmatpush.msra.mxu0 %v4709
    %4886 = vmatpush.msra.mxu0 %v4705
    %4887 = vmatpush.msra.mxu0 %v4701
    %4888 = vmatpush.msra.mxu0 %v4697
    %4889 = vmatpush.msra.mxu0 %v4693
    %4890 = vmatpush.msra.mxu0 %v4689
    %4891 = vmatpush.msra.mxu0 %v4685
    %4892 = vmatpush.msra.mxu0 %v4681
    %4893 = vmatpush.msra.mxu0 %v4677
    %4894 = vmatpush.msra.mxu0 %v4673
    %4895 = vmatpush.msra.mxu0 %v4669
    %4896 = vmatpush.msra.mxu0 %v4665
    %4897 = vmatmul.f32.gmra.mxu0 %v4661
    %v4898 = vpop.f32.mrf.mxu0
    %v4899 = vadd.f32 %v4795, %v4898
    %4900 = vdwg.mxu0
    %4901 = vmatpush.msra.mxu0 %v4789
    %4902 = vmatpush.msra.mxu0 %v4785
    %4903 = vmatpush.msra.mxu0 %v4781
    %4904 = vmatpush.msra.mxu0 %v4777
    %4905 = vmatpush.msra.mxu0 %v4773
    %4906 = vmatpush.msra.mxu0 %v4769
    %4907 = vmatpush.msra.mxu0 %v4765
    %4908 = vmatpush.msra.mxu0 %v4761
    %4909 = vmatpush.msra.mxu0 %v4757
    %4910 = vmatpush.msra.mxu0 %v4753
    %4911 = vmatpush.msra.mxu0 %v4749
    %4912 = vmatpush.msra.mxu0 %v4745
    %4913 = vmatpush.msra.mxu0 %v4741
    %4914 = vmatpush.msra.mxu0 %v4737
    %4915 = vmatpush.msra.mxu0 %v4733
    %4916 = vmatpush.msra.mxu0 %v4729
    %4917 = vmatmul.f32.gmra.mxu0 %v4662
    %v4918 = vpop.f32.mrf.mxu0
    %v4919 = vadd.f32 %v4899, %v4918
    %4920 = vdwg.mxu0
    %4921 = vmatpush.msra.mxu0 %v4726
    %4922 = vmatpush.msra.mxu0 %v4722
    %4923 = vmatpush.msra.mxu0 %v4718
    %4924 = vmatpush.msra.mxu0 %v4714
    %4925 = vmatpush.msra.mxu0 %v4710
    %4926 = vmatpush.msra.mxu0 %v4706
    %4927 = vmatpush.msra.mxu0 %v4702
    %4928 = vmatpush.msra.mxu0 %v4698
    %4929 = vmatpush.msra.mxu0 %v4694
    %4930 = vmatpush.msra.mxu0 %v4690
    %4931 = vmatpush.msra.mxu0 %v4686
    %4932 = vmatpush.msra.mxu0 %v4682
    %4933 = vmatpush.msra.mxu0 %v4678
    %4934 = vmatpush.msra.mxu0 %v4674
    %4935 = vmatpush.msra.mxu0 %v4670
    %4936 = vmatpush.msra.mxu0 %v4666
    %4937 = vmatmul.f32.gmra.mxu0 %v4661
    %v4938 = vpop.f32.mrf.mxu0
    %v4939 = vadd.f32 %v4796, %v4938
    %4940 = vdwg.mxu0
    %4941 = vmatpush.msra.mxu0 %v4790
    %4942 = vmatpush.msra.mxu0 %v4786
    %4943 = vmatpush.msra.mxu0 %v4782
    %4944 = vmatpush.msra.mxu0 %v4778
    %4945 = vmatpush.msra.mxu0 %v4774
    %4946 = vmatpush.msra.mxu0 %v4770
    %4947 = vmatpush.msra.mxu0 %v4766
    %4948 = vmatpush.msra.mxu0 %v4762
    %4949 = vmatpush.msra.mxu0 %v4758
    %4950 = vmatpush.msra.mxu0 %v4754
    %4951 = vmatpush.msra.mxu0 %v4750
    %4952 = vmatpush.msra.mxu0 %v4746
    %4953 = vmatpush.msra.mxu0 %v4742
    %4954 = vmatpush.msra.mxu0 %v4738
    %4955 = vmatpush.msra.mxu0 %v4734
    %4956 = vmatpush.msra.mxu0 %v4730
    %4957 = vmatmul.f32.gmra.mxu0 %v4662
    %v4958 = vpop.f32.mrf.mxu0
    %v4959 = vadd.f32 %v4939, %v4958
    %4960 = vdwg.mxu0
    %v4961 = vxor.u32 %v4839, 2147483648
    %v4962 = vmul.f32 %v4961, 1.442695
    %v4963 = vpow.pop %v4962
    %v4964 = vadd.f32 %v4963, 1.0
    %v4965 = vrcp.pop %v4964
    %v4966 = vmul.f32 %v4964, %v4965
    %v4967 = vsub.f32 1.0, %v4966
    %v4968 = vmul.f32 %v4965, %v4967
    %v4969 = vadd.f32 %v4965, %v4968
    %vm4970 = vweird.f32 %v4964
    %vm4971 = vweird.f32 %v4965
    %vm4972 = vmor %vm4970, %vm4971
    %v4973 = vsel %vm4972, %v4965, %v4969
    %v4974 = vand.u32 2147483647, %v4964
    %vm4975 = vcmp.eq.f32.partialorder %v4974, 8.507059e+37
    %v4976 = vand.u32 %v4964, 2147483648
    %v4977 = vor.u32 1.1754944e-38, %v4976
    %v4978 = vsel %vm4975, %v4977, %v4973
    %v4979 = vmul.f32 1.0, %v4978
    %v4980 = vxor.u32 %v4879, 2147483648
    %v4981 = vmul.f32 %v4980, 1.442695
    %v4982 = vpow.pop %v4981
    %v4983 = vadd.f32 %v4982, 1.0
    %v4984 = vrcp.pop %v4983
    %v4985 = vmul.f32 %v4983, %v4984
    %v4986 = vsub.f32 1.0, %v4985
    %v4987 = vmul.f32 %v4984, %v4986
    %v4988 = vadd.f32 %v4984, %v4987
    %vm4989 = vweird.f32 %v4983
    %vm4990 = vweird.f32 %v4984
    %vm4991 = vmor %vm4989, %vm4990
    %v4992 = vsel %vm4991, %v4984, %v4988
    %v4993 = vand.u32 2147483647, %v4983
    %vm4994 = vcmp.eq.f32.partialorder %v4993, 8.507059e+37
    %v4995 = vand.u32 %v4983, 2147483648
    %v4996 = vor.u32 1.1754944e-38, %v4995
    %v4997 = vsel %vm4994, %v4996, %v4992
    %v4998 = vmul.f32 1.0, %v4997
    %v4999 = vtanh.pop %v4919
    %v5000 = vxor.u32 %v4959, 2147483648
    %v5001 = vmul.f32 %v5000, 1.442695
    %v5002 = vpow.pop %v5001
    %v5003 = vadd.f32 %v5002, 1.0
    %v5004 = vrcp.pop %v5003
    %v5005 = vmul.f32 %v5003, %v5004
    %v5006 = vsub.f32 1.0, %v5005
    %v5007 = vmul.f32 %v5004, %v5006
    %v5008 = vadd.f32 %v5004, %v5007
    %vm5009 = vweird.f32 %v5003
    %vm5010 = vweird.f32 %v5004
    %vm5011 = vmor %vm5009, %vm5010
    %v5012 = vsel %vm5011, %v5004, %v5008
    %v5013 = vand.u32 2147483647, %v5003
    %vm5014 = vcmp.eq.f32.partialorder %v5013, 8.507059e+37
    %v5015 = vand.u32 %v5003, 2147483648
    %v5016 = vor.u32 1.1754944e-38, %v5015
    %v5017 = vsel %vm5014, %v5016, %v5012
    %v5018 = vmul.f32 1.0, %v5017
    %v5019 = vld [vmem:[#allocation5] sm:$0xff]
    %v5020 = vmul.f32 %v4998, %v5019
    %v5021 = vmul.f32 %v4979, %v4999
    %v5022 = vadd.f32 %v5020, %v5021
    %v5023 = vtanh.pop %v5022
    %v5024 = vmul.f32 %v5018, %v5023
    %5025 = vst [vmem:[#allocation5] sm:$0xff] %v5022
    %5026 = vst [vmem:[#allocation3 + $0x8] sm:$0xff] %v5024
    // Predicated region
    $region38: #{tpu_custom_call.1} parent=1 // pred_check
      %p5027 = pneg %p56
    $region39: #{tpu_custom_call.1} parent=1 // pred_check_branch
      %5029 = sbr.rel (%p5027) target = $region41
    $region40: #{tpu_custom_call.1} parent=1 // pred_region
      %v5030 = vld [vmem:[#allocation3 + $0x8] sm:$0xff]
      %5031 = vst [vmem:[#allocation11] sm:$0xff] %v5030
    $region41: #{tpu_custom_call.1} parent=1 // pred_fallthru
      _
    // Predicated region
    $region42: #{tpu_custom_call.1} parent=1 // pred_check
      _
    $region43: #{tpu_custom_call.1} parent=1 // pred_check_branch
      %5033 = sbr.rel (0) target = $region45
    $region44: #{tpu_custom_call.1} parent=1 // pred_region
      %5035 = vsyncadd [#allocation8], 0
      %s5037 = sshll.u32 [#allocation11], 4
      %s5038 = int_to_ptr.vmem [resolvable:$true] %s5037
      %s5039 = sshll.u32 %s6, 4
      %s5040 = int_to_ptr.hbm [resolvable:$true] %s5039
      %5042 = dma.vmem_to_hbm [thread:$0]  %s5038, 128, %s5040, [#allocation8]
    $region45: #{tpu_custom_call.1} parent=1 // pred_fallthru
      _
    // Predicated region
    $region46: #{tpu_custom_call.1} parent=1 // pred_check
      _
    $region47: #{tpu_custom_call.1} parent=1 // pred_check_branch
      %5044 = sbr.rel (0) target = $region49
    $region48: #{tpu_custom_call.1} parent=1 // pred_region
      %5046 = dma.done [#allocation8], 128
    $region49: #{tpu_custom_call.1} parent=1 // pred_fallthru
      _
    %5047 = vsyncpa [#allocation7], 1
    %5048 = vsyncpa [#allocation10], 1
    %5049 = vsyncpa [#allocation8], 1

</llo_original>
